<compile_context>
chip_gen: v7x
topology: tpu7x:2x2x1
jax: 0.10.0
libtpu: 0.0.40
codegen_flags: <defaults>
</compile_context>

<pallas_src>
import jax
import jax.numpy as jnp
from jax.experimental import pallas as pl
from jax.experimental.pallas import tpu as pltpu

HP = 128   # padded per-gate hidden width (hidden1 == 128; hidden2 32 -> 128)
OP = 128   # padded (lane-dense) FC output width


# ----------------------------------------------------------------------------
# Fused forward kernel: 4 LSTM layers + 2 MC-dropouts + Linear, one launch.
# ----------------------------------------------------------------------------
def _fused_kernel(x_ref,       # (T, Bp, HP)  f32   padded input sequence
                  wih_ref,     # (4, HP, 4*HP) bf16 input->gates weights (W_ih^T, gate-padded)
                  whh_ref,     # (4, HP, 4*HP) bf16 hidden->gates weights (W_hh^T, gate-padded)
                  b_ref,       # (4, 1, 4*HP)  f32  combined b_ih + b_hh per layer
                  wfc_ref,     # (HP, OP)      bf16 padded fc weight (transposed)
                  bfc_ref,     # (1, OP)       f32  padded fc bias
                  m1_ref,      # (T, Bp, HP)   f32  dropout keep-mask (scaled 1/keep) for lstm1 output
                  m2_ref,      # (Bp, HP)      f32  dropout keep-mask (scaled 1/keep) for final h
                  o_ref,       # (Bp, OP)      f32  output
                  act_ref,     # VMEM scratch (T, Bp, HP)    layer activations
                  pre_ref):    # VMEM scratch (T, Bp, 4*HP)  hoisted input projection
    T, B, H = act_ref.shape
    unroll = True if T <= 16 else 8   # partial unroll once T grows

    def run_layer(layer, *, read_x=False, apply_seq_mask=False, write_out=True):
        w_ih = wih_ref[layer]                       # (HP, 4*HP) bf16
        w_hh = whh_ref[layer]                       # (HP, 4*HP) bf16
        b = b_ref[layer]                            # (1, 4*HP)  f32

        # --- hoisted non-recurrent projection: one big M = T*Bp matmul ------
        src = x_ref[...] if read_x else act_ref[...]
        if apply_seq_mask:                          # F.dropout on lstm1 output seq
            src = src * m1_ref[...]
        src2 = src.reshape(T * B, H).astype(jnp.bfloat16)
        pre = jnp.dot(src2, w_ih, preferred_element_type=jnp.float32) + b
        pre_ref[...] = pre.reshape(T, B, 4 * H)

        # --- recurrence: per-step dot is only h @ W_hh (K = 128) ------------
        def step(t, carry):
            h, c = carry
            g = pre_ref[t] + jnp.dot(h.astype(jnp.bfloat16), w_hh,
                                     preferred_element_type=jnp.float32)
            i_g = jax.nn.sigmoid(g[:, 0 * H:1 * H])
            f_g = jax.nn.sigmoid(g[:, 1 * H:2 * H])
            g_g = jnp.tanh(g[:, 2 * H:3 * H])
            o_g = jax.nn.sigmoid(g[:, 3 * H:4 * H])
            c_new = f_g * c + i_g * g_g
            h_new = o_g * jnp.tanh(c_new)
            if write_out:
                act_ref[t] = h_new
            return h_new, c_new

        zeros = jnp.zeros((B, H), jnp.float32)
        return jax.lax.fori_loop(0, T, step, (zeros, zeros), unroll=unroll)

    # lstm1: 2 stacked layers, zero initial state.
    run_layer(0, read_x=True)
    run_layer(1)
    # lstm2: 2 stacked layers; the first consumes the dropped lstm1 output.
    run_layer(2, apply_seq_mask=True)
    h_last, _ = run_layer(3, write_out=False)
    # Second F.dropout: only the last time step is consumed downstream, so a
    # single (Bp, HP) mask on h_last is exactly what output[:, -1, :] sees.
    h_drop = (h_last * m2_ref[...]).astype(jnp.bfloat16)
    # Final Linear fused into the epilogue; lane-dense (Bp, OP) store.
    o_ref[...] = (jnp.dot(h_drop, wfc_ref[...], preferred_element_type=jnp.float32)
                  + bfc_ref[...])


# ----------------------------------------------------------------------------
# One-time parameter packing (transposes, bias combine, gate/lane padding).
# Zero-padding hidden2 (32) up to 128 per gate is numerically exact: padded
# gate columns have zero weights/bias -> padded hidden/cell lanes stay 0.
# ----------------------------------------------------------------------------
def _pad_gate_cols(m, h_real):
    """(rows, 4*h_real) -> (rows, 4*HP): each gate block on a 128-lane boundary."""
    rows = m.shape[0]
    m4 = m.reshape(rows, 4, h_real)
    out = jnp.zeros((rows, 4, HP), m.dtype).at[:, :, :h_real].set(m4)
    return out.reshape(rows, 4 * HP)


def _pack_layer(w_ih, w_hh, b_ih, b_hh):
    """One LSTM layer -> W_ih^T (HP,4HP) bf16, W_hh^T (HP,4HP) bf16, bias (1,4HP) f32."""
    w_ih = jnp.asarray(w_ih, jnp.float32)    # (4*h, in)  PyTorch layout, gates i,f,g,o
    w_hh = jnp.asarray(w_hh, jnp.float32)    # (4*h, h)
    h_real = w_ih.shape[0] // 4
    in_real = w_ih.shape[1]
    assert in_real <= HP and h_real <= HP
    wih = jnp.zeros((HP, 4 * HP), jnp.float32).at[:in_real, :].set(
        _pad_gate_cols(w_ih.T, h_real))
    whh = jnp.zeros((HP, 4 * HP), jnp.float32).at[:h_real, :].set(
        _pad_gate_cols(w_hh.T, h_real))
    b = _pad_gate_cols(
        (jnp.asarray(b_ih, jnp.float32) + jnp.asarray(b_hh, jnp.float32)
         ).reshape(1, 4 * h_real), h_real)
    return wih.astype(jnp.bfloat16), whh.astype(jnp.bfloat16), b


def prepare_params(raw):
    wihs, whhs, bs = [], [], []
    for (w_ih, w_hh, b_ih, b_hh) in list(raw["lstm1"]) + list(raw["lstm2"]):
        wih, whh, b = _pack_layer(w_ih, w_hh, b_ih, b_hh)
        wihs.append(wih); whhs.append(whh); bs.append(b)
    fc_w = jnp.asarray(raw["fc_w"], jnp.float32)     # (O, hidden2)
    fc_b = jnp.asarray(raw["fc_b"], jnp.float32)     # (O,)
    out_dim, h2 = fc_w.shape
    assert out_dim <= OP and h2 <= HP
    wfc = jnp.zeros((HP, OP), jnp.float32).at[:h2, :out_dim].set(fc_w.T)
    bfc = jnp.zeros((1, OP), jnp.float32).at[0, :out_dim].set(fc_b)
    return {"wih": jnp.stack(wihs), "whh": jnp.stack(whhs), "b": jnp.stack(bs),
            "wfc": wfc.astype(jnp.bfloat16), "bfc": bfc}


# ----------------------------------------------------------------------------
# Forward pass == BayesianLSTM.forward (MC dropout always on).
# ----------------------------------------------------------------------------
def bayesian_lstm_forward(x_btf, packed, dropout_key, output_length=1, p=0.5):
    """x_btf: (B, T, F) batch-first, as in the PyTorch module.
    dropout_key: jax PRNG key (vary per MC sample). Returns (B, output_length)."""
    B, T, F = x_btf.shape
    Bp = max(8, ((B + 7) // 8) * 8)                       # pad batch to full sublanes

    x_tbf = jnp.transpose(x_btf, (1, 0, 2)).astype(jnp.float32)        # (T, B, F)
    x_pad = jnp.zeros((T, Bp, HP), jnp.float32).at[:, :B, :F].set(x_tbf)

    # MC-dropout keep-masks (== F.dropout(p, training=True)), drawn host-side
    # with jax.random so the kernel contains no TPU-only PRNG primitives.
    keep = 1.0 - p
    k1, k2 = jax.random.split(dropout_key)
    if keep < 1.0:
        m1 = jax.random.bernoulli(k1, keep, (T, Bp, HP)).astype(jnp.float32) / keep
        m2 = jax.random.bernoulli(k2, keep, (Bp, HP)).astype(jnp.float32) / keep
    else:
        m1 = jnp.ones((T, Bp, HP), jnp.float32)
        m2 = jnp.ones((Bp, HP), jnp.float32)

    vmem_spec = pl.BlockSpec(memory_space=pltpu.MemorySpace.VMEM)
    out = pl.pallas_call(
        _fused_kernel,
        out_shape=jax.ShapeDtypeStruct((Bp, OP), jnp.float32),
        in_specs=[vmem_spec] * 8,                 # grid=(), single invocation,
        out_specs=vmem_spec,                      # whole arrays single-buffered in VMEM
        scratch_shapes=[pltpu.VMEM((T, Bp, HP), jnp.float32),
                        pltpu.VMEM((T, Bp, 4 * HP), jnp.float32)],
        compiler_params=pltpu.CompilerParams(vmem_limit_bytes=16 * 1024 * 1024),
    )(x_pad, packed["wih"], packed["whh"], packed["b"],
      packed["wfc"], packed["bfc"], m1, m2)

    return out[:B, :output_length]


# ----------------------------------------------------------------------------
# Deterministic PyTorch-style parameter init (uniform(-1/sqrt(H), 1/sqrt(H))).
# ----------------------------------------------------------------------------
def _init_lstm_stack(key, input_size, hidden_size, num_layers):
    params = []
    k = 1.0 / (hidden_size ** 0.5)
    for layer in range(num_layers):
        d = input_size if layer == 0 else hidden_size
        key, k1, k2, k3, k4 = jax.random.split(key, 5)
        w_ih = jax.random.uniform(k1, (4 * hidden_size, d), jnp.float32, -k, k)
        w_hh = jax.random.uniform(k2, (4 * hidden_size, hidden_size), jnp.float32, -k, k)
        b_ih = jax.random.uniform(k3, (4 * hidden_size,), jnp.float32, -k, k)
        b_hh = jax.random.uniform(k4, (4 * hidden_size,), jnp.float32, -k, k)
        params.append((w_ih, w_hh, b_ih, b_hh))
    return key, params


def init_bayesian_lstm_params(key, n_features, output_length,
                              hidden1=128, hidden2=32, stacked_layers=2):
    assert hidden1 == HP, "hidden_size_1 must equal the padded lane width (128)"
    key, lstm1 = _init_lstm_stack(key, n_features, hidden1, stacked_layers)
    key, lstm2 = _init_lstm_stack(key, hidden1, hidden2, stacked_layers)
    kf = 1.0 / (hidden2 ** 0.5)
    key, kw, kb = jax.random.split(key, 3)
    fc_w = jax.random.uniform(kw, (output_length, hidden2), jnp.float32, -kf, kf)
    fc_b = jax.random.uniform(kb, (output_length,), jnp.float32, -kf, kf)
    return {"lstm1": lstm1, "lstm2": lstm2, "fc_w": fc_w, "fc_b": fc_b}


if __name__ == "__main__":
    key = jax.random.PRNGKey(0)
    key, k_x, k_params, k_drop = jax.random.split(key, 4)

    batch = 2
    seq_len = 8
    n_features = 4
    output_length = 1

    x = jax.random.normal(k_x, (batch, seq_len, n_features), jnp.float32)
    raw_params = init_bayesian_lstm_params(k_params, n_features, output_length)
    packed = prepare_params(raw_params)            # one-time packing / padding

    fwd = jax.jit(bayesian_lstm_forward, static_argnames=("output_length", "p"))
    y = fwd(x, packed, k_drop, output_length=output_length)
    y = jax.block_until_ready(y)

    assert y.shape == (batch, output_length)
    assert bool(jnp.all(jnp.isfinite(y)))
    print("KERNEL_OK")
</pallas_src>

<mosaic_0001>
module attributes {stable_mosaic.version = 11 : i64} {
  func.func @_fused_kernel(%arg0: memref<8x8x128xf32, #tpu.memory_space<vmem>>, %arg1: memref<4x128x512xbf16, #tpu.memory_space<vmem>>, %arg2: memref<4x128x512xbf16, #tpu.memory_space<vmem>>, %arg3: memref<4x1x512xf32, #tpu.memory_space<vmem>>, %arg4: memref<128x128xbf16, #tpu.memory_space<vmem>>, %arg5: memref<1x128xf32, #tpu.memory_space<vmem>>, %arg6: memref<8x8x128xf32, #tpu.memory_space<vmem>>, %arg7: memref<8x128xf32, #tpu.memory_space<vmem>>, %arg8: memref<8x128xf32, #tpu.memory_space<vmem>>, %arg9: memref<8x8x128xf32, #tpu.memory_space<vmem>>, %arg10: memref<8x8x512xf32, #tpu.memory_space<vmem>>) attributes {dimension_semantics = [], scalar_prefetch = 0 : i64, scratch_operands = 2 : i64, tpu.core_type = #tpu.core_type<tc>} {
    %c0 = arith.constant 0 : index
    %c0_0 = arith.constant 0 : index
    %c0_1 = arith.constant 0 : index
    %0 = vector.load %arg1[%c0, %c0_0, %c0_1] : memref<4x128x512xbf16, #tpu.memory_space<vmem>>, vector<1x128x512xbf16>
    %1 = vector.shape_cast %0 : vector<1x128x512xbf16> to vector<128x512xbf16>
    %c0_2 = arith.constant 0 : index
    %c0_3 = arith.constant 0 : index
    %c0_4 = arith.constant 0 : index
    %2 = vector.load %arg2[%c0_2, %c0_3, %c0_4] : memref<4x128x512xbf16, #tpu.memory_space<vmem>>, vector<1x128x512xbf16>
    %3 = vector.shape_cast %2 : vector<1x128x512xbf16> to vector<128x512xbf16>
    %c0_5 = arith.constant 0 : index
    %c0_6 = arith.constant 0 : index
    %c0_7 = arith.constant 0 : index
    %4 = vector.load %arg3[%c0_5, %c0_6, %c0_7] : memref<4x1x512xf32, #tpu.memory_space<vmem>>, vector<1x1x512xf32>
    %5 = vector.shape_cast %4 : vector<1x1x512xf32> to vector<1x512xf32>
    %c0_8 = arith.constant 0 : index
    %c0_9 = arith.constant 0 : index
    %c0_10 = arith.constant 0 : index
    %6 = vector.load %arg0[%c0_8, %c0_9, %c0_10] : memref<8x8x128xf32, #tpu.memory_space<vmem>>, vector<8x8x128xf32>
    %7 = vector.shape_cast %6 : vector<8x8x128xf32> to vector<64x128xf32>
    %8 = arith.truncf %7 : vector<64x128xf32> to vector<64x128xbf16>
    %cst = arith.constant dense<0.000000e+00> : vector<64x512xf32>
    %9 = tpu.matmul %8, %1, %cst {dimension_numbers = #tpu.dot_dimension_numbers<[1], [0], [0], [1], [0, 0, 1, 1], [], []>} : vector<64x128xbf16>, vector<128x512xbf16>, vector<64x512xf32> -> vector<64x512xf32>
    %10 = vector.broadcast %5 : vector<1x512xf32> to vector<64x512xf32>
    %11 = arith.addf %9, %10 : vector<64x512xf32>
    %12 = vector.shape_cast %11 : vector<64x512xf32> to vector<8x8x512xf32>
    %c0_11 = arith.constant 0 : index
    %c0_12 = arith.constant 0 : index
    %c0_13 = arith.constant 0 : index
    %13 = vector.load %arg10[%c0_11, %c0_12, %c0_13] : memref<8x8x512xf32, #tpu.memory_space<vmem>>, vector<8x8x512xf32>
    tpu.vector_store %arg10[%c0_11, %c0_12, %c0_13], %12 {strides = array<i32>} : memref<8x8x512xf32, #tpu.memory_space<vmem>>, vector<8x8x512xf32>,
    %cst_14 = arith.constant 0.000000e+00 : f32
    %14 = vector.broadcast %cst_14 : f32 to vector<8x128xf32>
    %c0_i32 = arith.constant 0 : i32
    %15 = arith.index_cast %c0_i32 : i32 to index
    %c0_15 = arith.constant 0 : index
    %c0_16 = arith.constant 0 : index
    %16 = vector.load %arg10[%15, %c0_15, %c0_16] : memref<8x8x512xf32, #tpu.memory_space<vmem>>, vector<1x8x512xf32>
    %17 = vector.shape_cast %16 : vector<1x8x512xf32> to vector<8x512xf32>
    %18 = arith.truncf %14 : vector<8x128xf32> to vector<8x128xbf16>
    %cst_17 = arith.constant dense<0.000000e+00> : vector<8x512xf32>
    %19 = tpu.matmul %18, %3, %cst_17 {dimension_numbers = #tpu.dot_dimension_numbers<[1], [0], [0], [1], [0, 0, 1, 1], [], []>} : vector<8x128xbf16>, vector<128x512xbf16>, vector<8x512xf32> -> vector<8x512xf32>
    %20 = arith.addf %17, %19 : vector<8x512xf32>
    %21 = vector.extract_strided_slice %20 {offsets = [0, 0], sizes = [8, 128], strides = [1, 1]} : vector<8x512xf32> to vector<8x128xf32>
    %22 = arith.negf %21 : vector<8x128xf32>
    %23 = math.exp %22 : vector<8x128xf32>
    %cst_18 = arith.constant 1.000000e+00 : f32
    %24 = vector.broadcast %cst_18 : f32 to vector<8x128xf32>
    %25 = arith.addf %24, %23 : vector<8x128xf32>
    %26 = arith.divf %24, %25 : vector<8x128xf32>
    %27 = vector.extract_strided_slice %20 {offsets = [0, 128], sizes = [8, 128], strides = [1, 1]} : vector<8x512xf32> to vector<8x128xf32>
    %28 = arith.negf %27 : vector<8x128xf32>
    %29 = math.exp %28 : vector<8x128xf32>
    %cst_19 = arith.constant 1.000000e+00 : f32
    %30 = vector.broadcast %cst_19 : f32 to vector<8x128xf32>
    %31 = arith.addf %30, %29 : vector<8x128xf32>
    %32 = arith.divf %30, %31 : vector<8x128xf32>
    %33 = vector.extract_strided_slice %20 {offsets = [0, 256], sizes = [8, 128], strides = [1, 1]} : vector<8x512xf32> to vector<8x128xf32>
    %34 = math.tanh %33 : vector<8x128xf32>
    %35 = vector.extract_strided_slice %20 {offsets = [0, 384], sizes = [8, 128], strides = [1, 1]} : vector<8x512xf32> to vector<8x128xf32>
    %36 = arith.negf %35 : vector<8x128xf32>
    %37 = math.exp %36 : vector<8x128xf32>
    %cst_20 = arith.constant 1.000000e+00 : f32
    %38 = vector.broadcast %cst_20 : f32 to vector<8x128xf32>
    %39 = arith.addf %38, %37 : vector<8x128xf32>
    %40 = arith.divf %38, %39 : vector<8x128xf32>
    %41 = arith.mulf %32, %14 : vector<8x128xf32>
    %42 = arith.mulf %26, %34 : vector<8x128xf32>
    %43 = arith.addf %41, %42 : vector<8x128xf32>
    %44 = math.tanh %43 : vector<8x128xf32>
    %45 = arith.mulf %40, %44 : vector<8x128xf32>
    %46 = arith.index_cast %c0_i32 : i32 to index
    %c0_21 = arith.constant 0 : index
    %c0_22 = arith.constant 0 : index
    %47 = vector.load %arg9[%46, %c0_21, %c0_22] : memref<8x8x128xf32, #tpu.memory_space<vmem>>, vector<1x8x128xf32>
    %48 = vector.shape_cast %47 : vector<1x8x128xf32> to vector<8x128xf32>
    %49 = vector.shape_cast %45 : vector<8x128xf32> to vector<1x8x128xf32>
    tpu.vector_store %arg9[%46, %c0_21, %c0_22], %49 {strides = array<i32>} : memref<8x8x128xf32, #tpu.memory_space<vmem>>, vector<1x8x128xf32>,
    %c1_i32 = arith.constant 1 : i32
    %50 = arith.index_cast %c1_i32 : i32 to index
    %c0_23 = arith.constant 0 : index
    %c0_24 = arith.constant 0 : index
    %51 = vector.load %arg10[%50, %c0_23, %c0_24] : memref<8x8x512xf32, #tpu.memory_space<vmem>>, vector<1x8x512xf32>
    %52 = vector.shape_cast %51 : vector<1x8x512xf32> to vector<8x512xf32>
    %53 = arith.truncf %45 : vector<8x128xf32> to vector<8x128xbf16>
    %cst_25 = arith.constant dense<0.000000e+00> : vector<8x512xf32>
    %54 = tpu.matmul %53, %3, %cst_25 {dimension_numbers = #tpu.dot_dimension_numbers<[1], [0], [0], [1], [0, 0, 1, 1], [], []>} : vector<8x128xbf16>, vector<128x512xbf16>, vector<8x512xf32> -> vector<8x512xf32>
    %55 = arith.addf %52, %54 : vector<8x512xf32>
    %56 = vector.extract_strided_slice %55 {offsets = [0, 0], sizes = [8, 128], strides = [1, 1]} : vector<8x512xf32> to vector<8x128xf32>
    %57 = arith.negf %56 : vector<8x128xf32>
    %58 = math.exp %57 : vector<8x128xf32>
    %cst_26 = arith.constant 1.000000e+00 : f32
    %59 = vector.broadcast %cst_26 : f32 to vector<8x128xf32>
    %60 = arith.addf %59, %58 : vector<8x128xf32>
    %61 = arith.divf %59, %60 : vector<8x128xf32>
    %62 = vector.extract_strided_slice %55 {offsets = [0, 128], sizes = [8, 128], strides = [1, 1]} : vector<8x512xf32> to vector<8x128xf32>
    %63 = arith.negf %62 : vector<8x128xf32>
    %64 = math.exp %63 : vector<8x128xf32>
    %cst_27 = arith.constant 1.000000e+00 : f32
    %65 = vector.broadcast %cst_27 : f32 to vector<8x128xf32>
    %66 = arith.addf %65, %64 : vector<8x128xf32>
    %67 = arith.divf %65, %66 : vector<8x128xf32>
    %68 = vector.extract_strided_slice %55 {offsets = [0, 256], sizes = [8, 128], strides = [1, 1]} : vector<8x512xf32> to vector<8x128xf32>
    %69 = math.tanh %68 : vector<8x128xf32>
    %70 = vector.extract_strided_slice %55 {offsets = [0, 384], sizes = [8, 128], strides = [1, 1]} : vector<8x512xf32> to vector<8x128xf32>
    %71 = arith.negf %70 : vector<8x128xf32>
    %72 = math.exp %71 : vector<8x128xf32>
    %cst_28 = arith.constant 1.000000e+00 : f32
    %73 = vector.broadcast %cst_28 : f32 to vector<8x128xf32>
    %74 = arith.addf %73, %72 : vector<8x128xf32>
    %75 = arith.divf %73, %74 : vector<8x128xf32>
    %76 = arith.mulf %67, %43 : vector<8x128xf32>
    %77 = arith.mulf %61, %69 : vector<8x128xf32>
    %78 = arith.addf %76, %77 : vector<8x128xf32>
    %79 = math.tanh %78 : vector<8x128xf32>
    %80 = arith.mulf %75, %79 : vector<8x128xf32>
    %81 = arith.index_cast %c1_i32 : i32 to index
    %c0_29 = arith.constant 0 : index
    %c0_30 = arith.constant 0 : index
    %82 = vector.load %arg9[%81, %c0_29, %c0_30] : memref<8x8x128xf32, #tpu.memory_space<vmem>>, vector<1x8x128xf32>
    %83 = vector.shape_cast %82 : vector<1x8x128xf32> to vector<8x128xf32>
    %84 = vector.shape_cast %80 : vector<8x128xf32> to vector<1x8x128xf32>
    tpu.vector_store %arg9[%81, %c0_29, %c0_30], %84 {strides = array<i32>} : memref<8x8x128xf32, #tpu.memory_space<vmem>>, vector<1x8x128xf32>,
    %c2_i32 = arith.constant 2 : i32
    %85 = arith.index_cast %c2_i32 : i32 to index
    %c0_31 = arith.constant 0 : index
    %c0_32 = arith.constant 0 : index
    %86 = vector.load %arg10[%85, %c0_31, %c0_32] : memref<8x8x512xf32, #tpu.memory_space<vmem>>, vector<1x8x512xf32>
    %87 = vector.shape_cast %86 : vector<1x8x512xf32> to vector<8x512xf32>
    %88 = arith.truncf %80 : vector<8x128xf32> to vector<8x128xbf16>
    %cst_33 = arith.constant dense<0.000000e+00> : vector<8x512xf32>
    %89 = tpu.matmul %88, %3, %cst_33 {dimension_numbers = #tpu.dot_dimension_numbers<[1], [0], [0], [1], [0, 0, 1, 1], [], []>} : vector<8x128xbf16>, vector<128x512xbf16>, vector<8x512xf32> -> vector<8x512xf32>
    %90 = arith.addf %87, %89 : vector<8x512xf32>
    %91 = vector.extract_strided_slice %90 {offsets = [0, 0], sizes = [8, 128], strides = [1, 1]} : vector<8x512xf32> to vector<8x128xf32>
    %92 = arith.negf %91 : vector<8x128xf32>
    %93 = math.exp %92 : vector<8x128xf32>
    %cst_34 = arith.constant 1.000000e+00 : f32
    %94 = vector.broadcast %cst_34 : f32 to vector<8x128xf32>
    %95 = arith.addf %94, %93 : vector<8x128xf32>
    %96 = arith.divf %94, %95 : vector<8x128xf32>
    %97 = vector.extract_strided_slice %90 {offsets = [0, 128], sizes = [8, 128], strides = [1, 1]} : vector<8x512xf32> to vector<8x128xf32>
    %98 = arith.negf %97 : vector<8x128xf32>
    %99 = math.exp %98 : vector<8x128xf32>
    %cst_35 = arith.constant 1.000000e+00 : f32
    %100 = vector.broadcast %cst_35 : f32 to vector<8x128xf32>
    %101 = arith.addf %100, %99 : vector<8x128xf32>
    %102 = arith.divf %100, %101 : vector<8x128xf32>
    %103 = vector.extract_strided_slice %90 {offsets = [0, 256], sizes = [8, 128], strides = [1, 1]} : vector<8x512xf32> to vector<8x128xf32>
    %104 = math.tanh %103 : vector<8x128xf32>
    %105 = vector.extract_strided_slice %90 {offsets = [0, 384], sizes = [8, 128], strides = [1, 1]} : vector<8x512xf32> to vector<8x128xf32>
    %106 = arith.negf %105 : vector<8x128xf32>
    %107 = math.exp %106 : vector<8x128xf32>
    %cst_36 = arith.constant 1.000000e+00 : f32
    %108 = vector.broadcast %cst_36 : f32 to vector<8x128xf32>
    %109 = arith.addf %108, %107 : vector<8x128xf32>
    %110 = arith.divf %108, %109 : vector<8x128xf32>
    %111 = arith.mulf %102, %78 : vector<8x128xf32>
    %112 = arith.mulf %96, %104 : vector<8x128xf32>
    %113 = arith.addf %111, %112 : vector<8x128xf32>
    %114 = math.tanh %113 : vector<8x128xf32>
    %115 = arith.mulf %110, %114 : vector<8x128xf32>
    %116 = arith.index_cast %c2_i32 : i32 to index
    %c0_37 = arith.constant 0 : index
    %c0_38 = arith.constant 0 : index
    %117 = vector.load %arg9[%116, %c0_37, %c0_38] : memref<8x8x128xf32, #tpu.memory_space<vmem>>, vector<1x8x128xf32>
    %118 = vector.shape_cast %117 : vector<1x8x128xf32> to vector<8x128xf32>
    %119 = vector.shape_cast %115 : vector<8x128xf32> to vector<1x8x128xf32>
    tpu.vector_store %arg9[%116, %c0_37, %c0_38], %119 {strides = array<i32>} : memref<8x8x128xf32, #tpu.memory_space<vmem>>, vector<1x8x128xf32>,
    %c3_i32 = arith.constant 3 : i32
    %120 = arith.index_cast %c3_i32 : i32 to index
    %c0_39 = arith.constant 0 : index
    %c0_40 = arith.constant 0 : index
    %121 = vector.load %arg10[%120, %c0_39, %c0_40] : memref<8x8x512xf32, #tpu.memory_space<vmem>>, vector<1x8x512xf32>
    %122 = vector.shape_cast %121 : vector<1x8x512xf32> to vector<8x512xf32>
    %123 = arith.truncf %115 : vector<8x128xf32> to vector<8x128xbf16>
    %cst_41 = arith.constant dense<0.000000e+00> : vector<8x512xf32>
    %124 = tpu.matmul %123, %3, %cst_41 {dimension_numbers = #tpu.dot_dimension_numbers<[1], [0], [0], [1], [0, 0, 1, 1], [], []>} : vector<8x128xbf16>, vector<128x512xbf16>, vector<8x512xf32> -> vector<8x512xf32>
    %125 = arith.addf %122, %124 : vector<8x512xf32>
    %126 = vector.extract_strided_slice %125 {offsets = [0, 0], sizes = [8, 128], strides = [1, 1]} : vector<8x512xf32> to vector<8x128xf32>
    %127 = arith.negf %126 : vector<8x128xf32>
    %128 = math.exp %127 : vector<8x128xf32>
    %cst_42 = arith.constant 1.000000e+00 : f32
    %129 = vector.broadcast %cst_42 : f32 to vector<8x128xf32>
    %130 = arith.addf %129, %128 : vector<8x128xf32>
    %131 = arith.divf %129, %130 : vector<8x128xf32>
    %132 = vector.extract_strided_slice %125 {offsets = [0, 128], sizes = [8, 128], strides = [1, 1]} : vector<8x512xf32> to vector<8x128xf32>
    %133 = arith.negf %132 : vector<8x128xf32>
    %134 = math.exp %133 : vector<8x128xf32>
    %cst_43 = arith.constant 1.000000e+00 : f32
    %135 = vector.broadcast %cst_43 : f32 to vector<8x128xf32>
    %136 = arith.addf %135, %134 : vector<8x128xf32>
    %137 = arith.divf %135, %136 : vector<8x128xf32>
    %138 = vector.extract_strided_slice %125 {offsets = [0, 256], sizes = [8, 128], strides = [1, 1]} : vector<8x512xf32> to vector<8x128xf32>
    %139 = math.tanh %138 : vector<8x128xf32>
    %140 = vector.extract_strided_slice %125 {offsets = [0, 384], sizes = [8, 128], strides = [1, 1]} : vector<8x512xf32> to vector<8x128xf32>
    %141 = arith.negf %140 : vector<8x128xf32>
    %142 = math.exp %141 : vector<8x128xf32>
    %cst_44 = arith.constant 1.000000e+00 : f32
    %143 = vector.broadcast %cst_44 : f32 to vector<8x128xf32>
    %144 = arith.addf %143, %142 : vector<8x128xf32>
    %145 = arith.divf %143, %144 : vector<8x128xf32>
    %146 = arith.mulf %137, %113 : vector<8x128xf32>
    %147 = arith.mulf %131, %139 : vector<8x128xf32>
    %148 = arith.addf %146, %147 : vector<8x128xf32>
    %149 = math.tanh %148 : vector<8x128xf32>
    %150 = arith.mulf %145, %149 : vector<8x128xf32>
    %151 = arith.index_cast %c3_i32 : i32 to index
    %c0_45 = arith.constant 0 : index
    %c0_46 = arith.constant 0 : index
    %152 = vector.load %arg9[%151, %c0_45, %c0_46] : memref<8x8x128xf32, #tpu.memory_space<vmem>>, vector<1x8x128xf32>
    %153 = vector.shape_cast %152 : vector<1x8x128xf32> to vector<8x128xf32>
    %154 = vector.shape_cast %150 : vector<8x128xf32> to vector<1x8x128xf32>
    tpu.vector_store %arg9[%151, %c0_45, %c0_46], %154 {strides = array<i32>} : memref<8x8x128xf32, #tpu.memory_space<vmem>>, vector<1x8x128xf32>,
    %c4_i32 = arith.constant 4 : i32
    %155 = arith.index_cast %c4_i32 : i32 to index
    %c0_47 = arith.constant 0 : index
    %c0_48 = arith.constant 0 : index
    %156 = vector.load %arg10[%155, %c0_47, %c0_48] : memref<8x8x512xf32, #tpu.memory_space<vmem>>, vector<1x8x512xf32>
    %157 = vector.shape_cast %156 : vector<1x8x512xf32> to vector<8x512xf32>
    %158 = arith.truncf %150 : vector<8x128xf32> to vector<8x128xbf16>
    %cst_49 = arith.constant dense<0.000000e+00> : vector<8x512xf32>
    %159 = tpu.matmul %158, %3, %cst_49 {dimension_numbers = #tpu.dot_dimension_numbers<[1], [0], [0], [1], [0, 0, 1, 1], [], []>} : vector<8x128xbf16>, vector<128x512xbf16>, vector<8x512xf32> -> vector<8x512xf32>
    %160 = arith.addf %157, %159 : vector<8x512xf32>
    %161 = vector.extract_strided_slice %160 {offsets = [0, 0], sizes = [8, 128], strides = [1, 1]} : vector<8x512xf32> to vector<8x128xf32>
    %162 = arith.negf %161 : vector<8x128xf32>
    %163 = math.exp %162 : vector<8x128xf32>
    %cst_50 = arith.constant 1.000000e+00 : f32
    %164 = vector.broadcast %cst_50 : f32 to vector<8x128xf32>
    %165 = arith.addf %164, %163 : vector<8x128xf32>
    %166 = arith.divf %164, %165 : vector<8x128xf32>
    %167 = vector.extract_strided_slice %160 {offsets = [0, 128], sizes = [8, 128], strides = [1, 1]} : vector<8x512xf32> to vector<8x128xf32>
    %168 = arith.negf %167 : vector<8x128xf32>
    %169 = math.exp %168 : vector<8x128xf32>
    %cst_51 = arith.constant 1.000000e+00 : f32
    %170 = vector.broadcast %cst_51 : f32 to vector<8x128xf32>
    %171 = arith.addf %170, %169 : vector<8x128xf32>
    %172 = arith.divf %170, %171 : vector<8x128xf32>
    %173 = vector.extract_strided_slice %160 {offsets = [0, 256], sizes = [8, 128], strides = [1, 1]} : vector<8x512xf32> to vector<8x128xf32>
    %174 = math.tanh %173 : vector<8x128xf32>
    %175 = vector.extract_strided_slice %160 {offsets = [0, 384], sizes = [8, 128], strides = [1, 1]} : vector<8x512xf32> to vector<8x128xf32>
    %176 = arith.negf %175 : vector<8x128xf32>
    %177 = math.exp %176 : vector<8x128xf32>
    %cst_52 = arith.constant 1.000000e+00 : f32
    %178 = vector.broadcast %cst_52 : f32 to vector<8x128xf32>
    %179 = arith.addf %178, %177 : vector<8x128xf32>
    %180 = arith.divf %178, %179 : vector<8x128xf32>
    %181 = arith.mulf %172, %148 : vector<8x128xf32>
    %182 = arith.mulf %166, %174 : vector<8x128xf32>
    %183 = arith.addf %181, %182 : vector<8x128xf32>
    %184 = math.tanh %183 : vector<8x128xf32>
    %185 = arith.mulf %180, %184 : vector<8x128xf32>
    %186 = arith.index_cast %c4_i32 : i32 to index
    %c0_53 = arith.constant 0 : index
    %c0_54 = arith.constant 0 : index
    %187 = vector.load %arg9[%186, %c0_53, %c0_54] : memref<8x8x128xf32, #tpu.memory_space<vmem>>, vector<1x8x128xf32>
    %188 = vector.shape_cast %187 : vector<1x8x128xf32> to vector<8x128xf32>
    %189 = vector.shape_cast %185 : vector<8x128xf32> to vector<1x8x128xf32>
    tpu.vector_store %arg9[%186, %c0_53, %c0_54], %189 {strides = array<i32>} : memref<8x8x128xf32, #tpu.memory_space<vmem>>, vector<1x8x128xf32>,
    %c5_i32 = arith.constant 5 : i32
    %190 = arith.index_cast %c5_i32 : i32 to index
    %c0_55 = arith.constant 0 : index
    %c0_56 = arith.constant 0 : index
    %191 = vector.load %arg10[%190, %c0_55, %c0_56] : memref<8x8x512xf32, #tpu.memory_space<vmem>>, vector<1x8x512xf32>
    %192 = vector.shape_cast %191 : vector<1x8x512xf32> to vector<8x512xf32>
    %193 = arith.truncf %185 : vector<8x128xf32> to vector<8x128xbf16>
    %cst_57 = arith.constant dense<0.000000e+00> : vector<8x512xf32>
    %194 = tpu.matmul %193, %3, %cst_57 {dimension_numbers = #tpu.dot_dimension_numbers<[1], [0], [0], [1], [0, 0, 1, 1], [], []>} : vector<8x128xbf16>, vector<128x512xbf16>, vector<8x512xf32> -> vector<8x512xf32>
    %195 = arith.addf %192, %194 : vector<8x512xf32>
    %196 = vector.extract_strided_slice %195 {offsets = [0, 0], sizes = [8, 128], strides = [1, 1]} : vector<8x512xf32> to vector<8x128xf32>
    %197 = arith.negf %196 : vector<8x128xf32>
    %198 = math.exp %197 : vector<8x128xf32>
    %cst_58 = arith.constant 1.000000e+00 : f32
    %199 = vector.broadcast %cst_58 : f32 to vector<8x128xf32>
    %200 = arith.addf %199, %198 : vector<8x128xf32>
    %201 = arith.divf %199, %200 : vector<8x128xf32>
    %202 = vector.extract_strided_slice %195 {offsets = [0, 128], sizes = [8, 128], strides = [1, 1]} : vector<8x512xf32> to vector<8x128xf32>
    %203 = arith.negf %202 : vector<8x128xf32>
    %204 = math.exp %203 : vector<8x128xf32>
    %cst_59 = arith.constant 1.000000e+00 : f32
    %205 = vector.broadcast %cst_59 : f32 to vector<8x128xf32>
    %206 = arith.addf %205, %204 : vector<8x128xf32>
    %207 = arith.divf %205, %206 : vector<8x128xf32>
    %208 = vector.extract_strided_slice %195 {offsets = [0, 256], sizes = [8, 128], strides = [1, 1]} : vector<8x512xf32> to vector<8x128xf32>
    %209 = math.tanh %208 : vector<8x128xf32>
    %210 = vector.extract_strided_slice %195 {offsets = [0, 384], sizes = [8, 128], strides = [1, 1]} : vector<8x512xf32> to vector<8x128xf32>
    %211 = arith.negf %210 : vector<8x128xf32>
    %212 = math.exp %211 : vector<8x128xf32>
    %cst_60 = arith.constant 1.000000e+00 : f32
    %213 = vector.broadcast %cst_60 : f32 to vector<8x128xf32>
    %214 = arith.addf %213, %212 : vector<8x128xf32>
    %215 = arith.divf %213, %214 : vector<8x128xf32>
    %216 = arith.mulf %207, %183 : vector<8x128xf32>
    %217 = arith.mulf %201, %209 : vector<8x128xf32>
    %218 = arith.addf %216, %217 : vector<8x128xf32>
    %219 = math.tanh %218 : vector<8x128xf32>
    %220 = arith.mulf %215, %219 : vector<8x128xf32>
    %221 = arith.index_cast %c5_i32 : i32 to index
    %c0_61 = arith.constant 0 : index
    %c0_62 = arith.constant 0 : index
    %222 = vector.load %arg9[%221, %c0_61, %c0_62] : memref<8x8x128xf32, #tpu.memory_space<vmem>>, vector<1x8x128xf32>
    %223 = vector.shape_cast %222 : vector<1x8x128xf32> to vector<8x128xf32>
    %224 = vector.shape_cast %220 : vector<8x128xf32> to vector<1x8x128xf32>
    tpu.vector_store %arg9[%221, %c0_61, %c0_62], %224 {strides = array<i32>} : memref<8x8x128xf32, #tpu.memory_space<vmem>>, vector<1x8x128xf32>,
    %c6_i32 = arith.constant 6 : i32
    %225 = arith.index_cast %c6_i32 : i32 to index
    %c0_63 = arith.constant 0 : index
    %c0_64 = arith.constant 0 : index
    %226 = vector.load %arg10[%225, %c0_63, %c0_64] : memref<8x8x512xf32, #tpu.memory_space<vmem>>, vector<1x8x512xf32>
    %227 = vector.shape_cast %226 : vector<1x8x512xf32> to vector<8x512xf32>
    %228 = arith.truncf %220 : vector<8x128xf32> to vector<8x128xbf16>
    %cst_65 = arith.constant dense<0.000000e+00> : vector<8x512xf32>
    %229 = tpu.matmul %228, %3, %cst_65 {dimension_numbers = #tpu.dot_dimension_numbers<[1], [0], [0], [1], [0, 0, 1, 1], [], []>} : vector<8x128xbf16>, vector<128x512xbf16>, vector<8x512xf32> -> vector<8x512xf32>
    %230 = arith.addf %227, %229 : vector<8x512xf32>
    %231 = vector.extract_strided_slice %230 {offsets = [0, 0], sizes = [8, 128], strides = [1, 1]} : vector<8x512xf32> to vector<8x128xf32>
    %232 = arith.negf %231 : vector<8x128xf32>
    %233 = math.exp %232 : vector<8x128xf32>
    %cst_66 = arith.constant 1.000000e+00 : f32
    %234 = vector.broadcast %cst_66 : f32 to vector<8x128xf32>
    %235 = arith.addf %234, %233 : vector<8x128xf32>
    %236 = arith.divf %234, %235 : vector<8x128xf32>
    %237 = vector.extract_strided_slice %230 {offsets = [0, 128], sizes = [8, 128], strides = [1, 1]} : vector<8x512xf32> to vector<8x128xf32>
    %238 = arith.negf %237 : vector<8x128xf32>
    %239 = math.exp %238 : vector<8x128xf32>
    %cst_67 = arith.constant 1.000000e+00 : f32
    %240 = vector.broadcast %cst_67 : f32 to vector<8x128xf32>
    %241 = arith.addf %240, %239 : vector<8x128xf32>
    %242 = arith.divf %240, %241 : vector<8x128xf32>
    %243 = vector.extract_strided_slice %230 {offsets = [0, 256], sizes = [8, 128], strides = [1, 1]} : vector<8x512xf32> to vector<8x128xf32>
    %244 = math.tanh %243 : vector<8x128xf32>
    %245 = vector.extract_strided_slice %230 {offsets = [0, 384], sizes = [8, 128], strides = [1, 1]} : vector<8x512xf32> to vector<8x128xf32>
    %246 = arith.negf %245 : vector<8x128xf32>
    %247 = math.exp %246 : vector<8x128xf32>
    %cst_68 = arith.constant 1.000000e+00 : f32
    %248 = vector.broadcast %cst_68 : f32 to vector<8x128xf32>
    %249 = arith.addf %248, %247 : vector<8x128xf32>
    %250 = arith.divf %248, %249 : vector<8x128xf32>
    %251 = arith.mulf %242, %218 : vector<8x128xf32>
    %252 = arith.mulf %236, %244 : vector<8x128xf32>
    %253 = arith.addf %251, %252 : vector<8x128xf32>
    %254 = math.tanh %253 : vector<8x128xf32>
    %255 = arith.mulf %250, %254 : vector<8x128xf32>
    %256 = arith.index_cast %c6_i32 : i32 to index
    %c0_69 = arith.constant 0 : index
    %c0_70 = arith.constant 0 : index
    %257 = vector.load %arg9[%256, %c0_69, %c0_70] : memref<8x8x128xf32, #tpu.memory_space<vmem>>, vector<1x8x128xf32>
    %258 = vector.shape_cast %257 : vector<1x8x128xf32> to vector<8x128xf32>
    %259 = vector.shape_cast %255 : vector<8x128xf32> to vector<1x8x128xf32>
    tpu.vector_store %arg9[%256, %c0_69, %c0_70], %259 {strides = array<i32>} : memref<8x8x128xf32, #tpu.memory_space<vmem>>, vector<1x8x128xf32>,
    %c7_i32 = arith.constant 7 : i32
    %260 = arith.index_cast %c7_i32 : i32 to index
    %c0_71 = arith.constant 0 : index
    %c0_72 = arith.constant 0 : index
    %261 = vector.load %arg10[%260, %c0_71, %c0_72] : memref<8x8x512xf32, #tpu.memory_space<vmem>>, vector<1x8x512xf32>
    %262 = vector.shape_cast %261 : vector<1x8x512xf32> to vector<8x512xf32>
    %263 = arith.truncf %255 : vector<8x128xf32> to vector<8x128xbf16>
    %cst_73 = arith.constant dense<0.000000e+00> : vector<8x512xf32>
    %264 = tpu.matmul %263, %3, %cst_73 {dimension_numbers = #tpu.dot_dimension_numbers<[1], [0], [0], [1], [0, 0, 1, 1], [], []>} : vector<8x128xbf16>, vector<128x512xbf16>, vector<8x512xf32> -> vector<8x512xf32>
    %265 = arith.addf %262, %264 : vector<8x512xf32>
    %266 = vector.extract_strided_slice %265 {offsets = [0, 0], sizes = [8, 128], strides = [1, 1]} : vector<8x512xf32> to vector<8x128xf32>
    %267 = arith.negf %266 : vector<8x128xf32>
    %268 = math.exp %267 : vector<8x128xf32>
    %cst_74 = arith.constant 1.000000e+00 : f32
    %269 = vector.broadcast %cst_74 : f32 to vector<8x128xf32>
    %270 = arith.addf %269, %268 : vector<8x128xf32>
    %271 = arith.divf %269, %270 : vector<8x128xf32>
    %272 = vector.extract_strided_slice %265 {offsets = [0, 128], sizes = [8, 128], strides = [1, 1]} : vector<8x512xf32> to vector<8x128xf32>
    %273 = arith.negf %272 : vector<8x128xf32>
    %274 = math.exp %273 : vector<8x128xf32>
    %cst_75 = arith.constant 1.000000e+00 : f32
    %275 = vector.broadcast %cst_75 : f32 to vector<8x128xf32>
    %276 = arith.addf %275, %274 : vector<8x128xf32>
    %277 = arith.divf %275, %276 : vector<8x128xf32>
    %278 = vector.extract_strided_slice %265 {offsets = [0, 256], sizes = [8, 128], strides = [1, 1]} : vector<8x512xf32> to vector<8x128xf32>
    %279 = math.tanh %278 : vector<8x128xf32>
    %280 = vector.extract_strided_slice %265 {offsets = [0, 384], sizes = [8, 128], strides = [1, 1]} : vector<8x512xf32> to vector<8x128xf32>
    %281 = arith.negf %280 : vector<8x128xf32>
    %282 = math.exp %281 : vector<8x128xf32>
    %cst_76 = arith.constant 1.000000e+00 : f32
    %283 = vector.broadcast %cst_76 : f32 to vector<8x128xf32>
    %284 = arith.addf %283, %282 : vector<8x128xf32>
    %285 = arith.divf %283, %284 : vector<8x128xf32>
    %286 = arith.mulf %277, %253 : vector<8x128xf32>
    %287 = arith.mulf %271, %279 : vector<8x128xf32>
    %288 = arith.addf %286, %287 : vector<8x128xf32>
    %289 = math.tanh %288 : vector<8x128xf32>
    %290 = arith.mulf %285, %289 : vector<8x128xf32>
    %291 = arith.index_cast %c7_i32 : i32 to index
    %c0_77 = arith.constant 0 : index
    %c0_78 = arith.constant 0 : index
    %292 = vector.load %arg9[%291, %c0_77, %c0_78] : memref<8x8x128xf32, #tpu.memory_space<vmem>>, vector<1x8x128xf32>
    %293 = vector.shape_cast %292 : vector<1x8x128xf32> to vector<8x128xf32>
    %294 = vector.shape_cast %290 : vector<8x128xf32> to vector<1x8x128xf32>
    tpu.vector_store %arg9[%291, %c0_77, %c0_78], %294 {strides = array<i32>} : memref<8x8x128xf32, #tpu.memory_space<vmem>>, vector<1x8x128xf32>,
    %c8_i32 = arith.constant 8 : i32
    %c1 = arith.constant 1 : index
    %c0_79 = arith.constant 0 : index
    %c0_80 = arith.constant 0 : index
    %295 = vector.load %arg1[%c1, %c0_79, %c0_80] : memref<4x128x512xbf16, #tpu.memory_space<vmem>>, vector<1x128x512xbf16>
    %296 = vector.shape_cast %295 : vector<1x128x512xbf16> to vector<128x512xbf16>
    %c1_81 = arith.constant 1 : index
    %c0_82 = arith.constant 0 : index
    %c0_83 = arith.constant 0 : index
    %297 = vector.load %arg2[%c1_81, %c0_82, %c0_83] : memref<4x128x512xbf16, #tpu.memory_space<vmem>>, vector<1x128x512xbf16>
    %298 = vector.shape_cast %297 : vector<1x128x512xbf16> to vector<128x512xbf16>
    %c1_84 = arith.constant 1 : index
    %c0_85 = arith.constant 0 : index
    %c0_86 = arith.constant 0 : index
    %299 = vector.load %arg3[%c1_84, %c0_85, %c0_86] : memref<4x1x512xf32, #tpu.memory_space<vmem>>, vector<1x1x512xf32>
    %300 = vector.shape_cast %299 : vector<1x1x512xf32> to vector<1x512xf32>
    %c0_87 = arith.constant 0 : index
    %c0_88 = arith.constant 0 : index
    %c0_89 = arith.constant 0 : index
    %301 = vector.load %arg9[%c0_87, %c0_88, %c0_89] : memref<8x8x128xf32, #tpu.memory_space<vmem>>, vector<8x8x128xf32>
    %302 = vector.shape_cast %301 : vector<8x8x128xf32> to vector<64x128xf32>
    %303 = arith.truncf %302 : vector<64x128xf32> to vector<64x128xbf16>
    %cst_90 = arith.constant dense<0.000000e+00> : vector<64x512xf32>
    %304 = tpu.matmul %303, %296, %cst_90 {dimension_numbers = #tpu.dot_dimension_numbers<[1], [0], [0], [1], [0, 0, 1, 1], [], []>} : vector<64x128xbf16>, vector<128x512xbf16>, vector<64x512xf32> -> vector<64x512xf32>
    %305 = vector.broadcast %300 : vector<1x512xf32> to vector<64x512xf32>
    %306 = arith.addf %304, %305 : vector<64x512xf32>
    %307 = vector.shape_cast %306 : vector<64x512xf32> to vector<8x8x512xf32>
    %c0_91 = arith.constant 0 : index
    %c0_92 = arith.constant 0 : index
    %c0_93 = arith.constant 0 : index
    %308 = vector.load %arg10[%c0_91, %c0_92, %c0_93] : memref<8x8x512xf32, #tpu.memory_space<vmem>>, vector<8x8x512xf32>
    tpu.vector_store %arg10[%c0_91, %c0_92, %c0_93], %307 {strides = array<i32>} : memref<8x8x512xf32, #tpu.memory_space<vmem>>, vector<8x8x512xf32>,
    %cst_94 = arith.constant 0.000000e+00 : f32
    %309 = vector.broadcast %cst_94 : f32 to vector<8x128xf32>
    %c0_i32_95 = arith.constant 0 : i32
    %310 = arith.index_cast %c0_i32_95 : i32 to index
    %c0_96 = arith.constant 0 : index
    %c0_97 = arith.constant 0 : index
    %311 = vector.load %arg10[%310, %c0_96, %c0_97] : memref<8x8x512xf32, #tpu.memory_space<vmem>>, vector<1x8x512xf32>
    %312 = vector.shape_cast %311 : vector<1x8x512xf32> to vector<8x512xf32>
    %313 = arith.truncf %309 : vector<8x128xf32> to vector<8x128xbf16>
    %cst_98 = arith.constant dense<0.000000e+00> : vector<8x512xf32>
    %314 = tpu.matmul %313, %298, %cst_98 {dimension_numbers = #tpu.dot_dimension_numbers<[1], [0], [0], [1], [0, 0, 1, 1], [], []>} : vector<8x128xbf16>, vector<128x512xbf16>, vector<8x512xf32> -> vector<8x512xf32>
    %315 = arith.addf %312, %314 : vector<8x512xf32>
    %316 = vector.extract_strided_slice %315 {offsets = [0, 0], sizes = [8, 128], strides = [1, 1]} : vector<8x512xf32> to vector<8x128xf32>
    %317 = arith.negf %316 : vector<8x128xf32>
    %318 = math.exp %317 : vector<8x128xf32>
    %cst_99 = arith.constant 1.000000e+00 : f32
    %319 = vector.broadcast %cst_99 : f32 to vector<8x128xf32>
    %320 = arith.addf %319, %318 : vector<8x128xf32>
    %321 = arith.divf %319, %320 : vector<8x128xf32>
    %322 = vector.extract_strided_slice %315 {offsets = [0, 128], sizes = [8, 128], strides = [1, 1]} : vector<8x512xf32> to vector<8x128xf32>
    %323 = arith.negf %322 : vector<8x128xf32>
    %324 = math.exp %323 : vector<8x128xf32>
    %cst_100 = arith.constant 1.000000e+00 : f32
    %325 = vector.broadcast %cst_100 : f32 to vector<8x128xf32>
    %326 = arith.addf %325, %324 : vector<8x128xf32>
    %327 = arith.divf %325, %326 : vector<8x128xf32>
    %328 = vector.extract_strided_slice %315 {offsets = [0, 256], sizes = [8, 128], strides = [1, 1]} : vector<8x512xf32> to vector<8x128xf32>
    %329 = math.tanh %328 : vector<8x128xf32>
    %330 = vector.extract_strided_slice %315 {offsets = [0, 384], sizes = [8, 128], strides = [1, 1]} : vector<8x512xf32> to vector<8x128xf32>
    %331 = arith.negf %330 : vector<8x128xf32>
    %332 = math.exp %331 : vector<8x128xf32>
    %cst_101 = arith.constant 1.000000e+00 : f32
    %333 = vector.broadcast %cst_101 : f32 to vector<8x128xf32>
    %334 = arith.addf %333, %332 : vector<8x128xf32>
    %335 = arith.divf %333, %334 : vector<8x128xf32>
    %336 = arith.mulf %327, %309 : vector<8x128xf32>
    %337 = arith.mulf %321, %329 : vector<8x128xf32>
    %338 = arith.addf %336, %337 : vector<8x128xf32>
    %339 = math.tanh %338 : vector<8x128xf32>
    %340 = arith.mulf %335, %339 : vector<8x128xf32>
    %341 = arith.index_cast %c0_i32_95 : i32 to index
    %c0_102 = arith.constant 0 : index
    %c0_103 = arith.constant 0 : index
    %342 = vector.load %arg9[%341, %c0_102, %c0_103] : memref<8x8x128xf32, #tpu.memory_space<vmem>>, vector<1x8x128xf32>
    %343 = vector.shape_cast %342 : vector<1x8x128xf32> to vector<8x128xf32>
    %344 = vector.shape_cast %340 : vector<8x128xf32> to vector<1x8x128xf32>
    tpu.vector_store %arg9[%341, %c0_102, %c0_103], %344 {strides = array<i32>} : memref<8x8x128xf32, #tpu.memory_space<vmem>>, vector<1x8x128xf32>,
    %c1_i32_104 = arith.constant 1 : i32
    %345 = arith.index_cast %c1_i32_104 : i32 to index
    %c0_105 = arith.constant 0 : index
    %c0_106 = arith.constant 0 : index
    %346 = vector.load %arg10[%345, %c0_105, %c0_106] : memref<8x8x512xf32, #tpu.memory_space<vmem>>, vector<1x8x512xf32>
    %347 = vector.shape_cast %346 : vector<1x8x512xf32> to vector<8x512xf32>
    %348 = arith.truncf %340 : vector<8x128xf32> to vector<8x128xbf16>
    %cst_107 = arith.constant dense<0.000000e+00> : vector<8x512xf32>
    %349 = tpu.matmul %348, %298, %cst_107 {dimension_numbers = #tpu.dot_dimension_numbers<[1], [0], [0], [1], [0, 0, 1, 1], [], []>} : vector<8x128xbf16>, vector<128x512xbf16>, vector<8x512xf32> -> vector<8x512xf32>
    %350 = arith.addf %347, %349 : vector<8x512xf32>
    %351 = vector.extract_strided_slice %350 {offsets = [0, 0], sizes = [8, 128], strides = [1, 1]} : vector<8x512xf32> to vector<8x128xf32>
    %352 = arith.negf %351 : vector<8x128xf32>
    %353 = math.exp %352 : vector<8x128xf32>
    %cst_108 = arith.constant 1.000000e+00 : f32
    %354 = vector.broadcast %cst_108 : f32 to vector<8x128xf32>
    %355 = arith.addf %354, %353 : vector<8x128xf32>
    %356 = arith.divf %354, %355 : vector<8x128xf32>
    %357 = vector.extract_strided_slice %350 {offsets = [0, 128], sizes = [8, 128], strides = [1, 1]} : vector<8x512xf32> to vector<8x128xf32>
    %358 = arith.negf %357 : vector<8x128xf32>
    %359 = math.exp %358 : vector<8x128xf32>
    %cst_109 = arith.constant 1.000000e+00 : f32
    %360 = vector.broadcast %cst_109 : f32 to vector<8x128xf32>
    %361 = arith.addf %360, %359 : vector<8x128xf32>
    %362 = arith.divf %360, %361 : vector<8x128xf32>
    %363 = vector.extract_strided_slice %350 {offsets = [0, 256], sizes = [8, 128], strides = [1, 1]} : vector<8x512xf32> to vector<8x128xf32>
    %364 = math.tanh %363 : vector<8x128xf32>
    %365 = vector.extract_strided_slice %350 {offsets = [0, 384], sizes = [8, 128], strides = [1, 1]} : vector<8x512xf32> to vector<8x128xf32>
    %366 = arith.negf %365 : vector<8x128xf32>
    %367 = math.exp %366 : vector<8x128xf32>
    %cst_110 = arith.constant 1.000000e+00 : f32
    %368 = vector.broadcast %cst_110 : f32 to vector<8x128xf32>
    %369 = arith.addf %368, %367 : vector<8x128xf32>
    %370 = arith.divf %368, %369 : vector<8x128xf32>
    %371 = arith.mulf %362, %338 : vector<8x128xf32>
    %372 = arith.mulf %356, %364 : vector<8x128xf32>
    %373 = arith.addf %371, %372 : vector<8x128xf32>
    %374 = math.tanh %373 : vector<8x128xf32>
    %375 = arith.mulf %370, %374 : vector<8x128xf32>
    %376 = arith.index_cast %c1_i32_104 : i32 to index
    %c0_111 = arith.constant 0 : index
    %c0_112 = arith.constant 0 : index
    %377 = vector.load %arg9[%376, %c0_111, %c0_112] : memref<8x8x128xf32, #tpu.memory_space<vmem>>, vector<1x8x128xf32>
    %378 = vector.shape_cast %377 : vector<1x8x128xf32> to vector<8x128xf32>
    %379 = vector.shape_cast %375 : vector<8x128xf32> to vector<1x8x128xf32>
    tpu.vector_store %arg9[%376, %c0_111, %c0_112], %379 {strides = array<i32>} : memref<8x8x128xf32, #tpu.memory_space<vmem>>, vector<1x8x128xf32>,
    %c2_i32_113 = arith.constant 2 : i32
    %380 = arith.index_cast %c2_i32_113 : i32 to index
    %c0_114 = arith.constant 0 : index
    %c0_115 = arith.constant 0 : index
    %381 = vector.load %arg10[%380, %c0_114, %c0_115] : memref<8x8x512xf32, #tpu.memory_space<vmem>>, vector<1x8x512xf32>
    %382 = vector.shape_cast %381 : vector<1x8x512xf32> to vector<8x512xf32>
    %383 = arith.truncf %375 : vector<8x128xf32> to vector<8x128xbf16>
    %cst_116 = arith.constant dense<0.000000e+00> : vector<8x512xf32>
    %384 = tpu.matmul %383, %298, %cst_116 {dimension_numbers = #tpu.dot_dimension_numbers<[1], [0], [0], [1], [0, 0, 1, 1], [], []>} : vector<8x128xbf16>, vector<128x512xbf16>, vector<8x512xf32> -> vector<8x512xf32>
    %385 = arith.addf %382, %384 : vector<8x512xf32>
    %386 = vector.extract_strided_slice %385 {offsets = [0, 0], sizes = [8, 128], strides = [1, 1]} : vector<8x512xf32> to vector<8x128xf32>
    %387 = arith.negf %386 : vector<8x128xf32>
    %388 = math.exp %387 : vector<8x128xf32>
    %cst_117 = arith.constant 1.000000e+00 : f32
    %389 = vector.broadcast %cst_117 : f32 to vector<8x128xf32>
    %390 = arith.addf %389, %388 : vector<8x128xf32>
    %391 = arith.divf %389, %390 : vector<8x128xf32>
    %392 = vector.extract_strided_slice %385 {offsets = [0, 128], sizes = [8, 128], strides = [1, 1]} : vector<8x512xf32> to vector<8x128xf32>
    %393 = arith.negf %392 : vector<8x128xf32>
    %394 = math.exp %393 : vector<8x128xf32>
    %cst_118 = arith.constant 1.000000e+00 : f32
    %395 = vector.broadcast %cst_118 : f32 to vector<8x128xf32>
    %396 = arith.addf %395, %394 : vector<8x128xf32>
    %397 = arith.divf %395, %396 : vector<8x128xf32>
    %398 = vector.extract_strided_slice %385 {offsets = [0, 256], sizes = [8, 128], strides = [1, 1]} : vector<8x512xf32> to vector<8x128xf32>
    %399 = math.tanh %398 : vector<8x128xf32>
    %400 = vector.extract_strided_slice %385 {offsets = [0, 384], sizes = [8, 128], strides = [1, 1]} : vector<8x512xf32> to vector<8x128xf32>
    %401 = arith.negf %400 : vector<8x128xf32>
    %402 = math.exp %401 : vector<8x128xf32>
    %cst_119 = arith.constant 1.000000e+00 : f32
    %403 = vector.broadcast %cst_119 : f32 to vector<8x128xf32>
    %404 = arith.addf %403, %402 : vector<8x128xf32>
    %405 = arith.divf %403, %404 : vector<8x128xf32>
    %406 = arith.mulf %397, %373 : vector<8x128xf32>
    %407 = arith.mulf %391, %399 : vector<8x128xf32>
    %408 = arith.addf %406, %407 : vector<8x128xf32>
    %409 = math.tanh %408 : vector<8x128xf32>
    %410 = arith.mulf %405, %409 : vector<8x128xf32>
    %411 = arith.index_cast %c2_i32_113 : i32 to index
    %c0_120 = arith.constant 0 : index
    %c0_121 = arith.constant 0 : index
    %412 = vector.load %arg9[%411, %c0_120, %c0_121] : memref<8x8x128xf32, #tpu.memory_space<vmem>>, vector<1x8x128xf32>
    %413 = vector.shape_cast %412 : vector<1x8x128xf32> to vector<8x128xf32>
    %414 = vector.shape_cast %410 : vector<8x128xf32> to vector<1x8x128xf32>
    tpu.vector_store %arg9[%411, %c0_120, %c0_121], %414 {strides = array<i32>} : memref<8x8x128xf32, #tpu.memory_space<vmem>>, vector<1x8x128xf32>,
    %c3_i32_122 = arith.constant 3 : i32
    %415 = arith.index_cast %c3_i32_122 : i32 to index
    %c0_123 = arith.constant 0 : index
    %c0_124 = arith.constant 0 : index
    %416 = vector.load %arg10[%415, %c0_123, %c0_124] : memref<8x8x512xf32, #tpu.memory_space<vmem>>, vector<1x8x512xf32>
    %417 = vector.shape_cast %416 : vector<1x8x512xf32> to vector<8x512xf32>
    %418 = arith.truncf %410 : vector<8x128xf32> to vector<8x128xbf16>
    %cst_125 = arith.constant dense<0.000000e+00> : vector<8x512xf32>
    %419 = tpu.matmul %418, %298, %cst_125 {dimension_numbers = #tpu.dot_dimension_numbers<[1], [0], [0], [1], [0, 0, 1, 1], [], []>} : vector<8x128xbf16>, vector<128x512xbf16>, vector<8x512xf32> -> vector<8x512xf32>
    %420 = arith.addf %417, %419 : vector<8x512xf32>
    %421 = vector.extract_strided_slice %420 {offsets = [0, 0], sizes = [8, 128], strides = [1, 1]} : vector<8x512xf32> to vector<8x128xf32>
    %422 = arith.negf %421 : vector<8x128xf32>
    %423 = math.exp %422 : vector<8x128xf32>
    %cst_126 = arith.constant 1.000000e+00 : f32
    %424 = vector.broadcast %cst_126 : f32 to vector<8x128xf32>
    %425 = arith.addf %424, %423 : vector<8x128xf32>
    %426 = arith.divf %424, %425 : vector<8x128xf32>
    %427 = vector.extract_strided_slice %420 {offsets = [0, 128], sizes = [8, 128], strides = [1, 1]} : vector<8x512xf32> to vector<8x128xf32>
    %428 = arith.negf %427 : vector<8x128xf32>
    %429 = math.exp %428 : vector<8x128xf32>
    %cst_127 = arith.constant 1.000000e+00 : f32
    %430 = vector.broadcast %cst_127 : f32 to vector<8x128xf32>
    %431 = arith.addf %430, %429 : vector<8x128xf32>
    %432 = arith.divf %430, %431 : vector<8x128xf32>
    %433 = vector.extract_strided_slice %420 {offsets = [0, 256], sizes = [8, 128], strides = [1, 1]} : vector<8x512xf32> to vector<8x128xf32>
    %434 = math.tanh %433 : vector<8x128xf32>
    %435 = vector.extract_strided_slice %420 {offsets = [0, 384], sizes = [8, 128], strides = [1, 1]} : vector<8x512xf32> to vector<8x128xf32>
    %436 = arith.negf %435 : vector<8x128xf32>
    %437 = math.exp %436 : vector<8x128xf32>
    %cst_128 = arith.constant 1.000000e+00 : f32
    %438 = vector.broadcast %cst_128 : f32 to vector<8x128xf32>
    %439 = arith.addf %438, %437 : vector<8x128xf32>
    %440 = arith.divf %438, %439 : vector<8x128xf32>
    %441 = arith.mulf %432, %408 : vector<8x128xf32>
    %442 = arith.mulf %426, %434 : vector<8x128xf32>
    %443 = arith.addf %441, %442 : vector<8x128xf32>
    %444 = math.tanh %443 : vector<8x128xf32>
    %445 = arith.mulf %440, %444 : vector<8x128xf32>
    %446 = arith.index_cast %c3_i32_122 : i32 to index
    %c0_129 = arith.constant 0 : index
    %c0_130 = arith.constant 0 : index
    %447 = vector.load %arg9[%446, %c0_129, %c0_130] : memref<8x8x128xf32, #tpu.memory_space<vmem>>, vector<1x8x128xf32>
    %448 = vector.shape_cast %447 : vector<1x8x128xf32> to vector<8x128xf32>
    %449 = vector.shape_cast %445 : vector<8x128xf32> to vector<1x8x128xf32>
    tpu.vector_store %arg9[%446, %c0_129, %c0_130], %449 {strides = array<i32>} : memref<8x8x128xf32, #tpu.memory_space<vmem>>, vector<1x8x128xf32>,
    %c4_i32_131 = arith.constant 4 : i32
    %450 = arith.index_cast %c4_i32_131 : i32 to index
    %c0_132 = arith.constant 0 : index
    %c0_133 = arith.constant 0 : index
    %451 = vector.load %arg10[%450, %c0_132, %c0_133] : memref<8x8x512xf32, #tpu.memory_space<vmem>>, vector<1x8x512xf32>
    %452 = vector.shape_cast %451 : vector<1x8x512xf32> to vector<8x512xf32>
    %453 = arith.truncf %445 : vector<8x128xf32> to vector<8x128xbf16>
    %cst_134 = arith.constant dense<0.000000e+00> : vector<8x512xf32>
    %454 = tpu.matmul %453, %298, %cst_134 {dimension_numbers = #tpu.dot_dimension_numbers<[1], [0], [0], [1], [0, 0, 1, 1], [], []>} : vector<8x128xbf16>, vector<128x512xbf16>, vector<8x512xf32> -> vector<8x512xf32>
    %455 = arith.addf %452, %454 : vector<8x512xf32>
    %456 = vector.extract_strided_slice %455 {offsets = [0, 0], sizes = [8, 128], strides = [1, 1]} : vector<8x512xf32> to vector<8x128xf32>
    %457 = arith.negf %456 : vector<8x128xf32>
    %458 = math.exp %457 : vector<8x128xf32>
    %cst_135 = arith.constant 1.000000e+00 : f32
    %459 = vector.broadcast %cst_135 : f32 to vector<8x128xf32>
    %460 = arith.addf %459, %458 : vector<8x128xf32>
    %461 = arith.divf %459, %460 : vector<8x128xf32>
    %462 = vector.extract_strided_slice %455 {offsets = [0, 128], sizes = [8, 128], strides = [1, 1]} : vector<8x512xf32> to vector<8x128xf32>
    %463 = arith.negf %462 : vector<8x128xf32>
    %464 = math.exp %463 : vector<8x128xf32>
    %cst_136 = arith.constant 1.000000e+00 : f32
    %465 = vector.broadcast %cst_136 : f32 to vector<8x128xf32>
    %466 = arith.addf %465, %464 : vector<8x128xf32>
    %467 = arith.divf %465, %466 : vector<8x128xf32>
    %468 = vector.extract_strided_slice %455 {offsets = [0, 256], sizes = [8, 128], strides = [1, 1]} : vector<8x512xf32> to vector<8x128xf32>
    %469 = math.tanh %468 : vector<8x128xf32>
    %470 = vector.extract_strided_slice %455 {offsets = [0, 384], sizes = [8, 128], strides = [1, 1]} : vector<8x512xf32> to vector<8x128xf32>
    %471 = arith.negf %470 : vector<8x128xf32>
    %472 = math.exp %471 : vector<8x128xf32>
    %cst_137 = arith.constant 1.000000e+00 : f32
    %473 = vector.broadcast %cst_137 : f32 to vector<8x128xf32>
    %474 = arith.addf %473, %472 : vector<8x128xf32>
    %475 = arith.divf %473, %474 : vector<8x128xf32>
    %476 = arith.mulf %467, %443 : vector<8x128xf32>
    %477 = arith.mulf %461, %469 : vector<8x128xf32>
    %478 = arith.addf %476, %477 : vector<8x128xf32>
    %479 = math.tanh %478 : vector<8x128xf32>
    %480 = arith.mulf %475, %479 : vector<8x128xf32>
    %481 = arith.index_cast %c4_i32_131 : i32 to index
    %c0_138 = arith.constant 0 : index
    %c0_139 = arith.constant 0 : index
    %482 = vector.load %arg9[%481, %c0_138, %c0_139] : memref<8x8x128xf32, #tpu.memory_space<vmem>>, vector<1x8x128xf32>
    %483 = vector.shape_cast %482 : vector<1x8x128xf32> to vector<8x128xf32>
    %484 = vector.shape_cast %480 : vector<8x128xf32> to vector<1x8x128xf32>
    tpu.vector_store %arg9[%481, %c0_138, %c0_139], %484 {strides = array<i32>} : memref<8x8x128xf32, #tpu.memory_space<vmem>>, vector<1x8x128xf32>,
    %c5_i32_140 = arith.constant 5 : i32
    %485 = arith.index_cast %c5_i32_140 : i32 to index
    %c0_141 = arith.constant 0 : index
    %c0_142 = arith.constant 0 : index
    %486 = vector.load %arg10[%485, %c0_141, %c0_142] : memref<8x8x512xf32, #tpu.memory_space<vmem>>, vector<1x8x512xf32>
    %487 = vector.shape_cast %486 : vector<1x8x512xf32> to vector<8x512xf32>
    %488 = arith.truncf %480 : vector<8x128xf32> to vector<8x128xbf16>
    %cst_143 = arith.constant dense<0.000000e+00> : vector<8x512xf32>
    %489 = tpu.matmul %488, %298, %cst_143 {dimension_numbers = #tpu.dot_dimension_numbers<[1], [0], [0], [1], [0, 0, 1, 1], [], []>} : vector<8x128xbf16>, vector<128x512xbf16>, vector<8x512xf32> -> vector<8x512xf32>
    %490 = arith.addf %487, %489 : vector<8x512xf32>
    %491 = vector.extract_strided_slice %490 {offsets = [0, 0], sizes = [8, 128], strides = [1, 1]} : vector<8x512xf32> to vector<8x128xf32>
    %492 = arith.negf %491 : vector<8x128xf32>
    %493 = math.exp %492 : vector<8x128xf32>
    %cst_144 = arith.constant 1.000000e+00 : f32
    %494 = vector.broadcast %cst_144 : f32 to vector<8x128xf32>
    %495 = arith.addf %494, %493 : vector<8x128xf32>
    %496 = arith.divf %494, %495 : vector<8x128xf32>
    %497 = vector.extract_strided_slice %490 {offsets = [0, 128], sizes = [8, 128], strides = [1, 1]} : vector<8x512xf32> to vector<8x128xf32>
    %498 = arith.negf %497 : vector<8x128xf32>
    %499 = math.exp %498 : vector<8x128xf32>
    %cst_145 = arith.constant 1.000000e+00 : f32
    %500 = vector.broadcast %cst_145 : f32 to vector<8x128xf32>
    %501 = arith.addf %500, %499 : vector<8x128xf32>
    %502 = arith.divf %500, %501 : vector<8x128xf32>
    %503 = vector.extract_strided_slice %490 {offsets = [0, 256], sizes = [8, 128], strides = [1, 1]} : vector<8x512xf32> to vector<8x128xf32>
    %504 = math.tanh %503 : vector<8x128xf32>
    %505 = vector.extract_strided_slice %490 {offsets = [0, 384], sizes = [8, 128], strides = [1, 1]} : vector<8x512xf32> to vector<8x128xf32>
    %506 = arith.negf %505 : vector<8x128xf32>
    %507 = math.exp %506 : vector<8x128xf32>
    %cst_146 = arith.constant 1.000000e+00 : f32
    %508 = vector.broadcast %cst_146 : f32 to vector<8x128xf32>
    %509 = arith.addf %508, %507 : vector<8x128xf32>
    %510 = arith.divf %508, %509 : vector<8x128xf32>
    %511 = arith.mulf %502, %478 : vector<8x128xf32>
    %512 = arith.mulf %496, %504 : vector<8x128xf32>
    %513 = arith.addf %511, %512 : vector<8x128xf32>
    %514 = math.tanh %513 : vector<8x128xf32>
    %515 = arith.mulf %510, %514 : vector<8x128xf32>
    %516 = arith.index_cast %c5_i32_140 : i32 to index
    %c0_147 = arith.constant 0 : index
    %c0_148 = arith.constant 0 : index
    %517 = vector.load %arg9[%516, %c0_147, %c0_148] : memref<8x8x128xf32, #tpu.memory_space<vmem>>, vector<1x8x128xf32>
    %518 = vector.shape_cast %517 : vector<1x8x128xf32> to vector<8x128xf32>
    %519 = vector.shape_cast %515 : vector<8x128xf32> to vector<1x8x128xf32>
    tpu.vector_store %arg9[%516, %c0_147, %c0_148], %519 {strides = array<i32>} : memref<8x8x128xf32, #tpu.memory_space<vmem>>, vector<1x8x128xf32>,
    %c6_i32_149 = arith.constant 6 : i32
    %520 = arith.index_cast %c6_i32_149 : i32 to index
    %c0_150 = arith.constant 0 : index
    %c0_151 = arith.constant 0 : index
    %521 = vector.load %arg10[%520, %c0_150, %c0_151] : memref<8x8x512xf32, #tpu.memory_space<vmem>>, vector<1x8x512xf32>
    %522 = vector.shape_cast %521 : vector<1x8x512xf32> to vector<8x512xf32>
    %523 = arith.truncf %515 : vector<8x128xf32> to vector<8x128xbf16>
    %cst_152 = arith.constant dense<0.000000e+00> : vector<8x512xf32>
    %524 = tpu.matmul %523, %298, %cst_152 {dimension_numbers = #tpu.dot_dimension_numbers<[1], [0], [0], [1], [0, 0, 1, 1], [], []>} : vector<8x128xbf16>, vector<128x512xbf16>, vector<8x512xf32> -> vector<8x512xf32>
    %525 = arith.addf %522, %524 : vector<8x512xf32>
    %526 = vector.extract_strided_slice %525 {offsets = [0, 0], sizes = [8, 128], strides = [1, 1]} : vector<8x512xf32> to vector<8x128xf32>
    %527 = arith.negf %526 : vector<8x128xf32>
    %528 = math.exp %527 : vector<8x128xf32>
    %cst_153 = arith.constant 1.000000e+00 : f32
    %529 = vector.broadcast %cst_153 : f32 to vector<8x128xf32>
    %530 = arith.addf %529, %528 : vector<8x128xf32>
    %531 = arith.divf %529, %530 : vector<8x128xf32>
    %532 = vector.extract_strided_slice %525 {offsets = [0, 128], sizes = [8, 128], strides = [1, 1]} : vector<8x512xf32> to vector<8x128xf32>
    %533 = arith.negf %532 : vector<8x128xf32>
    %534 = math.exp %533 : vector<8x128xf32>
    %cst_154 = arith.constant 1.000000e+00 : f32
    %535 = vector.broadcast %cst_154 : f32 to vector<8x128xf32>
    %536 = arith.addf %535, %534 : vector<8x128xf32>
    %537 = arith.divf %535, %536 : vector<8x128xf32>
    %538 = vector.extract_strided_slice %525 {offsets = [0, 256], sizes = [8, 128], strides = [1, 1]} : vector<8x512xf32> to vector<8x128xf32>
    %539 = math.tanh %538 : vector<8x128xf32>
    %540 = vector.extract_strided_slice %525 {offsets = [0, 384], sizes = [8, 128], strides = [1, 1]} : vector<8x512xf32> to vector<8x128xf32>
    %541 = arith.negf %540 : vector<8x128xf32>
    %542 = math.exp %541 : vector<8x128xf32>
    %cst_155 = arith.constant 1.000000e+00 : f32
    %543 = vector.broadcast %cst_155 : f32 to vector<8x128xf32>
    %544 = arith.addf %543, %542 : vector<8x128xf32>
    %545 = arith.divf %543, %544 : vector<8x128xf32>
    %546 = arith.mulf %537, %513 : vector<8x128xf32>
    %547 = arith.mulf %531, %539 : vector<8x128xf32>
    %548 = arith.addf %546, %547 : vector<8x128xf32>
    %549 = math.tanh %548 : vector<8x128xf32>
    %550 = arith.mulf %545, %549 : vector<8x128xf32>
    %551 = arith.index_cast %c6_i32_149 : i32 to index
    %c0_156 = arith.constant 0 : index
    %c0_157 = arith.constant 0 : index
    %552 = vector.load %arg9[%551, %c0_156, %c0_157] : memref<8x8x128xf32, #tpu.memory_space<vmem>>, vector<1x8x128xf32>
    %553 = vector.shape_cast %552 : vector<1x8x128xf32> to vector<8x128xf32>
    %554 = vector.shape_cast %550 : vector<8x128xf32> to vector<1x8x128xf32>
    tpu.vector_store %arg9[%551, %c0_156, %c0_157], %554 {strides = array<i32>} : memref<8x8x128xf32, #tpu.memory_space<vmem>>, vector<1x8x128xf32>,
    %c7_i32_158 = arith.constant 7 : i32
    %555 = arith.index_cast %c7_i32_158 : i32 to index
    %c0_159 = arith.constant 0 : index
    %c0_160 = arith.constant 0 : index
    %556 = vector.load %arg10[%555, %c0_159, %c0_160] : memref<8x8x512xf32, #tpu.memory_space<vmem>>, vector<1x8x512xf32>
    %557 = vector.shape_cast %556 : vector<1x8x512xf32> to vector<8x512xf32>
    %558 = arith.truncf %550 : vector<8x128xf32> to vector<8x128xbf16>
    %cst_161 = arith.constant dense<0.000000e+00> : vector<8x512xf32>
    %559 = tpu.matmul %558, %298, %cst_161 {dimension_numbers = #tpu.dot_dimension_numbers<[1], [0], [0], [1], [0, 0, 1, 1], [], []>} : vector<8x128xbf16>, vector<128x512xbf16>, vector<8x512xf32> -> vector<8x512xf32>
    %560 = arith.addf %557, %559 : vector<8x512xf32>
    %561 = vector.extract_strided_slice %560 {offsets = [0, 0], sizes = [8, 128], strides = [1, 1]} : vector<8x512xf32> to vector<8x128xf32>
    %562 = arith.negf %561 : vector<8x128xf32>
    %563 = math.exp %562 : vector<8x128xf32>
    %cst_162 = arith.constant 1.000000e+00 : f32
    %564 = vector.broadcast %cst_162 : f32 to vector<8x128xf32>
    %565 = arith.addf %564, %563 : vector<8x128xf32>
    %566 = arith.divf %564, %565 : vector<8x128xf32>
    %567 = vector.extract_strided_slice %560 {offsets = [0, 128], sizes = [8, 128], strides = [1, 1]} : vector<8x512xf32> to vector<8x128xf32>
    %568 = arith.negf %567 : vector<8x128xf32>
    %569 = math.exp %568 : vector<8x128xf32>
    %cst_163 = arith.constant 1.000000e+00 : f32
    %570 = vector.broadcast %cst_163 : f32 to vector<8x128xf32>
    %571 = arith.addf %570, %569 : vector<8x128xf32>
    %572 = arith.divf %570, %571 : vector<8x128xf32>
    %573 = vector.extract_strided_slice %560 {offsets = [0, 256], sizes = [8, 128], strides = [1, 1]} : vector<8x512xf32> to vector<8x128xf32>
    %574 = math.tanh %573 : vector<8x128xf32>
    %575 = vector.extract_strided_slice %560 {offsets = [0, 384], sizes = [8, 128], strides = [1, 1]} : vector<8x512xf32> to vector<8x128xf32>
    %576 = arith.negf %575 : vector<8x128xf32>
    %577 = math.exp %576 : vector<8x128xf32>
    %cst_164 = arith.constant 1.000000e+00 : f32
    %578 = vector.broadcast %cst_164 : f32 to vector<8x128xf32>
    %579 = arith.addf %578, %577 : vector<8x128xf32>
    %580 = arith.divf %578, %579 : vector<8x128xf32>
    %581 = arith.mulf %572, %548 : vector<8x128xf32>
    %582 = arith.mulf %566, %574 : vector<8x128xf32>
    %583 = arith.addf %581, %582 : vector<8x128xf32>
    %584 = math.tanh %583 : vector<8x128xf32>
    %585 = arith.mulf %580, %584 : vector<8x128xf32>
    %586 = arith.index_cast %c7_i32_158 : i32 to index
    %c0_165 = arith.constant 0 : index
    %c0_166 = arith.constant 0 : index
    %587 = vector.load %arg9[%586, %c0_165, %c0_166] : memref<8x8x128xf32, #tpu.memory_space<vmem>>, vector<1x8x128xf32>
    %588 = vector.shape_cast %587 : vector<1x8x128xf32> to vector<8x128xf32>
    %589 = vector.shape_cast %585 : vector<8x128xf32> to vector<1x8x128xf32>
    tpu.vector_store %arg9[%586, %c0_165, %c0_166], %589 {strides = array<i32>} : memref<8x8x128xf32, #tpu.memory_space<vmem>>, vector<1x8x128xf32>,
    %c8_i32_167 = arith.constant 8 : i32
    %c2 = arith.constant 2 : index
    %c0_168 = arith.constant 0 : index
    %c0_169 = arith.constant 0 : index
    %590 = vector.load %arg1[%c2, %c0_168, %c0_169] : memref<4x128x512xbf16, #tpu.memory_space<vmem>>, vector<1x128x512xbf16>
    %591 = vector.shape_cast %590 : vector<1x128x512xbf16> to vector<128x512xbf16>
    %c2_170 = arith.constant 2 : index
    %c0_171 = arith.constant 0 : index
    %c0_172 = arith.constant 0 : index
    %592 = vector.load %arg2[%c2_170, %c0_171, %c0_172] : memref<4x128x512xbf16, #tpu.memory_space<vmem>>, vector<1x128x512xbf16>
    %593 = vector.shape_cast %592 : vector<1x128x512xbf16> to vector<128x512xbf16>
    %c2_173 = arith.constant 2 : index
    %c0_174 = arith.constant 0 : index
    %c0_175 = arith.constant 0 : index
    %594 = vector.load %arg3[%c2_173, %c0_174, %c0_175] : memref<4x1x512xf32, #tpu.memory_space<vmem>>, vector<1x1x512xf32>
    %595 = vector.shape_cast %594 : vector<1x1x512xf32> to vector<1x512xf32>
    %c0_176 = arith.constant 0 : index
    %c0_177 = arith.constant 0 : index
    %c0_178 = arith.constant 0 : index
    %596 = vector.load %arg9[%c0_176, %c0_177, %c0_178] : memref<8x8x128xf32, #tpu.memory_space<vmem>>, vector<8x8x128xf32>
    %c0_179 = arith.constant 0 : index
    %c0_180 = arith.constant 0 : index
    %c0_181 = arith.constant 0 : index
    %597 = vector.load %arg6[%c0_179, %c0_180, %c0_181] : memref<8x8x128xf32, #tpu.memory_space<vmem>>, vector<8x8x128xf32>
    %598 = arith.mulf %596, %597 : vector<8x8x128xf32>
    %599 = vector.shape_cast %598 : vector<8x8x128xf32> to vector<64x128xf32>
    %600 = arith.truncf %599 : vector<64x128xf32> to vector<64x128xbf16>
    %cst_182 = arith.constant dense<0.000000e+00> : vector<64x512xf32>
    %601 = tpu.matmul %600, %591, %cst_182 {dimension_numbers = #tpu.dot_dimension_numbers<[1], [0], [0], [1], [0, 0, 1, 1], [], []>} : vector<64x128xbf16>, vector<128x512xbf16>, vector<64x512xf32> -> vector<64x512xf32>
    %602 = vector.broadcast %595 : vector<1x512xf32> to vector<64x512xf32>
    %603 = arith.addf %601, %602 : vector<64x512xf32>
    %604 = vector.shape_cast %603 : vector<64x512xf32> to vector<8x8x512xf32>
    %c0_183 = arith.constant 0 : index
    %c0_184 = arith.constant 0 : index
    %c0_185 = arith.constant 0 : index
    %605 = vector.load %arg10[%c0_183, %c0_184, %c0_185] : memref<8x8x512xf32, #tpu.memory_space<vmem>>, vector<8x8x512xf32>
    tpu.vector_store %arg10[%c0_183, %c0_184, %c0_185], %604 {strides = array<i32>} : memref<8x8x512xf32, #tpu.memory_space<vmem>>, vector<8x8x512xf32>,
    %cst_186 = arith.constant 0.000000e+00 : f32
    %606 = vector.broadcast %cst_186 : f32 to vector<8x128xf32>
    %c0_i32_187 = arith.constant 0 : i32
    %607 = arith.index_cast %c0_i32_187 : i32 to index
    %c0_188 = arith.constant 0 : index
    %c0_189 = arith.constant 0 : index
    %608 = vector.load %arg10[%607, %c0_188, %c0_189] : memref<8x8x512xf32, #tpu.memory_space<vmem>>, vector<1x8x512xf32>
    %609 = vector.shape_cast %608 : vector<1x8x512xf32> to vector<8x512xf32>
    %610 = arith.truncf %606 : vector<8x128xf32> to vector<8x128xbf16>
    %cst_190 = arith.constant dense<0.000000e+00> : vector<8x512xf32>
    %611 = tpu.matmul %610, %593, %cst_190 {dimension_numbers = #tpu.dot_dimension_numbers<[1], [0], [0], [1], [0, 0, 1, 1], [], []>} : vector<8x128xbf16>, vector<128x512xbf16>, vector<8x512xf32> -> vector<8x512xf32>
    %612 = arith.addf %609, %611 : vector<8x512xf32>
    %613 = vector.extract_strided_slice %612 {offsets = [0, 0], sizes = [8, 128], strides = [1, 1]} : vector<8x512xf32> to vector<8x128xf32>
    %614 = arith.negf %613 : vector<8x128xf32>
    %615 = math.exp %614 : vector<8x128xf32>
    %cst_191 = arith.constant 1.000000e+00 : f32
    %616 = vector.broadcast %cst_191 : f32 to vector<8x128xf32>
    %617 = arith.addf %616, %615 : vector<8x128xf32>
    %618 = arith.divf %616, %617 : vector<8x128xf32>
    %619 = vector.extract_strided_slice %612 {offsets = [0, 128], sizes = [8, 128], strides = [1, 1]} : vector<8x512xf32> to vector<8x128xf32>
    %620 = arith.negf %619 : vector<8x128xf32>
    %621 = math.exp %620 : vector<8x128xf32>
    %cst_192 = arith.constant 1.000000e+00 : f32
    %622 = vector.broadcast %cst_192 : f32 to vector<8x128xf32>
    %623 = arith.addf %622, %621 : vector<8x128xf32>
    %624 = arith.divf %622, %623 : vector<8x128xf32>
    %625 = vector.extract_strided_slice %612 {offsets = [0, 256], sizes = [8, 128], strides = [1, 1]} : vector<8x512xf32> to vector<8x128xf32>
    %626 = math.tanh %625 : vector<8x128xf32>
    %627 = vector.extract_strided_slice %612 {offsets = [0, 384], sizes = [8, 128], strides = [1, 1]} : vector<8x512xf32> to vector<8x128xf32>
    %628 = arith.negf %627 : vector<8x128xf32>
    %629 = math.exp %628 : vector<8x128xf32>
    %cst_193 = arith.constant 1.000000e+00 : f32
    %630 = vector.broadcast %cst_193 : f32 to vector<8x128xf32>
    %631 = arith.addf %630, %629 : vector<8x128xf32>
    %632 = arith.divf %630, %631 : vector<8x128xf32>
    %633 = arith.mulf %624, %606 : vector<8x128xf32>
    %634 = arith.mulf %618, %626 : vector<8x128xf32>
    %635 = arith.addf %633, %634 : vector<8x128xf32>
    %636 = math.tanh %635 : vector<8x128xf32>
    %637 = arith.mulf %632, %636 : vector<8x128xf32>
    %638 = arith.index_cast %c0_i32_187 : i32 to index
    %c0_194 = arith.constant 0 : index
    %c0_195 = arith.constant 0 : index
    %639 = vector.load %arg9[%638, %c0_194, %c0_195] : memref<8x8x128xf32, #tpu.memory_space<vmem>>, vector<1x8x128xf32>
    %640 = vector.shape_cast %639 : vector<1x8x128xf32> to vector<8x128xf32>
    %641 = vector.shape_cast %637 : vector<8x128xf32> to vector<1x8x128xf32>
    tpu.vector_store %arg9[%638, %c0_194, %c0_195], %641 {strides = array<i32>} : memref<8x8x128xf32, #tpu.memory_space<vmem>>, vector<1x8x128xf32>,
    %c1_i32_196 = arith.constant 1 : i32
    %642 = arith.index_cast %c1_i32_196 : i32 to index
    %c0_197 = arith.constant 0 : index
    %c0_198 = arith.constant 0 : index
    %643 = vector.load %arg10[%642, %c0_197, %c0_198] : memref<8x8x512xf32, #tpu.memory_space<vmem>>, vector<1x8x512xf32>
    %644 = vector.shape_cast %643 : vector<1x8x512xf32> to vector<8x512xf32>
    %645 = arith.truncf %637 : vector<8x128xf32> to vector<8x128xbf16>
    %cst_199 = arith.constant dense<0.000000e+00> : vector<8x512xf32>
    %646 = tpu.matmul %645, %593, %cst_199 {dimension_numbers = #tpu.dot_dimension_numbers<[1], [0], [0], [1], [0, 0, 1, 1], [], []>} : vector<8x128xbf16>, vector<128x512xbf16>, vector<8x512xf32> -> vector<8x512xf32>
    %647 = arith.addf %644, %646 : vector<8x512xf32>
    %648 = vector.extract_strided_slice %647 {offsets = [0, 0], sizes = [8, 128], strides = [1, 1]} : vector<8x512xf32> to vector<8x128xf32>
    %649 = arith.negf %648 : vector<8x128xf32>
    %650 = math.exp %649 : vector<8x128xf32>
    %cst_200 = arith.constant 1.000000e+00 : f32
    %651 = vector.broadcast %cst_200 : f32 to vector<8x128xf32>
    %652 = arith.addf %651, %650 : vector<8x128xf32>
    %653 = arith.divf %651, %652 : vector<8x128xf32>
    %654 = vector.extract_strided_slice %647 {offsets = [0, 128], sizes = [8, 128], strides = [1, 1]} : vector<8x512xf32> to vector<8x128xf32>
    %655 = arith.negf %654 : vector<8x128xf32>
    %656 = math.exp %655 : vector<8x128xf32>
    %cst_201 = arith.constant 1.000000e+00 : f32
    %657 = vector.broadcast %cst_201 : f32 to vector<8x128xf32>
    %658 = arith.addf %657, %656 : vector<8x128xf32>
    %659 = arith.divf %657, %658 : vector<8x128xf32>
    %660 = vector.extract_strided_slice %647 {offsets = [0, 256], sizes = [8, 128], strides = [1, 1]} : vector<8x512xf32> to vector<8x128xf32>
    %661 = math.tanh %660 : vector<8x128xf32>
    %662 = vector.extract_strided_slice %647 {offsets = [0, 384], sizes = [8, 128], strides = [1, 1]} : vector<8x512xf32> to vector<8x128xf32>
    %663 = arith.negf %662 : vector<8x128xf32>
    %664 = math.exp %663 : vector<8x128xf32>
    %cst_202 = arith.constant 1.000000e+00 : f32
    %665 = vector.broadcast %cst_202 : f32 to vector<8x128xf32>
    %666 = arith.addf %665, %664 : vector<8x128xf32>
    %667 = arith.divf %665, %666 : vector<8x128xf32>
    %668 = arith.mulf %659, %635 : vector<8x128xf32>
    %669 = arith.mulf %653, %661 : vector<8x128xf32>
    %670 = arith.addf %668, %669 : vector<8x128xf32>
    %671 = math.tanh %670 : vector<8x128xf32>
    %672 = arith.mulf %667, %671 : vector<8x128xf32>
    %673 = arith.index_cast %c1_i32_196 : i32 to index
    %c0_203 = arith.constant 0 : index
    %c0_204 = arith.constant 0 : index
    %674 = vector.load %arg9[%673, %c0_203, %c0_204] : memref<8x8x128xf32, #tpu.memory_space<vmem>>, vector<1x8x128xf32>
    %675 = vector.shape_cast %674 : vector<1x8x128xf32> to vector<8x128xf32>
    %676 = vector.shape_cast %672 : vector<8x128xf32> to vector<1x8x128xf32>
    tpu.vector_store %arg9[%673, %c0_203, %c0_204], %676 {strides = array<i32>} : memref<8x8x128xf32, #tpu.memory_space<vmem>>, vector<1x8x128xf32>,
    %c2_i32_205 = arith.constant 2 : i32
    %677 = arith.index_cast %c2_i32_205 : i32 to index
    %c0_206 = arith.constant 0 : index
    %c0_207 = arith.constant 0 : index
    %678 = vector.load %arg10[%677, %c0_206, %c0_207] : memref<8x8x512xf32, #tpu.memory_space<vmem>>, vector<1x8x512xf32>
    %679 = vector.shape_cast %678 : vector<1x8x512xf32> to vector<8x512xf32>
    %680 = arith.truncf %672 : vector<8x128xf32> to vector<8x128xbf16>
    %cst_208 = arith.constant dense<0.000000e+00> : vector<8x512xf32>
    %681 = tpu.matmul %680, %593, %cst_208 {dimension_numbers = #tpu.dot_dimension_numbers<[1], [0], [0], [1], [0, 0, 1, 1], [], []>} : vector<8x128xbf16>, vector<128x512xbf16>, vector<8x512xf32> -> vector<8x512xf32>
    %682 = arith.addf %679, %681 : vector<8x512xf32>
    %683 = vector.extract_strided_slice %682 {offsets = [0, 0], sizes = [8, 128], strides = [1, 1]} : vector<8x512xf32> to vector<8x128xf32>
    %684 = arith.negf %683 : vector<8x128xf32>
    %685 = math.exp %684 : vector<8x128xf32>
    %cst_209 = arith.constant 1.000000e+00 : f32
    %686 = vector.broadcast %cst_209 : f32 to vector<8x128xf32>
    %687 = arith.addf %686, %685 : vector<8x128xf32>
    %688 = arith.divf %686, %687 : vector<8x128xf32>
    %689 = vector.extract_strided_slice %682 {offsets = [0, 128], sizes = [8, 128], strides = [1, 1]} : vector<8x512xf32> to vector<8x128xf32>
    %690 = arith.negf %689 : vector<8x128xf32>
    %691 = math.exp %690 : vector<8x128xf32>
    %cst_210 = arith.constant 1.000000e+00 : f32
    %692 = vector.broadcast %cst_210 : f32 to vector<8x128xf32>
    %693 = arith.addf %692, %691 : vector<8x128xf32>
    %694 = arith.divf %692, %693 : vector<8x128xf32>
    %695 = vector.extract_strided_slice %682 {offsets = [0, 256], sizes = [8, 128], strides = [1, 1]} : vector<8x512xf32> to vector<8x128xf32>
    %696 = math.tanh %695 : vector<8x128xf32>
    %697 = vector.extract_strided_slice %682 {offsets = [0, 384], sizes = [8, 128], strides = [1, 1]} : vector<8x512xf32> to vector<8x128xf32>
    %698 = arith.negf %697 : vector<8x128xf32>
    %699 = math.exp %698 : vector<8x128xf32>
    %cst_211 = arith.constant 1.000000e+00 : f32
    %700 = vector.broadcast %cst_211 : f32 to vector<8x128xf32>
    %701 = arith.addf %700, %699 : vector<8x128xf32>
    %702 = arith.divf %700, %701 : vector<8x128xf32>
    %703 = arith.mulf %694, %670 : vector<8x128xf32>
    %704 = arith.mulf %688, %696 : vector<8x128xf32>
    %705 = arith.addf %703, %704 : vector<8x128xf32>
    %706 = math.tanh %705 : vector<8x128xf32>
    %707 = arith.mulf %702, %706 : vector<8x128xf32>
    %708 = arith.index_cast %c2_i32_205 : i32 to index
    %c0_212 = arith.constant 0 : index
    %c0_213 = arith.constant 0 : index
    %709 = vector.load %arg9[%708, %c0_212, %c0_213] : memref<8x8x128xf32, #tpu.memory_space<vmem>>, vector<1x8x128xf32>
    %710 = vector.shape_cast %709 : vector<1x8x128xf32> to vector<8x128xf32>
    %711 = vector.shape_cast %707 : vector<8x128xf32> to vector<1x8x128xf32>
    tpu.vector_store %arg9[%708, %c0_212, %c0_213], %711 {strides = array<i32>} : memref<8x8x128xf32, #tpu.memory_space<vmem>>, vector<1x8x128xf32>,
    %c3_i32_214 = arith.constant 3 : i32
    %712 = arith.index_cast %c3_i32_214 : i32 to index
    %c0_215 = arith.constant 0 : index
    %c0_216 = arith.constant 0 : index
    %713 = vector.load %arg10[%712, %c0_215, %c0_216] : memref<8x8x512xf32, #tpu.memory_space<vmem>>, vector<1x8x512xf32>
    %714 = vector.shape_cast %713 : vector<1x8x512xf32> to vector<8x512xf32>
    %715 = arith.truncf %707 : vector<8x128xf32> to vector<8x128xbf16>
    %cst_217 = arith.constant dense<0.000000e+00> : vector<8x512xf32>
    %716 = tpu.matmul %715, %593, %cst_217 {dimension_numbers = #tpu.dot_dimension_numbers<[1], [0], [0], [1], [0, 0, 1, 1], [], []>} : vector<8x128xbf16>, vector<128x512xbf16>, vector<8x512xf32> -> vector<8x512xf32>
    %717 = arith.addf %714, %716 : vector<8x512xf32>
    %718 = vector.extract_strided_slice %717 {offsets = [0, 0], sizes = [8, 128], strides = [1, 1]} : vector<8x512xf32> to vector<8x128xf32>
    %719 = arith.negf %718 : vector<8x128xf32>
    %720 = math.exp %719 : vector<8x128xf32>
    %cst_218 = arith.constant 1.000000e+00 : f32
    %721 = vector.broadcast %cst_218 : f32 to vector<8x128xf32>
    %722 = arith.addf %721, %720 : vector<8x128xf32>
    %723 = arith.divf %721, %722 : vector<8x128xf32>
    %724 = vector.extract_strided_slice %717 {offsets = [0, 128], sizes = [8, 128], strides = [1, 1]} : vector<8x512xf32> to vector<8x128xf32>
    %725 = arith.negf %724 : vector<8x128xf32>
    %726 = math.exp %725 : vector<8x128xf32>
    %cst_219 = arith.constant 1.000000e+00 : f32
    %727 = vector.broadcast %cst_219 : f32 to vector<8x128xf32>
    %728 = arith.addf %727, %726 : vector<8x128xf32>
    %729 = arith.divf %727, %728 : vector<8x128xf32>
    %730 = vector.extract_strided_slice %717 {offsets = [0, 256], sizes = [8, 128], strides = [1, 1]} : vector<8x512xf32> to vector<8x128xf32>
    %731 = math.tanh %730 : vector<8x128xf32>
    %732 = vector.extract_strided_slice %717 {offsets = [0, 384], sizes = [8, 128], strides = [1, 1]} : vector<8x512xf32> to vector<8x128xf32>
    %733 = arith.negf %732 : vector<8x128xf32>
    %734 = math.exp %733 : vector<8x128xf32>
    %cst_220 = arith.constant 1.000000e+00 : f32
    %735 = vector.broadcast %cst_220 : f32 to vector<8x128xf32>
    %736 = arith.addf %735, %734 : vector<8x128xf32>
    %737 = arith.divf %735, %736 : vector<8x128xf32>
    %738 = arith.mulf %729, %705 : vector<8x128xf32>
    %739 = arith.mulf %723, %731 : vector<8x128xf32>
    %740 = arith.addf %738, %739 : vector<8x128xf32>
    %741 = math.tanh %740 : vector<8x128xf32>
    %742 = arith.mulf %737, %741 : vector<8x128xf32>
    %743 = arith.index_cast %c3_i32_214 : i32 to index
    %c0_221 = arith.constant 0 : index
    %c0_222 = arith.constant 0 : index
    %744 = vector.load %arg9[%743, %c0_221, %c0_222] : memref<8x8x128xf32, #tpu.memory_space<vmem>>, vector<1x8x128xf32>
    %745 = vector.shape_cast %744 : vector<1x8x128xf32> to vector<8x128xf32>
    %746 = vector.shape_cast %742 : vector<8x128xf32> to vector<1x8x128xf32>
    tpu.vector_store %arg9[%743, %c0_221, %c0_222], %746 {strides = array<i32>} : memref<8x8x128xf32, #tpu.memory_space<vmem>>, vector<1x8x128xf32>,
    %c4_i32_223 = arith.constant 4 : i32
    %747 = arith.index_cast %c4_i32_223 : i32 to index
    %c0_224 = arith.constant 0 : index
    %c0_225 = arith.constant 0 : index
    %748 = vector.load %arg10[%747, %c0_224, %c0_225] : memref<8x8x512xf32, #tpu.memory_space<vmem>>, vector<1x8x512xf32>
    %749 = vector.shape_cast %748 : vector<1x8x512xf32> to vector<8x512xf32>
    %750 = arith.truncf %742 : vector<8x128xf32> to vector<8x128xbf16>
    %cst_226 = arith.constant dense<0.000000e+00> : vector<8x512xf32>
    %751 = tpu.matmul %750, %593, %cst_226 {dimension_numbers = #tpu.dot_dimension_numbers<[1], [0], [0], [1], [0, 0, 1, 1], [], []>} : vector<8x128xbf16>, vector<128x512xbf16>, vector<8x512xf32> -> vector<8x512xf32>
    %752 = arith.addf %749, %751 : vector<8x512xf32>
    %753 = vector.extract_strided_slice %752 {offsets = [0, 0], sizes = [8, 128], strides = [1, 1]} : vector<8x512xf32> to vector<8x128xf32>
    %754 = arith.negf %753 : vector<8x128xf32>
    %755 = math.exp %754 : vector<8x128xf32>
    %cst_227 = arith.constant 1.000000e+00 : f32
    %756 = vector.broadcast %cst_227 : f32 to vector<8x128xf32>
    %757 = arith.addf %756, %755 : vector<8x128xf32>
    %758 = arith.divf %756, %757 : vector<8x128xf32>
    %759 = vector.extract_strided_slice %752 {offsets = [0, 128], sizes = [8, 128], strides = [1, 1]} : vector<8x512xf32> to vector<8x128xf32>
    %760 = arith.negf %759 : vector<8x128xf32>
    %761 = math.exp %760 : vector<8x128xf32>
    %cst_228 = arith.constant 1.000000e+00 : f32
    %762 = vector.broadcast %cst_228 : f32 to vector<8x128xf32>
    %763 = arith.addf %762, %761 : vector<8x128xf32>
    %764 = arith.divf %762, %763 : vector<8x128xf32>
    %765 = vector.extract_strided_slice %752 {offsets = [0, 256], sizes = [8, 128], strides = [1, 1]} : vector<8x512xf32> to vector<8x128xf32>
    %766 = math.tanh %765 : vector<8x128xf32>
    %767 = vector.extract_strided_slice %752 {offsets = [0, 384], sizes = [8, 128], strides = [1, 1]} : vector<8x512xf32> to vector<8x128xf32>
    %768 = arith.negf %767 : vector<8x128xf32>
    %769 = math.exp %768 : vector<8x128xf32>
    %cst_229 = arith.constant 1.000000e+00 : f32
    %770 = vector.broadcast %cst_229 : f32 to vector<8x128xf32>
    %771 = arith.addf %770, %769 : vector<8x128xf32>
    %772 = arith.divf %770, %771 : vector<8x128xf32>
    %773 = arith.mulf %764, %740 : vector<8x128xf32>
    %774 = arith.mulf %758, %766 : vector<8x128xf32>
    %775 = arith.addf %773, %774 : vector<8x128xf32>
    %776 = math.tanh %775 : vector<8x128xf32>
    %777 = arith.mulf %772, %776 : vector<8x128xf32>
    %778 = arith.index_cast %c4_i32_223 : i32 to index
    %c0_230 = arith.constant 0 : index
    %c0_231 = arith.constant 0 : index
    %779 = vector.load %arg9[%778, %c0_230, %c0_231] : memref<8x8x128xf32, #tpu.memory_space<vmem>>, vector<1x8x128xf32>
    %780 = vector.shape_cast %779 : vector<1x8x128xf32> to vector<8x128xf32>
    %781 = vector.shape_cast %777 : vector<8x128xf32> to vector<1x8x128xf32>
    tpu.vector_store %arg9[%778, %c0_230, %c0_231], %781 {strides = array<i32>} : memref<8x8x128xf32, #tpu.memory_space<vmem>>, vector<1x8x128xf32>,
    %c5_i32_232 = arith.constant 5 : i32
    %782 = arith.index_cast %c5_i32_232 : i32 to index
    %c0_233 = arith.constant 0 : index
    %c0_234 = arith.constant 0 : index
    %783 = vector.load %arg10[%782, %c0_233, %c0_234] : memref<8x8x512xf32, #tpu.memory_space<vmem>>, vector<1x8x512xf32>
    %784 = vector.shape_cast %783 : vector<1x8x512xf32> to vector<8x512xf32>
    %785 = arith.truncf %777 : vector<8x128xf32> to vector<8x128xbf16>
    %cst_235 = arith.constant dense<0.000000e+00> : vector<8x512xf32>
    %786 = tpu.matmul %785, %593, %cst_235 {dimension_numbers = #tpu.dot_dimension_numbers<[1], [0], [0], [1], [0, 0, 1, 1], [], []>} : vector<8x128xbf16>, vector<128x512xbf16>, vector<8x512xf32> -> vector<8x512xf32>
    %787 = arith.addf %784, %786 : vector<8x512xf32>
    %788 = vector.extract_strided_slice %787 {offsets = [0, 0], sizes = [8, 128], strides = [1, 1]} : vector<8x512xf32> to vector<8x128xf32>
    %789 = arith.negf %788 : vector<8x128xf32>
    %790 = math.exp %789 : vector<8x128xf32>
    %cst_236 = arith.constant 1.000000e+00 : f32
    %791 = vector.broadcast %cst_236 : f32 to vector<8x128xf32>
    %792 = arith.addf %791, %790 : vector<8x128xf32>
    %793 = arith.divf %791, %792 : vector<8x128xf32>
    %794 = vector.extract_strided_slice %787 {offsets = [0, 128], sizes = [8, 128], strides = [1, 1]} : vector<8x512xf32> to vector<8x128xf32>
    %795 = arith.negf %794 : vector<8x128xf32>
    %796 = math.exp %795 : vector<8x128xf32>
    %cst_237 = arith.constant 1.000000e+00 : f32
    %797 = vector.broadcast %cst_237 : f32 to vector<8x128xf32>
    %798 = arith.addf %797, %796 : vector<8x128xf32>
    %799 = arith.divf %797, %798 : vector<8x128xf32>
    %800 = vector.extract_strided_slice %787 {offsets = [0, 256], sizes = [8, 128], strides = [1, 1]} : vector<8x512xf32> to vector<8x128xf32>
    %801 = math.tanh %800 : vector<8x128xf32>
    %802 = vector.extract_strided_slice %787 {offsets = [0, 384], sizes = [8, 128], strides = [1, 1]} : vector<8x512xf32> to vector<8x128xf32>
    %803 = arith.negf %802 : vector<8x128xf32>
    %804 = math.exp %803 : vector<8x128xf32>
    %cst_238 = arith.constant 1.000000e+00 : f32
    %805 = vector.broadcast %cst_238 : f32 to vector<8x128xf32>
    %806 = arith.addf %805, %804 : vector<8x128xf32>
    %807 = arith.divf %805, %806 : vector<8x128xf32>
    %808 = arith.mulf %799, %775 : vector<8x128xf32>
    %809 = arith.mulf %793, %801 : vector<8x128xf32>
    %810 = arith.addf %808, %809 : vector<8x128xf32>
    %811 = math.tanh %810 : vector<8x128xf32>
    %812 = arith.mulf %807, %811 : vector<8x128xf32>
    %813 = arith.index_cast %c5_i32_232 : i32 to index
    %c0_239 = arith.constant 0 : index
    %c0_240 = arith.constant 0 : index
    %814 = vector.load %arg9[%813, %c0_239, %c0_240] : memref<8x8x128xf32, #tpu.memory_space<vmem>>, vector<1x8x128xf32>
    %815 = vector.shape_cast %814 : vector<1x8x128xf32> to vector<8x128xf32>
    %816 = vector.shape_cast %812 : vector<8x128xf32> to vector<1x8x128xf32>
    tpu.vector_store %arg9[%813, %c0_239, %c0_240], %816 {strides = array<i32>} : memref<8x8x128xf32, #tpu.memory_space<vmem>>, vector<1x8x128xf32>,
    %c6_i32_241 = arith.constant 6 : i32
    %817 = arith.index_cast %c6_i32_241 : i32 to index
    %c0_242 = arith.constant 0 : index
    %c0_243 = arith.constant 0 : index
    %818 = vector.load %arg10[%817, %c0_242, %c0_243] : memref<8x8x512xf32, #tpu.memory_space<vmem>>, vector<1x8x512xf32>
    %819 = vector.shape_cast %818 : vector<1x8x512xf32> to vector<8x512xf32>
    %820 = arith.truncf %812 : vector<8x128xf32> to vector<8x128xbf16>
    %cst_244 = arith.constant dense<0.000000e+00> : vector<8x512xf32>
    %821 = tpu.matmul %820, %593, %cst_244 {dimension_numbers = #tpu.dot_dimension_numbers<[1], [0], [0], [1], [0, 0, 1, 1], [], []>} : vector<8x128xbf16>, vector<128x512xbf16>, vector<8x512xf32> -> vector<8x512xf32>
    %822 = arith.addf %819, %821 : vector<8x512xf32>
    %823 = vector.extract_strided_slice %822 {offsets = [0, 0], sizes = [8, 128], strides = [1, 1]} : vector<8x512xf32> to vector<8x128xf32>
    %824 = arith.negf %823 : vector<8x128xf32>
    %825 = math.exp %824 : vector<8x128xf32>
    %cst_245 = arith.constant 1.000000e+00 : f32
    %826 = vector.broadcast %cst_245 : f32 to vector<8x128xf32>
    %827 = arith.addf %826, %825 : vector<8x128xf32>
    %828 = arith.divf %826, %827 : vector<8x128xf32>
    %829 = vector.extract_strided_slice %822 {offsets = [0, 128], sizes = [8, 128], strides = [1, 1]} : vector<8x512xf32> to vector<8x128xf32>
    %830 = arith.negf %829 : vector<8x128xf32>
    %831 = math.exp %830 : vector<8x128xf32>
    %cst_246 = arith.constant 1.000000e+00 : f32
    %832 = vector.broadcast %cst_246 : f32 to vector<8x128xf32>
    %833 = arith.addf %832, %831 : vector<8x128xf32>
    %834 = arith.divf %832, %833 : vector<8x128xf32>
    %835 = vector.extract_strided_slice %822 {offsets = [0, 256], sizes = [8, 128], strides = [1, 1]} : vector<8x512xf32> to vector<8x128xf32>
    %836 = math.tanh %835 : vector<8x128xf32>
    %837 = vector.extract_strided_slice %822 {offsets = [0, 384], sizes = [8, 128], strides = [1, 1]} : vector<8x512xf32> to vector<8x128xf32>
    %838 = arith.negf %837 : vector<8x128xf32>
    %839 = math.exp %838 : vector<8x128xf32>
    %cst_247 = arith.constant 1.000000e+00 : f32
    %840 = vector.broadcast %cst_247 : f32 to vector<8x128xf32>
    %841 = arith.addf %840, %839 : vector<8x128xf32>
    %842 = arith.divf %840, %841 : vector<8x128xf32>
    %843 = arith.mulf %834, %810 : vector<8x128xf32>
    %844 = arith.mulf %828, %836 : vector<8x128xf32>
    %845 = arith.addf %843, %844 : vector<8x128xf32>
    %846 = math.tanh %845 : vector<8x128xf32>
    %847 = arith.mulf %842, %846 : vector<8x128xf32>
    %848 = arith.index_cast %c6_i32_241 : i32 to index
    %c0_248 = arith.constant 0 : index
    %c0_249 = arith.constant 0 : index
    %849 = vector.load %arg9[%848, %c0_248, %c0_249] : memref<8x8x128xf32, #tpu.memory_space<vmem>>, vector<1x8x128xf32>
    %850 = vector.shape_cast %849 : vector<1x8x128xf32> to vector<8x128xf32>
    %851 = vector.shape_cast %847 : vector<8x128xf32> to vector<1x8x128xf32>
    tpu.vector_store %arg9[%848, %c0_248, %c0_249], %851 {strides = array<i32>} : memref<8x8x128xf32, #tpu.memory_space<vmem>>, vector<1x8x128xf32>,
    %c7_i32_250 = arith.constant 7 : i32
    %852 = arith.index_cast %c7_i32_250 : i32 to index
    %c0_251 = arith.constant 0 : index
    %c0_252 = arith.constant 0 : index
    %853 = vector.load %arg10[%852, %c0_251, %c0_252] : memref<8x8x512xf32, #tpu.memory_space<vmem>>, vector<1x8x512xf32>
    %854 = vector.shape_cast %853 : vector<1x8x512xf32> to vector<8x512xf32>
    %855 = arith.truncf %847 : vector<8x128xf32> to vector<8x128xbf16>
    %cst_253 = arith.constant dense<0.000000e+00> : vector<8x512xf32>
    %856 = tpu.matmul %855, %593, %cst_253 {dimension_numbers = #tpu.dot_dimension_numbers<[1], [0], [0], [1], [0, 0, 1, 1], [], []>} : vector<8x128xbf16>, vector<128x512xbf16>, vector<8x512xf32> -> vector<8x512xf32>
    %857 = arith.addf %854, %856 : vector<8x512xf32>
    %858 = vector.extract_strided_slice %857 {offsets = [0, 0], sizes = [8, 128], strides = [1, 1]} : vector<8x512xf32> to vector<8x128xf32>
    %859 = arith.negf %858 : vector<8x128xf32>
    %860 = math.exp %859 : vector<8x128xf32>
    %cst_254 = arith.constant 1.000000e+00 : f32
    %861 = vector.broadcast %cst_254 : f32 to vector<8x128xf32>
    %862 = arith.addf %861, %860 : vector<8x128xf32>
    %863 = arith.divf %861, %862 : vector<8x128xf32>
    %864 = vector.extract_strided_slice %857 {offsets = [0, 128], sizes = [8, 128], strides = [1, 1]} : vector<8x512xf32> to vector<8x128xf32>
    %865 = arith.negf %864 : vector<8x128xf32>
    %866 = math.exp %865 : vector<8x128xf32>
    %cst_255 = arith.constant 1.000000e+00 : f32
    %867 = vector.broadcast %cst_255 : f32 to vector<8x128xf32>
    %868 = arith.addf %867, %866 : vector<8x128xf32>
    %869 = arith.divf %867, %868 : vector<8x128xf32>
    %870 = vector.extract_strided_slice %857 {offsets = [0, 256], sizes = [8, 128], strides = [1, 1]} : vector<8x512xf32> to vector<8x128xf32>
    %871 = math.tanh %870 : vector<8x128xf32>
    %872 = vector.extract_strided_slice %857 {offsets = [0, 384], sizes = [8, 128], strides = [1, 1]} : vector<8x512xf32> to vector<8x128xf32>
    %873 = arith.negf %872 : vector<8x128xf32>
    %874 = math.exp %873 : vector<8x128xf32>
    %cst_256 = arith.constant 1.000000e+00 : f32
    %875 = vector.broadcast %cst_256 : f32 to vector<8x128xf32>
    %876 = arith.addf %875, %874 : vector<8x128xf32>
    %877 = arith.divf %875, %876 : vector<8x128xf32>
    %878 = arith.mulf %869, %845 : vector<8x128xf32>
    %879 = arith.mulf %863, %871 : vector<8x128xf32>
    %880 = arith.addf %878, %879 : vector<8x128xf32>
    %881 = math.tanh %880 : vector<8x128xf32>
    %882 = arith.mulf %877, %881 : vector<8x128xf32>
    %883 = arith.index_cast %c7_i32_250 : i32 to index
    %c0_257 = arith.constant 0 : index
    %c0_258 = arith.constant 0 : index
    %884 = vector.load %arg9[%883, %c0_257, %c0_258] : memref<8x8x128xf32, #tpu.memory_space<vmem>>, vector<1x8x128xf32>
    %885 = vector.shape_cast %884 : vector<1x8x128xf32> to vector<8x128xf32>
    %886 = vector.shape_cast %882 : vector<8x128xf32> to vector<1x8x128xf32>
    tpu.vector_store %arg9[%883, %c0_257, %c0_258], %886 {strides = array<i32>} : memref<8x8x128xf32, #tpu.memory_space<vmem>>, vector<1x8x128xf32>,
    %c8_i32_259 = arith.constant 8 : i32
    %c3 = arith.constant 3 : index
    %c0_260 = arith.constant 0 : index
    %c0_261 = arith.constant 0 : index
    %887 = vector.load %arg1[%c3, %c0_260, %c0_261] : memref<4x128x512xbf16, #tpu.memory_space<vmem>>, vector<1x128x512xbf16>
    %888 = vector.shape_cast %887 : vector<1x128x512xbf16> to vector<128x512xbf16>
    %c3_262 = arith.constant 3 : index
    %c0_263 = arith.constant 0 : index
    %c0_264 = arith.constant 0 : index
    %889 = vector.load %arg2[%c3_262, %c0_263, %c0_264] : memref<4x128x512xbf16, #tpu.memory_space<vmem>>, vector<1x128x512xbf16>
    %890 = vector.shape_cast %889 : vector<1x128x512xbf16> to vector<128x512xbf16>
    %c3_265 = arith.constant 3 : index
    %c0_266 = arith.constant 0 : index
    %c0_267 = arith.constant 0 : index
    %891 = vector.load %arg3[%c3_265, %c0_266, %c0_267] : memref<4x1x512xf32, #tpu.memory_space<vmem>>, vector<1x1x512xf32>
    %892 = vector.shape_cast %891 : vector<1x1x512xf32> to vector<1x512xf32>
    %c0_268 = arith.constant 0 : index
    %c0_269 = arith.constant 0 : index
    %c0_270 = arith.constant 0 : index
    %893 = vector.load %arg9[%c0_268, %c0_269, %c0_270] : memref<8x8x128xf32, #tpu.memory_space<vmem>>, vector<8x8x128xf32>
    %894 = vector.shape_cast %893 : vector<8x8x128xf32> to vector<64x128xf32>
    %895 = arith.truncf %894 : vector<64x128xf32> to vector<64x128xbf16>
    %cst_271 = arith.constant dense<0.000000e+00> : vector<64x512xf32>
    %896 = tpu.matmul %895, %888, %cst_271 {dimension_numbers = #tpu.dot_dimension_numbers<[1], [0], [0], [1], [0, 0, 1, 1], [], []>} : vector<64x128xbf16>, vector<128x512xbf16>, vector<64x512xf32> -> vector<64x512xf32>
    %897 = vector.broadcast %892 : vector<1x512xf32> to vector<64x512xf32>
    %898 = arith.addf %896, %897 : vector<64x512xf32>
    %899 = vector.shape_cast %898 : vector<64x512xf32> to vector<8x8x512xf32>
    %c0_272 = arith.constant 0 : index
    %c0_273 = arith.constant 0 : index
    %c0_274 = arith.constant 0 : index
    %900 = vector.load %arg10[%c0_272, %c0_273, %c0_274] : memref<8x8x512xf32, #tpu.memory_space<vmem>>, vector<8x8x512xf32>
    tpu.vector_store %arg10[%c0_272, %c0_273, %c0_274], %899 {strides = array<i32>} : memref<8x8x512xf32, #tpu.memory_space<vmem>>, vector<8x8x512xf32>,
    %cst_275 = arith.constant 0.000000e+00 : f32
    %901 = vector.broadcast %cst_275 : f32 to vector<8x128xf32>
    %c0_i32_276 = arith.constant 0 : i32
    %902 = arith.index_cast %c0_i32_276 : i32 to index
    %c0_277 = arith.constant 0 : index
    %c0_278 = arith.constant 0 : index
    %903 = vector.load %arg10[%902, %c0_277, %c0_278] : memref<8x8x512xf32, #tpu.memory_space<vmem>>, vector<1x8x512xf32>
    %904 = vector.shape_cast %903 : vector<1x8x512xf32> to vector<8x512xf32>
    %905 = arith.truncf %901 : vector<8x128xf32> to vector<8x128xbf16>
    %cst_279 = arith.constant dense<0.000000e+00> : vector<8x512xf32>
    %906 = tpu.matmul %905, %890, %cst_279 {dimension_numbers = #tpu.dot_dimension_numbers<[1], [0], [0], [1], [0, 0, 1, 1], [], []>} : vector<8x128xbf16>, vector<128x512xbf16>, vector<8x512xf32> -> vector<8x512xf32>
    %907 = arith.addf %904, %906 : vector<8x512xf32>
    %908 = vector.extract_strided_slice %907 {offsets = [0, 0], sizes = [8, 128], strides = [1, 1]} : vector<8x512xf32> to vector<8x128xf32>
    %909 = arith.negf %908 : vector<8x128xf32>
    %910 = math.exp %909 : vector<8x128xf32>
    %cst_280 = arith.constant 1.000000e+00 : f32
    %911 = vector.broadcast %cst_280 : f32 to vector<8x128xf32>
    %912 = arith.addf %911, %910 : vector<8x128xf32>
    %913 = arith.divf %911, %912 : vector<8x128xf32>
    %914 = vector.extract_strided_slice %907 {offsets = [0, 128], sizes = [8, 128], strides = [1, 1]} : vector<8x512xf32> to vector<8x128xf32>
    %915 = arith.negf %914 : vector<8x128xf32>
    %916 = math.exp %915 : vector<8x128xf32>
    %cst_281 = arith.constant 1.000000e+00 : f32
    %917 = vector.broadcast %cst_281 : f32 to vector<8x128xf32>
    %918 = arith.addf %917, %916 : vector<8x128xf32>
    %919 = arith.divf %917, %918 : vector<8x128xf32>
    %920 = vector.extract_strided_slice %907 {offsets = [0, 256], sizes = [8, 128], strides = [1, 1]} : vector<8x512xf32> to vector<8x128xf32>
    %921 = math.tanh %920 : vector<8x128xf32>
    %922 = vector.extract_strided_slice %907 {offsets = [0, 384], sizes = [8, 128], strides = [1, 1]} : vector<8x512xf32> to vector<8x128xf32>
    %923 = arith.negf %922 : vector<8x128xf32>
    %924 = math.exp %923 : vector<8x128xf32>
    %cst_282 = arith.constant 1.000000e+00 : f32
    %925 = vector.broadcast %cst_282 : f32 to vector<8x128xf32>
    %926 = arith.addf %925, %924 : vector<8x128xf32>
    %927 = arith.divf %925, %926 : vector<8x128xf32>
    %928 = arith.mulf %919, %901 : vector<8x128xf32>
    %929 = arith.mulf %913, %921 : vector<8x128xf32>
    %930 = arith.addf %928, %929 : vector<8x128xf32>
    %931 = math.tanh %930 : vector<8x128xf32>
    %932 = arith.mulf %927, %931 : vector<8x128xf32>
    %c1_i32_283 = arith.constant 1 : i32
    %933 = arith.index_cast %c1_i32_283 : i32 to index
    %c0_284 = arith.constant 0 : index
    %c0_285 = arith.constant 0 : index
    %934 = vector.load %arg10[%933, %c0_284, %c0_285] : memref<8x8x512xf32, #tpu.memory_space<vmem>>, vector<1x8x512xf32>
    %935 = vector.shape_cast %934 : vector<1x8x512xf32> to vector<8x512xf32>
    %936 = arith.truncf %932 : vector<8x128xf32> to vector<8x128xbf16>
    %cst_286 = arith.constant dense<0.000000e+00> : vector<8x512xf32>
    %937 = tpu.matmul %936, %890, %cst_286 {dimension_numbers = #tpu.dot_dimension_numbers<[1], [0], [0], [1], [0, 0, 1, 1], [], []>} : vector<8x128xbf16>, vector<128x512xbf16>, vector<8x512xf32> -> vector<8x512xf32>
    %938 = arith.addf %935, %937 : vector<8x512xf32>
    %939 = vector.extract_strided_slice %938 {offsets = [0, 0], sizes = [8, 128], strides = [1, 1]} : vector<8x512xf32> to vector<8x128xf32>
    %940 = arith.negf %939 : vector<8x128xf32>
    %941 = math.exp %940 : vector<8x128xf32>
    %cst_287 = arith.constant 1.000000e+00 : f32
    %942 = vector.broadcast %cst_287 : f32 to vector<8x128xf32>
    %943 = arith.addf %942, %941 : vector<8x128xf32>
    %944 = arith.divf %942, %943 : vector<8x128xf32>
    %945 = vector.extract_strided_slice %938 {offsets = [0, 128], sizes = [8, 128], strides = [1, 1]} : vector<8x512xf32> to vector<8x128xf32>
    %946 = arith.negf %945 : vector<8x128xf32>
    %947 = math.exp %946 : vector<8x128xf32>
    %cst_288 = arith.constant 1.000000e+00 : f32
    %948 = vector.broadcast %cst_288 : f32 to vector<8x128xf32>
    %949 = arith.addf %948, %947 : vector<8x128xf32>
    %950 = arith.divf %948, %949 : vector<8x128xf32>
    %951 = vector.extract_strided_slice %938 {offsets = [0, 256], sizes = [8, 128], strides = [1, 1]} : vector<8x512xf32> to vector<8x128xf32>
    %952 = math.tanh %951 : vector<8x128xf32>
    %953 = vector.extract_strided_slice %938 {offsets = [0, 384], sizes = [8, 128], strides = [1, 1]} : vector<8x512xf32> to vector<8x128xf32>
    %954 = arith.negf %953 : vector<8x128xf32>
    %955 = math.exp %954 : vector<8x128xf32>
    %cst_289 = arith.constant 1.000000e+00 : f32
    %956 = vector.broadcast %cst_289 : f32 to vector<8x128xf32>
    %957 = arith.addf %956, %955 : vector<8x128xf32>
    %958 = arith.divf %956, %957 : vector<8x128xf32>
    %959 = arith.mulf %950, %930 : vector<8x128xf32>
    %960 = arith.mulf %944, %952 : vector<8x128xf32>
    %961 = arith.addf %959, %960 : vector<8x128xf32>
    %962 = math.tanh %961 : vector<8x128xf32>
    %963 = arith.mulf %958, %962 : vector<8x128xf32>
    %c2_i32_290 = arith.constant 2 : i32
    %964 = arith.index_cast %c2_i32_290 : i32 to index
    %c0_291 = arith.constant 0 : index
    %c0_292 = arith.constant 0 : index
    %965 = vector.load %arg10[%964, %c0_291, %c0_292] : memref<8x8x512xf32, #tpu.memory_space<vmem>>, vector<1x8x512xf32>
    %966 = vector.shape_cast %965 : vector<1x8x512xf32> to vector<8x512xf32>
    %967 = arith.truncf %963 : vector<8x128xf32> to vector<8x128xbf16>
    %cst_293 = arith.constant dense<0.000000e+00> : vector<8x512xf32>
    %968 = tpu.matmul %967, %890, %cst_293 {dimension_numbers = #tpu.dot_dimension_numbers<[1], [0], [0], [1], [0, 0, 1, 1], [], []>} : vector<8x128xbf16>, vector<128x512xbf16>, vector<8x512xf32> -> vector<8x512xf32>
    %969 = arith.addf %966, %968 : vector<8x512xf32>
    %970 = vector.extract_strided_slice %969 {offsets = [0, 0], sizes = [8, 128], strides = [1, 1]} : vector<8x512xf32> to vector<8x128xf32>
    %971 = arith.negf %970 : vector<8x128xf32>
    %972 = math.exp %971 : vector<8x128xf32>
    %cst_294 = arith.constant 1.000000e+00 : f32
    %973 = vector.broadcast %cst_294 : f32 to vector<8x128xf32>
    %974 = arith.addf %973, %972 : vector<8x128xf32>
    %975 = arith.divf %973, %974 : vector<8x128xf32>
    %976 = vector.extract_strided_slice %969 {offsets = [0, 128], sizes = [8, 128], strides = [1, 1]} : vector<8x512xf32> to vector<8x128xf32>
    %977 = arith.negf %976 : vector<8x128xf32>
    %978 = math.exp %977 : vector<8x128xf32>
    %cst_295 = arith.constant 1.000000e+00 : f32
    %979 = vector.broadcast %cst_295 : f32 to vector<8x128xf32>
    %980 = arith.addf %979, %978 : vector<8x128xf32>
    %981 = arith.divf %979, %980 : vector<8x128xf32>
    %982 = vector.extract_strided_slice %969 {offsets = [0, 256], sizes = [8, 128], strides = [1, 1]} : vector<8x512xf32> to vector<8x128xf32>
    %983 = math.tanh %982 : vector<8x128xf32>
    %984 = vector.extract_strided_slice %969 {offsets = [0, 384], sizes = [8, 128], strides = [1, 1]} : vector<8x512xf32> to vector<8x128xf32>
    %985 = arith.negf %984 : vector<8x128xf32>
    %986 = math.exp %985 : vector<8x128xf32>
    %cst_296 = arith.constant 1.000000e+00 : f32
    %987 = vector.broadcast %cst_296 : f32 to vector<8x128xf32>
    %988 = arith.addf %987, %986 : vector<8x128xf32>
    %989 = arith.divf %987, %988 : vector<8x128xf32>
    %990 = arith.mulf %981, %961 : vector<8x128xf32>
    %991 = arith.mulf %975, %983 : vector<8x128xf32>
    %992 = arith.addf %990, %991 : vector<8x128xf32>
    %993 = math.tanh %992 : vector<8x128xf32>
    %994 = arith.mulf %989, %993 : vector<8x128xf32>
    %c3_i32_297 = arith.constant 3 : i32
    %995 = arith.index_cast %c3_i32_297 : i32 to index
    %c0_298 = arith.constant 0 : index
    %c0_299 = arith.constant 0 : index
    %996 = vector.load %arg10[%995, %c0_298, %c0_299] : memref<8x8x512xf32, #tpu.memory_space<vmem>>, vector<1x8x512xf32>
    %997 = vector.shape_cast %996 : vector<1x8x512xf32> to vector<8x512xf32>
    %998 = arith.truncf %994 : vector<8x128xf32> to vector<8x128xbf16>
    %cst_300 = arith.constant dense<0.000000e+00> : vector<8x512xf32>
    %999 = tpu.matmul %998, %890, %cst_300 {dimension_numbers = #tpu.dot_dimension_numbers<[1], [0], [0], [1], [0, 0, 1, 1], [], []>} : vector<8x128xbf16>, vector<128x512xbf16>, vector<8x512xf32> -> vector<8x512xf32>
    %1000 = arith.addf %997, %999 : vector<8x512xf32>
    %1001 = vector.extract_strided_slice %1000 {offsets = [0, 0], sizes = [8, 128], strides = [1, 1]} : vector<8x512xf32> to vector<8x128xf32>
    %1002 = arith.negf %1001 : vector<8x128xf32>
    %1003 = math.exp %1002 : vector<8x128xf32>
    %cst_301 = arith.constant 1.000000e+00 : f32
    %1004 = vector.broadcast %cst_301 : f32 to vector<8x128xf32>
    %1005 = arith.addf %1004, %1003 : vector<8x128xf32>
    %1006 = arith.divf %1004, %1005 : vector<8x128xf32>
    %1007 = vector.extract_strided_slice %1000 {offsets = [0, 128], sizes = [8, 128], strides = [1, 1]} : vector<8x512xf32> to vector<8x128xf32>
    %1008 = arith.negf %1007 : vector<8x128xf32>
    %1009 = math.exp %1008 : vector<8x128xf32>
    %cst_302 = arith.constant 1.000000e+00 : f32
    %1010 = vector.broadcast %cst_302 : f32 to vector<8x128xf32>
    %1011 = arith.addf %1010, %1009 : vector<8x128xf32>
    %1012 = arith.divf %1010, %1011 : vector<8x128xf32>
    %1013 = vector.extract_strided_slice %1000 {offsets = [0, 256], sizes = [8, 128], strides = [1, 1]} : vector<8x512xf32> to vector<8x128xf32>
    %1014 = math.tanh %1013 : vector<8x128xf32>
    %1015 = vector.extract_strided_slice %1000 {offsets = [0, 384], sizes = [8, 128], strides = [1, 1]} : vector<8x512xf32> to vector<8x128xf32>
    %1016 = arith.negf %1015 : vector<8x128xf32>
    %1017 = math.exp %1016 : vector<8x128xf32>
    %cst_303 = arith.constant 1.000000e+00 : f32
    %1018 = vector.broadcast %cst_303 : f32 to vector<8x128xf32>
    %1019 = arith.addf %1018, %1017 : vector<8x128xf32>
    %1020 = arith.divf %1018, %1019 : vector<8x128xf32>
    %1021 = arith.mulf %1012, %992 : vector<8x128xf32>
    %1022 = arith.mulf %1006, %1014 : vector<8x128xf32>
    %1023 = arith.addf %1021, %1022 : vector<8x128xf32>
    %1024 = math.tanh %1023 : vector<8x128xf32>
    %1025 = arith.mulf %1020, %1024 : vector<8x128xf32>
    %c4_i32_304 = arith.constant 4 : i32
    %1026 = arith.index_cast %c4_i32_304 : i32 to index
    %c0_305 = arith.constant 0 : index
    %c0_306 = arith.constant 0 : index
    %1027 = vector.load %arg10[%1026, %c0_305, %c0_306] : memref<8x8x512xf32, #tpu.memory_space<vmem>>, vector<1x8x512xf32>
    %1028 = vector.shape_cast %1027 : vector<1x8x512xf32> to vector<8x512xf32>
    %1029 = arith.truncf %1025 : vector<8x128xf32> to vector<8x128xbf16>
    %cst_307 = arith.constant dense<0.000000e+00> : vector<8x512xf32>
    %1030 = tpu.matmul %1029, %890, %cst_307 {dimension_numbers = #tpu.dot_dimension_numbers<[1], [0], [0], [1], [0, 0, 1, 1], [], []>} : vector<8x128xbf16>, vector<128x512xbf16>, vector<8x512xf32> -> vector<8x512xf32>
    %1031 = arith.addf %1028, %1030 : vector<8x512xf32>
    %1032 = vector.extract_strided_slice %1031 {offsets = [0, 0], sizes = [8, 128], strides = [1, 1]} : vector<8x512xf32> to vector<8x128xf32>
    %1033 = arith.negf %1032 : vector<8x128xf32>
    %1034 = math.exp %1033 : vector<8x128xf32>
    %cst_308 = arith.constant 1.000000e+00 : f32
    %1035 = vector.broadcast %cst_308 : f32 to vector<8x128xf32>
    %1036 = arith.addf %1035, %1034 : vector<8x128xf32>
    %1037 = arith.divf %1035, %1036 : vector<8x128xf32>
    %1038 = vector.extract_strided_slice %1031 {offsets = [0, 128], sizes = [8, 128], strides = [1, 1]} : vector<8x512xf32> to vector<8x128xf32>
    %1039 = arith.negf %1038 : vector<8x128xf32>
    %1040 = math.exp %1039 : vector<8x128xf32>
    %cst_309 = arith.constant 1.000000e+00 : f32
    %1041 = vector.broadcast %cst_309 : f32 to vector<8x128xf32>
    %1042 = arith.addf %1041, %1040 : vector<8x128xf32>
    %1043 = arith.divf %1041, %1042 : vector<8x128xf32>
    %1044 = vector.extract_strided_slice %1031 {offsets = [0, 256], sizes = [8, 128], strides = [1, 1]} : vector<8x512xf32> to vector<8x128xf32>
    %1045 = math.tanh %1044 : vector<8x128xf32>
    %1046 = vector.extract_strided_slice %1031 {offsets = [0, 384], sizes = [8, 128], strides = [1, 1]} : vector<8x512xf32> to vector<8x128xf32>
    %1047 = arith.negf %1046 : vector<8x128xf32>
    %1048 = math.exp %1047 : vector<8x128xf32>
    %cst_310 = arith.constant 1.000000e+00 : f32
    %1049 = vector.broadcast %cst_310 : f32 to vector<8x128xf32>
    %1050 = arith.addf %1049, %1048 : vector<8x128xf32>
    %1051 = arith.divf %1049, %1050 : vector<8x128xf32>
    %1052 = arith.mulf %1043, %1023 : vector<8x128xf32>
    %1053 = arith.mulf %1037, %1045 : vector<8x128xf32>
    %1054 = arith.addf %1052, %1053 : vector<8x128xf32>
    %1055 = math.tanh %1054 : vector<8x128xf32>
    %1056 = arith.mulf %1051, %1055 : vector<8x128xf32>
    %c5_i32_311 = arith.constant 5 : i32
    %1057 = arith.index_cast %c5_i32_311 : i32 to index
    %c0_312 = arith.constant 0 : index
    %c0_313 = arith.constant 0 : index
    %1058 = vector.load %arg10[%1057, %c0_312, %c0_313] : memref<8x8x512xf32, #tpu.memory_space<vmem>>, vector<1x8x512xf32>
    %1059 = vector.shape_cast %1058 : vector<1x8x512xf32> to vector<8x512xf32>
    %1060 = arith.truncf %1056 : vector<8x128xf32> to vector<8x128xbf16>
    %cst_314 = arith.constant dense<0.000000e+00> : vector<8x512xf32>
    %1061 = tpu.matmul %1060, %890, %cst_314 {dimension_numbers = #tpu.dot_dimension_numbers<[1], [0], [0], [1], [0, 0, 1, 1], [], []>} : vector<8x128xbf16>, vector<128x512xbf16>, vector<8x512xf32> -> vector<8x512xf32>
    %1062 = arith.addf %1059, %1061 : vector<8x512xf32>
    %1063 = vector.extract_strided_slice %1062 {offsets = [0, 0], sizes = [8, 128], strides = [1, 1]} : vector<8x512xf32> to vector<8x128xf32>
    %1064 = arith.negf %1063 : vector<8x128xf32>
    %1065 = math.exp %1064 : vector<8x128xf32>
    %cst_315 = arith.constant 1.000000e+00 : f32
    %1066 = vector.broadcast %cst_315 : f32 to vector<8x128xf32>
    %1067 = arith.addf %1066, %1065 : vector<8x128xf32>
    %1068 = arith.divf %1066, %1067 : vector<8x128xf32>
    %1069 = vector.extract_strided_slice %1062 {offsets = [0, 128], sizes = [8, 128], strides = [1, 1]} : vector<8x512xf32> to vector<8x128xf32>
    %1070 = arith.negf %1069 : vector<8x128xf32>
    %1071 = math.exp %1070 : vector<8x128xf32>
    %cst_316 = arith.constant 1.000000e+00 : f32
    %1072 = vector.broadcast %cst_316 : f32 to vector<8x128xf32>
    %1073 = arith.addf %1072, %1071 : vector<8x128xf32>
    %1074 = arith.divf %1072, %1073 : vector<8x128xf32>
    %1075 = vector.extract_strided_slice %1062 {offsets = [0, 256], sizes = [8, 128], strides = [1, 1]} : vector<8x512xf32> to vector<8x128xf32>
    %1076 = math.tanh %1075 : vector<8x128xf32>
    %1077 = vector.extract_strided_slice %1062 {offsets = [0, 384], sizes = [8, 128], strides = [1, 1]} : vector<8x512xf32> to vector<8x128xf32>
    %1078 = arith.negf %1077 : vector<8x128xf32>
    %1079 = math.exp %1078 : vector<8x128xf32>
    %cst_317 = arith.constant 1.000000e+00 : f32
    %1080 = vector.broadcast %cst_317 : f32 to vector<8x128xf32>
    %1081 = arith.addf %1080, %1079 : vector<8x128xf32>
    %1082 = arith.divf %1080, %1081 : vector<8x128xf32>
    %1083 = arith.mulf %1074, %1054 : vector<8x128xf32>
    %1084 = arith.mulf %1068, %1076 : vector<8x128xf32>
    %1085 = arith.addf %1083, %1084 : vector<8x128xf32>
    %1086 = math.tanh %1085 : vector<8x128xf32>
    %1087 = arith.mulf %1082, %1086 : vector<8x128xf32>
    %c6_i32_318 = arith.constant 6 : i32
    %1088 = arith.index_cast %c6_i32_318 : i32 to index
    %c0_319 = arith.constant 0 : index
    %c0_320 = arith.constant 0 : index
    %1089 = vector.load %arg10[%1088, %c0_319, %c0_320] : memref<8x8x512xf32, #tpu.memory_space<vmem>>, vector<1x8x512xf32>
    %1090 = vector.shape_cast %1089 : vector<1x8x512xf32> to vector<8x512xf32>
    %1091 = arith.truncf %1087 : vector<8x128xf32> to vector<8x128xbf16>
    %cst_321 = arith.constant dense<0.000000e+00> : vector<8x512xf32>
    %1092 = tpu.matmul %1091, %890, %cst_321 {dimension_numbers = #tpu.dot_dimension_numbers<[1], [0], [0], [1], [0, 0, 1, 1], [], []>} : vector<8x128xbf16>, vector<128x512xbf16>, vector<8x512xf32> -> vector<8x512xf32>
    %1093 = arith.addf %1090, %1092 : vector<8x512xf32>
    %1094 = vector.extract_strided_slice %1093 {offsets = [0, 0], sizes = [8, 128], strides = [1, 1]} : vector<8x512xf32> to vector<8x128xf32>
    %1095 = arith.negf %1094 : vector<8x128xf32>
    %1096 = math.exp %1095 : vector<8x128xf32>
    %cst_322 = arith.constant 1.000000e+00 : f32
    %1097 = vector.broadcast %cst_322 : f32 to vector<8x128xf32>
    %1098 = arith.addf %1097, %1096 : vector<8x128xf32>
    %1099 = arith.divf %1097, %1098 : vector<8x128xf32>
    %1100 = vector.extract_strided_slice %1093 {offsets = [0, 128], sizes = [8, 128], strides = [1, 1]} : vector<8x512xf32> to vector<8x128xf32>
    %1101 = arith.negf %1100 : vector<8x128xf32>
    %1102 = math.exp %1101 : vector<8x128xf32>
    %cst_323 = arith.constant 1.000000e+00 : f32
    %1103 = vector.broadcast %cst_323 : f32 to vector<8x128xf32>
    %1104 = arith.addf %1103, %1102 : vector<8x128xf32>
    %1105 = arith.divf %1103, %1104 : vector<8x128xf32>
    %1106 = vector.extract_strided_slice %1093 {offsets = [0, 256], sizes = [8, 128], strides = [1, 1]} : vector<8x512xf32> to vector<8x128xf32>
    %1107 = math.tanh %1106 : vector<8x128xf32>
    %1108 = vector.extract_strided_slice %1093 {offsets = [0, 384], sizes = [8, 128], strides = [1, 1]} : vector<8x512xf32> to vector<8x128xf32>
    %1109 = arith.negf %1108 : vector<8x128xf32>
    %1110 = math.exp %1109 : vector<8x128xf32>
    %cst_324 = arith.constant 1.000000e+00 : f32
    %1111 = vector.broadcast %cst_324 : f32 to vector<8x128xf32>
    %1112 = arith.addf %1111, %1110 : vector<8x128xf32>
    %1113 = arith.divf %1111, %1112 : vector<8x128xf32>
    %1114 = arith.mulf %1105, %1085 : vector<8x128xf32>
    %1115 = arith.mulf %1099, %1107 : vector<8x128xf32>
    %1116 = arith.addf %1114, %1115 : vector<8x128xf32>
    %1117 = math.tanh %1116 : vector<8x128xf32>
    %1118 = arith.mulf %1113, %1117 : vector<8x128xf32>
    %c7_i32_325 = arith.constant 7 : i32
    %1119 = arith.index_cast %c7_i32_325 : i32 to index
    %c0_326 = arith.constant 0 : index
    %c0_327 = arith.constant 0 : index
    %1120 = vector.load %arg10[%1119, %c0_326, %c0_327] : memref<8x8x512xf32, #tpu.memory_space<vmem>>, vector<1x8x512xf32>
    %1121 = vector.shape_cast %1120 : vector<1x8x512xf32> to vector<8x512xf32>
    %1122 = arith.truncf %1118 : vector<8x128xf32> to vector<8x128xbf16>
    %cst_328 = arith.constant dense<0.000000e+00> : vector<8x512xf32>
    %1123 = tpu.matmul %1122, %890, %cst_328 {dimension_numbers = #tpu.dot_dimension_numbers<[1], [0], [0], [1], [0, 0, 1, 1], [], []>} : vector<8x128xbf16>, vector<128x512xbf16>, vector<8x512xf32> -> vector<8x512xf32>
    %1124 = arith.addf %1121, %1123 : vector<8x512xf32>
    %1125 = vector.extract_strided_slice %1124 {offsets = [0, 0], sizes = [8, 128], strides = [1, 1]} : vector<8x512xf32> to vector<8x128xf32>
    %1126 = arith.negf %1125 : vector<8x128xf32>
    %1127 = math.exp %1126 : vector<8x128xf32>
    %cst_329 = arith.constant 1.000000e+00 : f32
    %1128 = vector.broadcast %cst_329 : f32 to vector<8x128xf32>
    %1129 = arith.addf %1128, %1127 : vector<8x128xf32>
    %1130 = arith.divf %1128, %1129 : vector<8x128xf32>
    %1131 = vector.extract_strided_slice %1124 {offsets = [0, 128], sizes = [8, 128], strides = [1, 1]} : vector<8x512xf32> to vector<8x128xf32>
    %1132 = arith.negf %1131 : vector<8x128xf32>
    %1133 = math.exp %1132 : vector<8x128xf32>
    %cst_330 = arith.constant 1.000000e+00 : f32
    %1134 = vector.broadcast %cst_330 : f32 to vector<8x128xf32>
    %1135 = arith.addf %1134, %1133 : vector<8x128xf32>
    %1136 = arith.divf %1134, %1135 : vector<8x128xf32>
    %1137 = vector.extract_strided_slice %1124 {offsets = [0, 256], sizes = [8, 128], strides = [1, 1]} : vector<8x512xf32> to vector<8x128xf32>
    %1138 = math.tanh %1137 : vector<8x128xf32>
    %1139 = vector.extract_strided_slice %1124 {offsets = [0, 384], sizes = [8, 128], strides = [1, 1]} : vector<8x512xf32> to vector<8x128xf32>
    %1140 = arith.negf %1139 : vector<8x128xf32>
    %1141 = math.exp %1140 : vector<8x128xf32>
    %cst_331 = arith.constant 1.000000e+00 : f32
    %1142 = vector.broadcast %cst_331 : f32 to vector<8x128xf32>
    %1143 = arith.addf %1142, %1141 : vector<8x128xf32>
    %1144 = arith.divf %1142, %1143 : vector<8x128xf32>
    %1145 = arith.mulf %1136, %1116 : vector<8x128xf32>
    %1146 = arith.mulf %1130, %1138 : vector<8x128xf32>
    %1147 = arith.addf %1145, %1146 : vector<8x128xf32>
    %1148 = math.tanh %1147 : vector<8x128xf32>
    %1149 = arith.mulf %1144, %1148 : vector<8x128xf32>
    %c8_i32_332 = arith.constant 8 : i32
    %c0_333 = arith.constant 0 : index
    %c0_334 = arith.constant 0 : index
    %1150 = vector.load %arg7[%c0_333, %c0_334] : memref<8x128xf32, #tpu.memory_space<vmem>>, vector<8x128xf32>
    %1151 = arith.mulf %1149, %1150 : vector<8x128xf32>
    %1152 = arith.truncf %1151 : vector<8x128xf32> to vector<8x128xbf16>
    %c0_335 = arith.constant 0 : index
    %c0_336 = arith.constant 0 : index
    %1153 = vector.load %arg4[%c0_335, %c0_336] : memref<128x128xbf16, #tpu.memory_space<vmem>>, vector<128x128xbf16>
    %cst_337 = arith.constant dense<0.000000e+00> : vector<8x128xf32>
    %1154 = tpu.matmul %1152, %1153, %cst_337 {dimension_numbers = #tpu.dot_dimension_numbers<[1], [0], [0], [1], [0, 0, 1, 1], [], []>} : vector<8x128xbf16>, vector<128x128xbf16>, vector<8x128xf32> -> vector<8x128xf32>
    %c0_338 = arith.constant 0 : index
    %c0_339 = arith.constant 0 : index
    %1155 = vector.load %arg5[%c0_338, %c0_339] : memref<1x128xf32, #tpu.memory_space<vmem>>, vector<1x128xf32>
    %1156 = vector.broadcast %1155 : vector<1x128xf32> to vector<8x128xf32>
    %1157 = arith.addf %1154, %1156 : vector<8x128xf32>
    %c0_340 = arith.constant 0 : index
    %c0_341 = arith.constant 0 : index
    %1158 = vector.load %arg8[%c0_340, %c0_341] : memref<8x128xf32, #tpu.memory_space<vmem>>, vector<8x128xf32>
    tpu.vector_store %arg8[%c0_340, %c0_341], %1157 {strides = array<i32>} : memref<8x128xf32, #tpu.memory_space<vmem>>, vector<8x128xf32>,
    return
  }
}

</mosaic_0001>

<llo_original>
// kernel: bayesian_lstm_forward.3
$region0: #{bayesian_lstm_forward.3}
  #allocation0 [shape = 'u32[]', space=smem, size = 0x4, offset = 0x4, fixed_abs, tag = 'smem constant byte address 0x4 - core index']
  #allocation1 [shape = 'u32[144,128]{1,0:T(1,128)}', space=vmem, size = 0x12000, scoped, tag = 'internal scratch']
  #allocation2 [shape = 'f32[8,8,128]{2,1,0:T(8,128)}', space=vmem, size = 0x8000, scoped, tag = 'scratch operand']
  #allocation3 [shape = 'f32[8,8,512]{2,1,0:T(8,128)}', space=vmem, size = 0x20000, scoped, tag = 'scratch operand']
  %s0 = inlined_call_operand.vmem [shape: f32[8,8,128], index: 0, kind: input, shape index: {}]
  %s1 = inlined_call_operand.hbm [shape: bf16[4,128,512], index: 1, kind: input, shape index: {}]
  %s2 = inlined_call_operand.hbm [shape: bf16[4,128,512], index: 2, kind: input, shape index: {}]
  %s3 = inlined_call_operand.vmem [shape: f32[4,1,512], index: 3, kind: input, shape index: {}]
  %s4 = inlined_call_operand.vmem [shape: bf16[128,128], index: 4, kind: input, shape index: {}]
  %s5 = inlined_call_operand.vmem [shape: f32[1,128], index: 5, kind: input, shape index: {}]
  %s6 = inlined_call_operand.vmem [shape: f32[8,8,128], index: 6, kind: input, shape index: {}]
  %s7 = inlined_call_operand.vmem [shape: f32[8,128], index: 7, kind: input, shape index: {}]
  %s8 = inlined_call_operand.vmem [shape: f32[8,128], index: 8, kind: output, shape index: {}]
  %s9 = sld [smem:[#allocation0]]
  $region50: #{bayesian_lstm_forward.3} parent=0
    _
  %s11 = ssub.s32 1, %s9
  %s12 = scalar_select 0, %s11, %s9
  $region1: #{bayesian_lstm_forward.3} parent=0
    #allocation4 [shape = 'u8[524288]{0}', space=vmem, size = 0x80000, scoped, tag = 'input window, operand 1, single buffered']
    #allocation5 [shape = 's32[1]{0}', space=sflag, size = 0x4, scoped, tag = 'scoped memory for bayesian_lstm_forward.3']
    #allocation6 [shape = 'u8[524288]{0}', space=vmem, size = 0x80000, scoped, tag = 'input window, operand 2, single buffered']
    #allocation7 [shape = 's32[1]{0}', space=sflag, size = 0x4, scoped, tag = 'scoped memory for bayesian_lstm_forward.3']
    %13 = vsyncpa [#allocation5], 0
    %14 = vsyncpa [#allocation7], 0
    // Predicated region
    $region2: #{bayesian_lstm_forward.3} parent=1 // pred_check
      _
    $region3: #{bayesian_lstm_forward.3} parent=1 // pred_check_branch
      %16 = sbr.rel (0) target = $region5
    $region4: #{bayesian_lstm_forward.3} parent=1 // pred_region
      _
    $region5: #{bayesian_lstm_forward.3} parent=1 // pred_fallthru
      _
    // Predicated region
    $region6: #{bayesian_lstm_forward.3} parent=1 // pred_check
      _
    $region7: #{bayesian_lstm_forward.3} parent=1 // pred_check_branch
      %18 = sbr.rel (0) target = $region9
    $region8: #{bayesian_lstm_forward.3} parent=1 // pred_region
      %s20 = ssub.s32 16384, 16384
      %21 = vsyncadd [#allocation5], %s20
      %s22 = sshll.u32 [#allocation4], 4
      %s23 = int_to_ptr.vmem [resolvable:$true] %s22
      %28 = dma.hbm_to_vmem [thread:$0]  %s1, 16384, %s23, [#allocation5], 256, 256, 16
    $region9: #{bayesian_lstm_forward.3} parent=1 // pred_fallthru
      _
    // Predicated region
    $region10: #{bayesian_lstm_forward.3} parent=1 // pred_check
      _
    $region11: #{bayesian_lstm_forward.3} parent=1 // pred_check_branch
      %30 = sbr.rel (0) target = $region13
    $region12: #{bayesian_lstm_forward.3} parent=1 // pred_region
      %s32 = ssub.s32 16384, 16384
      %33 = vsyncadd [#allocation7], %s32
      %s34 = sshll.u32 [#allocation6], 4
      %s35 = int_to_ptr.vmem [resolvable:$true] %s34
      %40 = dma.hbm_to_vmem [thread:$0]  %s2, 16384, %s35, [#allocation7], 256, 256, 16
    $region13: #{bayesian_lstm_forward.3} parent=1 // pred_fallthru
      _
    // Predicated region
    $region14: #{bayesian_lstm_forward.3} parent=1 // pred_check
      _
    $region15: #{bayesian_lstm_forward.3} parent=1 // pred_check_branch
      %42 = sbr.rel (0) target = $region17
    $region16: #{bayesian_lstm_forward.3} parent=1 // pred_region
      _
    $region17: #{bayesian_lstm_forward.3} parent=1 // pred_fallthru
      _
    // Predicated region
    $region18: #{bayesian_lstm_forward.3} parent=1 // pred_check
      _
    $region19: #{bayesian_lstm_forward.3} parent=1 // pred_check_branch
      %44 = sbr.rel (0) target = $region21
    $region20: #{bayesian_lstm_forward.3} parent=1 // pred_region
      _
    $region21: #{bayesian_lstm_forward.3} parent=1 // pred_fallthru
      _
    // Predicated region
    $region22: #{bayesian_lstm_forward.3} parent=1 // pred_check
      _
    $region23: #{bayesian_lstm_forward.3} parent=1 // pred_check_branch
      %46 = sbr.rel (0) target = $region25
    $region24: #{bayesian_lstm_forward.3} parent=1 // pred_region
      _
    $region25: #{bayesian_lstm_forward.3} parent=1 // pred_fallthru
      _
    // Predicated region
    $region26: #{bayesian_lstm_forward.3} parent=1 // pred_check
      _
    $region27: #{bayesian_lstm_forward.3} parent=1 // pred_check_branch
      %48 = sbr.rel (0) target = $region29
    $region28: #{bayesian_lstm_forward.3} parent=1 // pred_region
      _
    $region29: #{bayesian_lstm_forward.3} parent=1 // pred_fallthru
      _
    // Predicated region
    $region30: #{bayesian_lstm_forward.3} parent=1 // pred_check
      _
    $region31: #{bayesian_lstm_forward.3} parent=1 // pred_check_branch
      %50 = sbr.rel (0) target = $region33
    $region32: #{bayesian_lstm_forward.3} parent=1 // pred_region
      _
    $region33: #{bayesian_lstm_forward.3} parent=1 // pred_fallthru
      _
    // Predicated region
    $region34: #{bayesian_lstm_forward.3} parent=1 // pred_check
      _
    $region35: #{bayesian_lstm_forward.3} parent=1 // pred_check_branch
      %52 = sbr.rel (0) target = $region37
    $region36: #{bayesian_lstm_forward.3} parent=1 // pred_region
      %53 = dma.done [#allocation5], 16384
    $region37: #{bayesian_lstm_forward.3} parent=1 // pred_fallthru
      _
    // Predicated region
    $region38: #{bayesian_lstm_forward.3} parent=1 // pred_check
      _
    $region39: #{bayesian_lstm_forward.3} parent=1 // pred_check_branch
      %55 = sbr.rel (0) target = $region41
    $region40: #{bayesian_lstm_forward.3} parent=1 // pred_region
      %56 = dma.done [#allocation7], 16384
    $region41: #{bayesian_lstm_forward.3} parent=1 // pred_fallthru
      _
    %v58 = vld [vmem:[#allocation4] sm:$0xff]
    %v59 = vld [vmem:[#allocation4 + $0x8] sm:$0xff]
    %v60 = vld [vmem:[#allocation4 + $0x10] sm:$0xff]
    %v61 = vld [vmem:[#allocation4 + $0x18] sm:$0xff]
    %v62 = vld [vmem:[#allocation4 + $0x20] sm:$0xff]
    %v63 = vld [vmem:[#allocation4 + $0x28] sm:$0xff]
    %v64 = vld [vmem:[#allocation4 + $0x30] sm:$0xff]
    %v65 = vld [vmem:[#allocation4 + $0x38] sm:$0xff]
    %v66 = vld [vmem:[#allocation4 + $0x40] sm:$0xff]
    %v67 = vld [vmem:[#allocation4 + $0x48] sm:$0xff]
    %v68 = vld [vmem:[#allocation4 + $0x50] sm:$0xff]
    %v69 = vld [vmem:[#allocation4 + $0x58] sm:$0xff]
    %v70 = vld [vmem:[#allocation4 + $0x60] sm:$0xff]
    %v71 = vld [vmem:[#allocation4 + $0x68] sm:$0xff]
    %v72 = vld [vmem:[#allocation4 + $0x70] sm:$0xff]
    %v73 = vld [vmem:[#allocation4 + $0x78] sm:$0xff]
    %v74 = vld [vmem:[#allocation4 + $0x80] sm:$0xff]
    %v75 = vld [vmem:[#allocation4 + $0x88] sm:$0xff]
    %v76 = vld [vmem:[#allocation4 + $0x90] sm:$0xff]
    %v77 = vld [vmem:[#allocation4 + $0x98] sm:$0xff]
    %v78 = vld [vmem:[#allocation4 + $0xa0] sm:$0xff]
    %v79 = vld [vmem:[#allocation4 + $0xa8] sm:$0xff]
    %v80 = vld [vmem:[#allocation4 + $0xb0] sm:$0xff]
    %v81 = vld [vmem:[#allocation4 + $0xb8] sm:$0xff]
    %v82 = vld [vmem:[#allocation4 + $0xc0] sm:$0xff]
    %v83 = vld [vmem:[#allocation4 + $0xc8] sm:$0xff]
    %v84 = vld [vmem:[#allocation4 + $0xd0] sm:$0xff]
    %v85 = vld [vmem:[#allocation4 + $0xd8] sm:$0xff]
    %v86 = vld [vmem:[#allocation4 + $0xe0] sm:$0xff]
    %v87 = vld [vmem:[#allocation4 + $0xe8] sm:$0xff]
    %v88 = vld [vmem:[#allocation4 + $0xf0] sm:$0xff]
    %v89 = vld [vmem:[#allocation4 + $0xf8] sm:$0xff]
    %v90 = vld [vmem:[#allocation6] sm:$0xff]
    %v91 = vld [vmem:[#allocation6 + $0x8] sm:$0xff]
    %v92 = vld [vmem:[#allocation6 + $0x10] sm:$0xff]
    %v93 = vld [vmem:[#allocation6 + $0x18] sm:$0xff]
    %v94 = vld [vmem:[#allocation6 + $0x20] sm:$0xff]
    %v95 = vld [vmem:[#allocation6 + $0x28] sm:$0xff]
    %v96 = vld [vmem:[#allocation6 + $0x30] sm:$0xff]
    %v97 = vld [vmem:[#allocation6 + $0x38] sm:$0xff]
    %v98 = vld [vmem:[#allocation6 + $0x40] sm:$0xff]
    %v99 = vld [vmem:[#allocation6 + $0x48] sm:$0xff]
    %v100 = vld [vmem:[#allocation6 + $0x50] sm:$0xff]
    %v101 = vld [vmem:[#allocation6 + $0x58] sm:$0xff]
    %v102 = vld [vmem:[#allocation6 + $0x60] sm:$0xff]
    %v103 = vld [vmem:[#allocation6 + $0x68] sm:$0xff]
    %v104 = vld [vmem:[#allocation6 + $0x70] sm:$0xff]
    %v105 = vld [vmem:[#allocation6 + $0x78] sm:$0xff]
    %v106 = vld [vmem:[#allocation6 + $0x80] sm:$0xff]
    %v107 = vld [vmem:[#allocation6 + $0x88] sm:$0xff]
    %v108 = vld [vmem:[#allocation6 + $0x90] sm:$0xff]
    %v109 = vld [vmem:[#allocation6 + $0x98] sm:$0xff]
    %v110 = vld [vmem:[#allocation6 + $0xa0] sm:$0xff]
    %v111 = vld [vmem:[#allocation6 + $0xa8] sm:$0xff]
    %v112 = vld [vmem:[#allocation6 + $0xb0] sm:$0xff]
    %v113 = vld [vmem:[#allocation6 + $0xb8] sm:$0xff]
    %v114 = vld [vmem:[#allocation6 + $0xc0] sm:$0xff]
    %v115 = vld [vmem:[#allocation6 + $0xc8] sm:$0xff]
    %v116 = vld [vmem:[#allocation6 + $0xd0] sm:$0xff]
    %v117 = vld [vmem:[#allocation6 + $0xd8] sm:$0xff]
    %v118 = vld [vmem:[#allocation6 + $0xe0] sm:$0xff]
    %v119 = vld [vmem:[#allocation6 + $0xe8] sm:$0xff]
    %v120 = vld [vmem:[#allocation6 + $0xf0] sm:$0xff]
    %v121 = vld [vmem:[#allocation6 + $0xf8] sm:$0xff]
    %v122 = vld [vmem:[%s3] sm:$0xf]
    %v123 = vld [vmem:[%s0] sm:$0xff]
    %v124 = vld [vmem:[%s0 + $0x8] sm:$0xff]
    %v125 = vld [vmem:[%s0 + $0x10] sm:$0xff]
    %v126 = vld [vmem:[%s0 + $0x18] sm:$0xff]
    %v127 = vld [vmem:[%s0 + $0x20] sm:$0xff]
    %v128 = vld [vmem:[%s0 + $0x28] sm:$0xff]
    %v129 = vld [vmem:[%s0 + $0x30] sm:$0xff]
    %v130 = vld [vmem:[%s0 + $0x38] sm:$0xff]
    %v131 = vpack.c.bf16 %v124, %v123
    %v132 = vpack.c.bf16 %v126, %v125
    %v133 = vpack.c.bf16 %v128, %v127
    %v134 = vpack.c.bf16 %v130, %v129
    %v136 = vlaneseq
    %v137 = vshrl.u32 %v136, 7
    %v138 = vsub.s32 0, %v137
    %v139 = vrot.slane %v122, %v138
    %v140 = vlaneseq
    %v141 = vshrl.u32 %v140, 7
    %v142 = vsub.s32 1, %v141
    %v143 = vrot.slane %v122, %v142
    %v144 = vlaneseq
    %v145 = vshrl.u32 %v144, 7
    %v146 = vsub.s32 2, %v145
    %v147 = vrot.slane %v122, %v146
    %v148 = vlaneseq
    %v149 = vshrl.u32 %v148, 7
    %v150 = vsub.s32 3, %v149
    %v151 = vrot.slane %v122, %v150
    %v188 = vunpack.c.l.b16 %v58
    %v189 = vunpack.c.h.b16 %v58
    %v190 = vunpack.c.l.b16 %v59
    %v191 = vunpack.c.h.b16 %v59
    %v192 = vunpack.c.l.b16 %v60
    %v193 = vunpack.c.h.b16 %v60
    %v194 = vunpack.c.l.b16 %v61
    %v195 = vunpack.c.h.b16 %v61
    %v196 = vunpack.c.l.b16 %v62
    %v197 = vunpack.c.h.b16 %v62
    %v198 = vunpack.c.l.b16 %v63
    %v199 = vunpack.c.h.b16 %v63
    %v200 = vunpack.c.l.b16 %v64
    %v201 = vunpack.c.h.b16 %v64
    %v202 = vunpack.c.l.b16 %v65
    %v203 = vunpack.c.h.b16 %v65
    %v204 = vunpack.c.l.b16 %v66
    %v205 = vunpack.c.h.b16 %v66
    %v206 = vunpack.c.l.b16 %v67
    %v207 = vunpack.c.h.b16 %v67
    %v208 = vunpack.c.l.b16 %v68
    %v209 = vunpack.c.h.b16 %v68
    %v210 = vunpack.c.l.b16 %v69
    %v211 = vunpack.c.h.b16 %v69
    %v212 = vunpack.c.l.b16 %v70
    %v213 = vunpack.c.h.b16 %v70
    %v214 = vunpack.c.l.b16 %v71
    %v215 = vunpack.c.h.b16 %v71
    %v216 = vunpack.c.l.b16 %v72
    %v217 = vunpack.c.h.b16 %v72
    %v218 = vunpack.c.l.b16 %v73
    %v219 = vunpack.c.h.b16 %v73
    %v220 = vunpack.c.l.b16 %v74
    %v221 = vunpack.c.h.b16 %v74
    %v222 = vunpack.c.l.b16 %v75
    %v223 = vunpack.c.h.b16 %v75
    %v224 = vunpack.c.l.b16 %v76
    %v225 = vunpack.c.h.b16 %v76
    %v226 = vunpack.c.l.b16 %v77
    %v227 = vunpack.c.h.b16 %v77
    %v228 = vunpack.c.l.b16 %v78
    %v229 = vunpack.c.h.b16 %v78
    %v230 = vunpack.c.l.b16 %v79
    %v231 = vunpack.c.h.b16 %v79
    %v232 = vunpack.c.l.b16 %v80
    %v233 = vunpack.c.h.b16 %v80
    %v234 = vunpack.c.l.b16 %v81
    %v235 = vunpack.c.h.b16 %v81
    %v236 = vunpack.c.l.b16 %v82
    %v237 = vunpack.c.h.b16 %v82
    %v238 = vunpack.c.l.b16 %v83
    %v239 = vunpack.c.h.b16 %v83
    %v240 = vunpack.c.l.b16 %v84
    %v241 = vunpack.c.h.b16 %v84
    %v242 = vunpack.c.l.b16 %v85
    %v243 = vunpack.c.h.b16 %v85
    %v244 = vunpack.c.l.b16 %v86
    %v245 = vunpack.c.h.b16 %v86
    %v246 = vunpack.c.l.b16 %v87
    %v247 = vunpack.c.h.b16 %v87
    %v248 = vunpack.c.l.b16 %v88
    %v249 = vunpack.c.h.b16 %v88
    %v250 = vunpack.c.l.b16 %v89
    %v251 = vunpack.c.h.b16 %v89
    %v252 = vpack.c.b16 %v192, %v188
    %v253 = vpack.c.b16 %v193, %v189
    %v254 = vpack.c.b16 %v194, %v190
    %v255 = vpack.c.b16 %v195, %v191
    %v256 = vpack.c.b16 %v200, %v196
    %v257 = vpack.c.b16 %v201, %v197
    %v258 = vpack.c.b16 %v202, %v198
    %v259 = vpack.c.b16 %v203, %v199
    %v260 = vpack.c.b16 %v208, %v204
    %v261 = vpack.c.b16 %v209, %v205
    %v262 = vpack.c.b16 %v210, %v206
    %v263 = vpack.c.b16 %v211, %v207
    %v264 = vpack.c.b16 %v216, %v212
    %v265 = vpack.c.b16 %v217, %v213
    %v266 = vpack.c.b16 %v218, %v214
    %v267 = vpack.c.b16 %v219, %v215
    %v268 = vpack.c.b16 %v224, %v220
    %v269 = vpack.c.b16 %v225, %v221
    %v270 = vpack.c.b16 %v226, %v222
    %v271 = vpack.c.b16 %v227, %v223
    %v272 = vpack.c.b16 %v232, %v228
    %v273 = vpack.c.b16 %v233, %v229
    %v274 = vpack.c.b16 %v234, %v230
    %v275 = vpack.c.b16 %v235, %v231
    %v276 = vpack.c.b16 %v240, %v236
    %v277 = vpack.c.b16 %v241, %v237
    %v278 = vpack.c.b16 %v242, %v238
    %v279 = vpack.c.b16 %v243, %v239
    %v280 = vpack.c.b16 %v248, %v244
    %v281 = vpack.c.b16 %v249, %v245
    %v282 = vpack.c.b16 %v250, %v246
    %v283 = vpack.c.b16 %v251, %v247
    %316 = vmatprep.subr.bf16.mxu0 %v253
    %317 = vmatpush1.bf16.msra.mxu0 %v252
    %318 = vmatprep.subr.bf16.mxu0 %v257
    %319 = vmatpush1.bf16.msra.mxu0 %v256
    %320 = vmatprep.subr.bf16.mxu0 %v261
    %321 = vmatpush1.bf16.msra.mxu0 %v260
    %322 = vmatprep.subr.bf16.mxu0 %v265
    %323 = vmatpush1.bf16.msra.mxu0 %v264
    %324 = vmatprep.subr.bf16.mxu0 %v269
    %325 = vmatpush1.bf16.msra.mxu0 %v268
    %326 = vmatprep.subr.bf16.mxu0 %v273
    %327 = vmatpush1.bf16.msra.mxu0 %v272
    %328 = vmatprep.subr.bf16.mxu0 %v277
    %329 = vmatpush1.bf16.msra.mxu0 %v276
    %330 = vmatprep.subr.bf16.mxu0 %v281
    %331 = vmatpush1.bf16.msra.mxu0 %v280
    %332 = vmatprep.subr.bf16.mxu0 0
    %333 = vmatpush1.bf16.msra.mxu0 0
    %334 = vmatprep.subr.bf16.mxu0 0
    %335 = vmatpush1.bf16.msra.mxu0 0
    %336 = vmatprep.subr.bf16.mxu0 0
    %337 = vmatpush1.bf16.msra.mxu0 0
    %338 = vmatprep.subr.bf16.mxu0 0
    %339 = vmatpush1.bf16.msra.mxu0 0
    %340 = vmatprep.subr.bf16.mxu0 0
    %341 = vmatpush1.bf16.msra.mxu0 0
    %342 = vmatprep.subr.bf16.mxu0 0
    %343 = vmatpush1.bf16.msra.mxu0 0
    %344 = vmatprep.subr.bf16.mxu0 0
    %345 = vmatpush1.bf16.msra.mxu0 0
    %346 = vmatprep.subr.bf16.mxu0 0
    %347 = vmatpush1.bf16.msra.mxu0 0
    %348 = vmatprep.mubr.bf16.mxu0 0
    %349 = vmatmul.mubr.bf16.gmra.mrb[0].mxu0 %v131
    %v350 = vpop.f32.mrb[0].mxu0
    %v351 = vadd.f32 %v139, %v350
    %v352 = vpop.f32.mrb[0].mxu0
    %v353 = vadd.f32 %v143, %v352
    %v354 = vpop.f32.mrb[0].mxu0
    %v355 = vadd.f32 %v139, %v354
    %v356 = vpop.f32.mrb[0].mxu0
    %v357 = vadd.f32 %v143, %v356
    %358 = vmatprep.mubr.bf16.mxu0 0
    %359 = vmatmul.mubr.bf16.gmra.mrb[0].mxu0 %v132
    %v360 = vpop.f32.mrb[0].mxu0
    %v361 = vadd.f32 %v139, %v360
    %v362 = vpop.f32.mrb[0].mxu0
    %v363 = vadd.f32 %v143, %v362
    %v364 = vpop.f32.mrb[0].mxu0
    %v365 = vadd.f32 %v139, %v364
    %v366 = vpop.f32.mrb[0].mxu0
    %v367 = vadd.f32 %v143, %v366
    %368 = vmatprep.mubr.bf16.mxu0 0
    %369 = vmatmul.mubr.bf16.gmra.mrb[0].mxu0 %v133
    %v370 = vpop.f32.mrb[0].mxu0
    %v371 = vadd.f32 %v139, %v370
    %v372 = vpop.f32.mrb[0].mxu0
    %v373 = vadd.f32 %v143, %v372
    %v374 = vpop.f32.mrb[0].mxu0
    %v375 = vadd.f32 %v139, %v374
    %v376 = vpop.f32.mrb[0].mxu0
    %v377 = vadd.f32 %v143, %v376
    %378 = vmatprep.mubr.bf16.mxu0 0
    %379 = vmatmul.mubr.bf16.gmra.mrb[0].mxu0 %v134
    %v380 = vpop.f32.mrb[0].mxu0
    %v381 = vadd.f32 %v139, %v380
    %v382 = vpop.f32.mrb[0].mxu0
    %v383 = vadd.f32 %v143, %v382
    %v384 = vpop.f32.mrb[0].mxu0
    %v385 = vadd.f32 %v139, %v384
    %v386 = vpop.f32.mrb[0].mxu0
    %v387 = vadd.f32 %v143, %v386
    %388 = vdwg.mxu0
    %389 = vmatprep.subr.bf16.mxu0 %v255
    %390 = vmatpush1.bf16.msra.mxu0 %v254
    %391 = vmatprep.subr.bf16.mxu0 %v259
    %392 = vmatpush1.bf16.msra.mxu0 %v258
    %393 = vmatprep.subr.bf16.mxu0 %v263
    %394 = vmatpush1.bf16.msra.mxu0 %v262
    %395 = vmatprep.subr.bf16.mxu0 %v267
    %396 = vmatpush1.bf16.msra.mxu0 %v266
    %397 = vmatprep.subr.bf16.mxu0 %v271
    %398 = vmatpush1.bf16.msra.mxu0 %v270
    %399 = vmatprep.subr.bf16.mxu0 %v275
    %400 = vmatpush1.bf16.msra.mxu0 %v274
    %401 = vmatprep.subr.bf16.mxu0 %v279
    %402 = vmatpush1.bf16.msra.mxu0 %v278
    %403 = vmatprep.subr.bf16.mxu0 %v283
    %404 = vmatpush1.bf16.msra.mxu0 %v282
    %405 = vmatprep.subr.bf16.mxu0 0
    %406 = vmatpush1.bf16.msra.mxu0 0
    %407 = vmatprep.subr.bf16.mxu0 0
    %408 = vmatpush1.bf16.msra.mxu0 0
    %409 = vmatprep.subr.bf16.mxu0 0
    %410 = vmatpush1.bf16.msra.mxu0 0
    %411 = vmatprep.subr.bf16.mxu0 0
    %412 = vmatpush1.bf16.msra.mxu0 0
    %413 = vmatprep.subr.bf16.mxu0 0
    %414 = vmatpush1.bf16.msra.mxu0 0
    %415 = vmatprep.subr.bf16.mxu0 0
    %416 = vmatpush1.bf16.msra.mxu0 0
    %417 = vmatprep.subr.bf16.mxu0 0
    %418 = vmatpush1.bf16.msra.mxu0 0
    %419 = vmatprep.subr.bf16.mxu0 0
    %420 = vmatpush1.bf16.msra.mxu0 0
    %421 = vmatprep.mubr.bf16.mxu0 0
    %422 = vmatmul.mubr.bf16.gmra.mrb[0].mxu0 %v131
    %v423 = vpop.f32.mrb[0].mxu0
    %v424 = vadd.f32 %v147, %v423
    %v425 = vpop.f32.mrb[0].mxu0
    %v426 = vadd.f32 %v151, %v425
    %v427 = vpop.f32.mrb[0].mxu0
    %v428 = vadd.f32 %v147, %v427
    %v429 = vpop.f32.mrb[0].mxu0
    %v430 = vadd.f32 %v151, %v429
    %431 = vmatprep.mubr.bf16.mxu0 0
    %432 = vmatmul.mubr.bf16.gmra.mrb[0].mxu0 %v132
    %v433 = vpop.f32.mrb[0].mxu0
    %v434 = vadd.f32 %v147, %v433
    %v435 = vpop.f32.mrb[0].mxu0
    %v436 = vadd.f32 %v151, %v435
    %v437 = vpop.f32.mrb[0].mxu0
    %v438 = vadd.f32 %v147, %v437
    %v439 = vpop.f32.mrb[0].mxu0
    %v440 = vadd.f32 %v151, %v439
    %441 = vmatprep.mubr.bf16.mxu0 0
    %442 = vmatmul.mubr.bf16.gmra.mrb[0].mxu0 %v133
    %v443 = vpop.f32.mrb[0].mxu0
    %v444 = vadd.f32 %v147, %v443
    %v445 = vpop.f32.mrb[0].mxu0
    %v446 = vadd.f32 %v151, %v445
    %v447 = vpop.f32.mrb[0].mxu0
    %v448 = vadd.f32 %v147, %v447
    %v449 = vpop.f32.mrb[0].mxu0
    %v450 = vadd.f32 %v151, %v449
    %451 = vmatprep.mubr.bf16.mxu0 0
    %452 = vmatmul.mubr.bf16.gmra.mrb[0].mxu0 %v134
    %v453 = vpop.f32.mrb[0].mxu0
    %v454 = vadd.f32 %v147, %v453
    %v455 = vpop.f32.mrb[0].mxu0
    %v456 = vadd.f32 %v151, %v455
    %v457 = vpop.f32.mrb[0].mxu0
    %v458 = vadd.f32 %v147, %v457
    %v459 = vpop.f32.mrb[0].mxu0
    %v460 = vadd.f32 %v151, %v459
    %461 = vdwg.mxu0
    %462 = vst [vmem:[#allocation3] sm:$0xff] %v351
    %463 = vst [vmem:[#allocation3 + $0x8] sm:$0xff] %v353
    %464 = vst [vmem:[#allocation3 + $0x10] sm:$0xff] %v424
    %465 = vst [vmem:[#allocation3 + $0x18] sm:$0xff] %v426
    %466 = vst [vmem:[#allocation3 + $0x20] sm:$0xff] %v355
    %467 = vst [vmem:[#allocation3 + $0x28] sm:$0xff] %v357
    %468 = vst [vmem:[#allocation3 + $0x30] sm:$0xff] %v428
    %469 = vst [vmem:[#allocation3 + $0x38] sm:$0xff] %v430
    %470 = vst [vmem:[#allocation3 + $0x40] sm:$0xff] %v361
    %471 = vst [vmem:[#allocation3 + $0x48] sm:$0xff] %v363
    %472 = vst [vmem:[#allocation3 + $0x50] sm:$0xff] %v434
    %473 = vst [vmem:[#allocation3 + $0x58] sm:$0xff] %v436
    %474 = vst [vmem:[#allocation3 + $0x60] sm:$0xff] %v365
    %475 = vst [vmem:[#allocation3 + $0x68] sm:$0xff] %v367
    %476 = vst [vmem:[#allocation3 + $0x70] sm:$0xff] %v438
    %477 = vst [vmem:[#allocation3 + $0x78] sm:$0xff] %v440
    %478 = vst [vmem:[#allocation3 + $0x80] sm:$0xff] %v371
    %479 = vst [vmem:[#allocation3 + $0x88] sm:$0xff] %v373
    %480 = vst [vmem:[#allocation3 + $0x90] sm:$0xff] %v444
    %481 = vst [vmem:[#allocation3 + $0x98] sm:$0xff] %v446
    %482 = vst [vmem:[#allocation3 + $0xa0] sm:$0xff] %v375
    %483 = vst [vmem:[#allocation3 + $0xa8] sm:$0xff] %v377
    %484 = vst [vmem:[#allocation3 + $0xb0] sm:$0xff] %v448
    %485 = vst [vmem:[#allocation3 + $0xb8] sm:$0xff] %v450
    %486 = vst [vmem:[#allocation3 + $0xc0] sm:$0xff] %v381
    %487 = vst [vmem:[#allocation3 + $0xc8] sm:$0xff] %v383
    %488 = vst [vmem:[#allocation3 + $0xd0] sm:$0xff] %v454
    %489 = vst [vmem:[#allocation3 + $0xd8] sm:$0xff] %v456
    %490 = vst [vmem:[#allocation3 + $0xe0] sm:$0xff] %v385
    %491 = vst [vmem:[#allocation3 + $0xe8] sm:$0xff] %v387
    %492 = vst [vmem:[#allocation3 + $0xf0] sm:$0xff] %v458
    %493 = vst [vmem:[#allocation3 + $0xf8] sm:$0xff] %v460
    %v494 = vld [vmem:[#allocation3] sm:$0xff]
    %v495 = vld [vmem:[#allocation3 + $0x8] sm:$0xff]
    %v496 = vld [vmem:[#allocation3 + $0x10] sm:$0xff]
    %v497 = vld [vmem:[#allocation3 + $0x18] sm:$0xff]
    %v530 = vunpack.c.l.b16 %v90
    %v531 = vunpack.c.h.b16 %v90
    %v532 = vunpack.c.l.b16 %v91
    %v533 = vunpack.c.h.b16 %v91
    %v534 = vunpack.c.l.b16 %v92
    %v535 = vunpack.c.h.b16 %v92
    %v536 = vunpack.c.l.b16 %v93
    %v537 = vunpack.c.h.b16 %v93
    %v538 = vunpack.c.l.b16 %v94
    %v539 = vunpack.c.h.b16 %v94
    %v540 = vunpack.c.l.b16 %v95
    %v541 = vunpack.c.h.b16 %v95
    %v542 = vunpack.c.l.b16 %v96
    %v543 = vunpack.c.h.b16 %v96
    %v544 = vunpack.c.l.b16 %v97
    %v545 = vunpack.c.h.b16 %v97
    %v546 = vunpack.c.l.b16 %v98
    %v547 = vunpack.c.h.b16 %v98
    %v548 = vunpack.c.l.b16 %v99
    %v549 = vunpack.c.h.b16 %v99
    %v550 = vunpack.c.l.b16 %v100
    %v551 = vunpack.c.h.b16 %v100
    %v552 = vunpack.c.l.b16 %v101
    %v553 = vunpack.c.h.b16 %v101
    %v554 = vunpack.c.l.b16 %v102
    %v555 = vunpack.c.h.b16 %v102
    %v556 = vunpack.c.l.b16 %v103
    %v557 = vunpack.c.h.b16 %v103
    %v558 = vunpack.c.l.b16 %v104
    %v559 = vunpack.c.h.b16 %v104
    %v560 = vunpack.c.l.b16 %v105
    %v561 = vunpack.c.h.b16 %v105
    %v562 = vunpack.c.l.b16 %v106
    %v563 = vunpack.c.h.b16 %v106
    %v564 = vunpack.c.l.b16 %v107
    %v565 = vunpack.c.h.b16 %v107
    %v566 = vunpack.c.l.b16 %v108
    %v567 = vunpack.c.h.b16 %v108
    %v568 = vunpack.c.l.b16 %v109
    %v569 = vunpack.c.h.b16 %v109
    %v570 = vunpack.c.l.b16 %v110
    %v571 = vunpack.c.h.b16 %v110
    %v572 = vunpack.c.l.b16 %v111
    %v573 = vunpack.c.h.b16 %v111
    %v574 = vunpack.c.l.b16 %v112
    %v575 = vunpack.c.h.b16 %v112
    %v576 = vunpack.c.l.b16 %v113
    %v577 = vunpack.c.h.b16 %v113
    %v578 = vunpack.c.l.b16 %v114
    %v579 = vunpack.c.h.b16 %v114
    %v580 = vunpack.c.l.b16 %v115
    %v581 = vunpack.c.h.b16 %v115
    %v582 = vunpack.c.l.b16 %v116
    %v583 = vunpack.c.h.b16 %v116
    %v584 = vunpack.c.l.b16 %v117
    %v585 = vunpack.c.h.b16 %v117
    %v586 = vunpack.c.l.b16 %v118
    %v587 = vunpack.c.h.b16 %v118
    %v588 = vunpack.c.l.b16 %v119
    %v589 = vunpack.c.h.b16 %v119
    %v590 = vunpack.c.l.b16 %v120
    %v591 = vunpack.c.h.b16 %v120
    %v592 = vunpack.c.l.b16 %v121
    %v593 = vunpack.c.h.b16 %v121
    %v594 = vpack.c.b16 %v534, %v530
    %v595 = vpack.c.b16 %v535, %v531
    %v596 = vpack.c.b16 %v536, %v532
    %v597 = vpack.c.b16 %v537, %v533
    %v598 = vpack.c.b16 %v542, %v538
    %v599 = vpack.c.b16 %v543, %v539
    %v600 = vpack.c.b16 %v544, %v540
    %v601 = vpack.c.b16 %v545, %v541
    %v602 = vpack.c.b16 %v550, %v546
    %v603 = vpack.c.b16 %v551, %v547
    %v604 = vpack.c.b16 %v552, %v548
    %v605 = vpack.c.b16 %v553, %v549
    %v606 = vpack.c.b16 %v558, %v554
    %v607 = vpack.c.b16 %v559, %v555
    %v608 = vpack.c.b16 %v560, %v556
    %v609 = vpack.c.b16 %v561, %v557
    %v610 = vpack.c.b16 %v566, %v562
    %v611 = vpack.c.b16 %v567, %v563
    %v612 = vpack.c.b16 %v568, %v564
    %v613 = vpack.c.b16 %v569, %v565
    %v614 = vpack.c.b16 %v574, %v570
    %v615 = vpack.c.b16 %v575, %v571
    %v616 = vpack.c.b16 %v576, %v572
    %v617 = vpack.c.b16 %v577, %v573
    %v618 = vpack.c.b16 %v582, %v578
    %v619 = vpack.c.b16 %v583, %v579
    %v620 = vpack.c.b16 %v584, %v580
    %v621 = vpack.c.b16 %v585, %v581
    %v622 = vpack.c.b16 %v590, %v586
    %v623 = vpack.c.b16 %v591, %v587
    %v624 = vpack.c.b16 %v592, %v588
    %v625 = vpack.c.b16 %v593, %v589
    %658 = vmatprep.subr.bf16.mxu0 %v595
    %659 = vmatpush1.bf16.msra.mxu0 %v594
    %660 = vmatprep.subr.bf16.mxu0 %v599
    %661 = vmatpush1.bf16.msra.mxu0 %v598
    %662 = vmatprep.subr.bf16.mxu0 %v603
    %663 = vmatpush1.bf16.msra.mxu0 %v602
    %664 = vmatprep.subr.bf16.mxu0 %v607
    %665 = vmatpush1.bf16.msra.mxu0 %v606
    %666 = vmatprep.subr.bf16.mxu0 %v611
    %667 = vmatpush1.bf16.msra.mxu0 %v610
    %668 = vmatprep.subr.bf16.mxu0 %v615
    %669 = vmatpush1.bf16.msra.mxu0 %v614
    %670 = vmatprep.subr.bf16.mxu0 %v619
    %671 = vmatpush1.bf16.msra.mxu0 %v618
    %672 = vmatprep.subr.bf16.mxu0 %v623
    %673 = vmatpush1.bf16.msra.mxu0 %v622
    %674 = vmatprep.subr.bf16.mxu0 0
    %675 = vmatpush1.bf16.msra.mxu0 0
    %676 = vmatprep.subr.bf16.mxu0 0
    %677 = vmatpush1.bf16.msra.mxu0 0
    %678 = vmatprep.subr.bf16.mxu0 0
    %679 = vmatpush1.bf16.msra.mxu0 0
    %680 = vmatprep.subr.bf16.mxu0 0
    %681 = vmatpush1.bf16.msra.mxu0 0
    %682 = vmatprep.subr.bf16.mxu0 0
    %683 = vmatpush1.bf16.msra.mxu0 0
    %684 = vmatprep.subr.bf16.mxu0 0
    %685 = vmatpush1.bf16.msra.mxu0 0
    %686 = vmatprep.subr.bf16.mxu0 0
    %687 = vmatpush1.bf16.msra.mxu0 0
    %688 = vmatprep.subr.bf16.mxu0 0
    %689 = vmatpush1.bf16.msra.mxu0 0
    %690 = vmatprep.mubr.bf16.mxu0 0
    %691 = vmatmul.mubr.bf16.gmra.mrb[0].mxu0 0
    %v692 = vpop.f32.mrb[0].mxu0
    %v693 = vadd.f32 0.0, %v692
    %v694 = vpop.f32.mrb[0].mxu0
    %v695 = vadd.f32 0.0, %v694
    %v696 = vpop.f32.mrb[0].mxu0
    %v697 = vpop.f32.mrb[0].mxu0
    %698 = vdwg.mxu0
    %699 = vmatprep.subr.bf16.mxu0 %v597
    %700 = vmatpush1.bf16.msra.mxu0 %v596
    %701 = vmatprep.subr.bf16.mxu0 %v601
    %702 = vmatpush1.bf16.msra.mxu0 %v600
    %703 = vmatprep.subr.bf16.mxu0 %v605
    %704 = vmatpush1.bf16.msra.mxu0 %v604
    %705 = vmatprep.subr.bf16.mxu0 %v609
    %706 = vmatpush1.bf16.msra.mxu0 %v608
    %707 = vmatprep.subr.bf16.mxu0 %v613
    %708 = vmatpush1.bf16.msra.mxu0 %v612
    %709 = vmatprep.subr.bf16.mxu0 %v617
    %710 = vmatpush1.bf16.msra.mxu0 %v616
    %711 = vmatprep.subr.bf16.mxu0 %v621
    %712 = vmatpush1.bf16.msra.mxu0 %v620
    %713 = vmatprep.subr.bf16.mxu0 %v625
    %714 = vmatpush1.bf16.msra.mxu0 %v624
    %715 = vmatprep.subr.bf16.mxu0 0
    %716 = vmatpush1.bf16.msra.mxu0 0
    %717 = vmatprep.subr.bf16.mxu0 0
    %718 = vmatpush1.bf16.msra.mxu0 0
    %719 = vmatprep.subr.bf16.mxu0 0
    %720 = vmatpush1.bf16.msra.mxu0 0
    %721 = vmatprep.subr.bf16.mxu0 0
    %722 = vmatpush1.bf16.msra.mxu0 0
    %723 = vmatprep.subr.bf16.mxu0 0
    %724 = vmatpush1.bf16.msra.mxu0 0
    %725 = vmatprep.subr.bf16.mxu0 0
    %726 = vmatpush1.bf16.msra.mxu0 0
    %727 = vmatprep.subr.bf16.mxu0 0
    %728 = vmatpush1.bf16.msra.mxu0 0
    %729 = vmatprep.subr.bf16.mxu0 0
    %730 = vmatpush1.bf16.msra.mxu0 0
    %731 = vmatprep.mubr.bf16.mxu0 0
    %732 = vmatmul.mubr.bf16.gmra.mrb[0].mxu0 0
    %v733 = vpop.f32.mrb[0].mxu0
    %v734 = vadd.f32 0.0, %v733
    %v735 = vpop.f32.mrb[0].mxu0
    %v736 = vadd.f32 0.0, %v735
    %v737 = vpop.f32.mrb[0].mxu0
    %v738 = vpop.f32.mrb[0].mxu0
    %739 = vdwg.mxu0
    %v740 = vadd.f32 %v494, %v693
    %v741 = vadd.f32 %v495, %v695
    %v742 = vadd.f32 %v496, %v734
    %v743 = vadd.f32 %v497, %v736
    %v744 = vxor.u32 %v740, 2147483648
    %v745 = vmul.f32 %v744, 1.442695
    %v746 = vpow.pop %v745
    %v747 = vadd.f32 %v746, 1.0
    %v748 = vrcp.pop %v747
    %v749 = vmul.f32 1.0, %v748
    %v750 = vxor.u32 %v741, 2147483648
    %v751 = vmul.f32 %v750, 1.442695
    %v752 = vpow.pop %v751
    %v753 = vadd.f32 %v752, 1.0
    %v754 = vrcp.pop %v753
    %v755 = vmul.f32 1.0, %v754
    %v756 = vtanh.pop %v742
    %v757 = vxor.u32 %v743, 2147483648
    %v758 = vmul.f32 %v757, 1.442695
    %v759 = vpow.pop %v758
    %v760 = vadd.f32 %v759, 1.0
    %v761 = vrcp.pop %v760
    %v762 = vmul.f32 1.0, %v761
    %v763 = vmul.f32 %v755, 0.0
    %v764 = vmul.f32 %v749, %v756
    %v765 = vadd.f32 %v763, %v764
    %v766 = vtanh.pop %v765
    %v767 = vmul.f32 %v762, %v766
    %768 = vst [vmem:[#allocation2] sm:$0xff] %v767
    %s769 = scalar_lea.vmem [#allocation3], 32
    %v770 = vld [vmem:[%s769] sm:$0xff]
    %v771 = vld [vmem:[%s769 + $0x8] sm:$0xff]
    %v772 = vld [vmem:[%s769 + $0x10] sm:$0xff]
    %v773 = vld [vmem:[%s769 + $0x18] sm:$0xff]
    %v774 = vpack.c.bf16 %v767, %v767
    %775 = vmatprep.subr.bf16.mxu0 %v595
    %776 = vmatpush1.bf16.msra.mxu0 %v594
    %777 = vmatprep.subr.bf16.mxu0 %v599
    %778 = vmatpush1.bf16.msra.mxu0 %v598
    %779 = vmatprep.subr.bf16.mxu0 %v603
    %780 = vmatpush1.bf16.msra.mxu0 %v602
    %781 = vmatprep.subr.bf16.mxu0 %v607
    %782 = vmatpush1.bf16.msra.mxu0 %v606
    %783 = vmatprep.subr.bf16.mxu0 %v611
    %784 = vmatpush1.bf16.msra.mxu0 %v610
    %785 = vmatprep.subr.bf16.mxu0 %v615
    %786 = vmatpush1.bf16.msra.mxu0 %v614
    %787 = vmatprep.subr.bf16.mxu0 %v619
    %788 = vmatpush1.bf16.msra.mxu0 %v618
    %789 = vmatprep.subr.bf16.mxu0 %v623
    %790 = vmatpush1.bf16.msra.mxu0 %v622
    %791 = vmatprep.subr.bf16.mxu0 0
    %792 = vmatpush1.bf16.msra.mxu0 0
    %793 = vmatprep.subr.bf16.mxu0 0
    %794 = vmatpush1.bf16.msra.mxu0 0
    %795 = vmatprep.subr.bf16.mxu0 0
    %796 = vmatpush1.bf16.msra.mxu0 0
    %797 = vmatprep.subr.bf16.mxu0 0
    %798 = vmatpush1.bf16.msra.mxu0 0
    %799 = vmatprep.subr.bf16.mxu0 0
    %800 = vmatpush1.bf16.msra.mxu0 0
    %801 = vmatprep.subr.bf16.mxu0 0
    %802 = vmatpush1.bf16.msra.mxu0 0
    %803 = vmatprep.subr.bf16.mxu0 0
    %804 = vmatpush1.bf16.msra.mxu0 0
    %805 = vmatprep.subr.bf16.mxu0 0
    %806 = vmatpush1.bf16.msra.mxu0 0
    %807 = vmatprep.mubr.bf16.mxu0 0
    %808 = vmatmul.mubr.bf16.gmra.mrb[0].mxu0 %v774
    %v809 = vpop.f32.mrb[0].mxu0
    %v810 = vadd.f32 0.0, %v809
    %v811 = vpop.f32.mrb[0].mxu0
    %v812 = vadd.f32 0.0, %v811
    %v813 = vpop.f32.mrb[0].mxu0
    %v814 = vpop.f32.mrb[0].mxu0
    %815 = vdwg.mxu0
    %816 = vmatprep.subr.bf16.mxu0 %v597
    %817 = vmatpush1.bf16.msra.mxu0 %v596
    %818 = vmatprep.subr.bf16.mxu0 %v601
    %819 = vmatpush1.bf16.msra.mxu0 %v600
    %820 = vmatprep.subr.bf16.mxu0 %v605
    %821 = vmatpush1.bf16.msra.mxu0 %v604
    %822 = vmatprep.subr.bf16.mxu0 %v609
    %823 = vmatpush1.bf16.msra.mxu0 %v608
    %824 = vmatprep.subr.bf16.mxu0 %v613
    %825 = vmatpush1.bf16.msra.mxu0 %v612
    %826 = vmatprep.subr.bf16.mxu0 %v617
    %827 = vmatpush1.bf16.msra.mxu0 %v616
    %828 = vmatprep.subr.bf16.mxu0 %v621
    %829 = vmatpush1.bf16.msra.mxu0 %v620
    %830 = vmatprep.subr.bf16.mxu0 %v625
    %831 = vmatpush1.bf16.msra.mxu0 %v624
    %832 = vmatprep.subr.bf16.mxu0 0
    %833 = vmatpush1.bf16.msra.mxu0 0
    %834 = vmatprep.subr.bf16.mxu0 0
    %835 = vmatpush1.bf16.msra.mxu0 0
    %836 = vmatprep.subr.bf16.mxu0 0
    %837 = vmatpush1.bf16.msra.mxu0 0
    %838 = vmatprep.subr.bf16.mxu0 0
    %839 = vmatpush1.bf16.msra.mxu0 0
    %840 = vmatprep.subr.bf16.mxu0 0
    %841 = vmatpush1.bf16.msra.mxu0 0
    %842 = vmatprep.subr.bf16.mxu0 0
    %843 = vmatpush1.bf16.msra.mxu0 0
    %844 = vmatprep.subr.bf16.mxu0 0
    %845 = vmatpush1.bf16.msra.mxu0 0
    %846 = vmatprep.subr.bf16.mxu0 0
    %847 = vmatpush1.bf16.msra.mxu0 0
    %848 = vmatprep.mubr.bf16.mxu0 0
    %849 = vmatmul.mubr.bf16.gmra.mrb[0].mxu0 %v774
    %v850 = vpop.f32.mrb[0].mxu0
    %v851 = vadd.f32 0.0, %v850
    %v852 = vpop.f32.mrb[0].mxu0
    %v853 = vadd.f32 0.0, %v852
    %v854 = vpop.f32.mrb[0].mxu0
    %v855 = vpop.f32.mrb[0].mxu0
    %856 = vdwg.mxu0
    %v857 = vadd.f32 %v770, %v810
    %v858 = vadd.f32 %v771, %v812
    %v859 = vadd.f32 %v772, %v851
    %v860 = vadd.f32 %v773, %v853
    %v861 = vxor.u32 %v857, 2147483648
    %v862 = vmul.f32 %v861, 1.442695
    %v863 = vpow.pop %v862
    %v864 = vadd.f32 %v863, 1.0
    %v865 = vrcp.pop %v864
    %v866 = vmul.f32 1.0, %v865
    %v867 = vxor.u32 %v858, 2147483648
    %v868 = vmul.f32 %v867, 1.442695
    %v869 = vpow.pop %v868
    %v870 = vadd.f32 %v869, 1.0
    %v871 = vrcp.pop %v870
    %v872 = vmul.f32 1.0, %v871
    %v873 = vtanh.pop %v859
    %v874 = vxor.u32 %v860, 2147483648
    %v875 = vmul.f32 %v874, 1.442695
    %v876 = vpow.pop %v875
    %v877 = vadd.f32 %v876, 1.0
    %v878 = vrcp.pop %v877
    %v879 = vmul.f32 1.0, %v878
    %v880 = vmul.f32 %v872, %v765
    %v881 = vmul.f32 %v866, %v873
    %v882 = vadd.f32 %v880, %v881
    %v883 = vtanh.pop %v882
    %v884 = vmul.f32 %v879, %v883
    %s885 = scalar_lea.vmem [#allocation2], 8
    %886 = vst [vmem:[%s885] sm:$0xff] %v884
    %s887 = scalar_lea.vmem [#allocation3], 64
    %v888 = vld [vmem:[%s887] sm:$0xff]
    %v889 = vld [vmem:[%s887 + $0x8] sm:$0xff]
    %v890 = vld [vmem:[%s887 + $0x10] sm:$0xff]
    %v891 = vld [vmem:[%s887 + $0x18] sm:$0xff]
    %v892 = vpack.c.bf16 %v884, %v884
    %893 = vmatprep.subr.bf16.mxu0 %v595
    %894 = vmatpush1.bf16.msra.mxu0 %v594
    %895 = vmatprep.subr.bf16.mxu0 %v599
    %896 = vmatpush1.bf16.msra.mxu0 %v598
    %897 = vmatprep.subr.bf16.mxu0 %v603
    %898 = vmatpush1.bf16.msra.mxu0 %v602
    %899 = vmatprep.subr.bf16.mxu0 %v607
    %900 = vmatpush1.bf16.msra.mxu0 %v606
    %901 = vmatprep.subr.bf16.mxu0 %v611
    %902 = vmatpush1.bf16.msra.mxu0 %v610
    %903 = vmatprep.subr.bf16.mxu0 %v615
    %904 = vmatpush1.bf16.msra.mxu0 %v614
    %905 = vmatprep.subr.bf16.mxu0 %v619
    %906 = vmatpush1.bf16.msra.mxu0 %v618
    %907 = vmatprep.subr.bf16.mxu0 %v623
    %908 = vmatpush1.bf16.msra.mxu0 %v622
    %909 = vmatprep.subr.bf16.mxu0 0
    %910 = vmatpush1.bf16.msra.mxu0 0
    %911 = vmatprep.subr.bf16.mxu0 0
    %912 = vmatpush1.bf16.msra.mxu0 0
    %913 = vmatprep.subr.bf16.mxu0 0
    %914 = vmatpush1.bf16.msra.mxu0 0
    %915 = vmatprep.subr.bf16.mxu0 0
    %916 = vmatpush1.bf16.msra.mxu0 0
    %917 = vmatprep.subr.bf16.mxu0 0
    %918 = vmatpush1.bf16.msra.mxu0 0
    %919 = vmatprep.subr.bf16.mxu0 0
    %920 = vmatpush1.bf16.msra.mxu0 0
    %921 = vmatprep.subr.bf16.mxu0 0
    %922 = vmatpush1.bf16.msra.mxu0 0
    %923 = vmatprep.subr.bf16.mxu0 0
    %924 = vmatpush1.bf16.msra.mxu0 0
    %925 = vmatprep.mubr.bf16.mxu0 0
    %926 = vmatmul.mubr.bf16.gmra.mrb[0].mxu0 %v892
    %v927 = vpop.f32.mrb[0].mxu0
    %v928 = vadd.f32 0.0, %v927
    %v929 = vpop.f32.mrb[0].mxu0
    %v930 = vadd.f32 0.0, %v929
    %v931 = vpop.f32.mrb[0].mxu0
    %v932 = vpop.f32.mrb[0].mxu0
    %933 = vdwg.mxu0
    %934 = vmatprep.subr.bf16.mxu0 %v597
    %935 = vmatpush1.bf16.msra.mxu0 %v596
    %936 = vmatprep.subr.bf16.mxu0 %v601
    %937 = vmatpush1.bf16.msra.mxu0 %v600
    %938 = vmatprep.subr.bf16.mxu0 %v605
    %939 = vmatpush1.bf16.msra.mxu0 %v604
    %940 = vmatprep.subr.bf16.mxu0 %v609
    %941 = vmatpush1.bf16.msra.mxu0 %v608
    %942 = vmatprep.subr.bf16.mxu0 %v613
    %943 = vmatpush1.bf16.msra.mxu0 %v612
    %944 = vmatprep.subr.bf16.mxu0 %v617
    %945 = vmatpush1.bf16.msra.mxu0 %v616
    %946 = vmatprep.subr.bf16.mxu0 %v621
    %947 = vmatpush1.bf16.msra.mxu0 %v620
    %948 = vmatprep.subr.bf16.mxu0 %v625
    %949 = vmatpush1.bf16.msra.mxu0 %v624
    %950 = vmatprep.subr.bf16.mxu0 0
    %951 = vmatpush1.bf16.msra.mxu0 0
    %952 = vmatprep.subr.bf16.mxu0 0
    %953 = vmatpush1.bf16.msra.mxu0 0
    %954 = vmatprep.subr.bf16.mxu0 0
    %955 = vmatpush1.bf16.msra.mxu0 0
    %956 = vmatprep.subr.bf16.mxu0 0
    %957 = vmatpush1.bf16.msra.mxu0 0
    %958 = vmatprep.subr.bf16.mxu0 0
    %959 = vmatpush1.bf16.msra.mxu0 0
    %960 = vmatprep.subr.bf16.mxu0 0
    %961 = vmatpush1.bf16.msra.mxu0 0
    %962 = vmatprep.subr.bf16.mxu0 0
    %963 = vmatpush1.bf16.msra.mxu0 0
    %964 = vmatprep.subr.bf16.mxu0 0
    %965 = vmatpush1.bf16.msra.mxu0 0
    %966 = vmatprep.mubr.bf16.mxu0 0
    %967 = vmatmul.mubr.bf16.gmra.mrb[0].mxu0 %v892
    %v968 = vpop.f32.mrb[0].mxu0
    %v969 = vadd.f32 0.0, %v968
    %v970 = vpop.f32.mrb[0].mxu0
    %v971 = vadd.f32 0.0, %v970
    %v972 = vpop.f32.mrb[0].mxu0
    %v973 = vpop.f32.mrb[0].mxu0
    %974 = vdwg.mxu0
    %v975 = vadd.f32 %v888, %v928
    %v976 = vadd.f32 %v889, %v930
    %v977 = vadd.f32 %v890, %v969
    %v978 = vadd.f32 %v891, %v971
    %v979 = vxor.u32 %v975, 2147483648
    %v980 = vmul.f32 %v979, 1.442695
    %v981 = vpow.pop %v980
    %v982 = vadd.f32 %v981, 1.0
    %v983 = vrcp.pop %v982
    %v984 = vmul.f32 1.0, %v983
    %v985 = vxor.u32 %v976, 2147483648
    %v986 = vmul.f32 %v985, 1.442695
    %v987 = vpow.pop %v986
    %v988 = vadd.f32 %v987, 1.0
    %v989 = vrcp.pop %v988
    %v990 = vmul.f32 1.0, %v989
    %v991 = vtanh.pop %v977
    %v992 = vxor.u32 %v978, 2147483648
    %v993 = vmul.f32 %v992, 1.442695
    %v994 = vpow.pop %v993
    %v995 = vadd.f32 %v994, 1.0
    %v996 = vrcp.pop %v995
    %v997 = vmul.f32 1.0, %v996
    %v998 = vmul.f32 %v990, %v882
    %v999 = vmul.f32 %v984, %v991
    %v1000 = vadd.f32 %v998, %v999
    %v1001 = vtanh.pop %v1000
    %v1002 = vmul.f32 %v997, %v1001
    %s1003 = scalar_lea.vmem [#allocation2], 16
    %1004 = vst [vmem:[%s1003] sm:$0xff] %v1002
    %s1005 = scalar_lea.vmem [#allocation3], 96
    %v1006 = vld [vmem:[%s1005] sm:$0xff]
    %v1007 = vld [vmem:[%s1005 + $0x8] sm:$0xff]
    %v1008 = vld [vmem:[%s1005 + $0x10] sm:$0xff]
    %v1009 = vld [vmem:[%s1005 + $0x18] sm:$0xff]
    %v1010 = vpack.c.bf16 %v1002, %v1002
    %1011 = vmatprep.subr.bf16.mxu0 %v595
    %1012 = vmatpush1.bf16.msra.mxu0 %v594
    %1013 = vmatprep.subr.bf16.mxu0 %v599
    %1014 = vmatpush1.bf16.msra.mxu0 %v598
    %1015 = vmatprep.subr.bf16.mxu0 %v603
    %1016 = vmatpush1.bf16.msra.mxu0 %v602
    %1017 = vmatprep.subr.bf16.mxu0 %v607
    %1018 = vmatpush1.bf16.msra.mxu0 %v606
    %1019 = vmatprep.subr.bf16.mxu0 %v611
    %1020 = vmatpush1.bf16.msra.mxu0 %v610
    %1021 = vmatprep.subr.bf16.mxu0 %v615
    %1022 = vmatpush1.bf16.msra.mxu0 %v614
    %1023 = vmatprep.subr.bf16.mxu0 %v619
    %1024 = vmatpush1.bf16.msra.mxu0 %v618
    %1025 = vmatprep.subr.bf16.mxu0 %v623
    %1026 = vmatpush1.bf16.msra.mxu0 %v622
    %1027 = vmatprep.subr.bf16.mxu0 0
    %1028 = vmatpush1.bf16.msra.mxu0 0
    %1029 = vmatprep.subr.bf16.mxu0 0
    %1030 = vmatpush1.bf16.msra.mxu0 0
    %1031 = vmatprep.subr.bf16.mxu0 0
    %1032 = vmatpush1.bf16.msra.mxu0 0
    %1033 = vmatprep.subr.bf16.mxu0 0
    %1034 = vmatpush1.bf16.msra.mxu0 0
    %1035 = vmatprep.subr.bf16.mxu0 0
    %1036 = vmatpush1.bf16.msra.mxu0 0
    %1037 = vmatprep.subr.bf16.mxu0 0
    %1038 = vmatpush1.bf16.msra.mxu0 0
    %1039 = vmatprep.subr.bf16.mxu0 0
    %1040 = vmatpush1.bf16.msra.mxu0 0
    %1041 = vmatprep.subr.bf16.mxu0 0
    %1042 = vmatpush1.bf16.msra.mxu0 0
    %1043 = vmatprep.mubr.bf16.mxu0 0
    %1044 = vmatmul.mubr.bf16.gmra.mrb[0].mxu0 %v1010
    %v1045 = vpop.f32.mrb[0].mxu0
    %v1046 = vadd.f32 0.0, %v1045
    %v1047 = vpop.f32.mrb[0].mxu0
    %v1048 = vadd.f32 0.0, %v1047
    %v1049 = vpop.f32.mrb[0].mxu0
    %v1050 = vpop.f32.mrb[0].mxu0
    %1051 = vdwg.mxu0
    %1052 = vmatprep.subr.bf16.mxu0 %v597
    %1053 = vmatpush1.bf16.msra.mxu0 %v596
    %1054 = vmatprep.subr.bf16.mxu0 %v601
    %1055 = vmatpush1.bf16.msra.mxu0 %v600
    %1056 = vmatprep.subr.bf16.mxu0 %v605
    %1057 = vmatpush1.bf16.msra.mxu0 %v604
    %1058 = vmatprep.subr.bf16.mxu0 %v609
    %1059 = vmatpush1.bf16.msra.mxu0 %v608
    %1060 = vmatprep.subr.bf16.mxu0 %v613
    %1061 = vmatpush1.bf16.msra.mxu0 %v612
    %1062 = vmatprep.subr.bf16.mxu0 %v617
    %1063 = vmatpush1.bf16.msra.mxu0 %v616
    %1064 = vmatprep.subr.bf16.mxu0 %v621
    %1065 = vmatpush1.bf16.msra.mxu0 %v620
    %1066 = vmatprep.subr.bf16.mxu0 %v625
    %1067 = vmatpush1.bf16.msra.mxu0 %v624
    %1068 = vmatprep.subr.bf16.mxu0 0
    %1069 = vmatpush1.bf16.msra.mxu0 0
    %1070 = vmatprep.subr.bf16.mxu0 0
    %1071 = vmatpush1.bf16.msra.mxu0 0
    %1072 = vmatprep.subr.bf16.mxu0 0
    %1073 = vmatpush1.bf16.msra.mxu0 0
    %1074 = vmatprep.subr.bf16.mxu0 0
    %1075 = vmatpush1.bf16.msra.mxu0 0
    %1076 = vmatprep.subr.bf16.mxu0 0
    %1077 = vmatpush1.bf16.msra.mxu0 0
    %1078 = vmatprep.subr.bf16.mxu0 0
    %1079 = vmatpush1.bf16.msra.mxu0 0
    %1080 = vmatprep.subr.bf16.mxu0 0
    %1081 = vmatpush1.bf16.msra.mxu0 0
    %1082 = vmatprep.subr.bf16.mxu0 0
    %1083 = vmatpush1.bf16.msra.mxu0 0
    %1084 = vmatprep.mubr.bf16.mxu0 0
    %1085 = vmatmul.mubr.bf16.gmra.mrb[0].mxu0 %v1010
    %v1086 = vpop.f32.mrb[0].mxu0
    %v1087 = vadd.f32 0.0, %v1086
    %v1088 = vpop.f32.mrb[0].mxu0
    %v1089 = vadd.f32 0.0, %v1088
    %v1090 = vpop.f32.mrb[0].mxu0
    %v1091 = vpop.f32.mrb[0].mxu0
    %1092 = vdwg.mxu0
    %v1093 = vadd.f32 %v1006, %v1046
    %v1094 = vadd.f32 %v1007, %v1048
    %v1095 = vadd.f32 %v1008, %v1087
    %v1096 = vadd.f32 %v1009, %v1089
    %v1097 = vxor.u32 %v1093, 2147483648
    %v1098 = vmul.f32 %v1097, 1.442695
    %v1099 = vpow.pop %v1098
    %v1100 = vadd.f32 %v1099, 1.0
    %v1101 = vrcp.pop %v1100
    %v1102 = vmul.f32 1.0, %v1101
    %v1103 = vxor.u32 %v1094, 2147483648
    %v1104 = vmul.f32 %v1103, 1.442695
    %v1105 = vpow.pop %v1104
    %v1106 = vadd.f32 %v1105, 1.0
    %v1107 = vrcp.pop %v1106
    %v1108 = vmul.f32 1.0, %v1107
    %v1109 = vtanh.pop %v1095
    %v1110 = vxor.u32 %v1096, 2147483648
    %v1111 = vmul.f32 %v1110, 1.442695
    %v1112 = vpow.pop %v1111
    %v1113 = vadd.f32 %v1112, 1.0
    %v1114 = vrcp.pop %v1113
    %v1115 = vmul.f32 1.0, %v1114
    %v1116 = vmul.f32 %v1108, %v1000
    %v1117 = vmul.f32 %v1102, %v1109
    %v1118 = vadd.f32 %v1116, %v1117
    %v1119 = vtanh.pop %v1118
    %v1120 = vmul.f32 %v1115, %v1119
    %s1121 = scalar_lea.vmem [#allocation2], 24
    %1122 = vst [vmem:[%s1121] sm:$0xff] %v1120
    %s1123 = scalar_lea.vmem [#allocation3], 128
    %v1124 = vld [vmem:[%s1123] sm:$0xff]
    %v1125 = vld [vmem:[%s1123 + $0x8] sm:$0xff]
    %v1126 = vld [vmem:[%s1123 + $0x10] sm:$0xff]
    %v1127 = vld [vmem:[%s1123 + $0x18] sm:$0xff]
    %v1128 = vpack.c.bf16 %v1120, %v1120
    %1129 = vmatprep.subr.bf16.mxu0 %v595
    %1130 = vmatpush1.bf16.msra.mxu0 %v594
    %1131 = vmatprep.subr.bf16.mxu0 %v599
    %1132 = vmatpush1.bf16.msra.mxu0 %v598
    %1133 = vmatprep.subr.bf16.mxu0 %v603
    %1134 = vmatpush1.bf16.msra.mxu0 %v602
    %1135 = vmatprep.subr.bf16.mxu0 %v607
    %1136 = vmatpush1.bf16.msra.mxu0 %v606
    %1137 = vmatprep.subr.bf16.mxu0 %v611
    %1138 = vmatpush1.bf16.msra.mxu0 %v610
    %1139 = vmatprep.subr.bf16.mxu0 %v615
    %1140 = vmatpush1.bf16.msra.mxu0 %v614
    %1141 = vmatprep.subr.bf16.mxu0 %v619
    %1142 = vmatpush1.bf16.msra.mxu0 %v618
    %1143 = vmatprep.subr.bf16.mxu0 %v623
    %1144 = vmatpush1.bf16.msra.mxu0 %v622
    %1145 = vmatprep.subr.bf16.mxu0 0
    %1146 = vmatpush1.bf16.msra.mxu0 0
    %1147 = vmatprep.subr.bf16.mxu0 0
    %1148 = vmatpush1.bf16.msra.mxu0 0
    %1149 = vmatprep.subr.bf16.mxu0 0
    %1150 = vmatpush1.bf16.msra.mxu0 0
    %1151 = vmatprep.subr.bf16.mxu0 0
    %1152 = vmatpush1.bf16.msra.mxu0 0
    %1153 = vmatprep.subr.bf16.mxu0 0
    %1154 = vmatpush1.bf16.msra.mxu0 0
    %1155 = vmatprep.subr.bf16.mxu0 0
    %1156 = vmatpush1.bf16.msra.mxu0 0
    %1157 = vmatprep.subr.bf16.mxu0 0
    %1158 = vmatpush1.bf16.msra.mxu0 0
    %1159 = vmatprep.subr.bf16.mxu0 0
    %1160 = vmatpush1.bf16.msra.mxu0 0
    %1161 = vmatprep.mubr.bf16.mxu0 0
    %1162 = vmatmul.mubr.bf16.gmra.mrb[0].mxu0 %v1128
    %v1163 = vpop.f32.mrb[0].mxu0
    %v1164 = vadd.f32 0.0, %v1163
    %v1165 = vpop.f32.mrb[0].mxu0
    %v1166 = vadd.f32 0.0, %v1165
    %v1167 = vpop.f32.mrb[0].mxu0
    %v1168 = vpop.f32.mrb[0].mxu0
    %1169 = vdwg.mxu0
    %1170 = vmatprep.subr.bf16.mxu0 %v597
    %1171 = vmatpush1.bf16.msra.mxu0 %v596
    %1172 = vmatprep.subr.bf16.mxu0 %v601
    %1173 = vmatpush1.bf16.msra.mxu0 %v600
    %1174 = vmatprep.subr.bf16.mxu0 %v605
    %1175 = vmatpush1.bf16.msra.mxu0 %v604
    %1176 = vmatprep.subr.bf16.mxu0 %v609
    %1177 = vmatpush1.bf16.msra.mxu0 %v608
    %1178 = vmatprep.subr.bf16.mxu0 %v613
    %1179 = vmatpush1.bf16.msra.mxu0 %v612
    %1180 = vmatprep.subr.bf16.mxu0 %v617
    %1181 = vmatpush1.bf16.msra.mxu0 %v616
    %1182 = vmatprep.subr.bf16.mxu0 %v621
    %1183 = vmatpush1.bf16.msra.mxu0 %v620
    %1184 = vmatprep.subr.bf16.mxu0 %v625
    %1185 = vmatpush1.bf16.msra.mxu0 %v624
    %1186 = vmatprep.subr.bf16.mxu0 0
    %1187 = vmatpush1.bf16.msra.mxu0 0
    %1188 = vmatprep.subr.bf16.mxu0 0
    %1189 = vmatpush1.bf16.msra.mxu0 0
    %1190 = vmatprep.subr.bf16.mxu0 0
    %1191 = vmatpush1.bf16.msra.mxu0 0
    %1192 = vmatprep.subr.bf16.mxu0 0
    %1193 = vmatpush1.bf16.msra.mxu0 0
    %1194 = vmatprep.subr.bf16.mxu0 0
    %1195 = vmatpush1.bf16.msra.mxu0 0
    %1196 = vmatprep.subr.bf16.mxu0 0
    %1197 = vmatpush1.bf16.msra.mxu0 0
    %1198 = vmatprep.subr.bf16.mxu0 0
    %1199 = vmatpush1.bf16.msra.mxu0 0
    %1200 = vmatprep.subr.bf16.mxu0 0
    %1201 = vmatpush1.bf16.msra.mxu0 0
    %1202 = vmatprep.mubr.bf16.mxu0 0
    %1203 = vmatmul.mubr.bf16.gmra.mrb[0].mxu0 %v1128
    %v1204 = vpop.f32.mrb[0].mxu0
    %v1205 = vadd.f32 0.0, %v1204
    %v1206 = vpop.f32.mrb[0].mxu0
    %v1207 = vadd.f32 0.0, %v1206
    %v1208 = vpop.f32.mrb[0].mxu0
    %v1209 = vpop.f32.mrb[0].mxu0
    %1210 = vdwg.mxu0
    %v1211 = vadd.f32 %v1124, %v1164
    %v1212 = vadd.f32 %v1125, %v1166
    %v1213 = vadd.f32 %v1126, %v1205
    %v1214 = vadd.f32 %v1127, %v1207
    %v1215 = vxor.u32 %v1211, 2147483648
    %v1216 = vmul.f32 %v1215, 1.442695
    %v1217 = vpow.pop %v1216
    %v1218 = vadd.f32 %v1217, 1.0
    %v1219 = vrcp.pop %v1218
    %v1220 = vmul.f32 1.0, %v1219
    %v1221 = vxor.u32 %v1212, 2147483648
    %v1222 = vmul.f32 %v1221, 1.442695
    %v1223 = vpow.pop %v1222
    %v1224 = vadd.f32 %v1223, 1.0
    %v1225 = vrcp.pop %v1224
    %v1226 = vmul.f32 1.0, %v1225
    %v1227 = vtanh.pop %v1213
    %v1228 = vxor.u32 %v1214, 2147483648
    %v1229 = vmul.f32 %v1228, 1.442695
    %v1230 = vpow.pop %v1229
    %v1231 = vadd.f32 %v1230, 1.0
    %v1232 = vrcp.pop %v1231
    %v1233 = vmul.f32 1.0, %v1232
    %v1234 = vmul.f32 %v1226, %v1118
    %v1235 = vmul.f32 %v1220, %v1227
    %v1236 = vadd.f32 %v1234, %v1235
    %v1237 = vtanh.pop %v1236
    %v1238 = vmul.f32 %v1233, %v1237
    %s1239 = scalar_lea.vmem [#allocation2], 32
    %1240 = vst [vmem:[%s1239] sm:$0xff] %v1238
    %s1241 = scalar_lea.vmem [#allocation3], 160
    %v1242 = vld [vmem:[%s1241] sm:$0xff]
    %v1243 = vld [vmem:[%s1241 + $0x8] sm:$0xff]
    %v1244 = vld [vmem:[%s1241 + $0x10] sm:$0xff]
    %v1245 = vld [vmem:[%s1241 + $0x18] sm:$0xff]
    %v1246 = vpack.c.bf16 %v1238, %v1238
    %1247 = vmatprep.subr.bf16.mxu0 %v595
    %1248 = vmatpush1.bf16.msra.mxu0 %v594
    %1249 = vmatprep.subr.bf16.mxu0 %v599
    %1250 = vmatpush1.bf16.msra.mxu0 %v598
    %1251 = vmatprep.subr.bf16.mxu0 %v603
    %1252 = vmatpush1.bf16.msra.mxu0 %v602
    %1253 = vmatprep.subr.bf16.mxu0 %v607
    %1254 = vmatpush1.bf16.msra.mxu0 %v606
    %1255 = vmatprep.subr.bf16.mxu0 %v611
    %1256 = vmatpush1.bf16.msra.mxu0 %v610
    %1257 = vmatprep.subr.bf16.mxu0 %v615
    %1258 = vmatpush1.bf16.msra.mxu0 %v614
    %1259 = vmatprep.subr.bf16.mxu0 %v619
    %1260 = vmatpush1.bf16.msra.mxu0 %v618
    %1261 = vmatprep.subr.bf16.mxu0 %v623
    %1262 = vmatpush1.bf16.msra.mxu0 %v622
    %1263 = vmatprep.subr.bf16.mxu0 0
    %1264 = vmatpush1.bf16.msra.mxu0 0
    %1265 = vmatprep.subr.bf16.mxu0 0
    %1266 = vmatpush1.bf16.msra.mxu0 0
    %1267 = vmatprep.subr.bf16.mxu0 0
    %1268 = vmatpush1.bf16.msra.mxu0 0
    %1269 = vmatprep.subr.bf16.mxu0 0
    %1270 = vmatpush1.bf16.msra.mxu0 0
    %1271 = vmatprep.subr.bf16.mxu0 0
    %1272 = vmatpush1.bf16.msra.mxu0 0
    %1273 = vmatprep.subr.bf16.mxu0 0
    %1274 = vmatpush1.bf16.msra.mxu0 0
    %1275 = vmatprep.subr.bf16.mxu0 0
    %1276 = vmatpush1.bf16.msra.mxu0 0
    %1277 = vmatprep.subr.bf16.mxu0 0
    %1278 = vmatpush1.bf16.msra.mxu0 0
    %1279 = vmatprep.mubr.bf16.mxu0 0
    %1280 = vmatmul.mubr.bf16.gmra.mrb[0].mxu0 %v1246
    %v1281 = vpop.f32.mrb[0].mxu0
    %v1282 = vadd.f32 0.0, %v1281
    %v1283 = vpop.f32.mrb[0].mxu0
    %v1284 = vadd.f32 0.0, %v1283
    %v1285 = vpop.f32.mrb[0].mxu0
    %v1286 = vpop.f32.mrb[0].mxu0
    %1287 = vdwg.mxu0
    %1288 = vmatprep.subr.bf16.mxu0 %v597
    %1289 = vmatpush1.bf16.msra.mxu0 %v596
    %1290 = vmatprep.subr.bf16.mxu0 %v601
    %1291 = vmatpush1.bf16.msra.mxu0 %v600
    %1292 = vmatprep.subr.bf16.mxu0 %v605
    %1293 = vmatpush1.bf16.msra.mxu0 %v604
    %1294 = vmatprep.subr.bf16.mxu0 %v609
    %1295 = vmatpush1.bf16.msra.mxu0 %v608
    %1296 = vmatprep.subr.bf16.mxu0 %v613
    %1297 = vmatpush1.bf16.msra.mxu0 %v612
    %1298 = vmatprep.subr.bf16.mxu0 %v617
    %1299 = vmatpush1.bf16.msra.mxu0 %v616
    %1300 = vmatprep.subr.bf16.mxu0 %v621
    %1301 = vmatpush1.bf16.msra.mxu0 %v620
    %1302 = vmatprep.subr.bf16.mxu0 %v625
    %1303 = vmatpush1.bf16.msra.mxu0 %v624
    %1304 = vmatprep.subr.bf16.mxu0 0
    %1305 = vmatpush1.bf16.msra.mxu0 0
    %1306 = vmatprep.subr.bf16.mxu0 0
    %1307 = vmatpush1.bf16.msra.mxu0 0
    %1308 = vmatprep.subr.bf16.mxu0 0
    %1309 = vmatpush1.bf16.msra.mxu0 0
    %1310 = vmatprep.subr.bf16.mxu0 0
    %1311 = vmatpush1.bf16.msra.mxu0 0
    %1312 = vmatprep.subr.bf16.mxu0 0
    %1313 = vmatpush1.bf16.msra.mxu0 0
    %1314 = vmatprep.subr.bf16.mxu0 0
    %1315 = vmatpush1.bf16.msra.mxu0 0
    %1316 = vmatprep.subr.bf16.mxu0 0
    %1317 = vmatpush1.bf16.msra.mxu0 0
    %1318 = vmatprep.subr.bf16.mxu0 0
    %1319 = vmatpush1.bf16.msra.mxu0 0
    %1320 = vmatprep.mubr.bf16.mxu0 0
    %1321 = vmatmul.mubr.bf16.gmra.mrb[0].mxu0 %v1246
    %v1322 = vpop.f32.mrb[0].mxu0
    %v1323 = vadd.f32 0.0, %v1322
    %v1324 = vpop.f32.mrb[0].mxu0
    %v1325 = vadd.f32 0.0, %v1324
    %v1326 = vpop.f32.mrb[0].mxu0
    %v1327 = vpop.f32.mrb[0].mxu0
    %1328 = vdwg.mxu0
    %v1329 = vadd.f32 %v1242, %v1282
    %v1330 = vadd.f32 %v1243, %v1284
    %v1331 = vadd.f32 %v1244, %v1323
    %v1332 = vadd.f32 %v1245, %v1325
    %v1333 = vxor.u32 %v1329, 2147483648
    %v1334 = vmul.f32 %v1333, 1.442695
    %v1335 = vpow.pop %v1334
    %v1336 = vadd.f32 %v1335, 1.0
    %v1337 = vrcp.pop %v1336
    %v1338 = vmul.f32 1.0, %v1337
    %v1339 = vxor.u32 %v1330, 2147483648
    %v1340 = vmul.f32 %v1339, 1.442695
    %v1341 = vpow.pop %v1340
    %v1342 = vadd.f32 %v1341, 1.0
    %v1343 = vrcp.pop %v1342
    %v1344 = vmul.f32 1.0, %v1343
    %v1345 = vtanh.pop %v1331
    %v1346 = vxor.u32 %v1332, 2147483648
    %v1347 = vmul.f32 %v1346, 1.442695
    %v1348 = vpow.pop %v1347
    %v1349 = vadd.f32 %v1348, 1.0
    %v1350 = vrcp.pop %v1349
    %v1351 = vmul.f32 1.0, %v1350
    %v1352 = vmul.f32 %v1344, %v1236
    %v1353 = vmul.f32 %v1338, %v1345
    %v1354 = vadd.f32 %v1352, %v1353
    %v1355 = vtanh.pop %v1354
    %v1356 = vmul.f32 %v1351, %v1355
    %s1357 = scalar_lea.vmem [#allocation2], 40
    %1358 = vst [vmem:[%s1357] sm:$0xff] %v1356
    %s1359 = scalar_lea.vmem [#allocation3], 192
    %v1360 = vld [vmem:[%s1359] sm:$0xff]
    %v1361 = vld [vmem:[%s1359 + $0x8] sm:$0xff]
    %v1362 = vld [vmem:[%s1359 + $0x10] sm:$0xff]
    %v1363 = vld [vmem:[%s1359 + $0x18] sm:$0xff]
    %v1364 = vpack.c.bf16 %v1356, %v1356
    %1365 = vmatprep.subr.bf16.mxu0 %v595
    %1366 = vmatpush1.bf16.msra.mxu0 %v594
    %1367 = vmatprep.subr.bf16.mxu0 %v599
    %1368 = vmatpush1.bf16.msra.mxu0 %v598
    %1369 = vmatprep.subr.bf16.mxu0 %v603
    %1370 = vmatpush1.bf16.msra.mxu0 %v602
    %1371 = vmatprep.subr.bf16.mxu0 %v607
    %1372 = vmatpush1.bf16.msra.mxu0 %v606
    %1373 = vmatprep.subr.bf16.mxu0 %v611
    %1374 = vmatpush1.bf16.msra.mxu0 %v610
    %1375 = vmatprep.subr.bf16.mxu0 %v615
    %1376 = vmatpush1.bf16.msra.mxu0 %v614
    %1377 = vmatprep.subr.bf16.mxu0 %v619
    %1378 = vmatpush1.bf16.msra.mxu0 %v618
    %1379 = vmatprep.subr.bf16.mxu0 %v623
    %1380 = vmatpush1.bf16.msra.mxu0 %v622
    %1381 = vmatprep.subr.bf16.mxu0 0
    %1382 = vmatpush1.bf16.msra.mxu0 0
    %1383 = vmatprep.subr.bf16.mxu0 0
    %1384 = vmatpush1.bf16.msra.mxu0 0
    %1385 = vmatprep.subr.bf16.mxu0 0
    %1386 = vmatpush1.bf16.msra.mxu0 0
    %1387 = vmatprep.subr.bf16.mxu0 0
    %1388 = vmatpush1.bf16.msra.mxu0 0
    %1389 = vmatprep.subr.bf16.mxu0 0
    %1390 = vmatpush1.bf16.msra.mxu0 0
    %1391 = vmatprep.subr.bf16.mxu0 0
    %1392 = vmatpush1.bf16.msra.mxu0 0
    %1393 = vmatprep.subr.bf16.mxu0 0
    %1394 = vmatpush1.bf16.msra.mxu0 0
    %1395 = vmatprep.subr.bf16.mxu0 0
    %1396 = vmatpush1.bf16.msra.mxu0 0
    %1397 = vmatprep.mubr.bf16.mxu0 0
    %1398 = vmatmul.mubr.bf16.gmra.mrb[0].mxu0 %v1364
    %v1399 = vpop.f32.mrb[0].mxu0
    %v1400 = vadd.f32 0.0, %v1399
    %v1401 = vpop.f32.mrb[0].mxu0
    %v1402 = vadd.f32 0.0, %v1401
    %v1403 = vpop.f32.mrb[0].mxu0
    %v1404 = vpop.f32.mrb[0].mxu0
    %1405 = vdwg.mxu0
    %1406 = vmatprep.subr.bf16.mxu0 %v597
    %1407 = vmatpush1.bf16.msra.mxu0 %v596
    %1408 = vmatprep.subr.bf16.mxu0 %v601
    %1409 = vmatpush1.bf16.msra.mxu0 %v600
    %1410 = vmatprep.subr.bf16.mxu0 %v605
    %1411 = vmatpush1.bf16.msra.mxu0 %v604
    %1412 = vmatprep.subr.bf16.mxu0 %v609
    %1413 = vmatpush1.bf16.msra.mxu0 %v608
    %1414 = vmatprep.subr.bf16.mxu0 %v613
    %1415 = vmatpush1.bf16.msra.mxu0 %v612
    %1416 = vmatprep.subr.bf16.mxu0 %v617
    %1417 = vmatpush1.bf16.msra.mxu0 %v616
    %1418 = vmatprep.subr.bf16.mxu0 %v621
    %1419 = vmatpush1.bf16.msra.mxu0 %v620
    %1420 = vmatprep.subr.bf16.mxu0 %v625
    %1421 = vmatpush1.bf16.msra.mxu0 %v624
    %1422 = vmatprep.subr.bf16.mxu0 0
    %1423 = vmatpush1.bf16.msra.mxu0 0
    %1424 = vmatprep.subr.bf16.mxu0 0
    %1425 = vmatpush1.bf16.msra.mxu0 0
    %1426 = vmatprep.subr.bf16.mxu0 0
    %1427 = vmatpush1.bf16.msra.mxu0 0
    %1428 = vmatprep.subr.bf16.mxu0 0
    %1429 = vmatpush1.bf16.msra.mxu0 0
    %1430 = vmatprep.subr.bf16.mxu0 0
    %1431 = vmatpush1.bf16.msra.mxu0 0
    %1432 = vmatprep.subr.bf16.mxu0 0
    %1433 = vmatpush1.bf16.msra.mxu0 0
    %1434 = vmatprep.subr.bf16.mxu0 0
    %1435 = vmatpush1.bf16.msra.mxu0 0
    %1436 = vmatprep.subr.bf16.mxu0 0
    %1437 = vmatpush1.bf16.msra.mxu0 0
    %1438 = vmatprep.mubr.bf16.mxu0 0
    %1439 = vmatmul.mubr.bf16.gmra.mrb[0].mxu0 %v1364
    %v1440 = vpop.f32.mrb[0].mxu0
    %v1441 = vadd.f32 0.0, %v1440
    %v1442 = vpop.f32.mrb[0].mxu0
    %v1443 = vadd.f32 0.0, %v1442
    %v1444 = vpop.f32.mrb[0].mxu0
    %v1445 = vpop.f32.mrb[0].mxu0
    %1446 = vdwg.mxu0
    %v1447 = vadd.f32 %v1360, %v1400
    %v1448 = vadd.f32 %v1361, %v1402
    %v1449 = vadd.f32 %v1362, %v1441
    %v1450 = vadd.f32 %v1363, %v1443
    %v1451 = vxor.u32 %v1447, 2147483648
    %v1452 = vmul.f32 %v1451, 1.442695
    %v1453 = vpow.pop %v1452
    %v1454 = vadd.f32 %v1453, 1.0
    %v1455 = vrcp.pop %v1454
    %v1456 = vmul.f32 1.0, %v1455
    %v1457 = vxor.u32 %v1448, 2147483648
    %v1458 = vmul.f32 %v1457, 1.442695
    %v1459 = vpow.pop %v1458
    %v1460 = vadd.f32 %v1459, 1.0
    %v1461 = vrcp.pop %v1460
    %v1462 = vmul.f32 1.0, %v1461
    %v1463 = vtanh.pop %v1449
    %v1464 = vxor.u32 %v1450, 2147483648
    %v1465 = vmul.f32 %v1464, 1.442695
    %v1466 = vpow.pop %v1465
    %v1467 = vadd.f32 %v1466, 1.0
    %v1468 = vrcp.pop %v1467
    %v1469 = vmul.f32 1.0, %v1468
    %v1470 = vmul.f32 %v1462, %v1354
    %v1471 = vmul.f32 %v1456, %v1463
    %v1472 = vadd.f32 %v1470, %v1471
    %v1473 = vtanh.pop %v1472
    %v1474 = vmul.f32 %v1469, %v1473
    %s1475 = scalar_lea.vmem [#allocation2], 48
    %1476 = vst [vmem:[%s1475] sm:$0xff] %v1474
    %s1477 = scalar_lea.vmem [#allocation3], 224
    %v1478 = vld [vmem:[%s1477] sm:$0xff]
    %v1479 = vld [vmem:[%s1477 + $0x8] sm:$0xff]
    %v1480 = vld [vmem:[%s1477 + $0x10] sm:$0xff]
    %v1481 = vld [vmem:[%s1477 + $0x18] sm:$0xff]
    %v1482 = vpack.c.bf16 %v1474, %v1474
    %1483 = vmatprep.subr.bf16.mxu0 %v595
    %1484 = vmatpush1.bf16.msra.mxu0 %v594
    %1485 = vmatprep.subr.bf16.mxu0 %v599
    %1486 = vmatpush1.bf16.msra.mxu0 %v598
    %1487 = vmatprep.subr.bf16.mxu0 %v603
    %1488 = vmatpush1.bf16.msra.mxu0 %v602
    %1489 = vmatprep.subr.bf16.mxu0 %v607
    %1490 = vmatpush1.bf16.msra.mxu0 %v606
    %1491 = vmatprep.subr.bf16.mxu0 %v611
    %1492 = vmatpush1.bf16.msra.mxu0 %v610
    %1493 = vmatprep.subr.bf16.mxu0 %v615
    %1494 = vmatpush1.bf16.msra.mxu0 %v614
    %1495 = vmatprep.subr.bf16.mxu0 %v619
    %1496 = vmatpush1.bf16.msra.mxu0 %v618
    %1497 = vmatprep.subr.bf16.mxu0 %v623
    %1498 = vmatpush1.bf16.msra.mxu0 %v622
    %1499 = vmatprep.subr.bf16.mxu0 0
    %1500 = vmatpush1.bf16.msra.mxu0 0
    %1501 = vmatprep.subr.bf16.mxu0 0
    %1502 = vmatpush1.bf16.msra.mxu0 0
    %1503 = vmatprep.subr.bf16.mxu0 0
    %1504 = vmatpush1.bf16.msra.mxu0 0
    %1505 = vmatprep.subr.bf16.mxu0 0
    %1506 = vmatpush1.bf16.msra.mxu0 0
    %1507 = vmatprep.subr.bf16.mxu0 0
    %1508 = vmatpush1.bf16.msra.mxu0 0
    %1509 = vmatprep.subr.bf16.mxu0 0
    %1510 = vmatpush1.bf16.msra.mxu0 0
    %1511 = vmatprep.subr.bf16.mxu0 0
    %1512 = vmatpush1.bf16.msra.mxu0 0
    %1513 = vmatprep.subr.bf16.mxu0 0
    %1514 = vmatpush1.bf16.msra.mxu0 0
    %1515 = vmatprep.mubr.bf16.mxu0 0
    %1516 = vmatmul.mubr.bf16.gmra.mrb[0].mxu0 %v1482
    %v1517 = vpop.f32.mrb[0].mxu0
    %v1518 = vadd.f32 0.0, %v1517
    %v1519 = vpop.f32.mrb[0].mxu0
    %v1520 = vadd.f32 0.0, %v1519
    %v1521 = vpop.f32.mrb[0].mxu0
    %v1522 = vpop.f32.mrb[0].mxu0
    %1523 = vdwg.mxu0
    %1524 = vmatprep.subr.bf16.mxu0 %v597
    %1525 = vmatpush1.bf16.msra.mxu0 %v596
    %1526 = vmatprep.subr.bf16.mxu0 %v601
    %1527 = vmatpush1.bf16.msra.mxu0 %v600
    %1528 = vmatprep.subr.bf16.mxu0 %v605
    %1529 = vmatpush1.bf16.msra.mxu0 %v604
    %1530 = vmatprep.subr.bf16.mxu0 %v609
    %1531 = vmatpush1.bf16.msra.mxu0 %v608
    %1532 = vmatprep.subr.bf16.mxu0 %v613
    %1533 = vmatpush1.bf16.msra.mxu0 %v612
    %1534 = vmatprep.subr.bf16.mxu0 %v617
    %1535 = vmatpush1.bf16.msra.mxu0 %v616
    %1536 = vmatprep.subr.bf16.mxu0 %v621
    %1537 = vmatpush1.bf16.msra.mxu0 %v620
    %1538 = vmatprep.subr.bf16.mxu0 %v625
    %1539 = vmatpush1.bf16.msra.mxu0 %v624
    %1540 = vmatprep.subr.bf16.mxu0 0
    %1541 = vmatpush1.bf16.msra.mxu0 0
    %1542 = vmatprep.subr.bf16.mxu0 0
    %1543 = vmatpush1.bf16.msra.mxu0 0
    %1544 = vmatprep.subr.bf16.mxu0 0
    %1545 = vmatpush1.bf16.msra.mxu0 0
    %1546 = vmatprep.subr.bf16.mxu0 0
    %1547 = vmatpush1.bf16.msra.mxu0 0
    %1548 = vmatprep.subr.bf16.mxu0 0
    %1549 = vmatpush1.bf16.msra.mxu0 0
    %1550 = vmatprep.subr.bf16.mxu0 0
    %1551 = vmatpush1.bf16.msra.mxu0 0
    %1552 = vmatprep.subr.bf16.mxu0 0
    %1553 = vmatpush1.bf16.msra.mxu0 0
    %1554 = vmatprep.subr.bf16.mxu0 0
    %1555 = vmatpush1.bf16.msra.mxu0 0
    %1556 = vmatprep.mubr.bf16.mxu0 0
    %1557 = vmatmul.mubr.bf16.gmra.mrb[0].mxu0 %v1482
    %v1558 = vpop.f32.mrb[0].mxu0
    %v1559 = vadd.f32 0.0, %v1558
    %v1560 = vpop.f32.mrb[0].mxu0
    %v1561 = vadd.f32 0.0, %v1560
    %v1562 = vpop.f32.mrb[0].mxu0
    %v1563 = vpop.f32.mrb[0].mxu0
    %1564 = vdwg.mxu0
    %v1565 = vadd.f32 %v1478, %v1518
    %v1566 = vadd.f32 %v1479, %v1520
    %v1567 = vadd.f32 %v1480, %v1559
    %v1568 = vadd.f32 %v1481, %v1561
    %v1569 = vxor.u32 %v1565, 2147483648
    %v1570 = vmul.f32 %v1569, 1.442695
    %v1571 = vpow.pop %v1570
    %v1572 = vadd.f32 %v1571, 1.0
    %v1573 = vrcp.pop %v1572
    %v1574 = vmul.f32 1.0, %v1573
    %v1575 = vxor.u32 %v1566, 2147483648
    %v1576 = vmul.f32 %v1575, 1.442695
    %v1577 = vpow.pop %v1576
    %v1578 = vadd.f32 %v1577, 1.0
    %v1579 = vrcp.pop %v1578
    %v1580 = vmul.f32 1.0, %v1579
    %v1581 = vtanh.pop %v1567
    %v1582 = vxor.u32 %v1568, 2147483648
    %v1583 = vmul.f32 %v1582, 1.442695
    %v1584 = vpow.pop %v1583
    %v1585 = vadd.f32 %v1584, 1.0
    %v1586 = vrcp.pop %v1585
    %v1587 = vmul.f32 1.0, %v1586
    %v1588 = vmul.f32 %v1580, %v1472
    %v1589 = vmul.f32 %v1574, %v1581
    %v1590 = vadd.f32 %v1588, %v1589
    %v1591 = vtanh.pop %v1590
    %v1592 = vmul.f32 %v1587, %v1591
    %s1593 = scalar_lea.vmem [#allocation2], 56
    %1594 = vst [vmem:[%s1593] sm:$0xff] %v1592
    %s1595 = scalar_lea.vmem [#allocation4], 256
    %v1596 = vld [vmem:[%s1595] sm:$0xff]
    %v1597 = vld [vmem:[%s1595 + $0x8] sm:$0xff]
    %v1598 = vld [vmem:[%s1595 + $0x10] sm:$0xff]
    %v1599 = vld [vmem:[%s1595 + $0x18] sm:$0xff]
    %v1600 = vld [vmem:[%s1595 + $0x20] sm:$0xff]
    %v1601 = vld [vmem:[%s1595 + $0x28] sm:$0xff]
    %v1602 = vld [vmem:[%s1595 + $0x30] sm:$0xff]
    %v1603 = vld [vmem:[%s1595 + $0x38] sm:$0xff]
    %v1604 = vld [vmem:[%s1595 + $0x40] sm:$0xff]
    %v1605 = vld [vmem:[%s1595 + $0x48] sm:$0xff]
    %v1606 = vld [vmem:[%s1595 + $0x50] sm:$0xff]
    %v1607 = vld [vmem:[%s1595 + $0x58] sm:$0xff]
    %v1608 = vld [vmem:[%s1595 + $0x60] sm:$0xff]
    %v1609 = vld [vmem:[%s1595 + $0x68] sm:$0xff]
    %v1610 = vld [vmem:[%s1595 + $0x70] sm:$0xff]
    %v1611 = vld [vmem:[%s1595 + $0x78] sm:$0xff]
    %v1612 = vld [vmem:[%s1595 + $0x80] sm:$0xff]
    %v1613 = vld [vmem:[%s1595 + $0x88] sm:$0xff]
    %v1614 = vld [vmem:[%s1595 + $0x90] sm:$0xff]
    %v1615 = vld [vmem:[%s1595 + $0x98] sm:$0xff]
    %v1616 = vld [vmem:[%s1595 + $0xa0] sm:$0xff]
    %v1617 = vld [vmem:[%s1595 + $0xa8] sm:$0xff]
    %v1618 = vld [vmem:[%s1595 + $0xb0] sm:$0xff]
    %v1619 = vld [vmem:[%s1595 + $0xb8] sm:$0xff]
    %v1620 = vld [vmem:[%s1595 + $0xc0] sm:$0xff]
    %v1621 = vld [vmem:[%s1595 + $0xc8] sm:$0xff]
    %v1622 = vld [vmem:[%s1595 + $0xd0] sm:$0xff]
    %v1623 = vld [vmem:[%s1595 + $0xd8] sm:$0xff]
    %v1624 = vld [vmem:[%s1595 + $0xe0] sm:$0xff]
    %v1625 = vld [vmem:[%s1595 + $0xe8] sm:$0xff]
    %v1626 = vld [vmem:[%s1595 + $0xf0] sm:$0xff]
    %v1627 = vld [vmem:[%s1595 + $0xf8] sm:$0xff]
    %s1628 = scalar_lea.vmem [#allocation6], 256
    %v1629 = vld [vmem:[%s1628] sm:$0xff]
    %v1630 = vld [vmem:[%s1628 + $0x8] sm:$0xff]
    %v1631 = vld [vmem:[%s1628 + $0x10] sm:$0xff]
    %v1632 = vld [vmem:[%s1628 + $0x18] sm:$0xff]
    %v1633 = vld [vmem:[%s1628 + $0x20] sm:$0xff]
    %v1634 = vld [vmem:[%s1628 + $0x28] sm:$0xff]
    %v1635 = vld [vmem:[%s1628 + $0x30] sm:$0xff]
    %v1636 = vld [vmem:[%s1628 + $0x38] sm:$0xff]
    %v1637 = vld [vmem:[%s1628 + $0x40] sm:$0xff]
    %v1638 = vld [vmem:[%s1628 + $0x48] sm:$0xff]
    %v1639 = vld [vmem:[%s1628 + $0x50] sm:$0xff]
    %v1640 = vld [vmem:[%s1628 + $0x58] sm:$0xff]
    %v1641 = vld [vmem:[%s1628 + $0x60] sm:$0xff]
    %v1642 = vld [vmem:[%s1628 + $0x68] sm:$0xff]
    %v1643 = vld [vmem:[%s1628 + $0x70] sm:$0xff]
    %v1644 = vld [vmem:[%s1628 + $0x78] sm:$0xff]
    %v1645 = vld [vmem:[%s1628 + $0x80] sm:$0xff]
    %v1646 = vld [vmem:[%s1628 + $0x88] sm:$0xff]
    %v1647 = vld [vmem:[%s1628 + $0x90] sm:$0xff]
    %v1648 = vld [vmem:[%s1628 + $0x98] sm:$0xff]
    %v1649 = vld [vmem:[%s1628 + $0xa0] sm:$0xff]
    %v1650 = vld [vmem:[%s1628 + $0xa8] sm:$0xff]
    %v1651 = vld [vmem:[%s1628 + $0xb0] sm:$0xff]
    %v1652 = vld [vmem:[%s1628 + $0xb8] sm:$0xff]
    %v1653 = vld [vmem:[%s1628 + $0xc0] sm:$0xff]
    %v1654 = vld [vmem:[%s1628 + $0xc8] sm:$0xff]
    %v1655 = vld [vmem:[%s1628 + $0xd0] sm:$0xff]
    %v1656 = vld [vmem:[%s1628 + $0xd8] sm:$0xff]
    %v1657 = vld [vmem:[%s1628 + $0xe0] sm:$0xff]
    %v1658 = vld [vmem:[%s1628 + $0xe8] sm:$0xff]
    %v1659 = vld [vmem:[%s1628 + $0xf0] sm:$0xff]
    %v1660 = vld [vmem:[%s1628 + $0xf8] sm:$0xff]
    %s1661 = scalar_lea.vmem %s3, 4
    %v1662 = vld [vmem:[%s1661] sm:$0xf]
    %v1663 = vld [vmem:[#allocation2] sm:$0xff]
    %v1664 = vld [vmem:[#allocation2 + $0x8] sm:$0xff]
    %v1665 = vld [vmem:[#allocation2 + $0x10] sm:$0xff]
    %v1666 = vld [vmem:[#allocation2 + $0x18] sm:$0xff]
    %v1667 = vld [vmem:[#allocation2 + $0x20] sm:$0xff]
    %v1668 = vld [vmem:[#allocation2 + $0x28] sm:$0xff]
    %v1669 = vld [vmem:[#allocation2 + $0x30] sm:$0xff]
    %v1670 = vld [vmem:[#allocation2 + $0x38] sm:$0xff]
    %v1671 = vpack.c.bf16 %v1664, %v1663
    %v1672 = vpack.c.bf16 %v1666, %v1665
    %v1673 = vpack.c.bf16 %v1668, %v1667
    %v1674 = vpack.c.bf16 %v1670, %v1669
    %v1676 = vlaneseq
    %v1677 = vshrl.u32 %v1676, 7
    %v1678 = vsub.s32 0, %v1677
    %v1679 = vrot.slane %v1662, %v1678
    %v1680 = vlaneseq
    %v1681 = vshrl.u32 %v1680, 7
    %v1682 = vsub.s32 1, %v1681
    %v1683 = vrot.slane %v1662, %v1682
    %v1684 = vlaneseq
    %v1685 = vshrl.u32 %v1684, 7
    %v1686 = vsub.s32 2, %v1685
    %v1687 = vrot.slane %v1662, %v1686
    %v1688 = vlaneseq
    %v1689 = vshrl.u32 %v1688, 7
    %v1690 = vsub.s32 3, %v1689
    %v1691 = vrot.slane %v1662, %v1690
    %v1728 = vunpack.c.l.b16 %v1596
    %v1729 = vunpack.c.h.b16 %v1596
    %v1730 = vunpack.c.l.b16 %v1597
    %v1731 = vunpack.c.h.b16 %v1597
    %v1732 = vunpack.c.l.b16 %v1598
    %v1733 = vunpack.c.h.b16 %v1598
    %v1734 = vunpack.c.l.b16 %v1599
    %v1735 = vunpack.c.h.b16 %v1599
    %v1736 = vunpack.c.l.b16 %v1600
    %v1737 = vunpack.c.h.b16 %v1600
    %v1738 = vunpack.c.l.b16 %v1601
    %v1739 = vunpack.c.h.b16 %v1601
    %v1740 = vunpack.c.l.b16 %v1602
    %v1741 = vunpack.c.h.b16 %v1602
    %v1742 = vunpack.c.l.b16 %v1603
    %v1743 = vunpack.c.h.b16 %v1603
    %v1744 = vunpack.c.l.b16 %v1604
    %v1745 = vunpack.c.h.b16 %v1604
    %v1746 = vunpack.c.l.b16 %v1605
    %v1747 = vunpack.c.h.b16 %v1605
    %v1748 = vunpack.c.l.b16 %v1606
    %v1749 = vunpack.c.h.b16 %v1606
    %v1750 = vunpack.c.l.b16 %v1607
    %v1751 = vunpack.c.h.b16 %v1607
    %v1752 = vunpack.c.l.b16 %v1608
    %v1753 = vunpack.c.h.b16 %v1608
    %v1754 = vunpack.c.l.b16 %v1609
    %v1755 = vunpack.c.h.b16 %v1609
    %v1756 = vunpack.c.l.b16 %v1610
    %v1757 = vunpack.c.h.b16 %v1610
    %v1758 = vunpack.c.l.b16 %v1611
    %v1759 = vunpack.c.h.b16 %v1611
    %v1760 = vunpack.c.l.b16 %v1612
    %v1761 = vunpack.c.h.b16 %v1612
    %v1762 = vunpack.c.l.b16 %v1613
    %v1763 = vunpack.c.h.b16 %v1613
    %v1764 = vunpack.c.l.b16 %v1614
    %v1765 = vunpack.c.h.b16 %v1614
    %v1766 = vunpack.c.l.b16 %v1615
    %v1767 = vunpack.c.h.b16 %v1615
    %v1768 = vunpack.c.l.b16 %v1616
    %v1769 = vunpack.c.h.b16 %v1616
    %v1770 = vunpack.c.l.b16 %v1617
    %v1771 = vunpack.c.h.b16 %v1617
    %v1772 = vunpack.c.l.b16 %v1618
    %v1773 = vunpack.c.h.b16 %v1618
    %v1774 = vunpack.c.l.b16 %v1619
    %v1775 = vunpack.c.h.b16 %v1619
    %v1776 = vunpack.c.l.b16 %v1620
    %v1777 = vunpack.c.h.b16 %v1620
    %v1778 = vunpack.c.l.b16 %v1621
    %v1779 = vunpack.c.h.b16 %v1621
    %v1780 = vunpack.c.l.b16 %v1622
    %v1781 = vunpack.c.h.b16 %v1622
    %v1782 = vunpack.c.l.b16 %v1623
    %v1783 = vunpack.c.h.b16 %v1623
    %v1784 = vunpack.c.l.b16 %v1624
    %v1785 = vunpack.c.h.b16 %v1624
    %v1786 = vunpack.c.l.b16 %v1625
    %v1787 = vunpack.c.h.b16 %v1625
    %v1788 = vunpack.c.l.b16 %v1626
    %v1789 = vunpack.c.h.b16 %v1626
    %v1790 = vunpack.c.l.b16 %v1627
    %v1791 = vunpack.c.h.b16 %v1627
    %v1792 = vpack.c.b16 %v1732, %v1728
    %v1793 = vpack.c.b16 %v1733, %v1729
    %v1794 = vpack.c.b16 %v1734, %v1730
    %v1795 = vpack.c.b16 %v1735, %v1731
    %v1796 = vpack.c.b16 %v1740, %v1736
    %v1797 = vpack.c.b16 %v1741, %v1737
    %v1798 = vpack.c.b16 %v1742, %v1738
    %v1799 = vpack.c.b16 %v1743, %v1739
    %v1800 = vpack.c.b16 %v1748, %v1744
    %v1801 = vpack.c.b16 %v1749, %v1745
    %v1802 = vpack.c.b16 %v1750, %v1746
    %v1803 = vpack.c.b16 %v1751, %v1747
    %v1804 = vpack.c.b16 %v1756, %v1752
    %v1805 = vpack.c.b16 %v1757, %v1753
    %v1806 = vpack.c.b16 %v1758, %v1754
    %v1807 = vpack.c.b16 %v1759, %v1755
    %v1808 = vpack.c.b16 %v1764, %v1760
    %v1809 = vpack.c.b16 %v1765, %v1761
    %v1810 = vpack.c.b16 %v1766, %v1762
    %v1811 = vpack.c.b16 %v1767, %v1763
    %v1812 = vpack.c.b16 %v1772, %v1768
    %v1813 = vpack.c.b16 %v1773, %v1769
    %v1814 = vpack.c.b16 %v1774, %v1770
    %v1815 = vpack.c.b16 %v1775, %v1771
    %v1816 = vpack.c.b16 %v1780, %v1776
    %v1817 = vpack.c.b16 %v1781, %v1777
    %v1818 = vpack.c.b16 %v1782, %v1778
    %v1819 = vpack.c.b16 %v1783, %v1779
    %v1820 = vpack.c.b16 %v1788, %v1784
    %v1821 = vpack.c.b16 %v1789, %v1785
    %v1822 = vpack.c.b16 %v1790, %v1786
    %v1823 = vpack.c.b16 %v1791, %v1787
    %1856 = vmatprep.subr.bf16.mxu0 %v1793
    %1857 = vmatpush1.bf16.msra.mxu0 %v1792
    %1858 = vmatprep.subr.bf16.mxu0 %v1797
    %1859 = vmatpush1.bf16.msra.mxu0 %v1796
    %1860 = vmatprep.subr.bf16.mxu0 %v1801
    %1861 = vmatpush1.bf16.msra.mxu0 %v1800
    %1862 = vmatprep.subr.bf16.mxu0 %v1805
    %1863 = vmatpush1.bf16.msra.mxu0 %v1804
    %1864 = vmatprep.subr.bf16.mxu0 %v1809
    %1865 = vmatpush1.bf16.msra.mxu0 %v1808
    %1866 = vmatprep.subr.bf16.mxu0 %v1813
    %1867 = vmatpush1.bf16.msra.mxu0 %v1812
    %1868 = vmatprep.subr.bf16.mxu0 %v1817
    %1869 = vmatpush1.bf16.msra.mxu0 %v1816
    %1870 = vmatprep.subr.bf16.mxu0 %v1821
    %1871 = vmatpush1.bf16.msra.mxu0 %v1820
    %1872 = vmatprep.subr.bf16.mxu0 0
    %1873 = vmatpush1.bf16.msra.mxu0 0
    %1874 = vmatprep.subr.bf16.mxu0 0
    %1875 = vmatpush1.bf16.msra.mxu0 0
    %1876 = vmatprep.subr.bf16.mxu0 0
    %1877 = vmatpush1.bf16.msra.mxu0 0
    %1878 = vmatprep.subr.bf16.mxu0 0
    %1879 = vmatpush1.bf16.msra.mxu0 0
    %1880 = vmatprep.subr.bf16.mxu0 0
    %1881 = vmatpush1.bf16.msra.mxu0 0
    %1882 = vmatprep.subr.bf16.mxu0 0
    %1883 = vmatpush1.bf16.msra.mxu0 0
    %1884 = vmatprep.subr.bf16.mxu0 0
    %1885 = vmatpush1.bf16.msra.mxu0 0
    %1886 = vmatprep.subr.bf16.mxu0 0
    %1887 = vmatpush1.bf16.msra.mxu0 0
    %1888 = vmatprep.mubr.bf16.mxu0 0
    %1889 = vmatmul.mubr.bf16.gmra.mrb[0].mxu0 %v1671
    %v1890 = vpop.f32.mrb[0].mxu0
    %v1891 = vadd.f32 %v1679, %v1890
    %v1892 = vpop.f32.mrb[0].mxu0
    %v1893 = vadd.f32 %v1683, %v1892
    %v1894 = vpop.f32.mrb[0].mxu0
    %v1895 = vadd.f32 %v1679, %v1894
    %v1896 = vpop.f32.mrb[0].mxu0
    %v1897 = vadd.f32 %v1683, %v1896
    %1898 = vmatprep.mubr.bf16.mxu0 0
    %1899 = vmatmul.mubr.bf16.gmra.mrb[0].mxu0 %v1672
    %v1900 = vpop.f32.mrb[0].mxu0
    %v1901 = vadd.f32 %v1679, %v1900
    %v1902 = vpop.f32.mrb[0].mxu0
    %v1903 = vadd.f32 %v1683, %v1902
    %v1904 = vpop.f32.mrb[0].mxu0
    %v1905 = vadd.f32 %v1679, %v1904
    %v1906 = vpop.f32.mrb[0].mxu0
    %v1907 = vadd.f32 %v1683, %v1906
    %1908 = vmatprep.mubr.bf16.mxu0 0
    %1909 = vmatmul.mubr.bf16.gmra.mrb[0].mxu0 %v1673
    %v1910 = vpop.f32.mrb[0].mxu0
    %v1911 = vadd.f32 %v1679, %v1910
    %v1912 = vpop.f32.mrb[0].mxu0
    %v1913 = vadd.f32 %v1683, %v1912
    %v1914 = vpop.f32.mrb[0].mxu0
    %v1915 = vadd.f32 %v1679, %v1914
    %v1916 = vpop.f32.mrb[0].mxu0
    %v1917 = vadd.f32 %v1683, %v1916
    %1918 = vmatprep.mubr.bf16.mxu0 0
    %1919 = vmatmul.mubr.bf16.gmra.mrb[0].mxu0 %v1674
    %v1920 = vpop.f32.mrb[0].mxu0
    %v1921 = vadd.f32 %v1679, %v1920
    %v1922 = vpop.f32.mrb[0].mxu0
    %v1923 = vadd.f32 %v1683, %v1922
    %v1924 = vpop.f32.mrb[0].mxu0
    %v1925 = vadd.f32 %v1679, %v1924
    %v1926 = vpop.f32.mrb[0].mxu0
    %v1927 = vadd.f32 %v1683, %v1926
    %1928 = vdwg.mxu0
    %1929 = vmatprep.subr.bf16.mxu0 %v1795
    %1930 = vmatpush1.bf16.msra.mxu0 %v1794
    %1931 = vmatprep.subr.bf16.mxu0 %v1799
    %1932 = vmatpush1.bf16.msra.mxu0 %v1798
    %1933 = vmatprep.subr.bf16.mxu0 %v1803
    %1934 = vmatpush1.bf16.msra.mxu0 %v1802
    %1935 = vmatprep.subr.bf16.mxu0 %v1807
    %1936 = vmatpush1.bf16.msra.mxu0 %v1806
    %1937 = vmatprep.subr.bf16.mxu0 %v1811
    %1938 = vmatpush1.bf16.msra.mxu0 %v1810
    %1939 = vmatprep.subr.bf16.mxu0 %v1815
    %1940 = vmatpush1.bf16.msra.mxu0 %v1814
    %1941 = vmatprep.subr.bf16.mxu0 %v1819
    %1942 = vmatpush1.bf16.msra.mxu0 %v1818
    %1943 = vmatprep.subr.bf16.mxu0 %v1823
    %1944 = vmatpush1.bf16.msra.mxu0 %v1822
    %1945 = vmatprep.subr.bf16.mxu0 0
    %1946 = vmatpush1.bf16.msra.mxu0 0
    %1947 = vmatprep.subr.bf16.mxu0 0
    %1948 = vmatpush1.bf16.msra.mxu0 0
    %1949 = vmatprep.subr.bf16.mxu0 0
    %1950 = vmatpush1.bf16.msra.mxu0 0
    %1951 = vmatprep.subr.bf16.mxu0 0
    %1952 = vmatpush1.bf16.msra.mxu0 0
    %1953 = vmatprep.subr.bf16.mxu0 0
    %1954 = vmatpush1.bf16.msra.mxu0 0
    %1955 = vmatprep.subr.bf16.mxu0 0
    %1956 = vmatpush1.bf16.msra.mxu0 0
    %1957 = vmatprep.subr.bf16.mxu0 0
    %1958 = vmatpush1.bf16.msra.mxu0 0
    %1959 = vmatprep.subr.bf16.mxu0 0
    %1960 = vmatpush1.bf16.msra.mxu0 0
    %1961 = vmatprep.mubr.bf16.mxu0 0
    %1962 = vmatmul.mubr.bf16.gmra.mrb[0].mxu0 %v1671
    %v1963 = vpop.f32.mrb[0].mxu0
    %v1964 = vadd.f32 %v1687, %v1963
    %v1965 = vpop.f32.mrb[0].mxu0
    %v1966 = vadd.f32 %v1691, %v1965
    %v1967 = vpop.f32.mrb[0].mxu0
    %v1968 = vadd.f32 %v1687, %v1967
    %v1969 = vpop.f32.mrb[0].mxu0
    %v1970 = vadd.f32 %v1691, %v1969
    %1971 = vmatprep.mubr.bf16.mxu0 0
    %1972 = vmatmul.mubr.bf16.gmra.mrb[0].mxu0 %v1672
    %v1973 = vpop.f32.mrb[0].mxu0
    %v1974 = vadd.f32 %v1687, %v1973
    %v1975 = vpop.f32.mrb[0].mxu0
    %v1976 = vadd.f32 %v1691, %v1975
    %v1977 = vpop.f32.mrb[0].mxu0
    %v1978 = vadd.f32 %v1687, %v1977
    %v1979 = vpop.f32.mrb[0].mxu0
    %v1980 = vadd.f32 %v1691, %v1979
    %1981 = vmatprep.mubr.bf16.mxu0 0
    %1982 = vmatmul.mubr.bf16.gmra.mrb[0].mxu0 %v1673
    %v1983 = vpop.f32.mrb[0].mxu0
    %v1984 = vadd.f32 %v1687, %v1983
    %v1985 = vpop.f32.mrb[0].mxu0
    %v1986 = vadd.f32 %v1691, %v1985
    %v1987 = vpop.f32.mrb[0].mxu0
    %v1988 = vadd.f32 %v1687, %v1987
    %v1989 = vpop.f32.mrb[0].mxu0
    %v1990 = vadd.f32 %v1691, %v1989
    %1991 = vmatprep.mubr.bf16.mxu0 0
    %1992 = vmatmul.mubr.bf16.gmra.mrb[0].mxu0 %v1674
    %v1993 = vpop.f32.mrb[0].mxu0
    %v1994 = vadd.f32 %v1687, %v1993
    %v1995 = vpop.f32.mrb[0].mxu0
    %v1996 = vadd.f32 %v1691, %v1995
    %v1997 = vpop.f32.mrb[0].mxu0
    %v1998 = vadd.f32 %v1687, %v1997
    %v1999 = vpop.f32.mrb[0].mxu0
    %v2000 = vadd.f32 %v1691, %v1999
    %2001 = vdwg.mxu0
    %2002 = vst [vmem:[#allocation3] sm:$0xff] %v1891
    %2003 = vst [vmem:[#allocation3 + $0x8] sm:$0xff] %v1893
    %2004 = vst [vmem:[#allocation3 + $0x10] sm:$0xff] %v1964
    %2005 = vst [vmem:[#allocation3 + $0x18] sm:$0xff] %v1966
    %2006 = vst [vmem:[#allocation3 + $0x20] sm:$0xff] %v1895
    %2007 = vst [vmem:[#allocation3 + $0x28] sm:$0xff] %v1897
    %2008 = vst [vmem:[#allocation3 + $0x30] sm:$0xff] %v1968
    %2009 = vst [vmem:[#allocation3 + $0x38] sm:$0xff] %v1970
    %2010 = vst [vmem:[#allocation3 + $0x40] sm:$0xff] %v1901
    %2011 = vst [vmem:[#allocation3 + $0x48] sm:$0xff] %v1903
    %2012 = vst [vmem:[#allocation3 + $0x50] sm:$0xff] %v1974
    %2013 = vst [vmem:[#allocation3 + $0x58] sm:$0xff] %v1976
    %2014 = vst [vmem:[#allocation3 + $0x60] sm:$0xff] %v1905
    %2015 = vst [vmem:[#allocation3 + $0x68] sm:$0xff] %v1907
    %2016 = vst [vmem:[#allocation3 + $0x70] sm:$0xff] %v1978
    %2017 = vst [vmem:[#allocation3 + $0x78] sm:$0xff] %v1980
    %2018 = vst [vmem:[#allocation3 + $0x80] sm:$0xff] %v1911
    %2019 = vst [vmem:[#allocation3 + $0x88] sm:$0xff] %v1913
    %2020 = vst [vmem:[#allocation3 + $0x90] sm:$0xff] %v1984
    %2021 = vst [vmem:[#allocation3 + $0x98] sm:$0xff] %v1986
    %2022 = vst [vmem:[#allocation3 + $0xa0] sm:$0xff] %v1915
    %2023 = vst [vmem:[#allocation3 + $0xa8] sm:$0xff] %v1917
    %2024 = vst [vmem:[#allocation3 + $0xb0] sm:$0xff] %v1988
    %2025 = vst [vmem:[#allocation3 + $0xb8] sm:$0xff] %v1990
    %2026 = vst [vmem:[#allocation3 + $0xc0] sm:$0xff] %v1921
    %2027 = vst [vmem:[#allocation3 + $0xc8] sm:$0xff] %v1923
    %2028 = vst [vmem:[#allocation3 + $0xd0] sm:$0xff] %v1994
    %2029 = vst [vmem:[#allocation3 + $0xd8] sm:$0xff] %v1996
    %2030 = vst [vmem:[#allocation3 + $0xe0] sm:$0xff] %v1925
    %2031 = vst [vmem:[#allocation3 + $0xe8] sm:$0xff] %v1927
    %2032 = vst [vmem:[#allocation3 + $0xf0] sm:$0xff] %v1998
    %2033 = vst [vmem:[#allocation3 + $0xf8] sm:$0xff] %v2000
    %v2034 = vld [vmem:[#allocation3] sm:$0xff]
    %v2035 = vld [vmem:[#allocation3 + $0x8] sm:$0xff]
    %v2036 = vld [vmem:[#allocation3 + $0x10] sm:$0xff]
    %v2037 = vld [vmem:[#allocation3 + $0x18] sm:$0xff]
    %v2070 = vunpack.c.l.b16 %v1629
    %v2071 = vunpack.c.h.b16 %v1629
    %v2072 = vunpack.c.l.b16 %v1630
    %v2073 = vunpack.c.h.b16 %v1630
    %v2074 = vunpack.c.l.b16 %v1631
    %v2075 = vunpack.c.h.b16 %v1631
    %v2076 = vunpack.c.l.b16 %v1632
    %v2077 = vunpack.c.h.b16 %v1632
    %v2078 = vunpack.c.l.b16 %v1633
    %v2079 = vunpack.c.h.b16 %v1633
    %v2080 = vunpack.c.l.b16 %v1634
    %v2081 = vunpack.c.h.b16 %v1634
    %v2082 = vunpack.c.l.b16 %v1635
    %v2083 = vunpack.c.h.b16 %v1635
    %v2084 = vunpack.c.l.b16 %v1636
    %v2085 = vunpack.c.h.b16 %v1636
    %v2086 = vunpack.c.l.b16 %v1637
    %v2087 = vunpack.c.h.b16 %v1637
    %v2088 = vunpack.c.l.b16 %v1638
    %v2089 = vunpack.c.h.b16 %v1638
    %v2090 = vunpack.c.l.b16 %v1639
    %v2091 = vunpack.c.h.b16 %v1639
    %v2092 = vunpack.c.l.b16 %v1640
    %v2093 = vunpack.c.h.b16 %v1640
    %v2094 = vunpack.c.l.b16 %v1641
    %v2095 = vunpack.c.h.b16 %v1641
    %v2096 = vunpack.c.l.b16 %v1642
    %v2097 = vunpack.c.h.b16 %v1642
    %v2098 = vunpack.c.l.b16 %v1643
    %v2099 = vunpack.c.h.b16 %v1643
    %v2100 = vunpack.c.l.b16 %v1644
    %v2101 = vunpack.c.h.b16 %v1644
    %v2102 = vunpack.c.l.b16 %v1645
    %v2103 = vunpack.c.h.b16 %v1645
    %v2104 = vunpack.c.l.b16 %v1646
    %v2105 = vunpack.c.h.b16 %v1646
    %v2106 = vunpack.c.l.b16 %v1647
    %v2107 = vunpack.c.h.b16 %v1647
    %v2108 = vunpack.c.l.b16 %v1648
    %v2109 = vunpack.c.h.b16 %v1648
    %v2110 = vunpack.c.l.b16 %v1649
    %v2111 = vunpack.c.h.b16 %v1649
    %v2112 = vunpack.c.l.b16 %v1650
    %v2113 = vunpack.c.h.b16 %v1650
    %v2114 = vunpack.c.l.b16 %v1651
    %v2115 = vunpack.c.h.b16 %v1651
    %v2116 = vunpack.c.l.b16 %v1652
    %v2117 = vunpack.c.h.b16 %v1652
    %v2118 = vunpack.c.l.b16 %v1653
    %v2119 = vunpack.c.h.b16 %v1653
    %v2120 = vunpack.c.l.b16 %v1654
    %v2121 = vunpack.c.h.b16 %v1654
    %v2122 = vunpack.c.l.b16 %v1655
    %v2123 = vunpack.c.h.b16 %v1655
    %v2124 = vunpack.c.l.b16 %v1656
    %v2125 = vunpack.c.h.b16 %v1656
    %v2126 = vunpack.c.l.b16 %v1657
    %v2127 = vunpack.c.h.b16 %v1657
    %v2128 = vunpack.c.l.b16 %v1658
    %v2129 = vunpack.c.h.b16 %v1658
    %v2130 = vunpack.c.l.b16 %v1659
    %v2131 = vunpack.c.h.b16 %v1659
    %v2132 = vunpack.c.l.b16 %v1660
    %v2133 = vunpack.c.h.b16 %v1660
    %v2134 = vpack.c.b16 %v2074, %v2070
    %v2135 = vpack.c.b16 %v2075, %v2071
    %v2136 = vpack.c.b16 %v2076, %v2072
    %v2137 = vpack.c.b16 %v2077, %v2073
    %v2138 = vpack.c.b16 %v2082, %v2078
    %v2139 = vpack.c.b16 %v2083, %v2079
    %v2140 = vpack.c.b16 %v2084, %v2080
    %v2141 = vpack.c.b16 %v2085, %v2081
    %v2142 = vpack.c.b16 %v2090, %v2086
    %v2143 = vpack.c.b16 %v2091, %v2087
    %v2144 = vpack.c.b16 %v2092, %v2088
    %v2145 = vpack.c.b16 %v2093, %v2089
    %v2146 = vpack.c.b16 %v2098, %v2094
    %v2147 = vpack.c.b16 %v2099, %v2095
    %v2148 = vpack.c.b16 %v2100, %v2096
    %v2149 = vpack.c.b16 %v2101, %v2097
    %v2150 = vpack.c.b16 %v2106, %v2102
    %v2151 = vpack.c.b16 %v2107, %v2103
    %v2152 = vpack.c.b16 %v2108, %v2104
    %v2153 = vpack.c.b16 %v2109, %v2105
    %v2154 = vpack.c.b16 %v2114, %v2110
    %v2155 = vpack.c.b16 %v2115, %v2111
    %v2156 = vpack.c.b16 %v2116, %v2112
    %v2157 = vpack.c.b16 %v2117, %v2113
    %v2158 = vpack.c.b16 %v2122, %v2118
    %v2159 = vpack.c.b16 %v2123, %v2119
    %v2160 = vpack.c.b16 %v2124, %v2120
    %v2161 = vpack.c.b16 %v2125, %v2121
    %v2162 = vpack.c.b16 %v2130, %v2126
    %v2163 = vpack.c.b16 %v2131, %v2127
    %v2164 = vpack.c.b16 %v2132, %v2128
    %v2165 = vpack.c.b16 %v2133, %v2129
    %2198 = vmatprep.subr.bf16.mxu0 %v2135
    %2199 = vmatpush1.bf16.msra.mxu0 %v2134
    %2200 = vmatprep.subr.bf16.mxu0 %v2139
    %2201 = vmatpush1.bf16.msra.mxu0 %v2138
    %2202 = vmatprep.subr.bf16.mxu0 %v2143
    %2203 = vmatpush1.bf16.msra.mxu0 %v2142
    %2204 = vmatprep.subr.bf16.mxu0 %v2147
    %2205 = vmatpush1.bf16.msra.mxu0 %v2146
    %2206 = vmatprep.subr.bf16.mxu0 %v2151
    %2207 = vmatpush1.bf16.msra.mxu0 %v2150
    %2208 = vmatprep.subr.bf16.mxu0 %v2155
    %2209 = vmatpush1.bf16.msra.mxu0 %v2154
    %2210 = vmatprep.subr.bf16.mxu0 %v2159
    %2211 = vmatpush1.bf16.msra.mxu0 %v2158
    %2212 = vmatprep.subr.bf16.mxu0 %v2163
    %2213 = vmatpush1.bf16.msra.mxu0 %v2162
    %2214 = vmatprep.subr.bf16.mxu0 0
    %2215 = vmatpush1.bf16.msra.mxu0 0
    %2216 = vmatprep.subr.bf16.mxu0 0
    %2217 = vmatpush1.bf16.msra.mxu0 0
    %2218 = vmatprep.subr.bf16.mxu0 0
    %2219 = vmatpush1.bf16.msra.mxu0 0
    %2220 = vmatprep.subr.bf16.mxu0 0
    %2221 = vmatpush1.bf16.msra.mxu0 0
    %2222 = vmatprep.subr.bf16.mxu0 0
    %2223 = vmatpush1.bf16.msra.mxu0 0
    %2224 = vmatprep.subr.bf16.mxu0 0
    %2225 = vmatpush1.bf16.msra.mxu0 0
    %2226 = vmatprep.subr.bf16.mxu0 0
    %2227 = vmatpush1.bf16.msra.mxu0 0
    %2228 = vmatprep.subr.bf16.mxu0 0
    %2229 = vmatpush1.bf16.msra.mxu0 0
    %2230 = vmatprep.mubr.bf16.mxu0 0
    %2231 = vmatmul.mubr.bf16.gmra.mrb[0].mxu0 0
    %v2232 = vpop.f32.mrb[0].mxu0
    %v2233 = vadd.f32 0.0, %v2232
    %v2234 = vpop.f32.mrb[0].mxu0
    %v2235 = vadd.f32 0.0, %v2234
    %v2236 = vpop.f32.mrb[0].mxu0
    %v2237 = vpop.f32.mrb[0].mxu0
    %2238 = vdwg.mxu0
    %2239 = vmatprep.subr.bf16.mxu0 %v2137
    %2240 = vmatpush1.bf16.msra.mxu0 %v2136
    %2241 = vmatprep.subr.bf16.mxu0 %v2141
    %2242 = vmatpush1.bf16.msra.mxu0 %v2140
    %2243 = vmatprep.subr.bf16.mxu0 %v2145
    %2244 = vmatpush1.bf16.msra.mxu0 %v2144
    %2245 = vmatprep.subr.bf16.mxu0 %v2149
    %2246 = vmatpush1.bf16.msra.mxu0 %v2148
    %2247 = vmatprep.subr.bf16.mxu0 %v2153
    %2248 = vmatpush1.bf16.msra.mxu0 %v2152
    %2249 = vmatprep.subr.bf16.mxu0 %v2157
    %2250 = vmatpush1.bf16.msra.mxu0 %v2156
    %2251 = vmatprep.subr.bf16.mxu0 %v2161
    %2252 = vmatpush1.bf16.msra.mxu0 %v2160
    %2253 = vmatprep.subr.bf16.mxu0 %v2165
    %2254 = vmatpush1.bf16.msra.mxu0 %v2164
    %2255 = vmatprep.subr.bf16.mxu0 0
    %2256 = vmatpush1.bf16.msra.mxu0 0
    %2257 = vmatprep.subr.bf16.mxu0 0
    %2258 = vmatpush1.bf16.msra.mxu0 0
    %2259 = vmatprep.subr.bf16.mxu0 0
    %2260 = vmatpush1.bf16.msra.mxu0 0
    %2261 = vmatprep.subr.bf16.mxu0 0
    %2262 = vmatpush1.bf16.msra.mxu0 0
    %2263 = vmatprep.subr.bf16.mxu0 0
    %2264 = vmatpush1.bf16.msra.mxu0 0
    %2265 = vmatprep.subr.bf16.mxu0 0
    %2266 = vmatpush1.bf16.msra.mxu0 0
    %2267 = vmatprep.subr.bf16.mxu0 0
    %2268 = vmatpush1.bf16.msra.mxu0 0
    %2269 = vmatprep.subr.bf16.mxu0 0
    %2270 = vmatpush1.bf16.msra.mxu0 0
    %2271 = vmatprep.mubr.bf16.mxu0 0
    %2272 = vmatmul.mubr.bf16.gmra.mrb[0].mxu0 0
    %v2273 = vpop.f32.mrb[0].mxu0
    %v2274 = vadd.f32 0.0, %v2273
    %v2275 = vpop.f32.mrb[0].mxu0
    %v2276 = vadd.f32 0.0, %v2275
    %v2277 = vpop.f32.mrb[0].mxu0
    %v2278 = vpop.f32.mrb[0].mxu0
    %2279 = vdwg.mxu0
    %v2280 = vadd.f32 %v2034, %v2233
    %v2281 = vadd.f32 %v2035, %v2235
    %v2282 = vadd.f32 %v2036, %v2274
    %v2283 = vadd.f32 %v2037, %v2276
    %v2284 = vxor.u32 %v2280, 2147483648
    %v2285 = vmul.f32 %v2284, 1.442695
    %v2286 = vpow.pop %v2285
    %v2287 = vadd.f32 %v2286, 1.0
    %v2288 = vrcp.pop %v2287
    %v2289 = vmul.f32 1.0, %v2288
    %v2290 = vxor.u32 %v2281, 2147483648
    %v2291 = vmul.f32 %v2290, 1.442695
    %v2292 = vpow.pop %v2291
    %v2293 = vadd.f32 %v2292, 1.0
    %v2294 = vrcp.pop %v2293
    %v2295 = vmul.f32 1.0, %v2294
    %v2296 = vtanh.pop %v2282
    %v2297 = vxor.u32 %v2283, 2147483648
    %v2298 = vmul.f32 %v2297, 1.442695
    %v2299 = vpow.pop %v2298
    %v2300 = vadd.f32 %v2299, 1.0
    %v2301 = vrcp.pop %v2300
    %v2302 = vmul.f32 1.0, %v2301
    %v2303 = vmul.f32 %v2295, 0.0
    %v2304 = vmul.f32 %v2289, %v2296
    %v2305 = vadd.f32 %v2303, %v2304
    %v2306 = vtanh.pop %v2305
    %v2307 = vmul.f32 %v2302, %v2306
    %2308 = vst [vmem:[#allocation2] sm:$0xff] %v2307
    %v2309 = vld [vmem:[%s769] sm:$0xff]
    %v2310 = vld [vmem:[%s769 + $0x8] sm:$0xff]
    %v2311 = vld [vmem:[%s769 + $0x10] sm:$0xff]
    %v2312 = vld [vmem:[%s769 + $0x18] sm:$0xff]
    %v2313 = vpack.c.bf16 %v2307, %v2307
    %2314 = vmatprep.subr.bf16.mxu0 %v2135
    %2315 = vmatpush1.bf16.msra.mxu0 %v2134
    %2316 = vmatprep.subr.bf16.mxu0 %v2139
    %2317 = vmatpush1.bf16.msra.mxu0 %v2138
    %2318 = vmatprep.subr.bf16.mxu0 %v2143
    %2319 = vmatpush1.bf16.msra.mxu0 %v2142
    %2320 = vmatprep.subr.bf16.mxu0 %v2147
    %2321 = vmatpush1.bf16.msra.mxu0 %v2146
    %2322 = vmatprep.subr.bf16.mxu0 %v2151
    %2323 = vmatpush1.bf16.msra.mxu0 %v2150
    %2324 = vmatprep.subr.bf16.mxu0 %v2155
    %2325 = vmatpush1.bf16.msra.mxu0 %v2154
    %2326 = vmatprep.subr.bf16.mxu0 %v2159
    %2327 = vmatpush1.bf16.msra.mxu0 %v2158
    %2328 = vmatprep.subr.bf16.mxu0 %v2163
    %2329 = vmatpush1.bf16.msra.mxu0 %v2162
    %2330 = vmatprep.subr.bf16.mxu0 0
    %2331 = vmatpush1.bf16.msra.mxu0 0
    %2332 = vmatprep.subr.bf16.mxu0 0
    %2333 = vmatpush1.bf16.msra.mxu0 0
    %2334 = vmatprep.subr.bf16.mxu0 0
    %2335 = vmatpush1.bf16.msra.mxu0 0
    %2336 = vmatprep.subr.bf16.mxu0 0
    %2337 = vmatpush1.bf16.msra.mxu0 0
    %2338 = vmatprep.subr.bf16.mxu0 0
    %2339 = vmatpush1.bf16.msra.mxu0 0
    %2340 = vmatprep.subr.bf16.mxu0 0
    %2341 = vmatpush1.bf16.msra.mxu0 0
    %2342 = vmatprep.subr.bf16.mxu0 0
    %2343 = vmatpush1.bf16.msra.mxu0 0
    %2344 = vmatprep.subr.bf16.mxu0 0
    %2345 = vmatpush1.bf16.msra.mxu0 0
    %2346 = vmatprep.mubr.bf16.mxu0 0
    %2347 = vmatmul.mubr.bf16.gmra.mrb[0].mxu0 %v2313
    %v2348 = vpop.f32.mrb[0].mxu0
    %v2349 = vadd.f32 0.0, %v2348
    %v2350 = vpop.f32.mrb[0].mxu0
    %v2351 = vadd.f32 0.0, %v2350
    %v2352 = vpop.f32.mrb[0].mxu0
    %v2353 = vpop.f32.mrb[0].mxu0
    %2354 = vdwg.mxu0
    %2355 = vmatprep.subr.bf16.mxu0 %v2137
    %2356 = vmatpush1.bf16.msra.mxu0 %v2136
    %2357 = vmatprep.subr.bf16.mxu0 %v2141
    %2358 = vmatpush1.bf16.msra.mxu0 %v2140
    %2359 = vmatprep.subr.bf16.mxu0 %v2145
    %2360 = vmatpush1.bf16.msra.mxu0 %v2144
    %2361 = vmatprep.subr.bf16.mxu0 %v2149
    %2362 = vmatpush1.bf16.msra.mxu0 %v2148
    %2363 = vmatprep.subr.bf16.mxu0 %v2153
    %2364 = vmatpush1.bf16.msra.mxu0 %v2152
    %2365 = vmatprep.subr.bf16.mxu0 %v2157
    %2366 = vmatpush1.bf16.msra.mxu0 %v2156
    %2367 = vmatprep.subr.bf16.mxu0 %v2161
    %2368 = vmatpush1.bf16.msra.mxu0 %v2160
    %2369 = vmatprep.subr.bf16.mxu0 %v2165
    %2370 = vmatpush1.bf16.msra.mxu0 %v2164
    %2371 = vmatprep.subr.bf16.mxu0 0
    %2372 = vmatpush1.bf16.msra.mxu0 0
    %2373 = vmatprep.subr.bf16.mxu0 0
    %2374 = vmatpush1.bf16.msra.mxu0 0
    %2375 = vmatprep.subr.bf16.mxu0 0
    %2376 = vmatpush1.bf16.msra.mxu0 0
    %2377 = vmatprep.subr.bf16.mxu0 0
    %2378 = vmatpush1.bf16.msra.mxu0 0
    %2379 = vmatprep.subr.bf16.mxu0 0
    %2380 = vmatpush1.bf16.msra.mxu0 0
    %2381 = vmatprep.subr.bf16.mxu0 0
    %2382 = vmatpush1.bf16.msra.mxu0 0
    %2383 = vmatprep.subr.bf16.mxu0 0
    %2384 = vmatpush1.bf16.msra.mxu0 0
    %2385 = vmatprep.subr.bf16.mxu0 0
    %2386 = vmatpush1.bf16.msra.mxu0 0
    %2387 = vmatprep.mubr.bf16.mxu0 0
    %2388 = vmatmul.mubr.bf16.gmra.mrb[0].mxu0 %v2313
    %v2389 = vpop.f32.mrb[0].mxu0
    %v2390 = vadd.f32 0.0, %v2389
    %v2391 = vpop.f32.mrb[0].mxu0
    %v2392 = vadd.f32 0.0, %v2391
    %v2393 = vpop.f32.mrb[0].mxu0
    %v2394 = vpop.f32.mrb[0].mxu0
    %2395 = vdwg.mxu0
    %v2396 = vadd.f32 %v2309, %v2349
    %v2397 = vadd.f32 %v2310, %v2351
    %v2398 = vadd.f32 %v2311, %v2390
    %v2399 = vadd.f32 %v2312, %v2392
    %v2400 = vxor.u32 %v2396, 2147483648
    %v2401 = vmul.f32 %v2400, 1.442695
    %v2402 = vpow.pop %v2401
    %v2403 = vadd.f32 %v2402, 1.0
    %v2404 = vrcp.pop %v2403
    %v2405 = vmul.f32 1.0, %v2404
    %v2406 = vxor.u32 %v2397, 2147483648
    %v2407 = vmul.f32 %v2406, 1.442695
    %v2408 = vpow.pop %v2407
    %v2409 = vadd.f32 %v2408, 1.0
    %v2410 = vrcp.pop %v2409
    %v2411 = vmul.f32 1.0, %v2410
    %v2412 = vtanh.pop %v2398
    %v2413 = vxor.u32 %v2399, 2147483648
    %v2414 = vmul.f32 %v2413, 1.442695
    %v2415 = vpow.pop %v2414
    %v2416 = vadd.f32 %v2415, 1.0
    %v2417 = vrcp.pop %v2416
    %v2418 = vmul.f32 1.0, %v2417
    %v2419 = vmul.f32 %v2411, %v2305
    %v2420 = vmul.f32 %v2405, %v2412
    %v2421 = vadd.f32 %v2419, %v2420
    %v2422 = vtanh.pop %v2421
    %v2423 = vmul.f32 %v2418, %v2422
    %2424 = vst [vmem:[%s885] sm:$0xff] %v2423
    %v2425 = vld [vmem:[%s887] sm:$0xff]
    %v2426 = vld [vmem:[%s887 + $0x8] sm:$0xff]
    %v2427 = vld [vmem:[%s887 + $0x10] sm:$0xff]
    %v2428 = vld [vmem:[%s887 + $0x18] sm:$0xff]
    %v2429 = vpack.c.bf16 %v2423, %v2423
    %2430 = vmatprep.subr.bf16.mxu0 %v2135
    %2431 = vmatpush1.bf16.msra.mxu0 %v2134
    %2432 = vmatprep.subr.bf16.mxu0 %v2139
    %2433 = vmatpush1.bf16.msra.mxu0 %v2138
    %2434 = vmatprep.subr.bf16.mxu0 %v2143
    %2435 = vmatpush1.bf16.msra.mxu0 %v2142
    %2436 = vmatprep.subr.bf16.mxu0 %v2147
    %2437 = vmatpush1.bf16.msra.mxu0 %v2146
    %2438 = vmatprep.subr.bf16.mxu0 %v2151
    %2439 = vmatpush1.bf16.msra.mxu0 %v2150
    %2440 = vmatprep.subr.bf16.mxu0 %v2155
    %2441 = vmatpush1.bf16.msra.mxu0 %v2154
    %2442 = vmatprep.subr.bf16.mxu0 %v2159
    %2443 = vmatpush1.bf16.msra.mxu0 %v2158
    %2444 = vmatprep.subr.bf16.mxu0 %v2163
    %2445 = vmatpush1.bf16.msra.mxu0 %v2162
    %2446 = vmatprep.subr.bf16.mxu0 0
    %2447 = vmatpush1.bf16.msra.mxu0 0
    %2448 = vmatprep.subr.bf16.mxu0 0
    %2449 = vmatpush1.bf16.msra.mxu0 0
    %2450 = vmatprep.subr.bf16.mxu0 0
    %2451 = vmatpush1.bf16.msra.mxu0 0
    %2452 = vmatprep.subr.bf16.mxu0 0
    %2453 = vmatpush1.bf16.msra.mxu0 0
    %2454 = vmatprep.subr.bf16.mxu0 0
    %2455 = vmatpush1.bf16.msra.mxu0 0
    %2456 = vmatprep.subr.bf16.mxu0 0
    %2457 = vmatpush1.bf16.msra.mxu0 0
    %2458 = vmatprep.subr.bf16.mxu0 0
    %2459 = vmatpush1.bf16.msra.mxu0 0
    %2460 = vmatprep.subr.bf16.mxu0 0
    %2461 = vmatpush1.bf16.msra.mxu0 0
    %2462 = vmatprep.mubr.bf16.mxu0 0
    %2463 = vmatmul.mubr.bf16.gmra.mrb[0].mxu0 %v2429
    %v2464 = vpop.f32.mrb[0].mxu0
    %v2465 = vadd.f32 0.0, %v2464
    %v2466 = vpop.f32.mrb[0].mxu0
    %v2467 = vadd.f32 0.0, %v2466
    %v2468 = vpop.f32.mrb[0].mxu0
    %v2469 = vpop.f32.mrb[0].mxu0
    %2470 = vdwg.mxu0
    %2471 = vmatprep.subr.bf16.mxu0 %v2137
    %2472 = vmatpush1.bf16.msra.mxu0 %v2136
    %2473 = vmatprep.subr.bf16.mxu0 %v2141
    %2474 = vmatpush1.bf16.msra.mxu0 %v2140
    %2475 = vmatprep.subr.bf16.mxu0 %v2145
    %2476 = vmatpush1.bf16.msra.mxu0 %v2144
    %2477 = vmatprep.subr.bf16.mxu0 %v2149
    %2478 = vmatpush1.bf16.msra.mxu0 %v2148
    %2479 = vmatprep.subr.bf16.mxu0 %v2153
    %2480 = vmatpush1.bf16.msra.mxu0 %v2152
    %2481 = vmatprep.subr.bf16.mxu0 %v2157
    %2482 = vmatpush1.bf16.msra.mxu0 %v2156
    %2483 = vmatprep.subr.bf16.mxu0 %v2161
    %2484 = vmatpush1.bf16.msra.mxu0 %v2160
    %2485 = vmatprep.subr.bf16.mxu0 %v2165
    %2486 = vmatpush1.bf16.msra.mxu0 %v2164
    %2487 = vmatprep.subr.bf16.mxu0 0
    %2488 = vmatpush1.bf16.msra.mxu0 0
    %2489 = vmatprep.subr.bf16.mxu0 0
    %2490 = vmatpush1.bf16.msra.mxu0 0
    %2491 = vmatprep.subr.bf16.mxu0 0
    %2492 = vmatpush1.bf16.msra.mxu0 0
    %2493 = vmatprep.subr.bf16.mxu0 0
    %2494 = vmatpush1.bf16.msra.mxu0 0
    %2495 = vmatprep.subr.bf16.mxu0 0
    %2496 = vmatpush1.bf16.msra.mxu0 0
    %2497 = vmatprep.subr.bf16.mxu0 0
    %2498 = vmatpush1.bf16.msra.mxu0 0
    %2499 = vmatprep.subr.bf16.mxu0 0
    %2500 = vmatpush1.bf16.msra.mxu0 0
    %2501 = vmatprep.subr.bf16.mxu0 0
    %2502 = vmatpush1.bf16.msra.mxu0 0
    %2503 = vmatprep.mubr.bf16.mxu0 0
    %2504 = vmatmul.mubr.bf16.gmra.mrb[0].mxu0 %v2429
    %v2505 = vpop.f32.mrb[0].mxu0
    %v2506 = vadd.f32 0.0, %v2505
    %v2507 = vpop.f32.mrb[0].mxu0
    %v2508 = vadd.f32 0.0, %v2507
    %v2509 = vpop.f32.mrb[0].mxu0
    %v2510 = vpop.f32.mrb[0].mxu0
    %2511 = vdwg.mxu0
    %v2512 = vadd.f32 %v2425, %v2465
    %v2513 = vadd.f32 %v2426, %v2467
    %v2514 = vadd.f32 %v2427, %v2506
    %v2515 = vadd.f32 %v2428, %v2508
    %v2516 = vxor.u32 %v2512, 2147483648
    %v2517 = vmul.f32 %v2516, 1.442695
    %v2518 = vpow.pop %v2517
    %v2519 = vadd.f32 %v2518, 1.0
    %v2520 = vrcp.pop %v2519
    %v2521 = vmul.f32 1.0, %v2520
    %v2522 = vxor.u32 %v2513, 2147483648
    %v2523 = vmul.f32 %v2522, 1.442695
    %v2524 = vpow.pop %v2523
    %v2525 = vadd.f32 %v2524, 1.0
    %v2526 = vrcp.pop %v2525
    %v2527 = vmul.f32 1.0, %v2526
    %v2528 = vtanh.pop %v2514
    %v2529 = vxor.u32 %v2515, 2147483648
    %v2530 = vmul.f32 %v2529, 1.442695
    %v2531 = vpow.pop %v2530
    %v2532 = vadd.f32 %v2531, 1.0
    %v2533 = vrcp.pop %v2532
    %v2534 = vmul.f32 1.0, %v2533
    %v2535 = vmul.f32 %v2527, %v2421
    %v2536 = vmul.f32 %v2521, %v2528
    %v2537 = vadd.f32 %v2535, %v2536
    %v2538 = vtanh.pop %v2537
    %v2539 = vmul.f32 %v2534, %v2538
    %2540 = vst [vmem:[%s1003] sm:$0xff] %v2539
    %v2541 = vld [vmem:[%s1005] sm:$0xff]
    %v2542 = vld [vmem:[%s1005 + $0x8] sm:$0xff]
    %v2543 = vld [vmem:[%s1005 + $0x10] sm:$0xff]
    %v2544 = vld [vmem:[%s1005 + $0x18] sm:$0xff]
    %v2545 = vpack.c.bf16 %v2539, %v2539
    %2546 = vmatprep.subr.bf16.mxu0 %v2135
    %2547 = vmatpush1.bf16.msra.mxu0 %v2134
    %2548 = vmatprep.subr.bf16.mxu0 %v2139
    %2549 = vmatpush1.bf16.msra.mxu0 %v2138
    %2550 = vmatprep.subr.bf16.mxu0 %v2143
    %2551 = vmatpush1.bf16.msra.mxu0 %v2142
    %2552 = vmatprep.subr.bf16.mxu0 %v2147
    %2553 = vmatpush1.bf16.msra.mxu0 %v2146
    %2554 = vmatprep.subr.bf16.mxu0 %v2151
    %2555 = vmatpush1.bf16.msra.mxu0 %v2150
    %2556 = vmatprep.subr.bf16.mxu0 %v2155
    %2557 = vmatpush1.bf16.msra.mxu0 %v2154
    %2558 = vmatprep.subr.bf16.mxu0 %v2159
    %2559 = vmatpush1.bf16.msra.mxu0 %v2158
    %2560 = vmatprep.subr.bf16.mxu0 %v2163
    %2561 = vmatpush1.bf16.msra.mxu0 %v2162
    %2562 = vmatprep.subr.bf16.mxu0 0
    %2563 = vmatpush1.bf16.msra.mxu0 0
    %2564 = vmatprep.subr.bf16.mxu0 0
    %2565 = vmatpush1.bf16.msra.mxu0 0
    %2566 = vmatprep.subr.bf16.mxu0 0
    %2567 = vmatpush1.bf16.msra.mxu0 0
    %2568 = vmatprep.subr.bf16.mxu0 0
    %2569 = vmatpush1.bf16.msra.mxu0 0
    %2570 = vmatprep.subr.bf16.mxu0 0
    %2571 = vmatpush1.bf16.msra.mxu0 0
    %2572 = vmatprep.subr.bf16.mxu0 0
    %2573 = vmatpush1.bf16.msra.mxu0 0
    %2574 = vmatprep.subr.bf16.mxu0 0
    %2575 = vmatpush1.bf16.msra.mxu0 0
    %2576 = vmatprep.subr.bf16.mxu0 0
    %2577 = vmatpush1.bf16.msra.mxu0 0
    %2578 = vmatprep.mubr.bf16.mxu0 0
    %2579 = vmatmul.mubr.bf16.gmra.mrb[0].mxu0 %v2545
    %v2580 = vpop.f32.mrb[0].mxu0
    %v2581 = vadd.f32 0.0, %v2580
    %v2582 = vpop.f32.mrb[0].mxu0
    %v2583 = vadd.f32 0.0, %v2582
    %v2584 = vpop.f32.mrb[0].mxu0
    %v2585 = vpop.f32.mrb[0].mxu0
    %2586 = vdwg.mxu0
    %2587 = vmatprep.subr.bf16.mxu0 %v2137
    %2588 = vmatpush1.bf16.msra.mxu0 %v2136
    %2589 = vmatprep.subr.bf16.mxu0 %v2141
    %2590 = vmatpush1.bf16.msra.mxu0 %v2140
    %2591 = vmatprep.subr.bf16.mxu0 %v2145
    %2592 = vmatpush1.bf16.msra.mxu0 %v2144
    %2593 = vmatprep.subr.bf16.mxu0 %v2149
    %2594 = vmatpush1.bf16.msra.mxu0 %v2148
    %2595 = vmatprep.subr.bf16.mxu0 %v2153
    %2596 = vmatpush1.bf16.msra.mxu0 %v2152
    %2597 = vmatprep.subr.bf16.mxu0 %v2157
    %2598 = vmatpush1.bf16.msra.mxu0 %v2156
    %2599 = vmatprep.subr.bf16.mxu0 %v2161
    %2600 = vmatpush1.bf16.msra.mxu0 %v2160
    %2601 = vmatprep.subr.bf16.mxu0 %v2165
    %2602 = vmatpush1.bf16.msra.mxu0 %v2164
    %2603 = vmatprep.subr.bf16.mxu0 0
    %2604 = vmatpush1.bf16.msra.mxu0 0
    %2605 = vmatprep.subr.bf16.mxu0 0
    %2606 = vmatpush1.bf16.msra.mxu0 0
    %2607 = vmatprep.subr.bf16.mxu0 0
    %2608 = vmatpush1.bf16.msra.mxu0 0
    %2609 = vmatprep.subr.bf16.mxu0 0
    %2610 = vmatpush1.bf16.msra.mxu0 0
    %2611 = vmatprep.subr.bf16.mxu0 0
    %2612 = vmatpush1.bf16.msra.mxu0 0
    %2613 = vmatprep.subr.bf16.mxu0 0
    %2614 = vmatpush1.bf16.msra.mxu0 0
    %2615 = vmatprep.subr.bf16.mxu0 0
    %2616 = vmatpush1.bf16.msra.mxu0 0
    %2617 = vmatprep.subr.bf16.mxu0 0
    %2618 = vmatpush1.bf16.msra.mxu0 0
    %2619 = vmatprep.mubr.bf16.mxu0 0
    %2620 = vmatmul.mubr.bf16.gmra.mrb[0].mxu0 %v2545
    %v2621 = vpop.f32.mrb[0].mxu0
    %v2622 = vadd.f32 0.0, %v2621
    %v2623 = vpop.f32.mrb[0].mxu0
    %v2624 = vadd.f32 0.0, %v2623
    %v2625 = vpop.f32.mrb[0].mxu0
    %v2626 = vpop.f32.mrb[0].mxu0
    %2627 = vdwg.mxu0
    %v2628 = vadd.f32 %v2541, %v2581
    %v2629 = vadd.f32 %v2542, %v2583
    %v2630 = vadd.f32 %v2543, %v2622
    %v2631 = vadd.f32 %v2544, %v2624
    %v2632 = vxor.u32 %v2628, 2147483648
    %v2633 = vmul.f32 %v2632, 1.442695
    %v2634 = vpow.pop %v2633
    %v2635 = vadd.f32 %v2634, 1.0
    %v2636 = vrcp.pop %v2635
    %v2637 = vmul.f32 1.0, %v2636
    %v2638 = vxor.u32 %v2629, 2147483648
    %v2639 = vmul.f32 %v2638, 1.442695
    %v2640 = vpow.pop %v2639
    %v2641 = vadd.f32 %v2640, 1.0
    %v2642 = vrcp.pop %v2641
    %v2643 = vmul.f32 1.0, %v2642
    %v2644 = vtanh.pop %v2630
    %v2645 = vxor.u32 %v2631, 2147483648
    %v2646 = vmul.f32 %v2645, 1.442695
    %v2647 = vpow.pop %v2646
    %v2648 = vadd.f32 %v2647, 1.0
    %v2649 = vrcp.pop %v2648
    %v2650 = vmul.f32 1.0, %v2649
    %v2651 = vmul.f32 %v2643, %v2537
    %v2652 = vmul.f32 %v2637, %v2644
    %v2653 = vadd.f32 %v2651, %v2652
    %v2654 = vtanh.pop %v2653
    %v2655 = vmul.f32 %v2650, %v2654
    %2656 = vst [vmem:[%s1121] sm:$0xff] %v2655
    %v2657 = vld [vmem:[%s1123] sm:$0xff]
    %v2658 = vld [vmem:[%s1123 + $0x8] sm:$0xff]
    %v2659 = vld [vmem:[%s1123 + $0x10] sm:$0xff]
    %v2660 = vld [vmem:[%s1123 + $0x18] sm:$0xff]
    %v2661 = vpack.c.bf16 %v2655, %v2655
    %2662 = vmatprep.subr.bf16.mxu0 %v2135
    %2663 = vmatpush1.bf16.msra.mxu0 %v2134
    %2664 = vmatprep.subr.bf16.mxu0 %v2139
    %2665 = vmatpush1.bf16.msra.mxu0 %v2138
    %2666 = vmatprep.subr.bf16.mxu0 %v2143
    %2667 = vmatpush1.bf16.msra.mxu0 %v2142
    %2668 = vmatprep.subr.bf16.mxu0 %v2147
    %2669 = vmatpush1.bf16.msra.mxu0 %v2146
    %2670 = vmatprep.subr.bf16.mxu0 %v2151
    %2671 = vmatpush1.bf16.msra.mxu0 %v2150
    %2672 = vmatprep.subr.bf16.mxu0 %v2155
    %2673 = vmatpush1.bf16.msra.mxu0 %v2154
    %2674 = vmatprep.subr.bf16.mxu0 %v2159
    %2675 = vmatpush1.bf16.msra.mxu0 %v2158
    %2676 = vmatprep.subr.bf16.mxu0 %v2163
    %2677 = vmatpush1.bf16.msra.mxu0 %v2162
    %2678 = vmatprep.subr.bf16.mxu0 0
    %2679 = vmatpush1.bf16.msra.mxu0 0
    %2680 = vmatprep.subr.bf16.mxu0 0
    %2681 = vmatpush1.bf16.msra.mxu0 0
    %2682 = vmatprep.subr.bf16.mxu0 0
    %2683 = vmatpush1.bf16.msra.mxu0 0
    %2684 = vmatprep.subr.bf16.mxu0 0
    %2685 = vmatpush1.bf16.msra.mxu0 0
    %2686 = vmatprep.subr.bf16.mxu0 0
    %2687 = vmatpush1.bf16.msra.mxu0 0
    %2688 = vmatprep.subr.bf16.mxu0 0
    %2689 = vmatpush1.bf16.msra.mxu0 0
    %2690 = vmatprep.subr.bf16.mxu0 0
    %2691 = vmatpush1.bf16.msra.mxu0 0
    %2692 = vmatprep.subr.bf16.mxu0 0
    %2693 = vmatpush1.bf16.msra.mxu0 0
    %2694 = vmatprep.mubr.bf16.mxu0 0
    %2695 = vmatmul.mubr.bf16.gmra.mrb[0].mxu0 %v2661
    %v2696 = vpop.f32.mrb[0].mxu0
    %v2697 = vadd.f32 0.0, %v2696
    %v2698 = vpop.f32.mrb[0].mxu0
    %v2699 = vadd.f32 0.0, %v2698
    %v2700 = vpop.f32.mrb[0].mxu0
    %v2701 = vpop.f32.mrb[0].mxu0
    %2702 = vdwg.mxu0
    %2703 = vmatprep.subr.bf16.mxu0 %v2137
    %2704 = vmatpush1.bf16.msra.mxu0 %v2136
    %2705 = vmatprep.subr.bf16.mxu0 %v2141
    %2706 = vmatpush1.bf16.msra.mxu0 %v2140
    %2707 = vmatprep.subr.bf16.mxu0 %v2145
    %2708 = vmatpush1.bf16.msra.mxu0 %v2144
    %2709 = vmatprep.subr.bf16.mxu0 %v2149
    %2710 = vmatpush1.bf16.msra.mxu0 %v2148
    %2711 = vmatprep.subr.bf16.mxu0 %v2153
    %2712 = vmatpush1.bf16.msra.mxu0 %v2152
    %2713 = vmatprep.subr.bf16.mxu0 %v2157
    %2714 = vmatpush1.bf16.msra.mxu0 %v2156
    %2715 = vmatprep.subr.bf16.mxu0 %v2161
    %2716 = vmatpush1.bf16.msra.mxu0 %v2160
    %2717 = vmatprep.subr.bf16.mxu0 %v2165
    %2718 = vmatpush1.bf16.msra.mxu0 %v2164
    %2719 = vmatprep.subr.bf16.mxu0 0
    %2720 = vmatpush1.bf16.msra.mxu0 0
    %2721 = vmatprep.subr.bf16.mxu0 0
    %2722 = vmatpush1.bf16.msra.mxu0 0
    %2723 = vmatprep.subr.bf16.mxu0 0
    %2724 = vmatpush1.bf16.msra.mxu0 0
    %2725 = vmatprep.subr.bf16.mxu0 0
    %2726 = vmatpush1.bf16.msra.mxu0 0
    %2727 = vmatprep.subr.bf16.mxu0 0
    %2728 = vmatpush1.bf16.msra.mxu0 0
    %2729 = vmatprep.subr.bf16.mxu0 0
    %2730 = vmatpush1.bf16.msra.mxu0 0
    %2731 = vmatprep.subr.bf16.mxu0 0
    %2732 = vmatpush1.bf16.msra.mxu0 0
    %2733 = vmatprep.subr.bf16.mxu0 0
    %2734 = vmatpush1.bf16.msra.mxu0 0
    %2735 = vmatprep.mubr.bf16.mxu0 0
    %2736 = vmatmul.mubr.bf16.gmra.mrb[0].mxu0 %v2661
    %v2737 = vpop.f32.mrb[0].mxu0
    %v2738 = vadd.f32 0.0, %v2737
    %v2739 = vpop.f32.mrb[0].mxu0
    %v2740 = vadd.f32 0.0, %v2739
    %v2741 = vpop.f32.mrb[0].mxu0
    %v2742 = vpop.f32.mrb[0].mxu0
    %2743 = vdwg.mxu0
    %v2744 = vadd.f32 %v2657, %v2697
    %v2745 = vadd.f32 %v2658, %v2699
    %v2746 = vadd.f32 %v2659, %v2738
    %v2747 = vadd.f32 %v2660, %v2740
    %v2748 = vxor.u32 %v2744, 2147483648
    %v2749 = vmul.f32 %v2748, 1.442695
    %v2750 = vpow.pop %v2749
    %v2751 = vadd.f32 %v2750, 1.0
    %v2752 = vrcp.pop %v2751
    %v2753 = vmul.f32 1.0, %v2752
    %v2754 = vxor.u32 %v2745, 2147483648
    %v2755 = vmul.f32 %v2754, 1.442695
    %v2756 = vpow.pop %v2755
    %v2757 = vadd.f32 %v2756, 1.0
    %v2758 = vrcp.pop %v2757
    %v2759 = vmul.f32 1.0, %v2758
    %v2760 = vtanh.pop %v2746
    %v2761 = vxor.u32 %v2747, 2147483648
    %v2762 = vmul.f32 %v2761, 1.442695
    %v2763 = vpow.pop %v2762
    %v2764 = vadd.f32 %v2763, 1.0
    %v2765 = vrcp.pop %v2764
    %v2766 = vmul.f32 1.0, %v2765
    %v2767 = vmul.f32 %v2759, %v2653
    %v2768 = vmul.f32 %v2753, %v2760
    %v2769 = vadd.f32 %v2767, %v2768
    %v2770 = vtanh.pop %v2769
    %v2771 = vmul.f32 %v2766, %v2770
    %2772 = vst [vmem:[%s1239] sm:$0xff] %v2771
    %v2773 = vld [vmem:[%s1241] sm:$0xff]
    %v2774 = vld [vmem:[%s1241 + $0x8] sm:$0xff]
    %v2775 = vld [vmem:[%s1241 + $0x10] sm:$0xff]
    %v2776 = vld [vmem:[%s1241 + $0x18] sm:$0xff]
    %v2777 = vpack.c.bf16 %v2771, %v2771
    %2778 = vmatprep.subr.bf16.mxu0 %v2135
    %2779 = vmatpush1.bf16.msra.mxu0 %v2134
    %2780 = vmatprep.subr.bf16.mxu0 %v2139
    %2781 = vmatpush1.bf16.msra.mxu0 %v2138
    %2782 = vmatprep.subr.bf16.mxu0 %v2143
    %2783 = vmatpush1.bf16.msra.mxu0 %v2142
    %2784 = vmatprep.subr.bf16.mxu0 %v2147
    %2785 = vmatpush1.bf16.msra.mxu0 %v2146
    %2786 = vmatprep.subr.bf16.mxu0 %v2151
    %2787 = vmatpush1.bf16.msra.mxu0 %v2150
    %2788 = vmatprep.subr.bf16.mxu0 %v2155
    %2789 = vmatpush1.bf16.msra.mxu0 %v2154
    %2790 = vmatprep.subr.bf16.mxu0 %v2159
    %2791 = vmatpush1.bf16.msra.mxu0 %v2158
    %2792 = vmatprep.subr.bf16.mxu0 %v2163
    %2793 = vmatpush1.bf16.msra.mxu0 %v2162
    %2794 = vmatprep.subr.bf16.mxu0 0
    %2795 = vmatpush1.bf16.msra.mxu0 0
    %2796 = vmatprep.subr.bf16.mxu0 0
    %2797 = vmatpush1.bf16.msra.mxu0 0
    %2798 = vmatprep.subr.bf16.mxu0 0
    %2799 = vmatpush1.bf16.msra.mxu0 0
    %2800 = vmatprep.subr.bf16.mxu0 0
    %2801 = vmatpush1.bf16.msra.mxu0 0
    %2802 = vmatprep.subr.bf16.mxu0 0
    %2803 = vmatpush1.bf16.msra.mxu0 0
    %2804 = vmatprep.subr.bf16.mxu0 0
    %2805 = vmatpush1.bf16.msra.mxu0 0
    %2806 = vmatprep.subr.bf16.mxu0 0
    %2807 = vmatpush1.bf16.msra.mxu0 0
    %2808 = vmatprep.subr.bf16.mxu0 0
    %2809 = vmatpush1.bf16.msra.mxu0 0
    %2810 = vmatprep.mubr.bf16.mxu0 0
    %2811 = vmatmul.mubr.bf16.gmra.mrb[0].mxu0 %v2777
    %v2812 = vpop.f32.mrb[0].mxu0
    %v2813 = vadd.f32 0.0, %v2812
    %v2814 = vpop.f32.mrb[0].mxu0
    %v2815 = vadd.f32 0.0, %v2814
    %v2816 = vpop.f32.mrb[0].mxu0
    %v2817 = vpop.f32.mrb[0].mxu0
    %2818 = vdwg.mxu0
    %2819 = vmatprep.subr.bf16.mxu0 %v2137
    %2820 = vmatpush1.bf16.msra.mxu0 %v2136
    %2821 = vmatprep.subr.bf16.mxu0 %v2141
    %2822 = vmatpush1.bf16.msra.mxu0 %v2140
    %2823 = vmatprep.subr.bf16.mxu0 %v2145
    %2824 = vmatpush1.bf16.msra.mxu0 %v2144
    %2825 = vmatprep.subr.bf16.mxu0 %v2149
    %2826 = vmatpush1.bf16.msra.mxu0 %v2148
    %2827 = vmatprep.subr.bf16.mxu0 %v2153
    %2828 = vmatpush1.bf16.msra.mxu0 %v2152
    %2829 = vmatprep.subr.bf16.mxu0 %v2157
    %2830 = vmatpush1.bf16.msra.mxu0 %v2156
    %2831 = vmatprep.subr.bf16.mxu0 %v2161
    %2832 = vmatpush1.bf16.msra.mxu0 %v2160
    %2833 = vmatprep.subr.bf16.mxu0 %v2165
    %2834 = vmatpush1.bf16.msra.mxu0 %v2164
    %2835 = vmatprep.subr.bf16.mxu0 0
    %2836 = vmatpush1.bf16.msra.mxu0 0
    %2837 = vmatprep.subr.bf16.mxu0 0
    %2838 = vmatpush1.bf16.msra.mxu0 0
    %2839 = vmatprep.subr.bf16.mxu0 0
    %2840 = vmatpush1.bf16.msra.mxu0 0
    %2841 = vmatprep.subr.bf16.mxu0 0
    %2842 = vmatpush1.bf16.msra.mxu0 0
    %2843 = vmatprep.subr.bf16.mxu0 0
    %2844 = vmatpush1.bf16.msra.mxu0 0
    %2845 = vmatprep.subr.bf16.mxu0 0
    %2846 = vmatpush1.bf16.msra.mxu0 0
    %2847 = vmatprep.subr.bf16.mxu0 0
    %2848 = vmatpush1.bf16.msra.mxu0 0
    %2849 = vmatprep.subr.bf16.mxu0 0
    %2850 = vmatpush1.bf16.msra.mxu0 0
    %2851 = vmatprep.mubr.bf16.mxu0 0
    %2852 = vmatmul.mubr.bf16.gmra.mrb[0].mxu0 %v2777
    %v2853 = vpop.f32.mrb[0].mxu0
    %v2854 = vadd.f32 0.0, %v2853
    %v2855 = vpop.f32.mrb[0].mxu0
    %v2856 = vadd.f32 0.0, %v2855
    %v2857 = vpop.f32.mrb[0].mxu0
    %v2858 = vpop.f32.mrb[0].mxu0
    %2859 = vdwg.mxu0
    %v2860 = vadd.f32 %v2773, %v2813
    %v2861 = vadd.f32 %v2774, %v2815
    %v2862 = vadd.f32 %v2775, %v2854
    %v2863 = vadd.f32 %v2776, %v2856
    %v2864 = vxor.u32 %v2860, 2147483648
    %v2865 = vmul.f32 %v2864, 1.442695
    %v2866 = vpow.pop %v2865
    %v2867 = vadd.f32 %v2866, 1.0
    %v2868 = vrcp.pop %v2867
    %v2869 = vmul.f32 1.0, %v2868
    %v2870 = vxor.u32 %v2861, 2147483648
    %v2871 = vmul.f32 %v2870, 1.442695
    %v2872 = vpow.pop %v2871
    %v2873 = vadd.f32 %v2872, 1.0
    %v2874 = vrcp.pop %v2873
    %v2875 = vmul.f32 1.0, %v2874
    %v2876 = vtanh.pop %v2862
    %v2877 = vxor.u32 %v2863, 2147483648
    %v2878 = vmul.f32 %v2877, 1.442695
    %v2879 = vpow.pop %v2878
    %v2880 = vadd.f32 %v2879, 1.0
    %v2881 = vrcp.pop %v2880
    %v2882 = vmul.f32 1.0, %v2881
    %v2883 = vmul.f32 %v2875, %v2769
    %v2884 = vmul.f32 %v2869, %v2876
    %v2885 = vadd.f32 %v2883, %v2884
    %v2886 = vtanh.pop %v2885
    %v2887 = vmul.f32 %v2882, %v2886
    %2888 = vst [vmem:[%s1357] sm:$0xff] %v2887
    %v2889 = vld [vmem:[%s1359] sm:$0xff]
    %v2890 = vld [vmem:[%s1359 + $0x8] sm:$0xff]
    %v2891 = vld [vmem:[%s1359 + $0x10] sm:$0xff]
    %v2892 = vld [vmem:[%s1359 + $0x18] sm:$0xff]
    %v2893 = vpack.c.bf16 %v2887, %v2887
    %2894 = vmatprep.subr.bf16.mxu0 %v2135
    %2895 = vmatpush1.bf16.msra.mxu0 %v2134
    %2896 = vmatprep.subr.bf16.mxu0 %v2139
    %2897 = vmatpush1.bf16.msra.mxu0 %v2138
    %2898 = vmatprep.subr.bf16.mxu0 %v2143
    %2899 = vmatpush1.bf16.msra.mxu0 %v2142
    %2900 = vmatprep.subr.bf16.mxu0 %v2147
    %2901 = vmatpush1.bf16.msra.mxu0 %v2146
    %2902 = vmatprep.subr.bf16.mxu0 %v2151
    %2903 = vmatpush1.bf16.msra.mxu0 %v2150
    %2904 = vmatprep.subr.bf16.mxu0 %v2155
    %2905 = vmatpush1.bf16.msra.mxu0 %v2154
    %2906 = vmatprep.subr.bf16.mxu0 %v2159
    %2907 = vmatpush1.bf16.msra.mxu0 %v2158
    %2908 = vmatprep.subr.bf16.mxu0 %v2163
    %2909 = vmatpush1.bf16.msra.mxu0 %v2162
    %2910 = vmatprep.subr.bf16.mxu0 0
    %2911 = vmatpush1.bf16.msra.mxu0 0
    %2912 = vmatprep.subr.bf16.mxu0 0
    %2913 = vmatpush1.bf16.msra.mxu0 0
    %2914 = vmatprep.subr.bf16.mxu0 0
    %2915 = vmatpush1.bf16.msra.mxu0 0
    %2916 = vmatprep.subr.bf16.mxu0 0
    %2917 = vmatpush1.bf16.msra.mxu0 0
    %2918 = vmatprep.subr.bf16.mxu0 0
    %2919 = vmatpush1.bf16.msra.mxu0 0
    %2920 = vmatprep.subr.bf16.mxu0 0
    %2921 = vmatpush1.bf16.msra.mxu0 0
    %2922 = vmatprep.subr.bf16.mxu0 0
    %2923 = vmatpush1.bf16.msra.mxu0 0
    %2924 = vmatprep.subr.bf16.mxu0 0
    %2925 = vmatpush1.bf16.msra.mxu0 0
    %2926 = vmatprep.mubr.bf16.mxu0 0
    %2927 = vmatmul.mubr.bf16.gmra.mrb[0].mxu0 %v2893
    %v2928 = vpop.f32.mrb[0].mxu0
    %v2929 = vadd.f32 0.0, %v2928
    %v2930 = vpop.f32.mrb[0].mxu0
    %v2931 = vadd.f32 0.0, %v2930
    %v2932 = vpop.f32.mrb[0].mxu0
    %v2933 = vpop.f32.mrb[0].mxu0
    %2934 = vdwg.mxu0
    %2935 = vmatprep.subr.bf16.mxu0 %v2137
    %2936 = vmatpush1.bf16.msra.mxu0 %v2136
    %2937 = vmatprep.subr.bf16.mxu0 %v2141
    %2938 = vmatpush1.bf16.msra.mxu0 %v2140
    %2939 = vmatprep.subr.bf16.mxu0 %v2145
    %2940 = vmatpush1.bf16.msra.mxu0 %v2144
    %2941 = vmatprep.subr.bf16.mxu0 %v2149
    %2942 = vmatpush1.bf16.msra.mxu0 %v2148
    %2943 = vmatprep.subr.bf16.mxu0 %v2153
    %2944 = vmatpush1.bf16.msra.mxu0 %v2152
    %2945 = vmatprep.subr.bf16.mxu0 %v2157
    %2946 = vmatpush1.bf16.msra.mxu0 %v2156
    %2947 = vmatprep.subr.bf16.mxu0 %v2161
    %2948 = vmatpush1.bf16.msra.mxu0 %v2160
    %2949 = vmatprep.subr.bf16.mxu0 %v2165
    %2950 = vmatpush1.bf16.msra.mxu0 %v2164
    %2951 = vmatprep.subr.bf16.mxu0 0
    %2952 = vmatpush1.bf16.msra.mxu0 0
    %2953 = vmatprep.subr.bf16.mxu0 0
    %2954 = vmatpush1.bf16.msra.mxu0 0
    %2955 = vmatprep.subr.bf16.mxu0 0
    %2956 = vmatpush1.bf16.msra.mxu0 0
    %2957 = vmatprep.subr.bf16.mxu0 0
    %2958 = vmatpush1.bf16.msra.mxu0 0
    %2959 = vmatprep.subr.bf16.mxu0 0
    %2960 = vmatpush1.bf16.msra.mxu0 0
    %2961 = vmatprep.subr.bf16.mxu0 0
    %2962 = vmatpush1.bf16.msra.mxu0 0
    %2963 = vmatprep.subr.bf16.mxu0 0
    %2964 = vmatpush1.bf16.msra.mxu0 0
    %2965 = vmatprep.subr.bf16.mxu0 0
    %2966 = vmatpush1.bf16.msra.mxu0 0
    %2967 = vmatprep.mubr.bf16.mxu0 0
    %2968 = vmatmul.mubr.bf16.gmra.mrb[0].mxu0 %v2893
    %v2969 = vpop.f32.mrb[0].mxu0
    %v2970 = vadd.f32 0.0, %v2969
    %v2971 = vpop.f32.mrb[0].mxu0
    %v2972 = vadd.f32 0.0, %v2971
    %v2973 = vpop.f32.mrb[0].mxu0
    %v2974 = vpop.f32.mrb[0].mxu0
    %2975 = vdwg.mxu0
    %v2976 = vadd.f32 %v2889, %v2929
    %v2977 = vadd.f32 %v2890, %v2931
    %v2978 = vadd.f32 %v2891, %v2970
    %v2979 = vadd.f32 %v2892, %v2972
    %v2980 = vxor.u32 %v2976, 2147483648
    %v2981 = vmul.f32 %v2980, 1.442695
    %v2982 = vpow.pop %v2981
    %v2983 = vadd.f32 %v2982, 1.0
    %v2984 = vrcp.pop %v2983
    %v2985 = vmul.f32 1.0, %v2984
    %v2986 = vxor.u32 %v2977, 2147483648
    %v2987 = vmul.f32 %v2986, 1.442695
    %v2988 = vpow.pop %v2987
    %v2989 = vadd.f32 %v2988, 1.0
    %v2990 = vrcp.pop %v2989
    %v2991 = vmul.f32 1.0, %v2990
    %v2992 = vtanh.pop %v2978
    %v2993 = vxor.u32 %v2979, 2147483648
    %v2994 = vmul.f32 %v2993, 1.442695
    %v2995 = vpow.pop %v2994
    %v2996 = vadd.f32 %v2995, 1.0
    %v2997 = vrcp.pop %v2996
    %v2998 = vmul.f32 1.0, %v2997
    %v2999 = vmul.f32 %v2991, %v2885
    %v3000 = vmul.f32 %v2985, %v2992
    %v3001 = vadd.f32 %v2999, %v3000
    %v3002 = vtanh.pop %v3001
    %v3003 = vmul.f32 %v2998, %v3002
    %3004 = vst [vmem:[%s1475] sm:$0xff] %v3003
    %v3005 = vld [vmem:[%s1477] sm:$0xff]
    %v3006 = vld [vmem:[%s1477 + $0x8] sm:$0xff]
    %v3007 = vld [vmem:[%s1477 + $0x10] sm:$0xff]
    %v3008 = vld [vmem:[%s1477 + $0x18] sm:$0xff]
    %v3009 = vpack.c.bf16 %v3003, %v3003
    %3010 = vmatprep.subr.bf16.mxu0 %v2135
    %3011 = vmatpush1.bf16.msra.mxu0 %v2134
    %3012 = vmatprep.subr.bf16.mxu0 %v2139
    %3013 = vmatpush1.bf16.msra.mxu0 %v2138
    %3014 = vmatprep.subr.bf16.mxu0 %v2143
    %3015 = vmatpush1.bf16.msra.mxu0 %v2142
    %3016 = vmatprep.subr.bf16.mxu0 %v2147
    %3017 = vmatpush1.bf16.msra.mxu0 %v2146
    %3018 = vmatprep.subr.bf16.mxu0 %v2151
    %3019 = vmatpush1.bf16.msra.mxu0 %v2150
    %3020 = vmatprep.subr.bf16.mxu0 %v2155
    %3021 = vmatpush1.bf16.msra.mxu0 %v2154
    %3022 = vmatprep.subr.bf16.mxu0 %v2159
    %3023 = vmatpush1.bf16.msra.mxu0 %v2158
    %3024 = vmatprep.subr.bf16.mxu0 %v2163
    %3025 = vmatpush1.bf16.msra.mxu0 %v2162
    %3026 = vmatprep.subr.bf16.mxu0 0
    %3027 = vmatpush1.bf16.msra.mxu0 0
    %3028 = vmatprep.subr.bf16.mxu0 0
    %3029 = vmatpush1.bf16.msra.mxu0 0
    %3030 = vmatprep.subr.bf16.mxu0 0
    %3031 = vmatpush1.bf16.msra.mxu0 0
    %3032 = vmatprep.subr.bf16.mxu0 0
    %3033 = vmatpush1.bf16.msra.mxu0 0
    %3034 = vmatprep.subr.bf16.mxu0 0
    %3035 = vmatpush1.bf16.msra.mxu0 0
    %3036 = vmatprep.subr.bf16.mxu0 0
    %3037 = vmatpush1.bf16.msra.mxu0 0
    %3038 = vmatprep.subr.bf16.mxu0 0
    %3039 = vmatpush1.bf16.msra.mxu0 0
    %3040 = vmatprep.subr.bf16.mxu0 0
    %3041 = vmatpush1.bf16.msra.mxu0 0
    %3042 = vmatprep.mubr.bf16.mxu0 0
    %3043 = vmatmul.mubr.bf16.gmra.mrb[0].mxu0 %v3009
    %v3044 = vpop.f32.mrb[0].mxu0
    %v3045 = vadd.f32 0.0, %v3044
    %v3046 = vpop.f32.mrb[0].mxu0
    %v3047 = vadd.f32 0.0, %v3046
    %v3048 = vpop.f32.mrb[0].mxu0
    %v3049 = vpop.f32.mrb[0].mxu0
    %3050 = vdwg.mxu0
    %3051 = vmatprep.subr.bf16.mxu0 %v2137
    %3052 = vmatpush1.bf16.msra.mxu0 %v2136
    %3053 = vmatprep.subr.bf16.mxu0 %v2141
    %3054 = vmatpush1.bf16.msra.mxu0 %v2140
    %3055 = vmatprep.subr.bf16.mxu0 %v2145
    %3056 = vmatpush1.bf16.msra.mxu0 %v2144
    %3057 = vmatprep.subr.bf16.mxu0 %v2149
    %3058 = vmatpush1.bf16.msra.mxu0 %v2148
    %3059 = vmatprep.subr.bf16.mxu0 %v2153
    %3060 = vmatpush1.bf16.msra.mxu0 %v2152
    %3061 = vmatprep.subr.bf16.mxu0 %v2157
    %3062 = vmatpush1.bf16.msra.mxu0 %v2156
    %3063 = vmatprep.subr.bf16.mxu0 %v2161
    %3064 = vmatpush1.bf16.msra.mxu0 %v2160
    %3065 = vmatprep.subr.bf16.mxu0 %v2165
    %3066 = vmatpush1.bf16.msra.mxu0 %v2164
    %3067 = vmatprep.subr.bf16.mxu0 0
    %3068 = vmatpush1.bf16.msra.mxu0 0
    %3069 = vmatprep.subr.bf16.mxu0 0
    %3070 = vmatpush1.bf16.msra.mxu0 0
    %3071 = vmatprep.subr.bf16.mxu0 0
    %3072 = vmatpush1.bf16.msra.mxu0 0
    %3073 = vmatprep.subr.bf16.mxu0 0
    %3074 = vmatpush1.bf16.msra.mxu0 0
    %3075 = vmatprep.subr.bf16.mxu0 0
    %3076 = vmatpush1.bf16.msra.mxu0 0
    %3077 = vmatprep.subr.bf16.mxu0 0
    %3078 = vmatpush1.bf16.msra.mxu0 0
    %3079 = vmatprep.subr.bf16.mxu0 0
    %3080 = vmatpush1.bf16.msra.mxu0 0
    %3081 = vmatprep.subr.bf16.mxu0 0
    %3082 = vmatpush1.bf16.msra.mxu0 0
    %3083 = vmatprep.mubr.bf16.mxu0 0
    %3084 = vmatmul.mubr.bf16.gmra.mrb[0].mxu0 %v3009
    %v3085 = vpop.f32.mrb[0].mxu0
    %v3086 = vadd.f32 0.0, %v3085
    %v3087 = vpop.f32.mrb[0].mxu0
    %v3088 = vadd.f32 0.0, %v3087
    %v3089 = vpop.f32.mrb[0].mxu0
    %v3090 = vpop.f32.mrb[0].mxu0
    %3091 = vdwg.mxu0
    %v3092 = vadd.f32 %v3005, %v3045
    %v3093 = vadd.f32 %v3006, %v3047
    %v3094 = vadd.f32 %v3007, %v3086
    %v3095 = vadd.f32 %v3008, %v3088
    %v3096 = vxor.u32 %v3092, 2147483648
    %v3097 = vmul.f32 %v3096, 1.442695
    %v3098 = vpow.pop %v3097
    %v3099 = vadd.f32 %v3098, 1.0
    %v3100 = vrcp.pop %v3099
    %v3101 = vmul.f32 1.0, %v3100
    %v3102 = vxor.u32 %v3093, 2147483648
    %v3103 = vmul.f32 %v3102, 1.442695
    %v3104 = vpow.pop %v3103
    %v3105 = vadd.f32 %v3104, 1.0
    %v3106 = vrcp.pop %v3105
    %v3107 = vmul.f32 1.0, %v3106
    %v3108 = vtanh.pop %v3094
    %v3109 = vxor.u32 %v3095, 2147483648
    %v3110 = vmul.f32 %v3109, 1.442695
    %v3111 = vpow.pop %v3110
    %v3112 = vadd.f32 %v3111, 1.0
    %v3113 = vrcp.pop %v3112
    %v3114 = vmul.f32 1.0, %v3113
    %v3115 = vmul.f32 %v3107, %v3001
    %v3116 = vmul.f32 %v3101, %v3108
    %v3117 = vadd.f32 %v3115, %v3116
    %v3118 = vtanh.pop %v3117
    %v3119 = vmul.f32 %v3114, %v3118
    %3120 = vst [vmem:[%s1593] sm:$0xff] %v3119
    %s3121 = scalar_lea.vmem [#allocation4], 512
    %v3122 = vld [vmem:[%s3121] sm:$0xff]
    %v3123 = vld [vmem:[%s3121 + $0x8] sm:$0xff]
    %v3124 = vld [vmem:[%s3121 + $0x10] sm:$0xff]
    %v3125 = vld [vmem:[%s3121 + $0x18] sm:$0xff]
    %v3126 = vld [vmem:[%s3121 + $0x20] sm:$0xff]
    %v3127 = vld [vmem:[%s3121 + $0x28] sm:$0xff]
    %v3128 = vld [vmem:[%s3121 + $0x30] sm:$0xff]
    %v3129 = vld [vmem:[%s3121 + $0x38] sm:$0xff]
    %v3130 = vld [vmem:[%s3121 + $0x40] sm:$0xff]
    %v3131 = vld [vmem:[%s3121 + $0x48] sm:$0xff]
    %v3132 = vld [vmem:[%s3121 + $0x50] sm:$0xff]
    %v3133 = vld [vmem:[%s3121 + $0x58] sm:$0xff]
    %v3134 = vld [vmem:[%s3121 + $0x60] sm:$0xff]
    %v3135 = vld [vmem:[%s3121 + $0x68] sm:$0xff]
    %v3136 = vld [vmem:[%s3121 + $0x70] sm:$0xff]
    %v3137 = vld [vmem:[%s3121 + $0x78] sm:$0xff]
    %v3138 = vld [vmem:[%s3121 + $0x80] sm:$0xff]
    %v3139 = vld [vmem:[%s3121 + $0x88] sm:$0xff]
    %v3140 = vld [vmem:[%s3121 + $0x90] sm:$0xff]
    %v3141 = vld [vmem:[%s3121 + $0x98] sm:$0xff]
    %v3142 = vld [vmem:[%s3121 + $0xa0] sm:$0xff]
    %v3143 = vld [vmem:[%s3121 + $0xa8] sm:$0xff]
    %v3144 = vld [vmem:[%s3121 + $0xb0] sm:$0xff]
    %v3145 = vld [vmem:[%s3121 + $0xb8] sm:$0xff]
    %v3146 = vld [vmem:[%s3121 + $0xc0] sm:$0xff]
    %v3147 = vld [vmem:[%s3121 + $0xc8] sm:$0xff]
    %v3148 = vld [vmem:[%s3121 + $0xd0] sm:$0xff]
    %v3149 = vld [vmem:[%s3121 + $0xd8] sm:$0xff]
    %v3150 = vld [vmem:[%s3121 + $0xe0] sm:$0xff]
    %v3151 = vld [vmem:[%s3121 + $0xe8] sm:$0xff]
    %v3152 = vld [vmem:[%s3121 + $0xf0] sm:$0xff]
    %v3153 = vld [vmem:[%s3121 + $0xf8] sm:$0xff]
    %s3154 = scalar_lea.vmem [#allocation6], 512
    %v3155 = vld [vmem:[%s3154] sm:$0xff]
    %v3156 = vld [vmem:[%s3154 + $0x8] sm:$0xff]
    %v3157 = vld [vmem:[%s3154 + $0x10] sm:$0xff]
    %v3158 = vld [vmem:[%s3154 + $0x18] sm:$0xff]
    %v3159 = vld [vmem:[%s3154 + $0x20] sm:$0xff]
    %v3160 = vld [vmem:[%s3154 + $0x28] sm:$0xff]
    %v3161 = vld [vmem:[%s3154 + $0x30] sm:$0xff]
    %v3162 = vld [vmem:[%s3154 + $0x38] sm:$0xff]
    %v3163 = vld [vmem:[%s3154 + $0x40] sm:$0xff]
    %v3164 = vld [vmem:[%s3154 + $0x48] sm:$0xff]
    %v3165 = vld [vmem:[%s3154 + $0x50] sm:$0xff]
    %v3166 = vld [vmem:[%s3154 + $0x58] sm:$0xff]
    %v3167 = vld [vmem:[%s3154 + $0x60] sm:$0xff]
    %v3168 = vld [vmem:[%s3154 + $0x68] sm:$0xff]
    %v3169 = vld [vmem:[%s3154 + $0x70] sm:$0xff]
    %v3170 = vld [vmem:[%s3154 + $0x78] sm:$0xff]
    %v3171 = vld [vmem:[%s3154 + $0x80] sm:$0xff]
    %v3172 = vld [vmem:[%s3154 + $0x88] sm:$0xff]
    %v3173 = vld [vmem:[%s3154 + $0x90] sm:$0xff]
    %v3174 = vld [vmem:[%s3154 + $0x98] sm:$0xff]
    %v3175 = vld [vmem:[%s3154 + $0xa0] sm:$0xff]
    %v3176 = vld [vmem:[%s3154 + $0xa8] sm:$0xff]
    %v3177 = vld [vmem:[%s3154 + $0xb0] sm:$0xff]
    %v3178 = vld [vmem:[%s3154 + $0xb8] sm:$0xff]
    %v3179 = vld [vmem:[%s3154 + $0xc0] sm:$0xff]
    %v3180 = vld [vmem:[%s3154 + $0xc8] sm:$0xff]
    %v3181 = vld [vmem:[%s3154 + $0xd0] sm:$0xff]
    %v3182 = vld [vmem:[%s3154 + $0xd8] sm:$0xff]
    %v3183 = vld [vmem:[%s3154 + $0xe0] sm:$0xff]
    %v3184 = vld [vmem:[%s3154 + $0xe8] sm:$0xff]
    %v3185 = vld [vmem:[%s3154 + $0xf0] sm:$0xff]
    %v3186 = vld [vmem:[%s3154 + $0xf8] sm:$0xff]
    %s3187 = scalar_lea.vmem %s3, 8
    %v3188 = vld [vmem:[%s3187] sm:$0xf]
    %v3189 = vld [vmem:[#allocation2] sm:$0xff]
    %v3190 = vld [vmem:[#allocation2 + $0x8] sm:$0xff]
    %v3191 = vld [vmem:[#allocation2 + $0x10] sm:$0xff]
    %v3192 = vld [vmem:[#allocation2 + $0x18] sm:$0xff]
    %v3193 = vld [vmem:[#allocation2 + $0x20] sm:$0xff]
    %v3194 = vld [vmem:[#allocation2 + $0x28] sm:$0xff]
    %v3195 = vld [vmem:[#allocation2 + $0x30] sm:$0xff]
    %v3196 = vld [vmem:[#allocation2 + $0x38] sm:$0xff]
    %v3197 = vld [vmem:[%s6] sm:$0xff]
    %v3198 = vld [vmem:[%s6 + $0x8] sm:$0xff]
    %v3199 = vld [vmem:[%s6 + $0x10] sm:$0xff]
    %v3200 = vld [vmem:[%s6 + $0x18] sm:$0xff]
    %v3201 = vld [vmem:[%s6 + $0x20] sm:$0xff]
    %v3202 = vld [vmem:[%s6 + $0x28] sm:$0xff]
    %v3203 = vld [vmem:[%s6 + $0x30] sm:$0xff]
    %v3204 = vld [vmem:[%s6 + $0x38] sm:$0xff]
    %v3205 = vmul.f32 %v3189, %v3197
    %v3206 = vmul.f32 %v3190, %v3198
    %v3207 = vmul.f32 %v3191, %v3199
    %v3208 = vmul.f32 %v3192, %v3200
    %v3209 = vmul.f32 %v3193, %v3201
    %v3210 = vmul.f32 %v3194, %v3202
    %v3211 = vmul.f32 %v3195, %v3203
    %v3212 = vmul.f32 %v3196, %v3204
    %v3213 = vpack.c.bf16 %v3206, %v3205
    %v3214 = vpack.c.bf16 %v3208, %v3207
    %v3215 = vpack.c.bf16 %v3210, %v3209
    %v3216 = vpack.c.bf16 %v3212, %v3211
    %v3218 = vlaneseq
    %v3219 = vshrl.u32 %v3218, 7
    %v3220 = vsub.s32 0, %v3219
    %v3221 = vrot.slane %v3188, %v3220
    %v3222 = vlaneseq
    %v3223 = vshrl.u32 %v3222, 7
    %v3224 = vsub.s32 1, %v3223
    %v3225 = vrot.slane %v3188, %v3224
    %v3226 = vlaneseq
    %v3227 = vshrl.u32 %v3226, 7
    %v3228 = vsub.s32 2, %v3227
    %v3229 = vrot.slane %v3188, %v3228
    %v3230 = vlaneseq
    %v3231 = vshrl.u32 %v3230, 7
    %v3232 = vsub.s32 3, %v3231
    %v3233 = vrot.slane %v3188, %v3232
    %v3270 = vunpack.c.l.b16 %v3122
    %v3271 = vunpack.c.h.b16 %v3122
    %v3272 = vunpack.c.l.b16 %v3123
    %v3273 = vunpack.c.h.b16 %v3123
    %v3274 = vunpack.c.l.b16 %v3124
    %v3275 = vunpack.c.h.b16 %v3124
    %v3276 = vunpack.c.l.b16 %v3125
    %v3277 = vunpack.c.h.b16 %v3125
    %v3278 = vunpack.c.l.b16 %v3126
    %v3279 = vunpack.c.h.b16 %v3126
    %v3280 = vunpack.c.l.b16 %v3127
    %v3281 = vunpack.c.h.b16 %v3127
    %v3282 = vunpack.c.l.b16 %v3128
    %v3283 = vunpack.c.h.b16 %v3128
    %v3284 = vunpack.c.l.b16 %v3129
    %v3285 = vunpack.c.h.b16 %v3129
    %v3286 = vunpack.c.l.b16 %v3130
    %v3287 = vunpack.c.h.b16 %v3130
    %v3288 = vunpack.c.l.b16 %v3131
    %v3289 = vunpack.c.h.b16 %v3131
    %v3290 = vunpack.c.l.b16 %v3132
    %v3291 = vunpack.c.h.b16 %v3132
    %v3292 = vunpack.c.l.b16 %v3133
    %v3293 = vunpack.c.h.b16 %v3133
    %v3294 = vunpack.c.l.b16 %v3134
    %v3295 = vunpack.c.h.b16 %v3134
    %v3296 = vunpack.c.l.b16 %v3135
    %v3297 = vunpack.c.h.b16 %v3135
    %v3298 = vunpack.c.l.b16 %v3136
    %v3299 = vunpack.c.h.b16 %v3136
    %v3300 = vunpack.c.l.b16 %v3137
    %v3301 = vunpack.c.h.b16 %v3137
    %v3302 = vunpack.c.l.b16 %v3138
    %v3303 = vunpack.c.h.b16 %v3138
    %v3304 = vunpack.c.l.b16 %v3139
    %v3305 = vunpack.c.h.b16 %v3139
    %v3306 = vunpack.c.l.b16 %v3140
    %v3307 = vunpack.c.h.b16 %v3140
    %v3308 = vunpack.c.l.b16 %v3141
    %v3309 = vunpack.c.h.b16 %v3141
    %v3310 = vunpack.c.l.b16 %v3142
    %v3311 = vunpack.c.h.b16 %v3142
    %v3312 = vunpack.c.l.b16 %v3143
    %v3313 = vunpack.c.h.b16 %v3143
    %v3314 = vunpack.c.l.b16 %v3144
    %v3315 = vunpack.c.h.b16 %v3144
    %v3316 = vunpack.c.l.b16 %v3145
    %v3317 = vunpack.c.h.b16 %v3145
    %v3318 = vunpack.c.l.b16 %v3146
    %v3319 = vunpack.c.h.b16 %v3146
    %v3320 = vunpack.c.l.b16 %v3147
    %v3321 = vunpack.c.h.b16 %v3147
    %v3322 = vunpack.c.l.b16 %v3148
    %v3323 = vunpack.c.h.b16 %v3148
    %v3324 = vunpack.c.l.b16 %v3149
    %v3325 = vunpack.c.h.b16 %v3149
    %v3326 = vunpack.c.l.b16 %v3150
    %v3327 = vunpack.c.h.b16 %v3150
    %v3328 = vunpack.c.l.b16 %v3151
    %v3329 = vunpack.c.h.b16 %v3151
    %v3330 = vunpack.c.l.b16 %v3152
    %v3331 = vunpack.c.h.b16 %v3152
    %v3332 = vunpack.c.l.b16 %v3153
    %v3333 = vunpack.c.h.b16 %v3153
    %v3334 = vpack.c.b16 %v3274, %v3270
    %v3335 = vpack.c.b16 %v3275, %v3271
    %v3336 = vpack.c.b16 %v3276, %v3272
    %v3337 = vpack.c.b16 %v3277, %v3273
    %v3338 = vpack.c.b16 %v3282, %v3278
    %v3339 = vpack.c.b16 %v3283, %v3279
    %v3340 = vpack.c.b16 %v3284, %v3280
    %v3341 = vpack.c.b16 %v3285, %v3281
    %v3342 = vpack.c.b16 %v3290, %v3286
    %v3343 = vpack.c.b16 %v3291, %v3287
    %v3344 = vpack.c.b16 %v3292, %v3288
    %v3345 = vpack.c.b16 %v3293, %v3289
    %v3346 = vpack.c.b16 %v3298, %v3294
    %v3347 = vpack.c.b16 %v3299, %v3295
    %v3348 = vpack.c.b16 %v3300, %v3296
    %v3349 = vpack.c.b16 %v3301, %v3297
    %v3350 = vpack.c.b16 %v3306, %v3302
    %v3351 = vpack.c.b16 %v3307, %v3303
    %v3352 = vpack.c.b16 %v3308, %v3304
    %v3353 = vpack.c.b16 %v3309, %v3305
    %v3354 = vpack.c.b16 %v3314, %v3310
    %v3355 = vpack.c.b16 %v3315, %v3311
    %v3356 = vpack.c.b16 %v3316, %v3312
    %v3357 = vpack.c.b16 %v3317, %v3313
    %v3358 = vpack.c.b16 %v3322, %v3318
    %v3359 = vpack.c.b16 %v3323, %v3319
    %v3360 = vpack.c.b16 %v3324, %v3320
    %v3361 = vpack.c.b16 %v3325, %v3321
    %v3362 = vpack.c.b16 %v3330, %v3326
    %v3363 = vpack.c.b16 %v3331, %v3327
    %v3364 = vpack.c.b16 %v3332, %v3328
    %v3365 = vpack.c.b16 %v3333, %v3329
    %3398 = vmatprep.subr.bf16.mxu0 %v3335
    %3399 = vmatpush1.bf16.msra.mxu0 %v3334
    %3400 = vmatprep.subr.bf16.mxu0 %v3339
    %3401 = vmatpush1.bf16.msra.mxu0 %v3338
    %3402 = vmatprep.subr.bf16.mxu0 %v3343
    %3403 = vmatpush1.bf16.msra.mxu0 %v3342
    %3404 = vmatprep.subr.bf16.mxu0 %v3347
    %3405 = vmatpush1.bf16.msra.mxu0 %v3346
    %3406 = vmatprep.subr.bf16.mxu0 %v3351
    %3407 = vmatpush1.bf16.msra.mxu0 %v3350
    %3408 = vmatprep.subr.bf16.mxu0 %v3355
    %3409 = vmatpush1.bf16.msra.mxu0 %v3354
    %3410 = vmatprep.subr.bf16.mxu0 %v3359
    %3411 = vmatpush1.bf16.msra.mxu0 %v3358
    %3412 = vmatprep.subr.bf16.mxu0 %v3363
    %3413 = vmatpush1.bf16.msra.mxu0 %v3362
    %3414 = vmatprep.subr.bf16.mxu0 0
    %3415 = vmatpush1.bf16.msra.mxu0 0
    %3416 = vmatprep.subr.bf16.mxu0 0
    %3417 = vmatpush1.bf16.msra.mxu0 0
    %3418 = vmatprep.subr.bf16.mxu0 0
    %3419 = vmatpush1.bf16.msra.mxu0 0
    %3420 = vmatprep.subr.bf16.mxu0 0
    %3421 = vmatpush1.bf16.msra.mxu0 0
    %3422 = vmatprep.subr.bf16.mxu0 0
    %3423 = vmatpush1.bf16.msra.mxu0 0
    %3424 = vmatprep.subr.bf16.mxu0 0
    %3425 = vmatpush1.bf16.msra.mxu0 0
    %3426 = vmatprep.subr.bf16.mxu0 0
    %3427 = vmatpush1.bf16.msra.mxu0 0
    %3428 = vmatprep.subr.bf16.mxu0 0
    %3429 = vmatpush1.bf16.msra.mxu0 0
    %3430 = vmatprep.mubr.bf16.mxu0 0
    %3431 = vmatmul.mubr.bf16.gmra.mrb[0].mxu0 %v3213
    %v3432 = vpop.f32.mrb[0].mxu0
    %v3433 = vadd.f32 %v3221, %v3432
    %v3434 = vpop.f32.mrb[0].mxu0
    %v3435 = vadd.f32 %v3225, %v3434
    %v3436 = vpop.f32.mrb[0].mxu0
    %v3437 = vadd.f32 %v3221, %v3436
    %v3438 = vpop.f32.mrb[0].mxu0
    %v3439 = vadd.f32 %v3225, %v3438
    %3440 = vmatprep.mubr.bf16.mxu0 0
    %3441 = vmatmul.mubr.bf16.gmra.mrb[0].mxu0 %v3214
    %v3442 = vpop.f32.mrb[0].mxu0
    %v3443 = vadd.f32 %v3221, %v3442
    %v3444 = vpop.f32.mrb[0].mxu0
    %v3445 = vadd.f32 %v3225, %v3444
    %v3446 = vpop.f32.mrb[0].mxu0
    %v3447 = vadd.f32 %v3221, %v3446
    %v3448 = vpop.f32.mrb[0].mxu0
    %v3449 = vadd.f32 %v3225, %v3448
    %3450 = vmatprep.mubr.bf16.mxu0 0
    %3451 = vmatmul.mubr.bf16.gmra.mrb[0].mxu0 %v3215
    %v3452 = vpop.f32.mrb[0].mxu0
    %v3453 = vadd.f32 %v3221, %v3452
    %v3454 = vpop.f32.mrb[0].mxu0
    %v3455 = vadd.f32 %v3225, %v3454
    %v3456 = vpop.f32.mrb[0].mxu0
    %v3457 = vadd.f32 %v3221, %v3456
    %v3458 = vpop.f32.mrb[0].mxu0
    %v3459 = vadd.f32 %v3225, %v3458
    %3460 = vmatprep.mubr.bf16.mxu0 0
    %3461 = vmatmul.mubr.bf16.gmra.mrb[0].mxu0 %v3216
    %v3462 = vpop.f32.mrb[0].mxu0
    %v3463 = vadd.f32 %v3221, %v3462
    %v3464 = vpop.f32.mrb[0].mxu0
    %v3465 = vadd.f32 %v3225, %v3464
    %v3466 = vpop.f32.mrb[0].mxu0
    %v3467 = vadd.f32 %v3221, %v3466
    %v3468 = vpop.f32.mrb[0].mxu0
    %v3469 = vadd.f32 %v3225, %v3468
    %3470 = vdwg.mxu0
    %3471 = vmatprep.subr.bf16.mxu0 %v3337
    %3472 = vmatpush1.bf16.msra.mxu0 %v3336
    %3473 = vmatprep.subr.bf16.mxu0 %v3341
    %3474 = vmatpush1.bf16.msra.mxu0 %v3340
    %3475 = vmatprep.subr.bf16.mxu0 %v3345
    %3476 = vmatpush1.bf16.msra.mxu0 %v3344
    %3477 = vmatprep.subr.bf16.mxu0 %v3349
    %3478 = vmatpush1.bf16.msra.mxu0 %v3348
    %3479 = vmatprep.subr.bf16.mxu0 %v3353
    %3480 = vmatpush1.bf16.msra.mxu0 %v3352
    %3481 = vmatprep.subr.bf16.mxu0 %v3357
    %3482 = vmatpush1.bf16.msra.mxu0 %v3356
    %3483 = vmatprep.subr.bf16.mxu0 %v3361
    %3484 = vmatpush1.bf16.msra.mxu0 %v3360
    %3485 = vmatprep.subr.bf16.mxu0 %v3365
    %3486 = vmatpush1.bf16.msra.mxu0 %v3364
    %3487 = vmatprep.subr.bf16.mxu0 0
    %3488 = vmatpush1.bf16.msra.mxu0 0
    %3489 = vmatprep.subr.bf16.mxu0 0
    %3490 = vmatpush1.bf16.msra.mxu0 0
    %3491 = vmatprep.subr.bf16.mxu0 0
    %3492 = vmatpush1.bf16.msra.mxu0 0
    %3493 = vmatprep.subr.bf16.mxu0 0
    %3494 = vmatpush1.bf16.msra.mxu0 0
    %3495 = vmatprep.subr.bf16.mxu0 0
    %3496 = vmatpush1.bf16.msra.mxu0 0
    %3497 = vmatprep.subr.bf16.mxu0 0
    %3498 = vmatpush1.bf16.msra.mxu0 0
    %3499 = vmatprep.subr.bf16.mxu0 0
    %3500 = vmatpush1.bf16.msra.mxu0 0
    %3501 = vmatprep.subr.bf16.mxu0 0
    %3502 = vmatpush1.bf16.msra.mxu0 0
    %3503 = vmatprep.mubr.bf16.mxu0 0
    %3504 = vmatmul.mubr.bf16.gmra.mrb[0].mxu0 %v3213
    %v3505 = vpop.f32.mrb[0].mxu0
    %v3506 = vadd.f32 %v3229, %v3505
    %v3507 = vpop.f32.mrb[0].mxu0
    %v3508 = vadd.f32 %v3233, %v3507
    %v3509 = vpop.f32.mrb[0].mxu0
    %v3510 = vadd.f32 %v3229, %v3509
    %v3511 = vpop.f32.mrb[0].mxu0
    %v3512 = vadd.f32 %v3233, %v3511
    %3513 = vmatprep.mubr.bf16.mxu0 0
    %3514 = vmatmul.mubr.bf16.gmra.mrb[0].mxu0 %v3214
    %v3515 = vpop.f32.mrb[0].mxu0
    %v3516 = vadd.f32 %v3229, %v3515
    %v3517 = vpop.f32.mrb[0].mxu0
    %v3518 = vadd.f32 %v3233, %v3517
    %v3519 = vpop.f32.mrb[0].mxu0
    %v3520 = vadd.f32 %v3229, %v3519
    %v3521 = vpop.f32.mrb[0].mxu0
    %v3522 = vadd.f32 %v3233, %v3521
    %3523 = vmatprep.mubr.bf16.mxu0 0
    %3524 = vmatmul.mubr.bf16.gmra.mrb[0].mxu0 %v3215
    %v3525 = vpop.f32.mrb[0].mxu0
    %v3526 = vadd.f32 %v3229, %v3525
    %v3527 = vpop.f32.mrb[0].mxu0
    %v3528 = vadd.f32 %v3233, %v3527
    %v3529 = vpop.f32.mrb[0].mxu0
    %v3530 = vadd.f32 %v3229, %v3529
    %v3531 = vpop.f32.mrb[0].mxu0
    %v3532 = vadd.f32 %v3233, %v3531
    %3533 = vmatprep.mubr.bf16.mxu0 0
    %3534 = vmatmul.mubr.bf16.gmra.mrb[0].mxu0 %v3216
    %v3535 = vpop.f32.mrb[0].mxu0
    %v3536 = vadd.f32 %v3229, %v3535
    %v3537 = vpop.f32.mrb[0].mxu0
    %v3538 = vadd.f32 %v3233, %v3537
    %v3539 = vpop.f32.mrb[0].mxu0
    %v3540 = vadd.f32 %v3229, %v3539
    %v3541 = vpop.f32.mrb[0].mxu0
    %v3542 = vadd.f32 %v3233, %v3541
    %3543 = vdwg.mxu0
    %3544 = vst [vmem:[#allocation3] sm:$0xff] %v3433
    %3545 = vst [vmem:[#allocation3 + $0x8] sm:$0xff] %v3435
    %3546 = vst [vmem:[#allocation3 + $0x10] sm:$0xff] %v3506
    %3547 = vst [vmem:[#allocation3 + $0x18] sm:$0xff] %v3508
    %3548 = vst [vmem:[#allocation3 + $0x20] sm:$0xff] %v3437
    %3549 = vst [vmem:[#allocation3 + $0x28] sm:$0xff] %v3439
    %3550 = vst [vmem:[#allocation3 + $0x30] sm:$0xff] %v3510
    %3551 = vst [vmem:[#allocation3 + $0x38] sm:$0xff] %v3512
    %3552 = vst [vmem:[#allocation3 + $0x40] sm:$0xff] %v3443
    %3553 = vst [vmem:[#allocation3 + $0x48] sm:$0xff] %v3445
    %3554 = vst [vmem:[#allocation3 + $0x50] sm:$0xff] %v3516
    %3555 = vst [vmem:[#allocation3 + $0x58] sm:$0xff] %v3518
    %3556 = vst [vmem:[#allocation3 + $0x60] sm:$0xff] %v3447
    %3557 = vst [vmem:[#allocation3 + $0x68] sm:$0xff] %v3449
    %3558 = vst [vmem:[#allocation3 + $0x70] sm:$0xff] %v3520
    %3559 = vst [vmem:[#allocation3 + $0x78] sm:$0xff] %v3522
    %3560 = vst [vmem:[#allocation3 + $0x80] sm:$0xff] %v3453
    %3561 = vst [vmem:[#allocation3 + $0x88] sm:$0xff] %v3455
    %3562 = vst [vmem:[#allocation3 + $0x90] sm:$0xff] %v3526
    %3563 = vst [vmem:[#allocation3 + $0x98] sm:$0xff] %v3528
    %3564 = vst [vmem:[#allocation3 + $0xa0] sm:$0xff] %v3457
    %3565 = vst [vmem:[#allocation3 + $0xa8] sm:$0xff] %v3459
    %3566 = vst [vmem:[#allocation3 + $0xb0] sm:$0xff] %v3530
    %3567 = vst [vmem:[#allocation3 + $0xb8] sm:$0xff] %v3532
    %3568 = vst [vmem:[#allocation3 + $0xc0] sm:$0xff] %v3463
    %3569 = vst [vmem:[#allocation3 + $0xc8] sm:$0xff] %v3465
    %3570 = vst [vmem:[#allocation3 + $0xd0] sm:$0xff] %v3536
    %3571 = vst [vmem:[#allocation3 + $0xd8] sm:$0xff] %v3538
    %3572 = vst [vmem:[#allocation3 + $0xe0] sm:$0xff] %v3467
    %3573 = vst [vmem:[#allocation3 + $0xe8] sm:$0xff] %v3469
    %3574 = vst [vmem:[#allocation3 + $0xf0] sm:$0xff] %v3540
    %3575 = vst [vmem:[#allocation3 + $0xf8] sm:$0xff] %v3542
    %v3576 = vld [vmem:[#allocation3] sm:$0xff]
    %v3577 = vld [vmem:[#allocation3 + $0x8] sm:$0xff]
    %v3578 = vld [vmem:[#allocation3 + $0x10] sm:$0xff]
    %v3579 = vld [vmem:[#allocation3 + $0x18] sm:$0xff]
    %v3612 = vunpack.c.l.b16 %v3155
    %v3613 = vunpack.c.h.b16 %v3155
    %v3614 = vunpack.c.l.b16 %v3156
    %v3615 = vunpack.c.h.b16 %v3156
    %v3616 = vunpack.c.l.b16 %v3157
    %v3617 = vunpack.c.h.b16 %v3157
    %v3618 = vunpack.c.l.b16 %v3158
    %v3619 = vunpack.c.h.b16 %v3158
    %v3620 = vunpack.c.l.b16 %v3159
    %v3621 = vunpack.c.h.b16 %v3159
    %v3622 = vunpack.c.l.b16 %v3160
    %v3623 = vunpack.c.h.b16 %v3160
    %v3624 = vunpack.c.l.b16 %v3161
    %v3625 = vunpack.c.h.b16 %v3161
    %v3626 = vunpack.c.l.b16 %v3162
    %v3627 = vunpack.c.h.b16 %v3162
    %v3628 = vunpack.c.l.b16 %v3163
    %v3629 = vunpack.c.h.b16 %v3163
    %v3630 = vunpack.c.l.b16 %v3164
    %v3631 = vunpack.c.h.b16 %v3164
    %v3632 = vunpack.c.l.b16 %v3165
    %v3633 = vunpack.c.h.b16 %v3165
    %v3634 = vunpack.c.l.b16 %v3166
    %v3635 = vunpack.c.h.b16 %v3166
    %v3636 = vunpack.c.l.b16 %v3167
    %v3637 = vunpack.c.h.b16 %v3167
    %v3638 = vunpack.c.l.b16 %v3168
    %v3639 = vunpack.c.h.b16 %v3168
    %v3640 = vunpack.c.l.b16 %v3169
    %v3641 = vunpack.c.h.b16 %v3169
    %v3642 = vunpack.c.l.b16 %v3170
    %v3643 = vunpack.c.h.b16 %v3170
    %v3644 = vunpack.c.l.b16 %v3171
    %v3645 = vunpack.c.h.b16 %v3171
    %v3646 = vunpack.c.l.b16 %v3172
    %v3647 = vunpack.c.h.b16 %v3172
    %v3648 = vunpack.c.l.b16 %v3173
    %v3649 = vunpack.c.h.b16 %v3173
    %v3650 = vunpack.c.l.b16 %v3174
    %v3651 = vunpack.c.h.b16 %v3174
    %v3652 = vunpack.c.l.b16 %v3175
    %v3653 = vunpack.c.h.b16 %v3175
    %v3654 = vunpack.c.l.b16 %v3176
    %v3655 = vunpack.c.h.b16 %v3176
    %v3656 = vunpack.c.l.b16 %v3177
    %v3657 = vunpack.c.h.b16 %v3177
    %v3658 = vunpack.c.l.b16 %v3178
    %v3659 = vunpack.c.h.b16 %v3178
    %v3660 = vunpack.c.l.b16 %v3179
    %v3661 = vunpack.c.h.b16 %v3179
    %v3662 = vunpack.c.l.b16 %v3180
    %v3663 = vunpack.c.h.b16 %v3180
    %v3664 = vunpack.c.l.b16 %v3181
    %v3665 = vunpack.c.h.b16 %v3181
    %v3666 = vunpack.c.l.b16 %v3182
    %v3667 = vunpack.c.h.b16 %v3182
    %v3668 = vunpack.c.l.b16 %v3183
    %v3669 = vunpack.c.h.b16 %v3183
    %v3670 = vunpack.c.l.b16 %v3184
    %v3671 = vunpack.c.h.b16 %v3184
    %v3672 = vunpack.c.l.b16 %v3185
    %v3673 = vunpack.c.h.b16 %v3185
    %v3674 = vunpack.c.l.b16 %v3186
    %v3675 = vunpack.c.h.b16 %v3186
    %v3676 = vpack.c.b16 %v3616, %v3612
    %v3677 = vpack.c.b16 %v3617, %v3613
    %v3678 = vpack.c.b16 %v3618, %v3614
    %v3679 = vpack.c.b16 %v3619, %v3615
    %v3680 = vpack.c.b16 %v3624, %v3620
    %v3681 = vpack.c.b16 %v3625, %v3621
    %v3682 = vpack.c.b16 %v3626, %v3622
    %v3683 = vpack.c.b16 %v3627, %v3623
    %v3684 = vpack.c.b16 %v3632, %v3628
    %v3685 = vpack.c.b16 %v3633, %v3629
    %v3686 = vpack.c.b16 %v3634, %v3630
    %v3687 = vpack.c.b16 %v3635, %v3631
    %v3688 = vpack.c.b16 %v3640, %v3636
    %v3689 = vpack.c.b16 %v3641, %v3637
    %v3690 = vpack.c.b16 %v3642, %v3638
    %v3691 = vpack.c.b16 %v3643, %v3639
    %v3692 = vpack.c.b16 %v3648, %v3644
    %v3693 = vpack.c.b16 %v3649, %v3645
    %v3694 = vpack.c.b16 %v3650, %v3646
    %v3695 = vpack.c.b16 %v3651, %v3647
    %v3696 = vpack.c.b16 %v3656, %v3652
    %v3697 = vpack.c.b16 %v3657, %v3653
    %v3698 = vpack.c.b16 %v3658, %v3654
    %v3699 = vpack.c.b16 %v3659, %v3655
    %v3700 = vpack.c.b16 %v3664, %v3660
    %v3701 = vpack.c.b16 %v3665, %v3661
    %v3702 = vpack.c.b16 %v3666, %v3662
    %v3703 = vpack.c.b16 %v3667, %v3663
    %v3704 = vpack.c.b16 %v3672, %v3668
    %v3705 = vpack.c.b16 %v3673, %v3669
    %v3706 = vpack.c.b16 %v3674, %v3670
    %v3707 = vpack.c.b16 %v3675, %v3671
    %3740 = vmatprep.subr.bf16.mxu0 %v3677
    %3741 = vmatpush1.bf16.msra.mxu0 %v3676
    %3742 = vmatprep.subr.bf16.mxu0 %v3681
    %3743 = vmatpush1.bf16.msra.mxu0 %v3680
    %3744 = vmatprep.subr.bf16.mxu0 %v3685
    %3745 = vmatpush1.bf16.msra.mxu0 %v3684
    %3746 = vmatprep.subr.bf16.mxu0 %v3689
    %3747 = vmatpush1.bf16.msra.mxu0 %v3688
    %3748 = vmatprep.subr.bf16.mxu0 %v3693
    %3749 = vmatpush1.bf16.msra.mxu0 %v3692
    %3750 = vmatprep.subr.bf16.mxu0 %v3697
    %3751 = vmatpush1.bf16.msra.mxu0 %v3696
    %3752 = vmatprep.subr.bf16.mxu0 %v3701
    %3753 = vmatpush1.bf16.msra.mxu0 %v3700
    %3754 = vmatprep.subr.bf16.mxu0 %v3705
    %3755 = vmatpush1.bf16.msra.mxu0 %v3704
    %3756 = vmatprep.subr.bf16.mxu0 0
    %3757 = vmatpush1.bf16.msra.mxu0 0
    %3758 = vmatprep.subr.bf16.mxu0 0
    %3759 = vmatpush1.bf16.msra.mxu0 0
    %3760 = vmatprep.subr.bf16.mxu0 0
    %3761 = vmatpush1.bf16.msra.mxu0 0
    %3762 = vmatprep.subr.bf16.mxu0 0
    %3763 = vmatpush1.bf16.msra.mxu0 0
    %3764 = vmatprep.subr.bf16.mxu0 0
    %3765 = vmatpush1.bf16.msra.mxu0 0
    %3766 = vmatprep.subr.bf16.mxu0 0
    %3767 = vmatpush1.bf16.msra.mxu0 0
    %3768 = vmatprep.subr.bf16.mxu0 0
    %3769 = vmatpush1.bf16.msra.mxu0 0
    %3770 = vmatprep.subr.bf16.mxu0 0
    %3771 = vmatpush1.bf16.msra.mxu0 0
    %3772 = vmatprep.mubr.bf16.mxu0 0
    %3773 = vmatmul.mubr.bf16.gmra.mrb[0].mxu0 0
    %v3774 = vpop.f32.mrb[0].mxu0
    %v3775 = vadd.f32 0.0, %v3774
    %v3776 = vpop.f32.mrb[0].mxu0
    %v3777 = vadd.f32 0.0, %v3776
    %v3778 = vpop.f32.mrb[0].mxu0
    %v3779 = vpop.f32.mrb[0].mxu0
    %3780 = vdwg.mxu0
    %3781 = vmatprep.subr.bf16.mxu0 %v3679
    %3782 = vmatpush1.bf16.msra.mxu0 %v3678
    %3783 = vmatprep.subr.bf16.mxu0 %v3683
    %3784 = vmatpush1.bf16.msra.mxu0 %v3682
    %3785 = vmatprep.subr.bf16.mxu0 %v3687
    %3786 = vmatpush1.bf16.msra.mxu0 %v3686
    %3787 = vmatprep.subr.bf16.mxu0 %v3691
    %3788 = vmatpush1.bf16.msra.mxu0 %v3690
    %3789 = vmatprep.subr.bf16.mxu0 %v3695
    %3790 = vmatpush1.bf16.msra.mxu0 %v3694
    %3791 = vmatprep.subr.bf16.mxu0 %v3699
    %3792 = vmatpush1.bf16.msra.mxu0 %v3698
    %3793 = vmatprep.subr.bf16.mxu0 %v3703
    %3794 = vmatpush1.bf16.msra.mxu0 %v3702
    %3795 = vmatprep.subr.bf16.mxu0 %v3707
    %3796 = vmatpush1.bf16.msra.mxu0 %v3706
    %3797 = vmatprep.subr.bf16.mxu0 0
    %3798 = vmatpush1.bf16.msra.mxu0 0
    %3799 = vmatprep.subr.bf16.mxu0 0
    %3800 = vmatpush1.bf16.msra.mxu0 0
    %3801 = vmatprep.subr.bf16.mxu0 0
    %3802 = vmatpush1.bf16.msra.mxu0 0
    %3803 = vmatprep.subr.bf16.mxu0 0
    %3804 = vmatpush1.bf16.msra.mxu0 0
    %3805 = vmatprep.subr.bf16.mxu0 0
    %3806 = vmatpush1.bf16.msra.mxu0 0
    %3807 = vmatprep.subr.bf16.mxu0 0
    %3808 = vmatpush1.bf16.msra.mxu0 0
    %3809 = vmatprep.subr.bf16.mxu0 0
    %3810 = vmatpush1.bf16.msra.mxu0 0
    %3811 = vmatprep.subr.bf16.mxu0 0
    %3812 = vmatpush1.bf16.msra.mxu0 0
    %3813 = vmatprep.mubr.bf16.mxu0 0
    %3814 = vmatmul.mubr.bf16.gmra.mrb[0].mxu0 0
    %v3815 = vpop.f32.mrb[0].mxu0
    %v3816 = vadd.f32 0.0, %v3815
    %v3817 = vpop.f32.mrb[0].mxu0
    %v3818 = vadd.f32 0.0, %v3817
    %v3819 = vpop.f32.mrb[0].mxu0
    %v3820 = vpop.f32.mrb[0].mxu0
    %3821 = vdwg.mxu0
    %v3822 = vadd.f32 %v3576, %v3775
    %v3823 = vadd.f32 %v3577, %v3777
    %v3824 = vadd.f32 %v3578, %v3816
    %v3825 = vadd.f32 %v3579, %v3818
    %v3826 = vxor.u32 %v3822, 2147483648
    %v3827 = vmul.f32 %v3826, 1.442695
    %v3828 = vpow.pop %v3827
    %v3829 = vadd.f32 %v3828, 1.0
    %v3830 = vrcp.pop %v3829
    %v3831 = vmul.f32 1.0, %v3830
    %v3832 = vxor.u32 %v3823, 2147483648
    %v3833 = vmul.f32 %v3832, 1.442695
    %v3834 = vpow.pop %v3833
    %v3835 = vadd.f32 %v3834, 1.0
    %v3836 = vrcp.pop %v3835
    %v3837 = vmul.f32 1.0, %v3836
    %v3838 = vtanh.pop %v3824
    %v3839 = vxor.u32 %v3825, 2147483648
    %v3840 = vmul.f32 %v3839, 1.442695
    %v3841 = vpow.pop %v3840
    %v3842 = vadd.f32 %v3841, 1.0
    %v3843 = vrcp.pop %v3842
    %v3844 = vmul.f32 1.0, %v3843
    %v3845 = vmul.f32 %v3837, 0.0
    %v3846 = vmul.f32 %v3831, %v3838
    %v3847 = vadd.f32 %v3845, %v3846
    %v3848 = vtanh.pop %v3847
    %v3849 = vmul.f32 %v3844, %v3848
    %3850 = vst [vmem:[#allocation2] sm:$0xff] %v3849
    %v3851 = vld [vmem:[%s769] sm:$0xff]
    %v3852 = vld [vmem:[%s769 + $0x8] sm:$0xff]
    %v3853 = vld [vmem:[%s769 + $0x10] sm:$0xff]
    %v3854 = vld [vmem:[%s769 + $0x18] sm:$0xff]
    %v3855 = vpack.c.bf16 %v3849, %v3849
    %3856 = vmatprep.subr.bf16.mxu0 %v3677
    %3857 = vmatpush1.bf16.msra.mxu0 %v3676
    %3858 = vmatprep.subr.bf16.mxu0 %v3681
    %3859 = vmatpush1.bf16.msra.mxu0 %v3680
    %3860 = vmatprep.subr.bf16.mxu0 %v3685
    %3861 = vmatpush1.bf16.msra.mxu0 %v3684
    %3862 = vmatprep.subr.bf16.mxu0 %v3689
    %3863 = vmatpush1.bf16.msra.mxu0 %v3688
    %3864 = vmatprep.subr.bf16.mxu0 %v3693
    %3865 = vmatpush1.bf16.msra.mxu0 %v3692
    %3866 = vmatprep.subr.bf16.mxu0 %v3697
    %3867 = vmatpush1.bf16.msra.mxu0 %v3696
    %3868 = vmatprep.subr.bf16.mxu0 %v3701
    %3869 = vmatpush1.bf16.msra.mxu0 %v3700
    %3870 = vmatprep.subr.bf16.mxu0 %v3705
    %3871 = vmatpush1.bf16.msra.mxu0 %v3704
    %3872 = vmatprep.subr.bf16.mxu0 0
    %3873 = vmatpush1.bf16.msra.mxu0 0
    %3874 = vmatprep.subr.bf16.mxu0 0
    %3875 = vmatpush1.bf16.msra.mxu0 0
    %3876 = vmatprep.subr.bf16.mxu0 0
    %3877 = vmatpush1.bf16.msra.mxu0 0
    %3878 = vmatprep.subr.bf16.mxu0 0
    %3879 = vmatpush1.bf16.msra.mxu0 0
    %3880 = vmatprep.subr.bf16.mxu0 0
    %3881 = vmatpush1.bf16.msra.mxu0 0
    %3882 = vmatprep.subr.bf16.mxu0 0
    %3883 = vmatpush1.bf16.msra.mxu0 0
    %3884 = vmatprep.subr.bf16.mxu0 0
    %3885 = vmatpush1.bf16.msra.mxu0 0
    %3886 = vmatprep.subr.bf16.mxu0 0
    %3887 = vmatpush1.bf16.msra.mxu0 0
    %3888 = vmatprep.mubr.bf16.mxu0 0
    %3889 = vmatmul.mubr.bf16.gmra.mrb[0].mxu0 %v3855
    %v3890 = vpop.f32.mrb[0].mxu0
    %v3891 = vadd.f32 0.0, %v3890
    %v3892 = vpop.f32.mrb[0].mxu0
    %v3893 = vadd.f32 0.0, %v3892
    %v3894 = vpop.f32.mrb[0].mxu0
    %v3895 = vpop.f32.mrb[0].mxu0
    %3896 = vdwg.mxu0
    %3897 = vmatprep.subr.bf16.mxu0 %v3679
    %3898 = vmatpush1.bf16.msra.mxu0 %v3678
    %3899 = vmatprep.subr.bf16.mxu0 %v3683
    %3900 = vmatpush1.bf16.msra.mxu0 %v3682
    %3901 = vmatprep.subr.bf16.mxu0 %v3687
    %3902 = vmatpush1.bf16.msra.mxu0 %v3686
    %3903 = vmatprep.subr.bf16.mxu0 %v3691
    %3904 = vmatpush1.bf16.msra.mxu0 %v3690
    %3905 = vmatprep.subr.bf16.mxu0 %v3695
    %3906 = vmatpush1.bf16.msra.mxu0 %v3694
    %3907 = vmatprep.subr.bf16.mxu0 %v3699
    %3908 = vmatpush1.bf16.msra.mxu0 %v3698
    %3909 = vmatprep.subr.bf16.mxu0 %v3703
    %3910 = vmatpush1.bf16.msra.mxu0 %v3702
    %3911 = vmatprep.subr.bf16.mxu0 %v3707
    %3912 = vmatpush1.bf16.msra.mxu0 %v3706
    %3913 = vmatprep.subr.bf16.mxu0 0
    %3914 = vmatpush1.bf16.msra.mxu0 0
    %3915 = vmatprep.subr.bf16.mxu0 0
    %3916 = vmatpush1.bf16.msra.mxu0 0
    %3917 = vmatprep.subr.bf16.mxu0 0
    %3918 = vmatpush1.bf16.msra.mxu0 0
    %3919 = vmatprep.subr.bf16.mxu0 0
    %3920 = vmatpush1.bf16.msra.mxu0 0
    %3921 = vmatprep.subr.bf16.mxu0 0
    %3922 = vmatpush1.bf16.msra.mxu0 0
    %3923 = vmatprep.subr.bf16.mxu0 0
    %3924 = vmatpush1.bf16.msra.mxu0 0
    %3925 = vmatprep.subr.bf16.mxu0 0
    %3926 = vmatpush1.bf16.msra.mxu0 0
    %3927 = vmatprep.subr.bf16.mxu0 0
    %3928 = vmatpush1.bf16.msra.mxu0 0
    %3929 = vmatprep.mubr.bf16.mxu0 0
    %3930 = vmatmul.mubr.bf16.gmra.mrb[0].mxu0 %v3855
    %v3931 = vpop.f32.mrb[0].mxu0
    %v3932 = vadd.f32 0.0, %v3931
    %v3933 = vpop.f32.mrb[0].mxu0
    %v3934 = vadd.f32 0.0, %v3933
    %v3935 = vpop.f32.mrb[0].mxu0
    %v3936 = vpop.f32.mrb[0].mxu0
    %3937 = vdwg.mxu0
    %v3938 = vadd.f32 %v3851, %v3891
    %v3939 = vadd.f32 %v3852, %v3893
    %v3940 = vadd.f32 %v3853, %v3932
    %v3941 = vadd.f32 %v3854, %v3934
    %v3942 = vxor.u32 %v3938, 2147483648
    %v3943 = vmul.f32 %v3942, 1.442695
    %v3944 = vpow.pop %v3943
    %v3945 = vadd.f32 %v3944, 1.0
    %v3946 = vrcp.pop %v3945
    %v3947 = vmul.f32 1.0, %v3946
    %v3948 = vxor.u32 %v3939, 2147483648
    %v3949 = vmul.f32 %v3948, 1.442695
    %v3950 = vpow.pop %v3949
    %v3951 = vadd.f32 %v3950, 1.0
    %v3952 = vrcp.pop %v3951
    %v3953 = vmul.f32 1.0, %v3952
    %v3954 = vtanh.pop %v3940
    %v3955 = vxor.u32 %v3941, 2147483648
    %v3956 = vmul.f32 %v3955, 1.442695
    %v3957 = vpow.pop %v3956
    %v3958 = vadd.f32 %v3957, 1.0
    %v3959 = vrcp.pop %v3958
    %v3960 = vmul.f32 1.0, %v3959
    %v3961 = vmul.f32 %v3953, %v3847
    %v3962 = vmul.f32 %v3947, %v3954
    %v3963 = vadd.f32 %v3961, %v3962
    %v3964 = vtanh.pop %v3963
    %v3965 = vmul.f32 %v3960, %v3964
    %3966 = vst [vmem:[%s885] sm:$0xff] %v3965
    %v3967 = vld [vmem:[%s887] sm:$0xff]
    %v3968 = vld [vmem:[%s887 + $0x8] sm:$0xff]
    %v3969 = vld [vmem:[%s887 + $0x10] sm:$0xff]
    %v3970 = vld [vmem:[%s887 + $0x18] sm:$0xff]
    %v3971 = vpack.c.bf16 %v3965, %v3965
    %3972 = vmatprep.subr.bf16.mxu0 %v3677
    %3973 = vmatpush1.bf16.msra.mxu0 %v3676
    %3974 = vmatprep.subr.bf16.mxu0 %v3681
    %3975 = vmatpush1.bf16.msra.mxu0 %v3680
    %3976 = vmatprep.subr.bf16.mxu0 %v3685
    %3977 = vmatpush1.bf16.msra.mxu0 %v3684
    %3978 = vmatprep.subr.bf16.mxu0 %v3689
    %3979 = vmatpush1.bf16.msra.mxu0 %v3688
    %3980 = vmatprep.subr.bf16.mxu0 %v3693
    %3981 = vmatpush1.bf16.msra.mxu0 %v3692
    %3982 = vmatprep.subr.bf16.mxu0 %v3697
    %3983 = vmatpush1.bf16.msra.mxu0 %v3696
    %3984 = vmatprep.subr.bf16.mxu0 %v3701
    %3985 = vmatpush1.bf16.msra.mxu0 %v3700
    %3986 = vmatprep.subr.bf16.mxu0 %v3705
    %3987 = vmatpush1.bf16.msra.mxu0 %v3704
    %3988 = vmatprep.subr.bf16.mxu0 0
    %3989 = vmatpush1.bf16.msra.mxu0 0
    %3990 = vmatprep.subr.bf16.mxu0 0
    %3991 = vmatpush1.bf16.msra.mxu0 0
    %3992 = vmatprep.subr.bf16.mxu0 0
    %3993 = vmatpush1.bf16.msra.mxu0 0
    %3994 = vmatprep.subr.bf16.mxu0 0
    %3995 = vmatpush1.bf16.msra.mxu0 0
    %3996 = vmatprep.subr.bf16.mxu0 0
    %3997 = vmatpush1.bf16.msra.mxu0 0
    %3998 = vmatprep.subr.bf16.mxu0 0
    %3999 = vmatpush1.bf16.msra.mxu0 0
    %4000 = vmatprep.subr.bf16.mxu0 0
    %4001 = vmatpush1.bf16.msra.mxu0 0
    %4002 = vmatprep.subr.bf16.mxu0 0
    %4003 = vmatpush1.bf16.msra.mxu0 0
    %4004 = vmatprep.mubr.bf16.mxu0 0
    %4005 = vmatmul.mubr.bf16.gmra.mrb[0].mxu0 %v3971
    %v4006 = vpop.f32.mrb[0].mxu0
    %v4007 = vadd.f32 0.0, %v4006
    %v4008 = vpop.f32.mrb[0].mxu0
    %v4009 = vadd.f32 0.0, %v4008
    %v4010 = vpop.f32.mrb[0].mxu0
    %v4011 = vpop.f32.mrb[0].mxu0
    %4012 = vdwg.mxu0
    %4013 = vmatprep.subr.bf16.mxu0 %v3679
    %4014 = vmatpush1.bf16.msra.mxu0 %v3678
    %4015 = vmatprep.subr.bf16.mxu0 %v3683
    %4016 = vmatpush1.bf16.msra.mxu0 %v3682
    %4017 = vmatprep.subr.bf16.mxu0 %v3687
    %4018 = vmatpush1.bf16.msra.mxu0 %v3686
    %4019 = vmatprep.subr.bf16.mxu0 %v3691
    %4020 = vmatpush1.bf16.msra.mxu0 %v3690
    %4021 = vmatprep.subr.bf16.mxu0 %v3695
    %4022 = vmatpush1.bf16.msra.mxu0 %v3694
    %4023 = vmatprep.subr.bf16.mxu0 %v3699
    %4024 = vmatpush1.bf16.msra.mxu0 %v3698
    %4025 = vmatprep.subr.bf16.mxu0 %v3703
    %4026 = vmatpush1.bf16.msra.mxu0 %v3702
    %4027 = vmatprep.subr.bf16.mxu0 %v3707
    %4028 = vmatpush1.bf16.msra.mxu0 %v3706
    %4029 = vmatprep.subr.bf16.mxu0 0
    %4030 = vmatpush1.bf16.msra.mxu0 0
    %4031 = vmatprep.subr.bf16.mxu0 0
    %4032 = vmatpush1.bf16.msra.mxu0 0
    %4033 = vmatprep.subr.bf16.mxu0 0
    %4034 = vmatpush1.bf16.msra.mxu0 0
    %4035 = vmatprep.subr.bf16.mxu0 0
    %4036 = vmatpush1.bf16.msra.mxu0 0
    %4037 = vmatprep.subr.bf16.mxu0 0
    %4038 = vmatpush1.bf16.msra.mxu0 0
    %4039 = vmatprep.subr.bf16.mxu0 0
    %4040 = vmatpush1.bf16.msra.mxu0 0
    %4041 = vmatprep.subr.bf16.mxu0 0
    %4042 = vmatpush1.bf16.msra.mxu0 0
    %4043 = vmatprep.subr.bf16.mxu0 0
    %4044 = vmatpush1.bf16.msra.mxu0 0
    %4045 = vmatprep.mubr.bf16.mxu0 0
    %4046 = vmatmul.mubr.bf16.gmra.mrb[0].mxu0 %v3971
    %v4047 = vpop.f32.mrb[0].mxu0
    %v4048 = vadd.f32 0.0, %v4047
    %v4049 = vpop.f32.mrb[0].mxu0
    %v4050 = vadd.f32 0.0, %v4049
    %v4051 = vpop.f32.mrb[0].mxu0
    %v4052 = vpop.f32.mrb[0].mxu0
    %4053 = vdwg.mxu0
    %v4054 = vadd.f32 %v3967, %v4007
    %v4055 = vadd.f32 %v3968, %v4009
    %v4056 = vadd.f32 %v3969, %v4048
    %v4057 = vadd.f32 %v3970, %v4050
    %v4058 = vxor.u32 %v4054, 2147483648
    %v4059 = vmul.f32 %v4058, 1.442695
    %v4060 = vpow.pop %v4059
    %v4061 = vadd.f32 %v4060, 1.0
    %v4062 = vrcp.pop %v4061
    %v4063 = vmul.f32 1.0, %v4062
    %v4064 = vxor.u32 %v4055, 2147483648
    %v4065 = vmul.f32 %v4064, 1.442695
    %v4066 = vpow.pop %v4065
    %v4067 = vadd.f32 %v4066, 1.0
    %v4068 = vrcp.pop %v4067
    %v4069 = vmul.f32 1.0, %v4068
    %v4070 = vtanh.pop %v4056
    %v4071 = vxor.u32 %v4057, 2147483648
    %v4072 = vmul.f32 %v4071, 1.442695
    %v4073 = vpow.pop %v4072
    %v4074 = vadd.f32 %v4073, 1.0
    %v4075 = vrcp.pop %v4074
    %v4076 = vmul.f32 1.0, %v4075
    %v4077 = vmul.f32 %v4069, %v3963
    %v4078 = vmul.f32 %v4063, %v4070
    %v4079 = vadd.f32 %v4077, %v4078
    %v4080 = vtanh.pop %v4079
    %v4081 = vmul.f32 %v4076, %v4080
    %4082 = vst [vmem:[%s1003] sm:$0xff] %v4081
    %v4083 = vld [vmem:[%s1005] sm:$0xff]
    %v4084 = vld [vmem:[%s1005 + $0x8] sm:$0xff]
    %v4085 = vld [vmem:[%s1005 + $0x10] sm:$0xff]
    %v4086 = vld [vmem:[%s1005 + $0x18] sm:$0xff]
    %v4087 = vpack.c.bf16 %v4081, %v4081
    %4088 = vmatprep.subr.bf16.mxu0 %v3677
    %4089 = vmatpush1.bf16.msra.mxu0 %v3676
    %4090 = vmatprep.subr.bf16.mxu0 %v3681
    %4091 = vmatpush1.bf16.msra.mxu0 %v3680
    %4092 = vmatprep.subr.bf16.mxu0 %v3685
    %4093 = vmatpush1.bf16.msra.mxu0 %v3684
    %4094 = vmatprep.subr.bf16.mxu0 %v3689
    %4095 = vmatpush1.bf16.msra.mxu0 %v3688
    %4096 = vmatprep.subr.bf16.mxu0 %v3693
    %4097 = vmatpush1.bf16.msra.mxu0 %v3692
    %4098 = vmatprep.subr.bf16.mxu0 %v3697
    %4099 = vmatpush1.bf16.msra.mxu0 %v3696
    %4100 = vmatprep.subr.bf16.mxu0 %v3701
    %4101 = vmatpush1.bf16.msra.mxu0 %v3700
    %4102 = vmatprep.subr.bf16.mxu0 %v3705
    %4103 = vmatpush1.bf16.msra.mxu0 %v3704
    %4104 = vmatprep.subr.bf16.mxu0 0
    %4105 = vmatpush1.bf16.msra.mxu0 0
    %4106 = vmatprep.subr.bf16.mxu0 0
    %4107 = vmatpush1.bf16.msra.mxu0 0
    %4108 = vmatprep.subr.bf16.mxu0 0
    %4109 = vmatpush1.bf16.msra.mxu0 0
    %4110 = vmatprep.subr.bf16.mxu0 0
    %4111 = vmatpush1.bf16.msra.mxu0 0
    %4112 = vmatprep.subr.bf16.mxu0 0
    %4113 = vmatpush1.bf16.msra.mxu0 0
    %4114 = vmatprep.subr.bf16.mxu0 0
    %4115 = vmatpush1.bf16.msra.mxu0 0
    %4116 = vmatprep.subr.bf16.mxu0 0
    %4117 = vmatpush1.bf16.msra.mxu0 0
    %4118 = vmatprep.subr.bf16.mxu0 0
    %4119 = vmatpush1.bf16.msra.mxu0 0
    %4120 = vmatprep.mubr.bf16.mxu0 0
    %4121 = vmatmul.mubr.bf16.gmra.mrb[0].mxu0 %v4087
    %v4122 = vpop.f32.mrb[0].mxu0
    %v4123 = vadd.f32 0.0, %v4122
    %v4124 = vpop.f32.mrb[0].mxu0
    %v4125 = vadd.f32 0.0, %v4124
    %v4126 = vpop.f32.mrb[0].mxu0
    %v4127 = vpop.f32.mrb[0].mxu0
    %4128 = vdwg.mxu0
    %4129 = vmatprep.subr.bf16.mxu0 %v3679
    %4130 = vmatpush1.bf16.msra.mxu0 %v3678
    %4131 = vmatprep.subr.bf16.mxu0 %v3683
    %4132 = vmatpush1.bf16.msra.mxu0 %v3682
    %4133 = vmatprep.subr.bf16.mxu0 %v3687
    %4134 = vmatpush1.bf16.msra.mxu0 %v3686
    %4135 = vmatprep.subr.bf16.mxu0 %v3691
    %4136 = vmatpush1.bf16.msra.mxu0 %v3690
    %4137 = vmatprep.subr.bf16.mxu0 %v3695
    %4138 = vmatpush1.bf16.msra.mxu0 %v3694
    %4139 = vmatprep.subr.bf16.mxu0 %v3699
    %4140 = vmatpush1.bf16.msra.mxu0 %v3698
    %4141 = vmatprep.subr.bf16.mxu0 %v3703
    %4142 = vmatpush1.bf16.msra.mxu0 %v3702
    %4143 = vmatprep.subr.bf16.mxu0 %v3707
    %4144 = vmatpush1.bf16.msra.mxu0 %v3706
    %4145 = vmatprep.subr.bf16.mxu0 0
    %4146 = vmatpush1.bf16.msra.mxu0 0
    %4147 = vmatprep.subr.bf16.mxu0 0
    %4148 = vmatpush1.bf16.msra.mxu0 0
    %4149 = vmatprep.subr.bf16.mxu0 0
    %4150 = vmatpush1.bf16.msra.mxu0 0
    %4151 = vmatprep.subr.bf16.mxu0 0
    %4152 = vmatpush1.bf16.msra.mxu0 0
    %4153 = vmatprep.subr.bf16.mxu0 0
    %4154 = vmatpush1.bf16.msra.mxu0 0
    %4155 = vmatprep.subr.bf16.mxu0 0
    %4156 = vmatpush1.bf16.msra.mxu0 0
    %4157 = vmatprep.subr.bf16.mxu0 0
    %4158 = vmatpush1.bf16.msra.mxu0 0
    %4159 = vmatprep.subr.bf16.mxu0 0
    %4160 = vmatpush1.bf16.msra.mxu0 0
    %4161 = vmatprep.mubr.bf16.mxu0 0
    %4162 = vmatmul.mubr.bf16.gmra.mrb[0].mxu0 %v4087
    %v4163 = vpop.f32.mrb[0].mxu0
    %v4164 = vadd.f32 0.0, %v4163
    %v4165 = vpop.f32.mrb[0].mxu0
    %v4166 = vadd.f32 0.0, %v4165
    %v4167 = vpop.f32.mrb[0].mxu0
    %v4168 = vpop.f32.mrb[0].mxu0
    %4169 = vdwg.mxu0
    %v4170 = vadd.f32 %v4083, %v4123
    %v4171 = vadd.f32 %v4084, %v4125
    %v4172 = vadd.f32 %v4085, %v4164
    %v4173 = vadd.f32 %v4086, %v4166
    %v4174 = vxor.u32 %v4170, 2147483648
    %v4175 = vmul.f32 %v4174, 1.442695
    %v4176 = vpow.pop %v4175
    %v4177 = vadd.f32 %v4176, 1.0
    %v4178 = vrcp.pop %v4177
    %v4179 = vmul.f32 1.0, %v4178
    %v4180 = vxor.u32 %v4171, 2147483648
    %v4181 = vmul.f32 %v4180, 1.442695
    %v4182 = vpow.pop %v4181
    %v4183 = vadd.f32 %v4182, 1.0
    %v4184 = vrcp.pop %v4183
    %v4185 = vmul.f32 1.0, %v4184
    %v4186 = vtanh.pop %v4172
    %v4187 = vxor.u32 %v4173, 2147483648
    %v4188 = vmul.f32 %v4187, 1.442695
    %v4189 = vpow.pop %v4188
    %v4190 = vadd.f32 %v4189, 1.0
    %v4191 = vrcp.pop %v4190
    %v4192 = vmul.f32 1.0, %v4191
    %v4193 = vmul.f32 %v4185, %v4079
    %v4194 = vmul.f32 %v4179, %v4186
    %v4195 = vadd.f32 %v4193, %v4194
    %v4196 = vtanh.pop %v4195
    %v4197 = vmul.f32 %v4192, %v4196
    %4198 = vst [vmem:[%s1121] sm:$0xff] %v4197
    %v4199 = vld [vmem:[%s1123] sm:$0xff]
    %v4200 = vld [vmem:[%s1123 + $0x8] sm:$0xff]
    %v4201 = vld [vmem:[%s1123 + $0x10] sm:$0xff]
    %v4202 = vld [vmem:[%s1123 + $0x18] sm:$0xff]
    %v4203 = vpack.c.bf16 %v4197, %v4197
    %4204 = vmatprep.subr.bf16.mxu0 %v3677
    %4205 = vmatpush1.bf16.msra.mxu0 %v3676
    %4206 = vmatprep.subr.bf16.mxu0 %v3681
    %4207 = vmatpush1.bf16.msra.mxu0 %v3680
    %4208 = vmatprep.subr.bf16.mxu0 %v3685
    %4209 = vmatpush1.bf16.msra.mxu0 %v3684
    %4210 = vmatprep.subr.bf16.mxu0 %v3689
    %4211 = vmatpush1.bf16.msra.mxu0 %v3688
    %4212 = vmatprep.subr.bf16.mxu0 %v3693
    %4213 = vmatpush1.bf16.msra.mxu0 %v3692
    %4214 = vmatprep.subr.bf16.mxu0 %v3697
    %4215 = vmatpush1.bf16.msra.mxu0 %v3696
    %4216 = vmatprep.subr.bf16.mxu0 %v3701
    %4217 = vmatpush1.bf16.msra.mxu0 %v3700
    %4218 = vmatprep.subr.bf16.mxu0 %v3705
    %4219 = vmatpush1.bf16.msra.mxu0 %v3704
    %4220 = vmatprep.subr.bf16.mxu0 0
    %4221 = vmatpush1.bf16.msra.mxu0 0
    %4222 = vmatprep.subr.bf16.mxu0 0
    %4223 = vmatpush1.bf16.msra.mxu0 0
    %4224 = vmatprep.subr.bf16.mxu0 0
    %4225 = vmatpush1.bf16.msra.mxu0 0
    %4226 = vmatprep.subr.bf16.mxu0 0
    %4227 = vmatpush1.bf16.msra.mxu0 0
    %4228 = vmatprep.subr.bf16.mxu0 0
    %4229 = vmatpush1.bf16.msra.mxu0 0
    %4230 = vmatprep.subr.bf16.mxu0 0
    %4231 = vmatpush1.bf16.msra.mxu0 0
    %4232 = vmatprep.subr.bf16.mxu0 0
    %4233 = vmatpush1.bf16.msra.mxu0 0
    %4234 = vmatprep.subr.bf16.mxu0 0
    %4235 = vmatpush1.bf16.msra.mxu0 0
    %4236 = vmatprep.mubr.bf16.mxu0 0
    %4237 = vmatmul.mubr.bf16.gmra.mrb[0].mxu0 %v4203
    %v4238 = vpop.f32.mrb[0].mxu0
    %v4239 = vadd.f32 0.0, %v4238
    %v4240 = vpop.f32.mrb[0].mxu0
    %v4241 = vadd.f32 0.0, %v4240
    %v4242 = vpop.f32.mrb[0].mxu0
    %v4243 = vpop.f32.mrb[0].mxu0
    %4244 = vdwg.mxu0
    %4245 = vmatprep.subr.bf16.mxu0 %v3679
    %4246 = vmatpush1.bf16.msra.mxu0 %v3678
    %4247 = vmatprep.subr.bf16.mxu0 %v3683
    %4248 = vmatpush1.bf16.msra.mxu0 %v3682
    %4249 = vmatprep.subr.bf16.mxu0 %v3687
    %4250 = vmatpush1.bf16.msra.mxu0 %v3686
    %4251 = vmatprep.subr.bf16.mxu0 %v3691
    %4252 = vmatpush1.bf16.msra.mxu0 %v3690
    %4253 = vmatprep.subr.bf16.mxu0 %v3695
    %4254 = vmatpush1.bf16.msra.mxu0 %v3694
    %4255 = vmatprep.subr.bf16.mxu0 %v3699
    %4256 = vmatpush1.bf16.msra.mxu0 %v3698
    %4257 = vmatprep.subr.bf16.mxu0 %v3703
    %4258 = vmatpush1.bf16.msra.mxu0 %v3702
    %4259 = vmatprep.subr.bf16.mxu0 %v3707
    %4260 = vmatpush1.bf16.msra.mxu0 %v3706
    %4261 = vmatprep.subr.bf16.mxu0 0
    %4262 = vmatpush1.bf16.msra.mxu0 0
    %4263 = vmatprep.subr.bf16.mxu0 0
    %4264 = vmatpush1.bf16.msra.mxu0 0
    %4265 = vmatprep.subr.bf16.mxu0 0
    %4266 = vmatpush1.bf16.msra.mxu0 0
    %4267 = vmatprep.subr.bf16.mxu0 0
    %4268 = vmatpush1.bf16.msra.mxu0 0
    %4269 = vmatprep.subr.bf16.mxu0 0
    %4270 = vmatpush1.bf16.msra.mxu0 0
    %4271 = vmatprep.subr.bf16.mxu0 0
    %4272 = vmatpush1.bf16.msra.mxu0 0
    %4273 = vmatprep.subr.bf16.mxu0 0
    %4274 = vmatpush1.bf16.msra.mxu0 0
    %4275 = vmatprep.subr.bf16.mxu0 0
    %4276 = vmatpush1.bf16.msra.mxu0 0
    %4277 = vmatprep.mubr.bf16.mxu0 0
    %4278 = vmatmul.mubr.bf16.gmra.mrb[0].mxu0 %v4203
    %v4279 = vpop.f32.mrb[0].mxu0
    %v4280 = vadd.f32 0.0, %v4279
    %v4281 = vpop.f32.mrb[0].mxu0
    %v4282 = vadd.f32 0.0, %v4281
    %v4283 = vpop.f32.mrb[0].mxu0
    %v4284 = vpop.f32.mrb[0].mxu0
    %4285 = vdwg.mxu0
    %v4286 = vadd.f32 %v4199, %v4239
    %v4287 = vadd.f32 %v4200, %v4241
    %v4288 = vadd.f32 %v4201, %v4280
    %v4289 = vadd.f32 %v4202, %v4282
    %v4290 = vxor.u32 %v4286, 2147483648
    %v4291 = vmul.f32 %v4290, 1.442695
    %v4292 = vpow.pop %v4291
    %v4293 = vadd.f32 %v4292, 1.0
    %v4294 = vrcp.pop %v4293
    %v4295 = vmul.f32 1.0, %v4294
    %v4296 = vxor.u32 %v4287, 2147483648
    %v4297 = vmul.f32 %v4296, 1.442695
    %v4298 = vpow.pop %v4297
    %v4299 = vadd.f32 %v4298, 1.0
    %v4300 = vrcp.pop %v4299
    %v4301 = vmul.f32 1.0, %v4300
    %v4302 = vtanh.pop %v4288
    %v4303 = vxor.u32 %v4289, 2147483648
    %v4304 = vmul.f32 %v4303, 1.442695
    %v4305 = vpow.pop %v4304
    %v4306 = vadd.f32 %v4305, 1.0
    %v4307 = vrcp.pop %v4306
    %v4308 = vmul.f32 1.0, %v4307
    %v4309 = vmul.f32 %v4301, %v4195
    %v4310 = vmul.f32 %v4295, %v4302
    %v4311 = vadd.f32 %v4309, %v4310
    %v4312 = vtanh.pop %v4311
    %v4313 = vmul.f32 %v4308, %v4312
    %4314 = vst [vmem:[%s1239] sm:$0xff] %v4313
    %v4315 = vld [vmem:[%s1241] sm:$0xff]
    %v4316 = vld [vmem:[%s1241 + $0x8] sm:$0xff]
    %v4317 = vld [vmem:[%s1241 + $0x10] sm:$0xff]
    %v4318 = vld [vmem:[%s1241 + $0x18] sm:$0xff]
    %v4319 = vpack.c.bf16 %v4313, %v4313
    %4320 = vmatprep.subr.bf16.mxu0 %v3677
    %4321 = vmatpush1.bf16.msra.mxu0 %v3676
    %4322 = vmatprep.subr.bf16.mxu0 %v3681
    %4323 = vmatpush1.bf16.msra.mxu0 %v3680
    %4324 = vmatprep.subr.bf16.mxu0 %v3685
    %4325 = vmatpush1.bf16.msra.mxu0 %v3684
    %4326 = vmatprep.subr.bf16.mxu0 %v3689
    %4327 = vmatpush1.bf16.msra.mxu0 %v3688
    %4328 = vmatprep.subr.bf16.mxu0 %v3693
    %4329 = vmatpush1.bf16.msra.mxu0 %v3692
    %4330 = vmatprep.subr.bf16.mxu0 %v3697
    %4331 = vmatpush1.bf16.msra.mxu0 %v3696
    %4332 = vmatprep.subr.bf16.mxu0 %v3701
    %4333 = vmatpush1.bf16.msra.mxu0 %v3700
    %4334 = vmatprep.subr.bf16.mxu0 %v3705
    %4335 = vmatpush1.bf16.msra.mxu0 %v3704
    %4336 = vmatprep.subr.bf16.mxu0 0
    %4337 = vmatpush1.bf16.msra.mxu0 0
    %4338 = vmatprep.subr.bf16.mxu0 0
    %4339 = vmatpush1.bf16.msra.mxu0 0
    %4340 = vmatprep.subr.bf16.mxu0 0
    %4341 = vmatpush1.bf16.msra.mxu0 0
    %4342 = vmatprep.subr.bf16.mxu0 0
    %4343 = vmatpush1.bf16.msra.mxu0 0
    %4344 = vmatprep.subr.bf16.mxu0 0
    %4345 = vmatpush1.bf16.msra.mxu0 0
    %4346 = vmatprep.subr.bf16.mxu0 0
    %4347 = vmatpush1.bf16.msra.mxu0 0
    %4348 = vmatprep.subr.bf16.mxu0 0
    %4349 = vmatpush1.bf16.msra.mxu0 0
    %4350 = vmatprep.subr.bf16.mxu0 0
    %4351 = vmatpush1.bf16.msra.mxu0 0
    %4352 = vmatprep.mubr.bf16.mxu0 0
    %4353 = vmatmul.mubr.bf16.gmra.mrb[0].mxu0 %v4319
    %v4354 = vpop.f32.mrb[0].mxu0
    %v4355 = vadd.f32 0.0, %v4354
    %v4356 = vpop.f32.mrb[0].mxu0
    %v4357 = vadd.f32 0.0, %v4356
    %v4358 = vpop.f32.mrb[0].mxu0
    %v4359 = vpop.f32.mrb[0].mxu0
    %4360 = vdwg.mxu0
    %4361 = vmatprep.subr.bf16.mxu0 %v3679
    %4362 = vmatpush1.bf16.msra.mxu0 %v3678
    %4363 = vmatprep.subr.bf16.mxu0 %v3683
    %4364 = vmatpush1.bf16.msra.mxu0 %v3682
    %4365 = vmatprep.subr.bf16.mxu0 %v3687
    %4366 = vmatpush1.bf16.msra.mxu0 %v3686
    %4367 = vmatprep.subr.bf16.mxu0 %v3691
    %4368 = vmatpush1.bf16.msra.mxu0 %v3690
    %4369 = vmatprep.subr.bf16.mxu0 %v3695
    %4370 = vmatpush1.bf16.msra.mxu0 %v3694
    %4371 = vmatprep.subr.bf16.mxu0 %v3699
    %4372 = vmatpush1.bf16.msra.mxu0 %v3698
    %4373 = vmatprep.subr.bf16.mxu0 %v3703
    %4374 = vmatpush1.bf16.msra.mxu0 %v3702
    %4375 = vmatprep.subr.bf16.mxu0 %v3707
    %4376 = vmatpush1.bf16.msra.mxu0 %v3706
    %4377 = vmatprep.subr.bf16.mxu0 0
    %4378 = vmatpush1.bf16.msra.mxu0 0
    %4379 = vmatprep.subr.bf16.mxu0 0
    %4380 = vmatpush1.bf16.msra.mxu0 0
    %4381 = vmatprep.subr.bf16.mxu0 0
    %4382 = vmatpush1.bf16.msra.mxu0 0
    %4383 = vmatprep.subr.bf16.mxu0 0
    %4384 = vmatpush1.bf16.msra.mxu0 0
    %4385 = vmatprep.subr.bf16.mxu0 0
    %4386 = vmatpush1.bf16.msra.mxu0 0
    %4387 = vmatprep.subr.bf16.mxu0 0
    %4388 = vmatpush1.bf16.msra.mxu0 0
    %4389 = vmatprep.subr.bf16.mxu0 0
    %4390 = vmatpush1.bf16.msra.mxu0 0
    %4391 = vmatprep.subr.bf16.mxu0 0
    %4392 = vmatpush1.bf16.msra.mxu0 0
    %4393 = vmatprep.mubr.bf16.mxu0 0
    %4394 = vmatmul.mubr.bf16.gmra.mrb[0].mxu0 %v4319
    %v4395 = vpop.f32.mrb[0].mxu0
    %v4396 = vadd.f32 0.0, %v4395
    %v4397 = vpop.f32.mrb[0].mxu0
    %v4398 = vadd.f32 0.0, %v4397
    %v4399 = vpop.f32.mrb[0].mxu0
    %v4400 = vpop.f32.mrb[0].mxu0
    %4401 = vdwg.mxu0
    %v4402 = vadd.f32 %v4315, %v4355
    %v4403 = vadd.f32 %v4316, %v4357
    %v4404 = vadd.f32 %v4317, %v4396
    %v4405 = vadd.f32 %v4318, %v4398
    %v4406 = vxor.u32 %v4402, 2147483648
    %v4407 = vmul.f32 %v4406, 1.442695
    %v4408 = vpow.pop %v4407
    %v4409 = vadd.f32 %v4408, 1.0
    %v4410 = vrcp.pop %v4409
    %v4411 = vmul.f32 1.0, %v4410
    %v4412 = vxor.u32 %v4403, 2147483648
    %v4413 = vmul.f32 %v4412, 1.442695
    %v4414 = vpow.pop %v4413
    %v4415 = vadd.f32 %v4414, 1.0
    %v4416 = vrcp.pop %v4415
    %v4417 = vmul.f32 1.0, %v4416
    %v4418 = vtanh.pop %v4404
    %v4419 = vxor.u32 %v4405, 2147483648
    %v4420 = vmul.f32 %v4419, 1.442695
    %v4421 = vpow.pop %v4420
    %v4422 = vadd.f32 %v4421, 1.0
    %v4423 = vrcp.pop %v4422
    %v4424 = vmul.f32 1.0, %v4423
    %v4425 = vmul.f32 %v4417, %v4311
    %v4426 = vmul.f32 %v4411, %v4418
    %v4427 = vadd.f32 %v4425, %v4426
    %v4428 = vtanh.pop %v4427
    %v4429 = vmul.f32 %v4424, %v4428
    %4430 = vst [vmem:[%s1357] sm:$0xff] %v4429
    %v4431 = vld [vmem:[%s1359] sm:$0xff]
    %v4432 = vld [vmem:[%s1359 + $0x8] sm:$0xff]
    %v4433 = vld [vmem:[%s1359 + $0x10] sm:$0xff]
    %v4434 = vld [vmem:[%s1359 + $0x18] sm:$0xff]
    %v4435 = vpack.c.bf16 %v4429, %v4429
    %4436 = vmatprep.subr.bf16.mxu0 %v3677
    %4437 = vmatpush1.bf16.msra.mxu0 %v3676
    %4438 = vmatprep.subr.bf16.mxu0 %v3681
    %4439 = vmatpush1.bf16.msra.mxu0 %v3680
    %4440 = vmatprep.subr.bf16.mxu0 %v3685
    %4441 = vmatpush1.bf16.msra.mxu0 %v3684
    %4442 = vmatprep.subr.bf16.mxu0 %v3689
    %4443 = vmatpush1.bf16.msra.mxu0 %v3688
    %4444 = vmatprep.subr.bf16.mxu0 %v3693
    %4445 = vmatpush1.bf16.msra.mxu0 %v3692
    %4446 = vmatprep.subr.bf16.mxu0 %v3697
    %4447 = vmatpush1.bf16.msra.mxu0 %v3696
    %4448 = vmatprep.subr.bf16.mxu0 %v3701
    %4449 = vmatpush1.bf16.msra.mxu0 %v3700
    %4450 = vmatprep.subr.bf16.mxu0 %v3705
    %4451 = vmatpush1.bf16.msra.mxu0 %v3704
    %4452 = vmatprep.subr.bf16.mxu0 0
    %4453 = vmatpush1.bf16.msra.mxu0 0
    %4454 = vmatprep.subr.bf16.mxu0 0
    %4455 = vmatpush1.bf16.msra.mxu0 0
    %4456 = vmatprep.subr.bf16.mxu0 0
    %4457 = vmatpush1.bf16.msra.mxu0 0
    %4458 = vmatprep.subr.bf16.mxu0 0
    %4459 = vmatpush1.bf16.msra.mxu0 0
    %4460 = vmatprep.subr.bf16.mxu0 0
    %4461 = vmatpush1.bf16.msra.mxu0 0
    %4462 = vmatprep.subr.bf16.mxu0 0
    %4463 = vmatpush1.bf16.msra.mxu0 0
    %4464 = vmatprep.subr.bf16.mxu0 0
    %4465 = vmatpush1.bf16.msra.mxu0 0
    %4466 = vmatprep.subr.bf16.mxu0 0
    %4467 = vmatpush1.bf16.msra.mxu0 0
    %4468 = vmatprep.mubr.bf16.mxu0 0
    %4469 = vmatmul.mubr.bf16.gmra.mrb[0].mxu0 %v4435
    %v4470 = vpop.f32.mrb[0].mxu0
    %v4471 = vadd.f32 0.0, %v4470
    %v4472 = vpop.f32.mrb[0].mxu0
    %v4473 = vadd.f32 0.0, %v4472
    %v4474 = vpop.f32.mrb[0].mxu0
    %v4475 = vpop.f32.mrb[0].mxu0
    %4476 = vdwg.mxu0
    %4477 = vmatprep.subr.bf16.mxu0 %v3679
    %4478 = vmatpush1.bf16.msra.mxu0 %v3678
    %4479 = vmatprep.subr.bf16.mxu0 %v3683
    %4480 = vmatpush1.bf16.msra.mxu0 %v3682
    %4481 = vmatprep.subr.bf16.mxu0 %v3687
    %4482 = vmatpush1.bf16.msra.mxu0 %v3686
    %4483 = vmatprep.subr.bf16.mxu0 %v3691
    %4484 = vmatpush1.bf16.msra.mxu0 %v3690
    %4485 = vmatprep.subr.bf16.mxu0 %v3695
    %4486 = vmatpush1.bf16.msra.mxu0 %v3694
    %4487 = vmatprep.subr.bf16.mxu0 %v3699
    %4488 = vmatpush1.bf16.msra.mxu0 %v3698
    %4489 = vmatprep.subr.bf16.mxu0 %v3703
    %4490 = vmatpush1.bf16.msra.mxu0 %v3702
    %4491 = vmatprep.subr.bf16.mxu0 %v3707
    %4492 = vmatpush1.bf16.msra.mxu0 %v3706
    %4493 = vmatprep.subr.bf16.mxu0 0
    %4494 = vmatpush1.bf16.msra.mxu0 0
    %4495 = vmatprep.subr.bf16.mxu0 0
    %4496 = vmatpush1.bf16.msra.mxu0 0
    %4497 = vmatprep.subr.bf16.mxu0 0
    %4498 = vmatpush1.bf16.msra.mxu0 0
    %4499 = vmatprep.subr.bf16.mxu0 0
    %4500 = vmatpush1.bf16.msra.mxu0 0
    %4501 = vmatprep.subr.bf16.mxu0 0
    %4502 = vmatpush1.bf16.msra.mxu0 0
    %4503 = vmatprep.subr.bf16.mxu0 0
    %4504 = vmatpush1.bf16.msra.mxu0 0
    %4505 = vmatprep.subr.bf16.mxu0 0
    %4506 = vmatpush1.bf16.msra.mxu0 0
    %4507 = vmatprep.subr.bf16.mxu0 0
    %4508 = vmatpush1.bf16.msra.mxu0 0
    %4509 = vmatprep.mubr.bf16.mxu0 0
    %4510 = vmatmul.mubr.bf16.gmra.mrb[0].mxu0 %v4435
    %v4511 = vpop.f32.mrb[0].mxu0
    %v4512 = vadd.f32 0.0, %v4511
    %v4513 = vpop.f32.mrb[0].mxu0
    %v4514 = vadd.f32 0.0, %v4513
    %v4515 = vpop.f32.mrb[0].mxu0
    %v4516 = vpop.f32.mrb[0].mxu0
    %4517 = vdwg.mxu0
    %v4518 = vadd.f32 %v4431, %v4471
    %v4519 = vadd.f32 %v4432, %v4473
    %v4520 = vadd.f32 %v4433, %v4512
    %v4521 = vadd.f32 %v4434, %v4514
    %v4522 = vxor.u32 %v4518, 2147483648
    %v4523 = vmul.f32 %v4522, 1.442695
    %v4524 = vpow.pop %v4523
    %v4525 = vadd.f32 %v4524, 1.0
    %v4526 = vrcp.pop %v4525
    %v4527 = vmul.f32 1.0, %v4526
    %v4528 = vxor.u32 %v4519, 2147483648
    %v4529 = vmul.f32 %v4528, 1.442695
    %v4530 = vpow.pop %v4529
    %v4531 = vadd.f32 %v4530, 1.0
    %v4532 = vrcp.pop %v4531
    %v4533 = vmul.f32 1.0, %v4532
    %v4534 = vtanh.pop %v4520
    %v4535 = vxor.u32 %v4521, 2147483648
    %v4536 = vmul.f32 %v4535, 1.442695
    %v4537 = vpow.pop %v4536
    %v4538 = vadd.f32 %v4537, 1.0
    %v4539 = vrcp.pop %v4538
    %v4540 = vmul.f32 1.0, %v4539
    %v4541 = vmul.f32 %v4533, %v4427
    %v4542 = vmul.f32 %v4527, %v4534
    %v4543 = vadd.f32 %v4541, %v4542
    %v4544 = vtanh.pop %v4543
    %v4545 = vmul.f32 %v4540, %v4544
    %4546 = vst [vmem:[%s1475] sm:$0xff] %v4545
    %v4547 = vld [vmem:[%s1477] sm:$0xff]
    %v4548 = vld [vmem:[%s1477 + $0x8] sm:$0xff]
    %v4549 = vld [vmem:[%s1477 + $0x10] sm:$0xff]
    %v4550 = vld [vmem:[%s1477 + $0x18] sm:$0xff]
    %v4551 = vpack.c.bf16 %v4545, %v4545
    %4552 = vmatprep.subr.bf16.mxu0 %v3677
    %4553 = vmatpush1.bf16.msra.mxu0 %v3676
    %4554 = vmatprep.subr.bf16.mxu0 %v3681
    %4555 = vmatpush1.bf16.msra.mxu0 %v3680
    %4556 = vmatprep.subr.bf16.mxu0 %v3685
    %4557 = vmatpush1.bf16.msra.mxu0 %v3684
    %4558 = vmatprep.subr.bf16.mxu0 %v3689
    %4559 = vmatpush1.bf16.msra.mxu0 %v3688
    %4560 = vmatprep.subr.bf16.mxu0 %v3693
    %4561 = vmatpush1.bf16.msra.mxu0 %v3692
    %4562 = vmatprep.subr.bf16.mxu0 %v3697
    %4563 = vmatpush1.bf16.msra.mxu0 %v3696
    %4564 = vmatprep.subr.bf16.mxu0 %v3701
    %4565 = vmatpush1.bf16.msra.mxu0 %v3700
    %4566 = vmatprep.subr.bf16.mxu0 %v3705
    %4567 = vmatpush1.bf16.msra.mxu0 %v3704
    %4568 = vmatprep.subr.bf16.mxu0 0
    %4569 = vmatpush1.bf16.msra.mxu0 0
    %4570 = vmatprep.subr.bf16.mxu0 0
    %4571 = vmatpush1.bf16.msra.mxu0 0
    %4572 = vmatprep.subr.bf16.mxu0 0
    %4573 = vmatpush1.bf16.msra.mxu0 0
    %4574 = vmatprep.subr.bf16.mxu0 0
    %4575 = vmatpush1.bf16.msra.mxu0 0
    %4576 = vmatprep.subr.bf16.mxu0 0
    %4577 = vmatpush1.bf16.msra.mxu0 0
    %4578 = vmatprep.subr.bf16.mxu0 0
    %4579 = vmatpush1.bf16.msra.mxu0 0
    %4580 = vmatprep.subr.bf16.mxu0 0
    %4581 = vmatpush1.bf16.msra.mxu0 0
    %4582 = vmatprep.subr.bf16.mxu0 0
    %4583 = vmatpush1.bf16.msra.mxu0 0
    %4584 = vmatprep.mubr.bf16.mxu0 0
    %4585 = vmatmul.mubr.bf16.gmra.mrb[0].mxu0 %v4551
    %v4586 = vpop.f32.mrb[0].mxu0
    %v4587 = vadd.f32 0.0, %v4586
    %v4588 = vpop.f32.mrb[0].mxu0
    %v4589 = vadd.f32 0.0, %v4588
    %v4590 = vpop.f32.mrb[0].mxu0
    %v4591 = vpop.f32.mrb[0].mxu0
    %4592 = vdwg.mxu0
    %4593 = vmatprep.subr.bf16.mxu0 %v3679
    %4594 = vmatpush1.bf16.msra.mxu0 %v3678
    %4595 = vmatprep.subr.bf16.mxu0 %v3683
    %4596 = vmatpush1.bf16.msra.mxu0 %v3682
    %4597 = vmatprep.subr.bf16.mxu0 %v3687
    %4598 = vmatpush1.bf16.msra.mxu0 %v3686
    %4599 = vmatprep.subr.bf16.mxu0 %v3691
    %4600 = vmatpush1.bf16.msra.mxu0 %v3690
    %4601 = vmatprep.subr.bf16.mxu0 %v3695
    %4602 = vmatpush1.bf16.msra.mxu0 %v3694
    %4603 = vmatprep.subr.bf16.mxu0 %v3699
    %4604 = vmatpush1.bf16.msra.mxu0 %v3698
    %4605 = vmatprep.subr.bf16.mxu0 %v3703
    %4606 = vmatpush1.bf16.msra.mxu0 %v3702
    %4607 = vmatprep.subr.bf16.mxu0 %v3707
    %4608 = vmatpush1.bf16.msra.mxu0 %v3706
    %4609 = vmatprep.subr.bf16.mxu0 0
    %4610 = vmatpush1.bf16.msra.mxu0 0
    %4611 = vmatprep.subr.bf16.mxu0 0
    %4612 = vmatpush1.bf16.msra.mxu0 0
    %4613 = vmatprep.subr.bf16.mxu0 0
    %4614 = vmatpush1.bf16.msra.mxu0 0
    %4615 = vmatprep.subr.bf16.mxu0 0
    %4616 = vmatpush1.bf16.msra.mxu0 0
    %4617 = vmatprep.subr.bf16.mxu0 0
    %4618 = vmatpush1.bf16.msra.mxu0 0
    %4619 = vmatprep.subr.bf16.mxu0 0
    %4620 = vmatpush1.bf16.msra.mxu0 0
    %4621 = vmatprep.subr.bf16.mxu0 0
    %4622 = vmatpush1.bf16.msra.mxu0 0
    %4623 = vmatprep.subr.bf16.mxu0 0
    %4624 = vmatpush1.bf16.msra.mxu0 0
    %4625 = vmatprep.mubr.bf16.mxu0 0
    %4626 = vmatmul.mubr.bf16.gmra.mrb[0].mxu0 %v4551
    %v4627 = vpop.f32.mrb[0].mxu0
    %v4628 = vadd.f32 0.0, %v4627
    %v4629 = vpop.f32.mrb[0].mxu0
    %v4630 = vadd.f32 0.0, %v4629
    %v4631 = vpop.f32.mrb[0].mxu0
    %v4632 = vpop.f32.mrb[0].mxu0
    %4633 = vdwg.mxu0
    %v4634 = vadd.f32 %v4547, %v4587
    %v4635 = vadd.f32 %v4548, %v4589
    %v4636 = vadd.f32 %v4549, %v4628
    %v4637 = vadd.f32 %v4550, %v4630
    %v4638 = vxor.u32 %v4634, 2147483648
    %v4639 = vmul.f32 %v4638, 1.442695
    %v4640 = vpow.pop %v4639
    %v4641 = vadd.f32 %v4640, 1.0
    %v4642 = vrcp.pop %v4641
    %v4643 = vmul.f32 1.0, %v4642
    %v4644 = vxor.u32 %v4635, 2147483648
    %v4645 = vmul.f32 %v4644, 1.442695
    %v4646 = vpow.pop %v4645
    %v4647 = vadd.f32 %v4646, 1.0
    %v4648 = vrcp.pop %v4647
    %v4649 = vmul.f32 1.0, %v4648
    %v4650 = vtanh.pop %v4636
    %v4651 = vxor.u32 %v4637, 2147483648
    %v4652 = vmul.f32 %v4651, 1.442695
    %v4653 = vpow.pop %v4652
    %v4654 = vadd.f32 %v4653, 1.0
    %v4655 = vrcp.pop %v4654
    %v4656 = vmul.f32 1.0, %v4655
    %v4657 = vmul.f32 %v4649, %v4543
    %v4658 = vmul.f32 %v4643, %v4650
    %v4659 = vadd.f32 %v4657, %v4658
    %v4660 = vtanh.pop %v4659
    %v4661 = vmul.f32 %v4656, %v4660
    %4662 = vst [vmem:[%s1593] sm:$0xff] %v4661
    %s4663 = scalar_lea.vmem [#allocation4], 768
    %v4664 = vld [vmem:[%s4663] sm:$0xff]
    %v4665 = vld [vmem:[%s4663 + $0x8] sm:$0xff]
    %v4666 = vld [vmem:[%s4663 + $0x10] sm:$0xff]
    %v4667 = vld [vmem:[%s4663 + $0x18] sm:$0xff]
    %v4668 = vld [vmem:[%s4663 + $0x20] sm:$0xff]
    %v4669 = vld [vmem:[%s4663 + $0x28] sm:$0xff]
    %v4670 = vld [vmem:[%s4663 + $0x30] sm:$0xff]
    %v4671 = vld [vmem:[%s4663 + $0x38] sm:$0xff]
    %v4672 = vld [vmem:[%s4663 + $0x40] sm:$0xff]
    %v4673 = vld [vmem:[%s4663 + $0x48] sm:$0xff]
    %v4674 = vld [vmem:[%s4663 + $0x50] sm:$0xff]
    %v4675 = vld [vmem:[%s4663 + $0x58] sm:$0xff]
    %v4676 = vld [vmem:[%s4663 + $0x60] sm:$0xff]
    %v4677 = vld [vmem:[%s4663 + $0x68] sm:$0xff]
    %v4678 = vld [vmem:[%s4663 + $0x70] sm:$0xff]
    %v4679 = vld [vmem:[%s4663 + $0x78] sm:$0xff]
    %v4680 = vld [vmem:[%s4663 + $0x80] sm:$0xff]
    %v4681 = vld [vmem:[%s4663 + $0x88] sm:$0xff]
    %v4682 = vld [vmem:[%s4663 + $0x90] sm:$0xff]
    %v4683 = vld [vmem:[%s4663 + $0x98] sm:$0xff]
    %v4684 = vld [vmem:[%s4663 + $0xa0] sm:$0xff]
    %v4685 = vld [vmem:[%s4663 + $0xa8] sm:$0xff]
    %v4686 = vld [vmem:[%s4663 + $0xb0] sm:$0xff]
    %v4687 = vld [vmem:[%s4663 + $0xb8] sm:$0xff]
    %v4688 = vld [vmem:[%s4663 + $0xc0] sm:$0xff]
    %v4689 = vld [vmem:[%s4663 + $0xc8] sm:$0xff]
    %v4690 = vld [vmem:[%s4663 + $0xd0] sm:$0xff]
    %v4691 = vld [vmem:[%s4663 + $0xd8] sm:$0xff]
    %v4692 = vld [vmem:[%s4663 + $0xe0] sm:$0xff]
    %v4693 = vld [vmem:[%s4663 + $0xe8] sm:$0xff]
    %v4694 = vld [vmem:[%s4663 + $0xf0] sm:$0xff]
    %v4695 = vld [vmem:[%s4663 + $0xf8] sm:$0xff]
    %s4696 = scalar_lea.vmem [#allocation6], 768
    %v4697 = vld [vmem:[%s4696] sm:$0xff]
    %v4698 = vld [vmem:[%s4696 + $0x8] sm:$0xff]
    %v4699 = vld [vmem:[%s4696 + $0x10] sm:$0xff]
    %v4700 = vld [vmem:[%s4696 + $0x18] sm:$0xff]
    %v4701 = vld [vmem:[%s4696 + $0x20] sm:$0xff]
    %v4702 = vld [vmem:[%s4696 + $0x28] sm:$0xff]
    %v4703 = vld [vmem:[%s4696 + $0x30] sm:$0xff]
    %v4704 = vld [vmem:[%s4696 + $0x38] sm:$0xff]
    %v4705 = vld [vmem:[%s4696 + $0x40] sm:$0xff]
    %v4706 = vld [vmem:[%s4696 + $0x48] sm:$0xff]
    %v4707 = vld [vmem:[%s4696 + $0x50] sm:$0xff]
    %v4708 = vld [vmem:[%s4696 + $0x58] sm:$0xff]
    %v4709 = vld [vmem:[%s4696 + $0x60] sm:$0xff]
    %v4710 = vld [vmem:[%s4696 + $0x68] sm:$0xff]
    %v4711 = vld [vmem:[%s4696 + $0x70] sm:$0xff]
    %v4712 = vld [vmem:[%s4696 + $0x78] sm:$0xff]
    %v4713 = vld [vmem:[%s4696 + $0x80] sm:$0xff]
    %v4714 = vld [vmem:[%s4696 + $0x88] sm:$0xff]
    %v4715 = vld [vmem:[%s4696 + $0x90] sm:$0xff]
    %v4716 = vld [vmem:[%s4696 + $0x98] sm:$0xff]
    %v4717 = vld [vmem:[%s4696 + $0xa0] sm:$0xff]
    %v4718 = vld [vmem:[%s4696 + $0xa8] sm:$0xff]
    %v4719 = vld [vmem:[%s4696 + $0xb0] sm:$0xff]
    %v4720 = vld [vmem:[%s4696 + $0xb8] sm:$0xff]
    %v4721 = vld [vmem:[%s4696 + $0xc0] sm:$0xff]
    %v4722 = vld [vmem:[%s4696 + $0xc8] sm:$0xff]
    %v4723 = vld [vmem:[%s4696 + $0xd0] sm:$0xff]
    %v4724 = vld [vmem:[%s4696 + $0xd8] sm:$0xff]
    %v4725 = vld [vmem:[%s4696 + $0xe0] sm:$0xff]
    %v4726 = vld [vmem:[%s4696 + $0xe8] sm:$0xff]
    %v4727 = vld [vmem:[%s4696 + $0xf0] sm:$0xff]
    %v4728 = vld [vmem:[%s4696 + $0xf8] sm:$0xff]
    %s4729 = scalar_lea.vmem %s3, 12
    %v4730 = vld [vmem:[%s4729] sm:$0xf]
    %v4731 = vld [vmem:[#allocation2] sm:$0xff]
    %v4732 = vld [vmem:[#allocation2 + $0x8] sm:$0xff]
    %v4733 = vld [vmem:[#allocation2 + $0x10] sm:$0xff]
    %v4734 = vld [vmem:[#allocation2 + $0x18] sm:$0xff]
    %v4735 = vld [vmem:[#allocation2 + $0x20] sm:$0xff]
    %v4736 = vld [vmem:[#allocation2 + $0x28] sm:$0xff]
    %v4737 = vld [vmem:[#allocation2 + $0x30] sm:$0xff]
    %v4738 = vld [vmem:[#allocation2 + $0x38] sm:$0xff]
    %v4739 = vpack.c.bf16 %v4732, %v4731
    %v4740 = vpack.c.bf16 %v4734, %v4733
    %v4741 = vpack.c.bf16 %v4736, %v4735
    %v4742 = vpack.c.bf16 %v4738, %v4737
    %v4744 = vlaneseq
    %v4745 = vshrl.u32 %v4744, 7
    %v4746 = vsub.s32 0, %v4745
    %v4747 = vrot.slane %v4730, %v4746
    %v4748 = vlaneseq
    %v4749 = vshrl.u32 %v4748, 7
    %v4750 = vsub.s32 1, %v4749
    %v4751 = vrot.slane %v4730, %v4750
    %v4752 = vlaneseq
    %v4753 = vshrl.u32 %v4752, 7
    %v4754 = vsub.s32 2, %v4753
    %v4755 = vrot.slane %v4730, %v4754
    %v4756 = vlaneseq
    %v4757 = vshrl.u32 %v4756, 7
    %v4758 = vsub.s32 3, %v4757
    %v4759 = vrot.slane %v4730, %v4758
    %v4796 = vunpack.c.l.b16 %v4664
    %v4797 = vunpack.c.h.b16 %v4664
    %v4798 = vunpack.c.l.b16 %v4665
    %v4799 = vunpack.c.h.b16 %v4665
    %v4800 = vunpack.c.l.b16 %v4666
    %v4801 = vunpack.c.h.b16 %v4666
    %v4802 = vunpack.c.l.b16 %v4667
    %v4803 = vunpack.c.h.b16 %v4667
    %v4804 = vunpack.c.l.b16 %v4668
    %v4805 = vunpack.c.h.b16 %v4668
    %v4806 = vunpack.c.l.b16 %v4669
    %v4807 = vunpack.c.h.b16 %v4669
    %v4808 = vunpack.c.l.b16 %v4670
    %v4809 = vunpack.c.h.b16 %v4670
    %v4810 = vunpack.c.l.b16 %v4671
    %v4811 = vunpack.c.h.b16 %v4671
    %v4812 = vunpack.c.l.b16 %v4672
    %v4813 = vunpack.c.h.b16 %v4672
    %v4814 = vunpack.c.l.b16 %v4673
    %v4815 = vunpack.c.h.b16 %v4673
    %v4816 = vunpack.c.l.b16 %v4674
    %v4817 = vunpack.c.h.b16 %v4674
    %v4818 = vunpack.c.l.b16 %v4675
    %v4819 = vunpack.c.h.b16 %v4675
    %v4820 = vunpack.c.l.b16 %v4676
    %v4821 = vunpack.c.h.b16 %v4676
    %v4822 = vunpack.c.l.b16 %v4677
    %v4823 = vunpack.c.h.b16 %v4677
    %v4824 = vunpack.c.l.b16 %v4678
    %v4825 = vunpack.c.h.b16 %v4678
    %v4826 = vunpack.c.l.b16 %v4679
    %v4827 = vunpack.c.h.b16 %v4679
    %v4828 = vunpack.c.l.b16 %v4680
    %v4829 = vunpack.c.h.b16 %v4680
    %v4830 = vunpack.c.l.b16 %v4681
    %v4831 = vunpack.c.h.b16 %v4681
    %v4832 = vunpack.c.l.b16 %v4682
    %v4833 = vunpack.c.h.b16 %v4682
    %v4834 = vunpack.c.l.b16 %v4683
    %v4835 = vunpack.c.h.b16 %v4683
    %v4836 = vunpack.c.l.b16 %v4684
    %v4837 = vunpack.c.h.b16 %v4684
    %v4838 = vunpack.c.l.b16 %v4685
    %v4839 = vunpack.c.h.b16 %v4685
    %v4840 = vunpack.c.l.b16 %v4686
    %v4841 = vunpack.c.h.b16 %v4686
    %v4842 = vunpack.c.l.b16 %v4687
    %v4843 = vunpack.c.h.b16 %v4687
    %v4844 = vunpack.c.l.b16 %v4688
    %v4845 = vunpack.c.h.b16 %v4688
    %v4846 = vunpack.c.l.b16 %v4689
    %v4847 = vunpack.c.h.b16 %v4689
    %v4848 = vunpack.c.l.b16 %v4690
    %v4849 = vunpack.c.h.b16 %v4690
    %v4850 = vunpack.c.l.b16 %v4691
    %v4851 = vunpack.c.h.b16 %v4691
    %v4852 = vunpack.c.l.b16 %v4692
    %v4853 = vunpack.c.h.b16 %v4692
    %v4854 = vunpack.c.l.b16 %v4693
    %v4855 = vunpack.c.h.b16 %v4693
    %v4856 = vunpack.c.l.b16 %v4694
    %v4857 = vunpack.c.h.b16 %v4694
    %v4858 = vunpack.c.l.b16 %v4695
    %v4859 = vunpack.c.h.b16 %v4695
    %v4860 = vpack.c.b16 %v4800, %v4796
    %v4861 = vpack.c.b16 %v4801, %v4797
    %v4862 = vpack.c.b16 %v4802, %v4798
    %v4863 = vpack.c.b16 %v4803, %v4799
    %v4864 = vpack.c.b16 %v4808, %v4804
    %v4865 = vpack.c.b16 %v4809, %v4805
    %v4866 = vpack.c.b16 %v4810, %v4806
    %v4867 = vpack.c.b16 %v4811, %v4807
    %v4868 = vpack.c.b16 %v4816, %v4812
    %v4869 = vpack.c.b16 %v4817, %v4813
    %v4870 = vpack.c.b16 %v4818, %v4814
    %v4871 = vpack.c.b16 %v4819, %v4815
    %v4872 = vpack.c.b16 %v4824, %v4820
    %v4873 = vpack.c.b16 %v4825, %v4821
    %v4874 = vpack.c.b16 %v4826, %v4822
    %v4875 = vpack.c.b16 %v4827, %v4823
    %v4876 = vpack.c.b16 %v4832, %v4828
    %v4877 = vpack.c.b16 %v4833, %v4829
    %v4878 = vpack.c.b16 %v4834, %v4830
    %v4879 = vpack.c.b16 %v4835, %v4831
    %v4880 = vpack.c.b16 %v4840, %v4836
    %v4881 = vpack.c.b16 %v4841, %v4837
    %v4882 = vpack.c.b16 %v4842, %v4838
    %v4883 = vpack.c.b16 %v4843, %v4839
    %v4884 = vpack.c.b16 %v4848, %v4844
    %v4885 = vpack.c.b16 %v4849, %v4845
    %v4886 = vpack.c.b16 %v4850, %v4846
    %v4887 = vpack.c.b16 %v4851, %v4847
    %v4888 = vpack.c.b16 %v4856, %v4852
    %v4889 = vpack.c.b16 %v4857, %v4853
    %v4890 = vpack.c.b16 %v4858, %v4854
    %v4891 = vpack.c.b16 %v4859, %v4855
    %4924 = vmatprep.subr.bf16.mxu0 %v4861
    %4925 = vmatpush1.bf16.msra.mxu0 %v4860
    %4926 = vmatprep.subr.bf16.mxu0 %v4865
    %4927 = vmatpush1.bf16.msra.mxu0 %v4864
    %4928 = vmatprep.subr.bf16.mxu0 %v4869
    %4929 = vmatpush1.bf16.msra.mxu0 %v4868
    %4930 = vmatprep.subr.bf16.mxu0 %v4873
    %4931 = vmatpush1.bf16.msra.mxu0 %v4872
    %4932 = vmatprep.subr.bf16.mxu0 %v4877
    %4933 = vmatpush1.bf16.msra.mxu0 %v4876
    %4934 = vmatprep.subr.bf16.mxu0 %v4881
    %4935 = vmatpush1.bf16.msra.mxu0 %v4880
    %4936 = vmatprep.subr.bf16.mxu0 %v4885
    %4937 = vmatpush1.bf16.msra.mxu0 %v4884
    %4938 = vmatprep.subr.bf16.mxu0 %v4889
    %4939 = vmatpush1.bf16.msra.mxu0 %v4888
    %4940 = vmatprep.subr.bf16.mxu0 0
    %4941 = vmatpush1.bf16.msra.mxu0 0
    %4942 = vmatprep.subr.bf16.mxu0 0
    %4943 = vmatpush1.bf16.msra.mxu0 0
    %4944 = vmatprep.subr.bf16.mxu0 0
    %4945 = vmatpush1.bf16.msra.mxu0 0
    %4946 = vmatprep.subr.bf16.mxu0 0
    %4947 = vmatpush1.bf16.msra.mxu0 0
    %4948 = vmatprep.subr.bf16.mxu0 0
    %4949 = vmatpush1.bf16.msra.mxu0 0
    %4950 = vmatprep.subr.bf16.mxu0 0
    %4951 = vmatpush1.bf16.msra.mxu0 0
    %4952 = vmatprep.subr.bf16.mxu0 0
    %4953 = vmatpush1.bf16.msra.mxu0 0
    %4954 = vmatprep.subr.bf16.mxu0 0
    %4955 = vmatpush1.bf16.msra.mxu0 0
    %4956 = vmatprep.mubr.bf16.mxu0 0
    %4957 = vmatmul.mubr.bf16.gmra.mrb[0].mxu0 %v4739
    %v4958 = vpop.f32.mrb[0].mxu0
    %v4959 = vadd.f32 %v4747, %v4958
    %v4960 = vpop.f32.mrb[0].mxu0
    %v4961 = vadd.f32 %v4751, %v4960
    %v4962 = vpop.f32.mrb[0].mxu0
    %v4963 = vadd.f32 %v4747, %v4962
    %v4964 = vpop.f32.mrb[0].mxu0
    %v4965 = vadd.f32 %v4751, %v4964
    %4966 = vmatprep.mubr.bf16.mxu0 0
    %4967 = vmatmul.mubr.bf16.gmra.mrb[0].mxu0 %v4740
    %v4968 = vpop.f32.mrb[0].mxu0
    %v4969 = vadd.f32 %v4747, %v4968
    %v4970 = vpop.f32.mrb[0].mxu0
    %v4971 = vadd.f32 %v4751, %v4970
    %v4972 = vpop.f32.mrb[0].mxu0
    %v4973 = vadd.f32 %v4747, %v4972
    %v4974 = vpop.f32.mrb[0].mxu0
    %v4975 = vadd.f32 %v4751, %v4974
    %4976 = vmatprep.mubr.bf16.mxu0 0
    %4977 = vmatmul.mubr.bf16.gmra.mrb[0].mxu0 %v4741
    %v4978 = vpop.f32.mrb[0].mxu0
    %v4979 = vadd.f32 %v4747, %v4978
    %v4980 = vpop.f32.mrb[0].mxu0
    %v4981 = vadd.f32 %v4751, %v4980
    %v4982 = vpop.f32.mrb[0].mxu0
    %v4983 = vadd.f32 %v4747, %v4982
    %v4984 = vpop.f32.mrb[0].mxu0
    %v4985 = vadd.f32 %v4751, %v4984
    %4986 = vmatprep.mubr.bf16.mxu0 0
    %4987 = vmatmul.mubr.bf16.gmra.mrb[0].mxu0 %v4742
    %v4988 = vpop.f32.mrb[0].mxu0
    %v4989 = vadd.f32 %v4747, %v4988
    %v4990 = vpop.f32.mrb[0].mxu0
    %v4991 = vadd.f32 %v4751, %v4990
    %v4992 = vpop.f32.mrb[0].mxu0
    %v4993 = vadd.f32 %v4747, %v4992
    %v4994 = vpop.f32.mrb[0].mxu0
    %v4995 = vadd.f32 %v4751, %v4994
    %4996 = vdwg.mxu0
    %4997 = vmatprep.subr.bf16.mxu0 %v4863
    %4998 = vmatpush1.bf16.msra.mxu0 %v4862
    %4999 = vmatprep.subr.bf16.mxu0 %v4867
    %5000 = vmatpush1.bf16.msra.mxu0 %v4866
    %5001 = vmatprep.subr.bf16.mxu0 %v4871
    %5002 = vmatpush1.bf16.msra.mxu0 %v4870
    %5003 = vmatprep.subr.bf16.mxu0 %v4875
    %5004 = vmatpush1.bf16.msra.mxu0 %v4874
    %5005 = vmatprep.subr.bf16.mxu0 %v4879
    %5006 = vmatpush1.bf16.msra.mxu0 %v4878
    %5007 = vmatprep.subr.bf16.mxu0 %v4883
    %5008 = vmatpush1.bf16.msra.mxu0 %v4882
    %5009 = vmatprep.subr.bf16.mxu0 %v4887
    %5010 = vmatpush1.bf16.msra.mxu0 %v4886
    %5011 = vmatprep.subr.bf16.mxu0 %v4891
    %5012 = vmatpush1.bf16.msra.mxu0 %v4890
    %5013 = vmatprep.subr.bf16.mxu0 0
    %5014 = vmatpush1.bf16.msra.mxu0 0
    %5015 = vmatprep.subr.bf16.mxu0 0
    %5016 = vmatpush1.bf16.msra.mxu0 0
    %5017 = vmatprep.subr.bf16.mxu0 0
    %5018 = vmatpush1.bf16.msra.mxu0 0
    %5019 = vmatprep.subr.bf16.mxu0 0
    %5020 = vmatpush1.bf16.msra.mxu0 0
    %5021 = vmatprep.subr.bf16.mxu0 0
    %5022 = vmatpush1.bf16.msra.mxu0 0
    %5023 = vmatprep.subr.bf16.mxu0 0
    %5024 = vmatpush1.bf16.msra.mxu0 0
    %5025 = vmatprep.subr.bf16.mxu0 0
    %5026 = vmatpush1.bf16.msra.mxu0 0
    %5027 = vmatprep.subr.bf16.mxu0 0
    %5028 = vmatpush1.bf16.msra.mxu0 0
    %5029 = vmatprep.mubr.bf16.mxu0 0
    %5030 = vmatmul.mubr.bf16.gmra.mrb[0].mxu0 %v4739
    %v5031 = vpop.f32.mrb[0].mxu0
    %v5032 = vadd.f32 %v4755, %v5031
    %v5033 = vpop.f32.mrb[0].mxu0
    %v5034 = vadd.f32 %v4759, %v5033
    %v5035 = vpop.f32.mrb[0].mxu0
    %v5036 = vadd.f32 %v4755, %v5035
    %v5037 = vpop.f32.mrb[0].mxu0
    %v5038 = vadd.f32 %v4759, %v5037
    %5039 = vmatprep.mubr.bf16.mxu0 0
    %5040 = vmatmul.mubr.bf16.gmra.mrb[0].mxu0 %v4740
    %v5041 = vpop.f32.mrb[0].mxu0
    %v5042 = vadd.f32 %v4755, %v5041
    %v5043 = vpop.f32.mrb[0].mxu0
    %v5044 = vadd.f32 %v4759, %v5043
    %v5045 = vpop.f32.mrb[0].mxu0
    %v5046 = vadd.f32 %v4755, %v5045
    %v5047 = vpop.f32.mrb[0].mxu0
    %v5048 = vadd.f32 %v4759, %v5047
    %5049 = vmatprep.mubr.bf16.mxu0 0
    %5050 = vmatmul.mubr.bf16.gmra.mrb[0].mxu0 %v4741
    %v5051 = vpop.f32.mrb[0].mxu0
    %v5052 = vadd.f32 %v4755, %v5051
    %v5053 = vpop.f32.mrb[0].mxu0
    %v5054 = vadd.f32 %v4759, %v5053
    %v5055 = vpop.f32.mrb[0].mxu0
    %v5056 = vadd.f32 %v4755, %v5055
    %v5057 = vpop.f32.mrb[0].mxu0
    %v5058 = vadd.f32 %v4759, %v5057
    %5059 = vmatprep.mubr.bf16.mxu0 0
    %5060 = vmatmul.mubr.bf16.gmra.mrb[0].mxu0 %v4742
    %v5061 = vpop.f32.mrb[0].mxu0
    %v5062 = vadd.f32 %v4755, %v5061
    %v5063 = vpop.f32.mrb[0].mxu0
    %v5064 = vadd.f32 %v4759, %v5063
    %v5065 = vpop.f32.mrb[0].mxu0
    %v5066 = vadd.f32 %v4755, %v5065
    %v5067 = vpop.f32.mrb[0].mxu0
    %v5068 = vadd.f32 %v4759, %v5067
    %5069 = vdwg.mxu0
    %5070 = vst [vmem:[#allocation3] sm:$0xff] %v4959
    %5071 = vst [vmem:[#allocation3 + $0x8] sm:$0xff] %v4961
    %5072 = vst [vmem:[#allocation3 + $0x10] sm:$0xff] %v5032
    %5073 = vst [vmem:[#allocation3 + $0x18] sm:$0xff] %v5034
    %5074 = vst [vmem:[#allocation3 + $0x20] sm:$0xff] %v4963
    %5075 = vst [vmem:[#allocation3 + $0x28] sm:$0xff] %v4965
    %5076 = vst [vmem:[#allocation3 + $0x30] sm:$0xff] %v5036
    %5077 = vst [vmem:[#allocation3 + $0x38] sm:$0xff] %v5038
    %5078 = vst [vmem:[#allocation3 + $0x40] sm:$0xff] %v4969
    %5079 = vst [vmem:[#allocation3 + $0x48] sm:$0xff] %v4971
    %5080 = vst [vmem:[#allocation3 + $0x50] sm:$0xff] %v5042
    %5081 = vst [vmem:[#allocation3 + $0x58] sm:$0xff] %v5044
    %5082 = vst [vmem:[#allocation3 + $0x60] sm:$0xff] %v4973
    %5083 = vst [vmem:[#allocation3 + $0x68] sm:$0xff] %v4975
    %5084 = vst [vmem:[#allocation3 + $0x70] sm:$0xff] %v5046
    %5085 = vst [vmem:[#allocation3 + $0x78] sm:$0xff] %v5048
    %5086 = vst [vmem:[#allocation3 + $0x80] sm:$0xff] %v4979
    %5087 = vst [vmem:[#allocation3 + $0x88] sm:$0xff] %v4981
    %5088 = vst [vmem:[#allocation3 + $0x90] sm:$0xff] %v5052
    %5089 = vst [vmem:[#allocation3 + $0x98] sm:$0xff] %v5054
    %5090 = vst [vmem:[#allocation3 + $0xa0] sm:$0xff] %v4983
    %5091 = vst [vmem:[#allocation3 + $0xa8] sm:$0xff] %v4985
    %5092 = vst [vmem:[#allocation3 + $0xb0] sm:$0xff] %v5056
    %5093 = vst [vmem:[#allocation3 + $0xb8] sm:$0xff] %v5058
    %5094 = vst [vmem:[#allocation3 + $0xc0] sm:$0xff] %v4989
    %5095 = vst [vmem:[#allocation3 + $0xc8] sm:$0xff] %v4991
    %5096 = vst [vmem:[#allocation3 + $0xd0] sm:$0xff] %v5062
    %5097 = vst [vmem:[#allocation3 + $0xd8] sm:$0xff] %v5064
    %5098 = vst [vmem:[#allocation3 + $0xe0] sm:$0xff] %v4993
    %5099 = vst [vmem:[#allocation3 + $0xe8] sm:$0xff] %v4995
    %5100 = vst [vmem:[#allocation3 + $0xf0] sm:$0xff] %v5066
    %5101 = vst [vmem:[#allocation3 + $0xf8] sm:$0xff] %v5068
    %v5102 = vld [vmem:[#allocation3] sm:$0xff]
    %v5103 = vld [vmem:[#allocation3 + $0x8] sm:$0xff]
    %v5104 = vld [vmem:[#allocation3 + $0x10] sm:$0xff]
    %v5105 = vld [vmem:[#allocation3 + $0x18] sm:$0xff]
    %v5138 = vunpack.c.l.b16 %v4697
    %v5139 = vunpack.c.h.b16 %v4697
    %v5140 = vunpack.c.l.b16 %v4698
    %v5141 = vunpack.c.h.b16 %v4698
    %v5142 = vunpack.c.l.b16 %v4699
    %v5143 = vunpack.c.h.b16 %v4699
    %v5144 = vunpack.c.l.b16 %v4700
    %v5145 = vunpack.c.h.b16 %v4700
    %v5146 = vunpack.c.l.b16 %v4701
    %v5147 = vunpack.c.h.b16 %v4701
    %v5148 = vunpack.c.l.b16 %v4702
    %v5149 = vunpack.c.h.b16 %v4702
    %v5150 = vunpack.c.l.b16 %v4703
    %v5151 = vunpack.c.h.b16 %v4703
    %v5152 = vunpack.c.l.b16 %v4704
    %v5153 = vunpack.c.h.b16 %v4704
    %v5154 = vunpack.c.l.b16 %v4705
    %v5155 = vunpack.c.h.b16 %v4705
    %v5156 = vunpack.c.l.b16 %v4706
    %v5157 = vunpack.c.h.b16 %v4706
    %v5158 = vunpack.c.l.b16 %v4707
    %v5159 = vunpack.c.h.b16 %v4707
    %v5160 = vunpack.c.l.b16 %v4708
    %v5161 = vunpack.c.h.b16 %v4708
    %v5162 = vunpack.c.l.b16 %v4709
    %v5163 = vunpack.c.h.b16 %v4709
    %v5164 = vunpack.c.l.b16 %v4710
    %v5165 = vunpack.c.h.b16 %v4710
    %v5166 = vunpack.c.l.b16 %v4711
    %v5167 = vunpack.c.h.b16 %v4711
    %v5168 = vunpack.c.l.b16 %v4712
    %v5169 = vunpack.c.h.b16 %v4712
    %v5170 = vunpack.c.l.b16 %v4713
    %v5171 = vunpack.c.h.b16 %v4713
    %v5172 = vunpack.c.l.b16 %v4714
    %v5173 = vunpack.c.h.b16 %v4714
    %v5174 = vunpack.c.l.b16 %v4715
    %v5175 = vunpack.c.h.b16 %v4715
    %v5176 = vunpack.c.l.b16 %v4716
    %v5177 = vunpack.c.h.b16 %v4716
    %v5178 = vunpack.c.l.b16 %v4717
    %v5179 = vunpack.c.h.b16 %v4717
    %v5180 = vunpack.c.l.b16 %v4718
    %v5181 = vunpack.c.h.b16 %v4718
    %v5182 = vunpack.c.l.b16 %v4719
    %v5183 = vunpack.c.h.b16 %v4719
    %v5184 = vunpack.c.l.b16 %v4720
    %v5185 = vunpack.c.h.b16 %v4720
    %v5186 = vunpack.c.l.b16 %v4721
    %v5187 = vunpack.c.h.b16 %v4721
    %v5188 = vunpack.c.l.b16 %v4722
    %v5189 = vunpack.c.h.b16 %v4722
    %v5190 = vunpack.c.l.b16 %v4723
    %v5191 = vunpack.c.h.b16 %v4723
    %v5192 = vunpack.c.l.b16 %v4724
    %v5193 = vunpack.c.h.b16 %v4724
    %v5194 = vunpack.c.l.b16 %v4725
    %v5195 = vunpack.c.h.b16 %v4725
    %v5196 = vunpack.c.l.b16 %v4726
    %v5197 = vunpack.c.h.b16 %v4726
    %v5198 = vunpack.c.l.b16 %v4727
    %v5199 = vunpack.c.h.b16 %v4727
    %v5200 = vunpack.c.l.b16 %v4728
    %v5201 = vunpack.c.h.b16 %v4728
    %v5202 = vpack.c.b16 %v5142, %v5138
    %v5203 = vpack.c.b16 %v5143, %v5139
    %v5204 = vpack.c.b16 %v5144, %v5140
    %v5205 = vpack.c.b16 %v5145, %v5141
    %v5206 = vpack.c.b16 %v5150, %v5146
    %v5207 = vpack.c.b16 %v5151, %v5147
    %v5208 = vpack.c.b16 %v5152, %v5148
    %v5209 = vpack.c.b16 %v5153, %v5149
    %v5210 = vpack.c.b16 %v5158, %v5154
    %v5211 = vpack.c.b16 %v5159, %v5155
    %v5212 = vpack.c.b16 %v5160, %v5156
    %v5213 = vpack.c.b16 %v5161, %v5157
    %v5214 = vpack.c.b16 %v5166, %v5162
    %v5215 = vpack.c.b16 %v5167, %v5163
    %v5216 = vpack.c.b16 %v5168, %v5164
    %v5217 = vpack.c.b16 %v5169, %v5165
    %v5218 = vpack.c.b16 %v5174, %v5170
    %v5219 = vpack.c.b16 %v5175, %v5171
    %v5220 = vpack.c.b16 %v5176, %v5172
    %v5221 = vpack.c.b16 %v5177, %v5173
    %v5222 = vpack.c.b16 %v5182, %v5178
    %v5223 = vpack.c.b16 %v5183, %v5179
    %v5224 = vpack.c.b16 %v5184, %v5180
    %v5225 = vpack.c.b16 %v5185, %v5181
    %v5226 = vpack.c.b16 %v5190, %v5186
    %v5227 = vpack.c.b16 %v5191, %v5187
    %v5228 = vpack.c.b16 %v5192, %v5188
    %v5229 = vpack.c.b16 %v5193, %v5189
    %v5230 = vpack.c.b16 %v5198, %v5194
    %v5231 = vpack.c.b16 %v5199, %v5195
    %v5232 = vpack.c.b16 %v5200, %v5196
    %v5233 = vpack.c.b16 %v5201, %v5197
    %5266 = vmatprep.subr.bf16.mxu0 %v5203
    %5267 = vmatpush1.bf16.msra.mxu0 %v5202
    %5268 = vmatprep.subr.bf16.mxu0 %v5207
    %5269 = vmatpush1.bf16.msra.mxu0 %v5206
    %5270 = vmatprep.subr.bf16.mxu0 %v5211
    %5271 = vmatpush1.bf16.msra.mxu0 %v5210
    %5272 = vmatprep.subr.bf16.mxu0 %v5215
    %5273 = vmatpush1.bf16.msra.mxu0 %v5214
    %5274 = vmatprep.subr.bf16.mxu0 %v5219
    %5275 = vmatpush1.bf16.msra.mxu0 %v5218
    %5276 = vmatprep.subr.bf16.mxu0 %v5223
    %5277 = vmatpush1.bf16.msra.mxu0 %v5222
    %5278 = vmatprep.subr.bf16.mxu0 %v5227
    %5279 = vmatpush1.bf16.msra.mxu0 %v5226
    %5280 = vmatprep.subr.bf16.mxu0 %v5231
    %5281 = vmatpush1.bf16.msra.mxu0 %v5230
    %5282 = vmatprep.subr.bf16.mxu0 0
    %5283 = vmatpush1.bf16.msra.mxu0 0
    %5284 = vmatprep.subr.bf16.mxu0 0
    %5285 = vmatpush1.bf16.msra.mxu0 0
    %5286 = vmatprep.subr.bf16.mxu0 0
    %5287 = vmatpush1.bf16.msra.mxu0 0
    %5288 = vmatprep.subr.bf16.mxu0 0
    %5289 = vmatpush1.bf16.msra.mxu0 0
    %5290 = vmatprep.subr.bf16.mxu0 0
    %5291 = vmatpush1.bf16.msra.mxu0 0
    %5292 = vmatprep.subr.bf16.mxu0 0
    %5293 = vmatpush1.bf16.msra.mxu0 0
    %5294 = vmatprep.subr.bf16.mxu0 0
    %5295 = vmatpush1.bf16.msra.mxu0 0
    %5296 = vmatprep.subr.bf16.mxu0 0
    %5297 = vmatpush1.bf16.msra.mxu0 0
    %5298 = vmatprep.mubr.bf16.mxu0 0
    %5299 = vmatmul.mubr.bf16.gmra.mrb[0].mxu0 0
    %v5300 = vpop.f32.mrb[0].mxu0
    %v5301 = vadd.f32 0.0, %v5300
    %v5302 = vpop.f32.mrb[0].mxu0
    %v5303 = vadd.f32 0.0, %v5302
    %v5304 = vpop.f32.mrb[0].mxu0
    %v5305 = vpop.f32.mrb[0].mxu0
    %5306 = vdwg.mxu0
    %5307 = vmatprep.subr.bf16.mxu0 %v5205
    %5308 = vmatpush1.bf16.msra.mxu0 %v5204
    %5309 = vmatprep.subr.bf16.mxu0 %v5209
    %5310 = vmatpush1.bf16.msra.mxu0 %v5208
    %5311 = vmatprep.subr.bf16.mxu0 %v5213
    %5312 = vmatpush1.bf16.msra.mxu0 %v5212
    %5313 = vmatprep.subr.bf16.mxu0 %v5217
    %5314 = vmatpush1.bf16.msra.mxu0 %v5216
    %5315 = vmatprep.subr.bf16.mxu0 %v5221
    %5316 = vmatpush1.bf16.msra.mxu0 %v5220
    %5317 = vmatprep.subr.bf16.mxu0 %v5225
    %5318 = vmatpush1.bf16.msra.mxu0 %v5224
    %5319 = vmatprep.subr.bf16.mxu0 %v5229
    %5320 = vmatpush1.bf16.msra.mxu0 %v5228
    %5321 = vmatprep.subr.bf16.mxu0 %v5233
    %5322 = vmatpush1.bf16.msra.mxu0 %v5232
    %5323 = vmatprep.subr.bf16.mxu0 0
    %5324 = vmatpush1.bf16.msra.mxu0 0
    %5325 = vmatprep.subr.bf16.mxu0 0
    %5326 = vmatpush1.bf16.msra.mxu0 0
    %5327 = vmatprep.subr.bf16.mxu0 0
    %5328 = vmatpush1.bf16.msra.mxu0 0
    %5329 = vmatprep.subr.bf16.mxu0 0
    %5330 = vmatpush1.bf16.msra.mxu0 0
    %5331 = vmatprep.subr.bf16.mxu0 0
    %5332 = vmatpush1.bf16.msra.mxu0 0
    %5333 = vmatprep.subr.bf16.mxu0 0
    %5334 = vmatpush1.bf16.msra.mxu0 0
    %5335 = vmatprep.subr.bf16.mxu0 0
    %5336 = vmatpush1.bf16.msra.mxu0 0
    %5337 = vmatprep.subr.bf16.mxu0 0
    %5338 = vmatpush1.bf16.msra.mxu0 0
    %5339 = vmatprep.mubr.bf16.mxu0 0
    %5340 = vmatmul.mubr.bf16.gmra.mrb[0].mxu0 0
    %v5341 = vpop.f32.mrb[0].mxu0
    %v5342 = vadd.f32 0.0, %v5341
    %v5343 = vpop.f32.mrb[0].mxu0
    %v5344 = vadd.f32 0.0, %v5343
    %v5345 = vpop.f32.mrb[0].mxu0
    %v5346 = vpop.f32.mrb[0].mxu0
    %5347 = vdwg.mxu0
    %v5348 = vadd.f32 %v5102, %v5301
    %v5349 = vadd.f32 %v5103, %v5303
    %v5350 = vadd.f32 %v5104, %v5342
    %v5351 = vadd.f32 %v5105, %v5344
    %v5352 = vxor.u32 %v5348, 2147483648
    %v5353 = vmul.f32 %v5352, 1.442695
    %v5354 = vpow.pop %v5353
    %v5355 = vadd.f32 %v5354, 1.0
    %v5356 = vrcp.pop %v5355
    %v5357 = vmul.f32 1.0, %v5356
    %v5358 = vxor.u32 %v5349, 2147483648
    %v5359 = vmul.f32 %v5358, 1.442695
    %v5360 = vpow.pop %v5359
    %v5361 = vadd.f32 %v5360, 1.0
    %v5362 = vrcp.pop %v5361
    %v5363 = vmul.f32 1.0, %v5362
    %v5364 = vtanh.pop %v5350
    %v5365 = vxor.u32 %v5351, 2147483648
    %v5366 = vmul.f32 %v5365, 1.442695
    %v5367 = vpow.pop %v5366
    %v5368 = vadd.f32 %v5367, 1.0
    %v5369 = vrcp.pop %v5368
    %v5370 = vmul.f32 1.0, %v5369
    %v5371 = vmul.f32 %v5363, 0.0
    %v5372 = vmul.f32 %v5357, %v5364
    %v5373 = vadd.f32 %v5371, %v5372
    %v5374 = vtanh.pop %v5373
    %v5375 = vmul.f32 %v5370, %v5374
    %v5376 = vld [vmem:[%s769] sm:$0xff]
    %v5377 = vld [vmem:[%s769 + $0x8] sm:$0xff]
    %v5378 = vld [vmem:[%s769 + $0x10] sm:$0xff]
    %v5379 = vld [vmem:[%s769 + $0x18] sm:$0xff]
    %v5380 = vpack.c.bf16 %v5375, %v5375
    %5381 = vmatprep.subr.bf16.mxu0 %v5203
    %5382 = vmatpush1.bf16.msra.mxu0 %v5202
    %5383 = vmatprep.subr.bf16.mxu0 %v5207
    %5384 = vmatpush1.bf16.msra.mxu0 %v5206
    %5385 = vmatprep.subr.bf16.mxu0 %v5211
    %5386 = vmatpush1.bf16.msra.mxu0 %v5210
    %5387 = vmatprep.subr.bf16.mxu0 %v5215
    %5388 = vmatpush1.bf16.msra.mxu0 %v5214
    %5389 = vmatprep.subr.bf16.mxu0 %v5219
    %5390 = vmatpush1.bf16.msra.mxu0 %v5218
    %5391 = vmatprep.subr.bf16.mxu0 %v5223
    %5392 = vmatpush1.bf16.msra.mxu0 %v5222
    %5393 = vmatprep.subr.bf16.mxu0 %v5227
    %5394 = vmatpush1.bf16.msra.mxu0 %v5226
    %5395 = vmatprep.subr.bf16.mxu0 %v5231
    %5396 = vmatpush1.bf16.msra.mxu0 %v5230
    %5397 = vmatprep.subr.bf16.mxu0 0
    %5398 = vmatpush1.bf16.msra.mxu0 0
    %5399 = vmatprep.subr.bf16.mxu0 0
    %5400 = vmatpush1.bf16.msra.mxu0 0
    %5401 = vmatprep.subr.bf16.mxu0 0
    %5402 = vmatpush1.bf16.msra.mxu0 0
    %5403 = vmatprep.subr.bf16.mxu0 0
    %5404 = vmatpush1.bf16.msra.mxu0 0
    %5405 = vmatprep.subr.bf16.mxu0 0
    %5406 = vmatpush1.bf16.msra.mxu0 0
    %5407 = vmatprep.subr.bf16.mxu0 0
    %5408 = vmatpush1.bf16.msra.mxu0 0
    %5409 = vmatprep.subr.bf16.mxu0 0
    %5410 = vmatpush1.bf16.msra.mxu0 0
    %5411 = vmatprep.subr.bf16.mxu0 0
    %5412 = vmatpush1.bf16.msra.mxu0 0
    %5413 = vmatprep.mubr.bf16.mxu0 0
    %5414 = vmatmul.mubr.bf16.gmra.mrb[0].mxu0 %v5380
    %v5415 = vpop.f32.mrb[0].mxu0
    %v5416 = vadd.f32 0.0, %v5415
    %v5417 = vpop.f32.mrb[0].mxu0
    %v5418 = vadd.f32 0.0, %v5417
    %v5419 = vpop.f32.mrb[0].mxu0
    %v5420 = vpop.f32.mrb[0].mxu0
    %5421 = vdwg.mxu0
    %5422 = vmatprep.subr.bf16.mxu0 %v5205
    %5423 = vmatpush1.bf16.msra.mxu0 %v5204
    %5424 = vmatprep.subr.bf16.mxu0 %v5209
    %5425 = vmatpush1.bf16.msra.mxu0 %v5208
    %5426 = vmatprep.subr.bf16.mxu0 %v5213
    %5427 = vmatpush1.bf16.msra.mxu0 %v5212
    %5428 = vmatprep.subr.bf16.mxu0 %v5217
    %5429 = vmatpush1.bf16.msra.mxu0 %v5216
    %5430 = vmatprep.subr.bf16.mxu0 %v5221
    %5431 = vmatpush1.bf16.msra.mxu0 %v5220
    %5432 = vmatprep.subr.bf16.mxu0 %v5225
    %5433 = vmatpush1.bf16.msra.mxu0 %v5224
    %5434 = vmatprep.subr.bf16.mxu0 %v5229
    %5435 = vmatpush1.bf16.msra.mxu0 %v5228
    %5436 = vmatprep.subr.bf16.mxu0 %v5233
    %5437 = vmatpush1.bf16.msra.mxu0 %v5232
    %5438 = vmatprep.subr.bf16.mxu0 0
    %5439 = vmatpush1.bf16.msra.mxu0 0
    %5440 = vmatprep.subr.bf16.mxu0 0
    %5441 = vmatpush1.bf16.msra.mxu0 0
    %5442 = vmatprep.subr.bf16.mxu0 0
    %5443 = vmatpush1.bf16.msra.mxu0 0
    %5444 = vmatprep.subr.bf16.mxu0 0
    %5445 = vmatpush1.bf16.msra.mxu0 0
    %5446 = vmatprep.subr.bf16.mxu0 0
    %5447 = vmatpush1.bf16.msra.mxu0 0
    %5448 = vmatprep.subr.bf16.mxu0 0
    %5449 = vmatpush1.bf16.msra.mxu0 0
    %5450 = vmatprep.subr.bf16.mxu0 0
    %5451 = vmatpush1.bf16.msra.mxu0 0
    %5452 = vmatprep.subr.bf16.mxu0 0
    %5453 = vmatpush1.bf16.msra.mxu0 0
    %5454 = vmatprep.mubr.bf16.mxu0 0
    %5455 = vmatmul.mubr.bf16.gmra.mrb[0].mxu0 %v5380
    %v5456 = vpop.f32.mrb[0].mxu0
    %v5457 = vadd.f32 0.0, %v5456
    %v5458 = vpop.f32.mrb[0].mxu0
    %v5459 = vadd.f32 0.0, %v5458
    %v5460 = vpop.f32.mrb[0].mxu0
    %v5461 = vpop.f32.mrb[0].mxu0
    %5462 = vdwg.mxu0
    %v5463 = vadd.f32 %v5376, %v5416
    %v5464 = vadd.f32 %v5377, %v5418
    %v5465 = vadd.f32 %v5378, %v5457
    %v5466 = vadd.f32 %v5379, %v5459
    %v5467 = vxor.u32 %v5463, 2147483648
    %v5468 = vmul.f32 %v5467, 1.442695
    %v5469 = vpow.pop %v5468
    %v5470 = vadd.f32 %v5469, 1.0
    %v5471 = vrcp.pop %v5470
    %v5472 = vmul.f32 1.0, %v5471
    %v5473 = vxor.u32 %v5464, 2147483648
    %v5474 = vmul.f32 %v5473, 1.442695
    %v5475 = vpow.pop %v5474
    %v5476 = vadd.f32 %v5475, 1.0
    %v5477 = vrcp.pop %v5476
    %v5478 = vmul.f32 1.0, %v5477
    %v5479 = vtanh.pop %v5465
    %v5480 = vxor.u32 %v5466, 2147483648
    %v5481 = vmul.f32 %v5480, 1.442695
    %v5482 = vpow.pop %v5481
    %v5483 = vadd.f32 %v5482, 1.0
    %v5484 = vrcp.pop %v5483
    %v5485 = vmul.f32 1.0, %v5484
    %v5486 = vmul.f32 %v5478, %v5373
    %v5487 = vmul.f32 %v5472, %v5479
    %v5488 = vadd.f32 %v5486, %v5487
    %v5489 = vtanh.pop %v5488
    %v5490 = vmul.f32 %v5485, %v5489
    %v5491 = vld [vmem:[%s887] sm:$0xff]
    %v5492 = vld [vmem:[%s887 + $0x8] sm:$0xff]
    %v5493 = vld [vmem:[%s887 + $0x10] sm:$0xff]
    %v5494 = vld [vmem:[%s887 + $0x18] sm:$0xff]
    %v5495 = vpack.c.bf16 %v5490, %v5490
    %5496 = vmatprep.subr.bf16.mxu0 %v5203
    %5497 = vmatpush1.bf16.msra.mxu0 %v5202
    %5498 = vmatprep.subr.bf16.mxu0 %v5207
    %5499 = vmatpush1.bf16.msra.mxu0 %v5206
    %5500 = vmatprep.subr.bf16.mxu0 %v5211
    %5501 = vmatpush1.bf16.msra.mxu0 %v5210
    %5502 = vmatprep.subr.bf16.mxu0 %v5215
    %5503 = vmatpush1.bf16.msra.mxu0 %v5214
    %5504 = vmatprep.subr.bf16.mxu0 %v5219
    %5505 = vmatpush1.bf16.msra.mxu0 %v5218
    %5506 = vmatprep.subr.bf16.mxu0 %v5223
    %5507 = vmatpush1.bf16.msra.mxu0 %v5222
    %5508 = vmatprep.subr.bf16.mxu0 %v5227
    %5509 = vmatpush1.bf16.msra.mxu0 %v5226
    %5510 = vmatprep.subr.bf16.mxu0 %v5231
    %5511 = vmatpush1.bf16.msra.mxu0 %v5230
    %5512 = vmatprep.subr.bf16.mxu0 0
    %5513 = vmatpush1.bf16.msra.mxu0 0
    %5514 = vmatprep.subr.bf16.mxu0 0
    %5515 = vmatpush1.bf16.msra.mxu0 0
    %5516 = vmatprep.subr.bf16.mxu0 0
    %5517 = vmatpush1.bf16.msra.mxu0 0
    %5518 = vmatprep.subr.bf16.mxu0 0
    %5519 = vmatpush1.bf16.msra.mxu0 0
    %5520 = vmatprep.subr.bf16.mxu0 0
    %5521 = vmatpush1.bf16.msra.mxu0 0
    %5522 = vmatprep.subr.bf16.mxu0 0
    %5523 = vmatpush1.bf16.msra.mxu0 0
    %5524 = vmatprep.subr.bf16.mxu0 0
    %5525 = vmatpush1.bf16.msra.mxu0 0
    %5526 = vmatprep.subr.bf16.mxu0 0
    %5527 = vmatpush1.bf16.msra.mxu0 0
    %5528 = vmatprep.mubr.bf16.mxu0 0
    %5529 = vmatmul.mubr.bf16.gmra.mrb[0].mxu0 %v5495
    %v5530 = vpop.f32.mrb[0].mxu0
    %v5531 = vadd.f32 0.0, %v5530
    %v5532 = vpop.f32.mrb[0].mxu0
    %v5533 = vadd.f32 0.0, %v5532
    %v5534 = vpop.f32.mrb[0].mxu0
    %v5535 = vpop.f32.mrb[0].mxu0
    %5536 = vdwg.mxu0
    %5537 = vmatprep.subr.bf16.mxu0 %v5205
    %5538 = vmatpush1.bf16.msra.mxu0 %v5204
    %5539 = vmatprep.subr.bf16.mxu0 %v5209
    %5540 = vmatpush1.bf16.msra.mxu0 %v5208
    %5541 = vmatprep.subr.bf16.mxu0 %v5213
    %5542 = vmatpush1.bf16.msra.mxu0 %v5212
    %5543 = vmatprep.subr.bf16.mxu0 %v5217
    %5544 = vmatpush1.bf16.msra.mxu0 %v5216
    %5545 = vmatprep.subr.bf16.mxu0 %v5221
    %5546 = vmatpush1.bf16.msra.mxu0 %v5220
    %5547 = vmatprep.subr.bf16.mxu0 %v5225
    %5548 = vmatpush1.bf16.msra.mxu0 %v5224
    %5549 = vmatprep.subr.bf16.mxu0 %v5229
    %5550 = vmatpush1.bf16.msra.mxu0 %v5228
    %5551 = vmatprep.subr.bf16.mxu0 %v5233
    %5552 = vmatpush1.bf16.msra.mxu0 %v5232
    %5553 = vmatprep.subr.bf16.mxu0 0
    %5554 = vmatpush1.bf16.msra.mxu0 0
    %5555 = vmatprep.subr.bf16.mxu0 0
    %5556 = vmatpush1.bf16.msra.mxu0 0
    %5557 = vmatprep.subr.bf16.mxu0 0
    %5558 = vmatpush1.bf16.msra.mxu0 0
    %5559 = vmatprep.subr.bf16.mxu0 0
    %5560 = vmatpush1.bf16.msra.mxu0 0
    %5561 = vmatprep.subr.bf16.mxu0 0
    %5562 = vmatpush1.bf16.msra.mxu0 0
    %5563 = vmatprep.subr.bf16.mxu0 0
    %5564 = vmatpush1.bf16.msra.mxu0 0
    %5565 = vmatprep.subr.bf16.mxu0 0
    %5566 = vmatpush1.bf16.msra.mxu0 0
    %5567 = vmatprep.subr.bf16.mxu0 0
    %5568 = vmatpush1.bf16.msra.mxu0 0
    %5569 = vmatprep.mubr.bf16.mxu0 0
    %5570 = vmatmul.mubr.bf16.gmra.mrb[0].mxu0 %v5495
    %v5571 = vpop.f32.mrb[0].mxu0
    %v5572 = vadd.f32 0.0, %v5571
    %v5573 = vpop.f32.mrb[0].mxu0
    %v5574 = vadd.f32 0.0, %v5573
    %v5575 = vpop.f32.mrb[0].mxu0
    %v5576 = vpop.f32.mrb[0].mxu0
    %5577 = vdwg.mxu0
    %v5578 = vadd.f32 %v5491, %v5531
    %v5579 = vadd.f32 %v5492, %v5533
    %v5580 = vadd.f32 %v5493, %v5572
    %v5581 = vadd.f32 %v5494, %v5574
    %v5582 = vxor.u32 %v5578, 2147483648
    %v5583 = vmul.f32 %v5582, 1.442695
    %v5584 = vpow.pop %v5583
    %v5585 = vadd.f32 %v5584, 1.0
    %v5586 = vrcp.pop %v5585
    %v5587 = vmul.f32 1.0, %v5586
    %v5588 = vxor.u32 %v5579, 2147483648
    %v5589 = vmul.f32 %v5588, 1.442695
    %v5590 = vpow.pop %v5589
    %v5591 = vadd.f32 %v5590, 1.0
    %v5592 = vrcp.pop %v5591
    %v5593 = vmul.f32 1.0, %v5592
    %v5594 = vtanh.pop %v5580
    %v5595 = vxor.u32 %v5581, 2147483648
    %v5596 = vmul.f32 %v5595, 1.442695
    %v5597 = vpow.pop %v5596
    %v5598 = vadd.f32 %v5597, 1.0
    %v5599 = vrcp.pop %v5598
    %v5600 = vmul.f32 1.0, %v5599
    %v5601 = vmul.f32 %v5593, %v5488
    %v5602 = vmul.f32 %v5587, %v5594
    %v5603 = vadd.f32 %v5601, %v5602
    %v5604 = vtanh.pop %v5603
    %v5605 = vmul.f32 %v5600, %v5604
    %v5606 = vld [vmem:[%s1005] sm:$0xff]
    %v5607 = vld [vmem:[%s1005 + $0x8] sm:$0xff]
    %v5608 = vld [vmem:[%s1005 + $0x10] sm:$0xff]
    %v5609 = vld [vmem:[%s1005 + $0x18] sm:$0xff]
    %v5610 = vpack.c.bf16 %v5605, %v5605
    %5611 = vmatprep.subr.bf16.mxu0 %v5203
    %5612 = vmatpush1.bf16.msra.mxu0 %v5202
    %5613 = vmatprep.subr.bf16.mxu0 %v5207
    %5614 = vmatpush1.bf16.msra.mxu0 %v5206
    %5615 = vmatprep.subr.bf16.mxu0 %v5211
    %5616 = vmatpush1.bf16.msra.mxu0 %v5210
    %5617 = vmatprep.subr.bf16.mxu0 %v5215
    %5618 = vmatpush1.bf16.msra.mxu0 %v5214
    %5619 = vmatprep.subr.bf16.mxu0 %v5219
    %5620 = vmatpush1.bf16.msra.mxu0 %v5218
    %5621 = vmatprep.subr.bf16.mxu0 %v5223
    %5622 = vmatpush1.bf16.msra.mxu0 %v5222
    %5623 = vmatprep.subr.bf16.mxu0 %v5227
    %5624 = vmatpush1.bf16.msra.mxu0 %v5226
    %5625 = vmatprep.subr.bf16.mxu0 %v5231
    %5626 = vmatpush1.bf16.msra.mxu0 %v5230
    %5627 = vmatprep.subr.bf16.mxu0 0
    %5628 = vmatpush1.bf16.msra.mxu0 0
    %5629 = vmatprep.subr.bf16.mxu0 0
    %5630 = vmatpush1.bf16.msra.mxu0 0
    %5631 = vmatprep.subr.bf16.mxu0 0
    %5632 = vmatpush1.bf16.msra.mxu0 0
    %5633 = vmatprep.subr.bf16.mxu0 0
    %5634 = vmatpush1.bf16.msra.mxu0 0
    %5635 = vmatprep.subr.bf16.mxu0 0
    %5636 = vmatpush1.bf16.msra.mxu0 0
    %5637 = vmatprep.subr.bf16.mxu0 0
    %5638 = vmatpush1.bf16.msra.mxu0 0
    %5639 = vmatprep.subr.bf16.mxu0 0
    %5640 = vmatpush1.bf16.msra.mxu0 0
    %5641 = vmatprep.subr.bf16.mxu0 0
    %5642 = vmatpush1.bf16.msra.mxu0 0
    %5643 = vmatprep.mubr.bf16.mxu0 0
    %5644 = vmatmul.mubr.bf16.gmra.mrb[0].mxu0 %v5610
    %v5645 = vpop.f32.mrb[0].mxu0
    %v5646 = vadd.f32 0.0, %v5645
    %v5647 = vpop.f32.mrb[0].mxu0
    %v5648 = vadd.f32 0.0, %v5647
    %v5649 = vpop.f32.mrb[0].mxu0
    %v5650 = vpop.f32.mrb[0].mxu0
    %5651 = vdwg.mxu0
    %5652 = vmatprep.subr.bf16.mxu0 %v5205
    %5653 = vmatpush1.bf16.msra.mxu0 %v5204
    %5654 = vmatprep.subr.bf16.mxu0 %v5209
    %5655 = vmatpush1.bf16.msra.mxu0 %v5208
    %5656 = vmatprep.subr.bf16.mxu0 %v5213
    %5657 = vmatpush1.bf16.msra.mxu0 %v5212
    %5658 = vmatprep.subr.bf16.mxu0 %v5217
    %5659 = vmatpush1.bf16.msra.mxu0 %v5216
    %5660 = vmatprep.subr.bf16.mxu0 %v5221
    %5661 = vmatpush1.bf16.msra.mxu0 %v5220
    %5662 = vmatprep.subr.bf16.mxu0 %v5225
    %5663 = vmatpush1.bf16.msra.mxu0 %v5224
    %5664 = vmatprep.subr.bf16.mxu0 %v5229
    %5665 = vmatpush1.bf16.msra.mxu0 %v5228
    %5666 = vmatprep.subr.bf16.mxu0 %v5233
    %5667 = vmatpush1.bf16.msra.mxu0 %v5232
    %5668 = vmatprep.subr.bf16.mxu0 0
    %5669 = vmatpush1.bf16.msra.mxu0 0
    %5670 = vmatprep.subr.bf16.mxu0 0
    %5671 = vmatpush1.bf16.msra.mxu0 0
    %5672 = vmatprep.subr.bf16.mxu0 0
    %5673 = vmatpush1.bf16.msra.mxu0 0
    %5674 = vmatprep.subr.bf16.mxu0 0
    %5675 = vmatpush1.bf16.msra.mxu0 0
    %5676 = vmatprep.subr.bf16.mxu0 0
    %5677 = vmatpush1.bf16.msra.mxu0 0
    %5678 = vmatprep.subr.bf16.mxu0 0
    %5679 = vmatpush1.bf16.msra.mxu0 0
    %5680 = vmatprep.subr.bf16.mxu0 0
    %5681 = vmatpush1.bf16.msra.mxu0 0
    %5682 = vmatprep.subr.bf16.mxu0 0
    %5683 = vmatpush1.bf16.msra.mxu0 0
    %5684 = vmatprep.mubr.bf16.mxu0 0
    %5685 = vmatmul.mubr.bf16.gmra.mrb[0].mxu0 %v5610
    %v5686 = vpop.f32.mrb[0].mxu0
    %v5687 = vadd.f32 0.0, %v5686
    %v5688 = vpop.f32.mrb[0].mxu0
    %v5689 = vadd.f32 0.0, %v5688
    %v5690 = vpop.f32.mrb[0].mxu0
    %v5691 = vpop.f32.mrb[0].mxu0
    %5692 = vdwg.mxu0
    %v5693 = vadd.f32 %v5606, %v5646
    %v5694 = vadd.f32 %v5607, %v5648
    %v5695 = vadd.f32 %v5608, %v5687
    %v5696 = vadd.f32 %v5609, %v5689
    %v5697 = vxor.u32 %v5693, 2147483648
    %v5698 = vmul.f32 %v5697, 1.442695
    %v5699 = vpow.pop %v5698
    %v5700 = vadd.f32 %v5699, 1.0
    %v5701 = vrcp.pop %v5700
    %v5702 = vmul.f32 1.0, %v5701
    %v5703 = vxor.u32 %v5694, 2147483648
    %v5704 = vmul.f32 %v5703, 1.442695
    %v5705 = vpow.pop %v5704
    %v5706 = vadd.f32 %v5705, 1.0
    %v5707 = vrcp.pop %v5706
    %v5708 = vmul.f32 1.0, %v5707
    %v5709 = vtanh.pop %v5695
    %v5710 = vxor.u32 %v5696, 2147483648
    %v5711 = vmul.f32 %v5710, 1.442695
    %v5712 = vpow.pop %v5711
    %v5713 = vadd.f32 %v5712, 1.0
    %v5714 = vrcp.pop %v5713
    %v5715 = vmul.f32 1.0, %v5714
    %v5716 = vmul.f32 %v5708, %v5603
    %v5717 = vmul.f32 %v5702, %v5709
    %v5718 = vadd.f32 %v5716, %v5717
    %v5719 = vtanh.pop %v5718
    %v5720 = vmul.f32 %v5715, %v5719
    %v5721 = vld [vmem:[%s1123] sm:$0xff]
    %v5722 = vld [vmem:[%s1123 + $0x8] sm:$0xff]
    %v5723 = vld [vmem:[%s1123 + $0x10] sm:$0xff]
    %v5724 = vld [vmem:[%s1123 + $0x18] sm:$0xff]
    %v5725 = vpack.c.bf16 %v5720, %v5720
    %5726 = vmatprep.subr.bf16.mxu0 %v5203
    %5727 = vmatpush1.bf16.msra.mxu0 %v5202
    %5728 = vmatprep.subr.bf16.mxu0 %v5207
    %5729 = vmatpush1.bf16.msra.mxu0 %v5206
    %5730 = vmatprep.subr.bf16.mxu0 %v5211
    %5731 = vmatpush1.bf16.msra.mxu0 %v5210
    %5732 = vmatprep.subr.bf16.mxu0 %v5215
    %5733 = vmatpush1.bf16.msra.mxu0 %v5214
    %5734 = vmatprep.subr.bf16.mxu0 %v5219
    %5735 = vmatpush1.bf16.msra.mxu0 %v5218
    %5736 = vmatprep.subr.bf16.mxu0 %v5223
    %5737 = vmatpush1.bf16.msra.mxu0 %v5222
    %5738 = vmatprep.subr.bf16.mxu0 %v5227
    %5739 = vmatpush1.bf16.msra.mxu0 %v5226
    %5740 = vmatprep.subr.bf16.mxu0 %v5231
    %5741 = vmatpush1.bf16.msra.mxu0 %v5230
    %5742 = vmatprep.subr.bf16.mxu0 0
    %5743 = vmatpush1.bf16.msra.mxu0 0
    %5744 = vmatprep.subr.bf16.mxu0 0
    %5745 = vmatpush1.bf16.msra.mxu0 0
    %5746 = vmatprep.subr.bf16.mxu0 0
    %5747 = vmatpush1.bf16.msra.mxu0 0
    %5748 = vmatprep.subr.bf16.mxu0 0
    %5749 = vmatpush1.bf16.msra.mxu0 0
    %5750 = vmatprep.subr.bf16.mxu0 0
    %5751 = vmatpush1.bf16.msra.mxu0 0
    %5752 = vmatprep.subr.bf16.mxu0 0
    %5753 = vmatpush1.bf16.msra.mxu0 0
    %5754 = vmatprep.subr.bf16.mxu0 0
    %5755 = vmatpush1.bf16.msra.mxu0 0
    %5756 = vmatprep.subr.bf16.mxu0 0
    %5757 = vmatpush1.bf16.msra.mxu0 0
    %5758 = vmatprep.mubr.bf16.mxu0 0
    %5759 = vmatmul.mubr.bf16.gmra.mrb[0].mxu0 %v5725
    %v5760 = vpop.f32.mrb[0].mxu0
    %v5761 = vadd.f32 0.0, %v5760
    %v5762 = vpop.f32.mrb[0].mxu0
    %v5763 = vadd.f32 0.0, %v5762
    %v5764 = vpop.f32.mrb[0].mxu0
    %v5765 = vpop.f32.mrb[0].mxu0
    %5766 = vdwg.mxu0
    %5767 = vmatprep.subr.bf16.mxu0 %v5205
    %5768 = vmatpush1.bf16.msra.mxu0 %v5204
    %5769 = vmatprep.subr.bf16.mxu0 %v5209
    %5770 = vmatpush1.bf16.msra.mxu0 %v5208
    %5771 = vmatprep.subr.bf16.mxu0 %v5213
    %5772 = vmatpush1.bf16.msra.mxu0 %v5212
    %5773 = vmatprep.subr.bf16.mxu0 %v5217
    %5774 = vmatpush1.bf16.msra.mxu0 %v5216
    %5775 = vmatprep.subr.bf16.mxu0 %v5221
    %5776 = vmatpush1.bf16.msra.mxu0 %v5220
    %5777 = vmatprep.subr.bf16.mxu0 %v5225
    %5778 = vmatpush1.bf16.msra.mxu0 %v5224
    %5779 = vmatprep.subr.bf16.mxu0 %v5229
    %5780 = vmatpush1.bf16.msra.mxu0 %v5228
    %5781 = vmatprep.subr.bf16.mxu0 %v5233
    %5782 = vmatpush1.bf16.msra.mxu0 %v5232
    %5783 = vmatprep.subr.bf16.mxu0 0
    %5784 = vmatpush1.bf16.msra.mxu0 0
    %5785 = vmatprep.subr.bf16.mxu0 0
    %5786 = vmatpush1.bf16.msra.mxu0 0
    %5787 = vmatprep.subr.bf16.mxu0 0
    %5788 = vmatpush1.bf16.msra.mxu0 0
    %5789 = vmatprep.subr.bf16.mxu0 0
    %5790 = vmatpush1.bf16.msra.mxu0 0
    %5791 = vmatprep.subr.bf16.mxu0 0
    %5792 = vmatpush1.bf16.msra.mxu0 0
    %5793 = vmatprep.subr.bf16.mxu0 0
    %5794 = vmatpush1.bf16.msra.mxu0 0
    %5795 = vmatprep.subr.bf16.mxu0 0
    %5796 = vmatpush1.bf16.msra.mxu0 0
    %5797 = vmatprep.subr.bf16.mxu0 0
    %5798 = vmatpush1.bf16.msra.mxu0 0
    %5799 = vmatprep.mubr.bf16.mxu0 0
    %5800 = vmatmul.mubr.bf16.gmra.mrb[0].mxu0 %v5725
    %v5801 = vpop.f32.mrb[0].mxu0
    %v5802 = vadd.f32 0.0, %v5801
    %v5803 = vpop.f32.mrb[0].mxu0
    %v5804 = vadd.f32 0.0, %v5803
    %v5805 = vpop.f32.mrb[0].mxu0
    %v5806 = vpop.f32.mrb[0].mxu0
    %5807 = vdwg.mxu0
    %v5808 = vadd.f32 %v5721, %v5761
    %v5809 = vadd.f32 %v5722, %v5763
    %v5810 = vadd.f32 %v5723, %v5802
    %v5811 = vadd.f32 %v5724, %v5804
    %v5812 = vxor.u32 %v5808, 2147483648
    %v5813 = vmul.f32 %v5812, 1.442695
    %v5814 = vpow.pop %v5813
    %v5815 = vadd.f32 %v5814, 1.0
    %v5816 = vrcp.pop %v5815
    %v5817 = vmul.f32 1.0, %v5816
    %v5818 = vxor.u32 %v5809, 2147483648
    %v5819 = vmul.f32 %v5818, 1.442695
    %v5820 = vpow.pop %v5819
    %v5821 = vadd.f32 %v5820, 1.0
    %v5822 = vrcp.pop %v5821
    %v5823 = vmul.f32 1.0, %v5822
    %v5824 = vtanh.pop %v5810
    %v5825 = vxor.u32 %v5811, 2147483648
    %v5826 = vmul.f32 %v5825, 1.442695
    %v5827 = vpow.pop %v5826
    %v5828 = vadd.f32 %v5827, 1.0
    %v5829 = vrcp.pop %v5828
    %v5830 = vmul.f32 1.0, %v5829
    %v5831 = vmul.f32 %v5823, %v5718
    %v5832 = vmul.f32 %v5817, %v5824
    %v5833 = vadd.f32 %v5831, %v5832
    %v5834 = vtanh.pop %v5833
    %v5835 = vmul.f32 %v5830, %v5834
    %v5836 = vld [vmem:[%s1241] sm:$0xff]
    %v5837 = vld [vmem:[%s1241 + $0x8] sm:$0xff]
    %v5838 = vld [vmem:[%s1241 + $0x10] sm:$0xff]
    %v5839 = vld [vmem:[%s1241 + $0x18] sm:$0xff]
    %v5840 = vpack.c.bf16 %v5835, %v5835
    %5841 = vmatprep.subr.bf16.mxu0 %v5203
    %5842 = vmatpush1.bf16.msra.mxu0 %v5202
    %5843 = vmatprep.subr.bf16.mxu0 %v5207
    %5844 = vmatpush1.bf16.msra.mxu0 %v5206
    %5845 = vmatprep.subr.bf16.mxu0 %v5211
    %5846 = vmatpush1.bf16.msra.mxu0 %v5210
    %5847 = vmatprep.subr.bf16.mxu0 %v5215
    %5848 = vmatpush1.bf16.msra.mxu0 %v5214
    %5849 = vmatprep.subr.bf16.mxu0 %v5219
    %5850 = vmatpush1.bf16.msra.mxu0 %v5218
    %5851 = vmatprep.subr.bf16.mxu0 %v5223
    %5852 = vmatpush1.bf16.msra.mxu0 %v5222
    %5853 = vmatprep.subr.bf16.mxu0 %v5227
    %5854 = vmatpush1.bf16.msra.mxu0 %v5226
    %5855 = vmatprep.subr.bf16.mxu0 %v5231
    %5856 = vmatpush1.bf16.msra.mxu0 %v5230
    %5857 = vmatprep.subr.bf16.mxu0 0
    %5858 = vmatpush1.bf16.msra.mxu0 0
    %5859 = vmatprep.subr.bf16.mxu0 0
    %5860 = vmatpush1.bf16.msra.mxu0 0
    %5861 = vmatprep.subr.bf16.mxu0 0
    %5862 = vmatpush1.bf16.msra.mxu0 0
    %5863 = vmatprep.subr.bf16.mxu0 0
    %5864 = vmatpush1.bf16.msra.mxu0 0
    %5865 = vmatprep.subr.bf16.mxu0 0
    %5866 = vmatpush1.bf16.msra.mxu0 0
    %5867 = vmatprep.subr.bf16.mxu0 0
    %5868 = vmatpush1.bf16.msra.mxu0 0
    %5869 = vmatprep.subr.bf16.mxu0 0
    %5870 = vmatpush1.bf16.msra.mxu0 0
    %5871 = vmatprep.subr.bf16.mxu0 0
    %5872 = vmatpush1.bf16.msra.mxu0 0
    %5873 = vmatprep.mubr.bf16.mxu0 0
    %5874 = vmatmul.mubr.bf16.gmra.mrb[0].mxu0 %v5840
    %v5875 = vpop.f32.mrb[0].mxu0
    %v5876 = vadd.f32 0.0, %v5875
    %v5877 = vpop.f32.mrb[0].mxu0
    %v5878 = vadd.f32 0.0, %v5877
    %v5879 = vpop.f32.mrb[0].mxu0
    %v5880 = vpop.f32.mrb[0].mxu0
    %5881 = vdwg.mxu0
    %5882 = vmatprep.subr.bf16.mxu0 %v5205
    %5883 = vmatpush1.bf16.msra.mxu0 %v5204
    %5884 = vmatprep.subr.bf16.mxu0 %v5209
    %5885 = vmatpush1.bf16.msra.mxu0 %v5208
    %5886 = vmatprep.subr.bf16.mxu0 %v5213
    %5887 = vmatpush1.bf16.msra.mxu0 %v5212
    %5888 = vmatprep.subr.bf16.mxu0 %v5217
    %5889 = vmatpush1.bf16.msra.mxu0 %v5216
    %5890 = vmatprep.subr.bf16.mxu0 %v5221
    %5891 = vmatpush1.bf16.msra.mxu0 %v5220
    %5892 = vmatprep.subr.bf16.mxu0 %v5225
    %5893 = vmatpush1.bf16.msra.mxu0 %v5224
    %5894 = vmatprep.subr.bf16.mxu0 %v5229
    %5895 = vmatpush1.bf16.msra.mxu0 %v5228
    %5896 = vmatprep.subr.bf16.mxu0 %v5233
    %5897 = vmatpush1.bf16.msra.mxu0 %v5232
    %5898 = vmatprep.subr.bf16.mxu0 0
    %5899 = vmatpush1.bf16.msra.mxu0 0
    %5900 = vmatprep.subr.bf16.mxu0 0
    %5901 = vmatpush1.bf16.msra.mxu0 0
    %5902 = vmatprep.subr.bf16.mxu0 0
    %5903 = vmatpush1.bf16.msra.mxu0 0
    %5904 = vmatprep.subr.bf16.mxu0 0
    %5905 = vmatpush1.bf16.msra.mxu0 0
    %5906 = vmatprep.subr.bf16.mxu0 0
    %5907 = vmatpush1.bf16.msra.mxu0 0
    %5908 = vmatprep.subr.bf16.mxu0 0
    %5909 = vmatpush1.bf16.msra.mxu0 0
    %5910 = vmatprep.subr.bf16.mxu0 0
    %5911 = vmatpush1.bf16.msra.mxu0 0
    %5912 = vmatprep.subr.bf16.mxu0 0
    %5913 = vmatpush1.bf16.msra.mxu0 0
    %5914 = vmatprep.mubr.bf16.mxu0 0
    %5915 = vmatmul.mubr.bf16.gmra.mrb[0].mxu0 %v5840
    %v5916 = vpop.f32.mrb[0].mxu0
    %v5917 = vadd.f32 0.0, %v5916
    %v5918 = vpop.f32.mrb[0].mxu0
    %v5919 = vadd.f32 0.0, %v5918
    %v5920 = vpop.f32.mrb[0].mxu0
    %v5921 = vpop.f32.mrb[0].mxu0
    %5922 = vdwg.mxu0
    %v5923 = vadd.f32 %v5836, %v5876
    %v5924 = vadd.f32 %v5837, %v5878
    %v5925 = vadd.f32 %v5838, %v5917
    %v5926 = vadd.f32 %v5839, %v5919
    %v5927 = vxor.u32 %v5923, 2147483648
    %v5928 = vmul.f32 %v5927, 1.442695
    %v5929 = vpow.pop %v5928
    %v5930 = vadd.f32 %v5929, 1.0
    %v5931 = vrcp.pop %v5930
    %v5932 = vmul.f32 1.0, %v5931
    %v5933 = vxor.u32 %v5924, 2147483648
    %v5934 = vmul.f32 %v5933, 1.442695
    %v5935 = vpow.pop %v5934
    %v5936 = vadd.f32 %v5935, 1.0
    %v5937 = vrcp.pop %v5936
    %v5938 = vmul.f32 1.0, %v5937
    %v5939 = vtanh.pop %v5925
    %v5940 = vxor.u32 %v5926, 2147483648
    %v5941 = vmul.f32 %v5940, 1.442695
    %v5942 = vpow.pop %v5941
    %v5943 = vadd.f32 %v5942, 1.0
    %v5944 = vrcp.pop %v5943
    %v5945 = vmul.f32 1.0, %v5944
    %v5946 = vmul.f32 %v5938, %v5833
    %v5947 = vmul.f32 %v5932, %v5939
    %v5948 = vadd.f32 %v5946, %v5947
    %v5949 = vtanh.pop %v5948
    %v5950 = vmul.f32 %v5945, %v5949
    %v5951 = vld [vmem:[%s1359] sm:$0xff]
    %v5952 = vld [vmem:[%s1359 + $0x8] sm:$0xff]
    %v5953 = vld [vmem:[%s1359 + $0x10] sm:$0xff]
    %v5954 = vld [vmem:[%s1359 + $0x18] sm:$0xff]
    %v5955 = vpack.c.bf16 %v5950, %v5950
    %5956 = vmatprep.subr.bf16.mxu0 %v5203
    %5957 = vmatpush1.bf16.msra.mxu0 %v5202
    %5958 = vmatprep.subr.bf16.mxu0 %v5207
    %5959 = vmatpush1.bf16.msra.mxu0 %v5206
    %5960 = vmatprep.subr.bf16.mxu0 %v5211
    %5961 = vmatpush1.bf16.msra.mxu0 %v5210
    %5962 = vmatprep.subr.bf16.mxu0 %v5215
    %5963 = vmatpush1.bf16.msra.mxu0 %v5214
    %5964 = vmatprep.subr.bf16.mxu0 %v5219
    %5965 = vmatpush1.bf16.msra.mxu0 %v5218
    %5966 = vmatprep.subr.bf16.mxu0 %v5223
    %5967 = vmatpush1.bf16.msra.mxu0 %v5222
    %5968 = vmatprep.subr.bf16.mxu0 %v5227
    %5969 = vmatpush1.bf16.msra.mxu0 %v5226
    %5970 = vmatprep.subr.bf16.mxu0 %v5231
    %5971 = vmatpush1.bf16.msra.mxu0 %v5230
    %5972 = vmatprep.subr.bf16.mxu0 0
    %5973 = vmatpush1.bf16.msra.mxu0 0
    %5974 = vmatprep.subr.bf16.mxu0 0
    %5975 = vmatpush1.bf16.msra.mxu0 0
    %5976 = vmatprep.subr.bf16.mxu0 0
    %5977 = vmatpush1.bf16.msra.mxu0 0
    %5978 = vmatprep.subr.bf16.mxu0 0
    %5979 = vmatpush1.bf16.msra.mxu0 0
    %5980 = vmatprep.subr.bf16.mxu0 0
    %5981 = vmatpush1.bf16.msra.mxu0 0
    %5982 = vmatprep.subr.bf16.mxu0 0
    %5983 = vmatpush1.bf16.msra.mxu0 0
    %5984 = vmatprep.subr.bf16.mxu0 0
    %5985 = vmatpush1.bf16.msra.mxu0 0
    %5986 = vmatprep.subr.bf16.mxu0 0
    %5987 = vmatpush1.bf16.msra.mxu0 0
    %5988 = vmatprep.mubr.bf16.mxu0 0
    %5989 = vmatmul.mubr.bf16.gmra.mrb[0].mxu0 %v5955
    %v5990 = vpop.f32.mrb[0].mxu0
    %v5991 = vadd.f32 0.0, %v5990
    %v5992 = vpop.f32.mrb[0].mxu0
    %v5993 = vadd.f32 0.0, %v5992
    %v5994 = vpop.f32.mrb[0].mxu0
    %v5995 = vpop.f32.mrb[0].mxu0
    %5996 = vdwg.mxu0
    %5997 = vmatprep.subr.bf16.mxu0 %v5205
    %5998 = vmatpush1.bf16.msra.mxu0 %v5204
    %5999 = vmatprep.subr.bf16.mxu0 %v5209
    %6000 = vmatpush1.bf16.msra.mxu0 %v5208
    %6001 = vmatprep.subr.bf16.mxu0 %v5213
    %6002 = vmatpush1.bf16.msra.mxu0 %v5212
    %6003 = vmatprep.subr.bf16.mxu0 %v5217
    %6004 = vmatpush1.bf16.msra.mxu0 %v5216
    %6005 = vmatprep.subr.bf16.mxu0 %v5221
    %6006 = vmatpush1.bf16.msra.mxu0 %v5220
    %6007 = vmatprep.subr.bf16.mxu0 %v5225
    %6008 = vmatpush1.bf16.msra.mxu0 %v5224
    %6009 = vmatprep.subr.bf16.mxu0 %v5229
    %6010 = vmatpush1.bf16.msra.mxu0 %v5228
    %6011 = vmatprep.subr.bf16.mxu0 %v5233
    %6012 = vmatpush1.bf16.msra.mxu0 %v5232
    %6013 = vmatprep.subr.bf16.mxu0 0
    %6014 = vmatpush1.bf16.msra.mxu0 0
    %6015 = vmatprep.subr.bf16.mxu0 0
    %6016 = vmatpush1.bf16.msra.mxu0 0
    %6017 = vmatprep.subr.bf16.mxu0 0
    %6018 = vmatpush1.bf16.msra.mxu0 0
    %6019 = vmatprep.subr.bf16.mxu0 0
    %6020 = vmatpush1.bf16.msra.mxu0 0
    %6021 = vmatprep.subr.bf16.mxu0 0
    %6022 = vmatpush1.bf16.msra.mxu0 0
    %6023 = vmatprep.subr.bf16.mxu0 0
    %6024 = vmatpush1.bf16.msra.mxu0 0
    %6025 = vmatprep.subr.bf16.mxu0 0
    %6026 = vmatpush1.bf16.msra.mxu0 0
    %6027 = vmatprep.subr.bf16.mxu0 0
    %6028 = vmatpush1.bf16.msra.mxu0 0
    %6029 = vmatprep.mubr.bf16.mxu0 0
    %6030 = vmatmul.mubr.bf16.gmra.mrb[0].mxu0 %v5955
    %v6031 = vpop.f32.mrb[0].mxu0
    %v6032 = vadd.f32 0.0, %v6031
    %v6033 = vpop.f32.mrb[0].mxu0
    %v6034 = vadd.f32 0.0, %v6033
    %v6035 = vpop.f32.mrb[0].mxu0
    %v6036 = vpop.f32.mrb[0].mxu0
    %6037 = vdwg.mxu0
    %v6038 = vadd.f32 %v5951, %v5991
    %v6039 = vadd.f32 %v5952, %v5993
    %v6040 = vadd.f32 %v5953, %v6032
    %v6041 = vadd.f32 %v5954, %v6034
    %v6042 = vxor.u32 %v6038, 2147483648
    %v6043 = vmul.f32 %v6042, 1.442695
    %v6044 = vpow.pop %v6043
    %v6045 = vadd.f32 %v6044, 1.0
    %v6046 = vrcp.pop %v6045
    %v6047 = vmul.f32 1.0, %v6046
    %v6048 = vxor.u32 %v6039, 2147483648
    %v6049 = vmul.f32 %v6048, 1.442695
    %v6050 = vpow.pop %v6049
    %v6051 = vadd.f32 %v6050, 1.0
    %v6052 = vrcp.pop %v6051
    %v6053 = vmul.f32 1.0, %v6052
    %v6054 = vtanh.pop %v6040
    %v6055 = vxor.u32 %v6041, 2147483648
    %v6056 = vmul.f32 %v6055, 1.442695
    %v6057 = vpow.pop %v6056
    %v6058 = vadd.f32 %v6057, 1.0
    %v6059 = vrcp.pop %v6058
    %v6060 = vmul.f32 1.0, %v6059
    %v6061 = vmul.f32 %v6053, %v5948
    %v6062 = vmul.f32 %v6047, %v6054
    %v6063 = vadd.f32 %v6061, %v6062
    %v6064 = vtanh.pop %v6063
    %v6065 = vmul.f32 %v6060, %v6064
    %v6066 = vld [vmem:[%s1477] sm:$0xff]
    %v6067 = vld [vmem:[%s1477 + $0x8] sm:$0xff]
    %v6068 = vld [vmem:[%s1477 + $0x10] sm:$0xff]
    %v6069 = vld [vmem:[%s1477 + $0x18] sm:$0xff]
    %v6070 = vpack.c.bf16 %v6065, %v6065
    %6071 = vmatprep.subr.bf16.mxu0 %v5203
    %6072 = vmatpush1.bf16.msra.mxu0 %v5202
    %6073 = vmatprep.subr.bf16.mxu0 %v5207
    %6074 = vmatpush1.bf16.msra.mxu0 %v5206
    %6075 = vmatprep.subr.bf16.mxu0 %v5211
    %6076 = vmatpush1.bf16.msra.mxu0 %v5210
    %6077 = vmatprep.subr.bf16.mxu0 %v5215
    %6078 = vmatpush1.bf16.msra.mxu0 %v5214
    %6079 = vmatprep.subr.bf16.mxu0 %v5219
    %6080 = vmatpush1.bf16.msra.mxu0 %v5218
    %6081 = vmatprep.subr.bf16.mxu0 %v5223
    %6082 = vmatpush1.bf16.msra.mxu0 %v5222
    %6083 = vmatprep.subr.bf16.mxu0 %v5227
    %6084 = vmatpush1.bf16.msra.mxu0 %v5226
    %6085 = vmatprep.subr.bf16.mxu0 %v5231
    %6086 = vmatpush1.bf16.msra.mxu0 %v5230
    %6087 = vmatprep.subr.bf16.mxu0 0
    %6088 = vmatpush1.bf16.msra.mxu0 0
    %6089 = vmatprep.subr.bf16.mxu0 0
    %6090 = vmatpush1.bf16.msra.mxu0 0
    %6091 = vmatprep.subr.bf16.mxu0 0
    %6092 = vmatpush1.bf16.msra.mxu0 0
    %6093 = vmatprep.subr.bf16.mxu0 0
    %6094 = vmatpush1.bf16.msra.mxu0 0
    %6095 = vmatprep.subr.bf16.mxu0 0
    %6096 = vmatpush1.bf16.msra.mxu0 0
    %6097 = vmatprep.subr.bf16.mxu0 0
    %6098 = vmatpush1.bf16.msra.mxu0 0
    %6099 = vmatprep.subr.bf16.mxu0 0
    %6100 = vmatpush1.bf16.msra.mxu0 0
    %6101 = vmatprep.subr.bf16.mxu0 0
    %6102 = vmatpush1.bf16.msra.mxu0 0
    %6103 = vmatprep.mubr.bf16.mxu0 0
    %6104 = vmatmul.mubr.bf16.gmra.mrb[0].mxu0 %v6070
    %v6105 = vpop.f32.mrb[0].mxu0
    %v6106 = vadd.f32 0.0, %v6105
    %v6107 = vpop.f32.mrb[0].mxu0
    %v6108 = vadd.f32 0.0, %v6107
    %v6109 = vpop.f32.mrb[0].mxu0
    %v6110 = vpop.f32.mrb[0].mxu0
    %6111 = vdwg.mxu0
    %6112 = vmatprep.subr.bf16.mxu0 %v5205
    %6113 = vmatpush1.bf16.msra.mxu0 %v5204
    %6114 = vmatprep.subr.bf16.mxu0 %v5209
    %6115 = vmatpush1.bf16.msra.mxu0 %v5208
    %6116 = vmatprep.subr.bf16.mxu0 %v5213
    %6117 = vmatpush1.bf16.msra.mxu0 %v5212
    %6118 = vmatprep.subr.bf16.mxu0 %v5217
    %6119 = vmatpush1.bf16.msra.mxu0 %v5216
    %6120 = vmatprep.subr.bf16.mxu0 %v5221
    %6121 = vmatpush1.bf16.msra.mxu0 %v5220
    %6122 = vmatprep.subr.bf16.mxu0 %v5225
    %6123 = vmatpush1.bf16.msra.mxu0 %v5224
    %6124 = vmatprep.subr.bf16.mxu0 %v5229
    %6125 = vmatpush1.bf16.msra.mxu0 %v5228
    %6126 = vmatprep.subr.bf16.mxu0 %v5233
    %6127 = vmatpush1.bf16.msra.mxu0 %v5232
    %6128 = vmatprep.subr.bf16.mxu0 0
    %6129 = vmatpush1.bf16.msra.mxu0 0
    %6130 = vmatprep.subr.bf16.mxu0 0
    %6131 = vmatpush1.bf16.msra.mxu0 0
    %6132 = vmatprep.subr.bf16.mxu0 0
    %6133 = vmatpush1.bf16.msra.mxu0 0
    %6134 = vmatprep.subr.bf16.mxu0 0
    %6135 = vmatpush1.bf16.msra.mxu0 0
    %6136 = vmatprep.subr.bf16.mxu0 0
    %6137 = vmatpush1.bf16.msra.mxu0 0
    %6138 = vmatprep.subr.bf16.mxu0 0
    %6139 = vmatpush1.bf16.msra.mxu0 0
    %6140 = vmatprep.subr.bf16.mxu0 0
    %6141 = vmatpush1.bf16.msra.mxu0 0
    %6142 = vmatprep.subr.bf16.mxu0 0
    %6143 = vmatpush1.bf16.msra.mxu0 0
    %6144 = vmatprep.mubr.bf16.mxu0 0
    %6145 = vmatmul.mubr.bf16.gmra.mrb[0].mxu0 %v6070
    %v6146 = vpop.f32.mrb[0].mxu0
    %v6147 = vadd.f32 0.0, %v6146
    %v6148 = vpop.f32.mrb[0].mxu0
    %v6149 = vadd.f32 0.0, %v6148
    %v6150 = vpop.f32.mrb[0].mxu0
    %v6151 = vpop.f32.mrb[0].mxu0
    %6152 = vdwg.mxu0
    %v6153 = vadd.f32 %v6066, %v6106
    %v6154 = vadd.f32 %v6067, %v6108
    %v6155 = vadd.f32 %v6068, %v6147
    %v6156 = vadd.f32 %v6069, %v6149
    %v6157 = vxor.u32 %v6153, 2147483648
    %v6158 = vmul.f32 %v6157, 1.442695
    %v6159 = vpow.pop %v6158
    %v6160 = vadd.f32 %v6159, 1.0
    %v6161 = vrcp.pop %v6160
    %v6162 = vmul.f32 1.0, %v6161
    %v6163 = vxor.u32 %v6154, 2147483648
    %v6164 = vmul.f32 %v6163, 1.442695
    %v6165 = vpow.pop %v6164
    %v6166 = vadd.f32 %v6165, 1.0
    %v6167 = vrcp.pop %v6166
    %v6168 = vmul.f32 1.0, %v6167
    %v6169 = vtanh.pop %v6155
    %v6170 = vxor.u32 %v6156, 2147483648
    %v6171 = vmul.f32 %v6170, 1.442695
    %v6172 = vpow.pop %v6171
    %v6173 = vadd.f32 %v6172, 1.0
    %v6174 = vrcp.pop %v6173
    %v6175 = vmul.f32 1.0, %v6174
    %v6176 = vmul.f32 %v6168, %v6063
    %v6177 = vmul.f32 %v6162, %v6169
    %v6178 = vadd.f32 %v6176, %v6177
    %v6179 = vtanh.pop %v6178
    %v6180 = vmul.f32 %v6175, %v6179
    %v6181 = vld [vmem:[%s7] sm:$0xff]
    %v6182 = vmul.f32 %v6180, %v6181
    %v6183 = vpack.c.bf16 %v6182, %v6182
    %v6184 = vld [vmem:[%s4] sm:$0xf]
    %v6185 = vld [vmem:[%s4 + $0x4] sm:$0xf]
    %v6186 = vld [vmem:[%s4 + $0x8] sm:$0xf]
    %v6187 = vld [vmem:[%s4 + $0xc] sm:$0xf]
    %v6188 = vld [vmem:[%s4 + $0x10] sm:$0xf]
    %v6189 = vld [vmem:[%s4 + $0x14] sm:$0xf]
    %v6190 = vld [vmem:[%s4 + $0x18] sm:$0xf]
    %v6191 = vld [vmem:[%s4 + $0x1c] sm:$0xf]
    %v6192 = vld [vmem:[%s4 + $0x20] sm:$0xf]
    %v6193 = vld [vmem:[%s4 + $0x24] sm:$0xf]
    %v6194 = vld [vmem:[%s4 + $0x28] sm:$0xf]
    %v6195 = vld [vmem:[%s4 + $0x2c] sm:$0xf]
    %v6196 = vld [vmem:[%s4 + $0x30] sm:$0xf]
    %v6197 = vld [vmem:[%s4 + $0x34] sm:$0xf]
    %v6198 = vld [vmem:[%s4 + $0x38] sm:$0xf]
    %v6199 = vld [vmem:[%s4 + $0x3c] sm:$0xf]
    %v6200 = vld [vmem:[%s5] sm:$0x1]
    %v6202 = vlaneseq
    %v6203 = vshrl.u32 %v6202, 7
    %v6204 = vsub.s32 0, %v6203
    %v6205 = vrot.slane %v6200, %v6204
    %v6223 = vunpack.c.l.b16 %v6184
    %v6224 = vunpack.c.l.b16 %v6185
    %v6225 = vunpack.c.l.b16 %v6186
    %v6226 = vunpack.c.l.b16 %v6187
    %v6227 = vunpack.c.l.b16 %v6188
    %v6228 = vunpack.c.l.b16 %v6189
    %v6229 = vunpack.c.l.b16 %v6190
    %v6230 = vunpack.c.l.b16 %v6191
    %v6231 = vunpack.c.l.b16 %v6192
    %v6232 = vunpack.c.l.b16 %v6193
    %v6233 = vunpack.c.l.b16 %v6194
    %v6234 = vunpack.c.l.b16 %v6195
    %v6235 = vunpack.c.l.b16 %v6196
    %v6236 = vunpack.c.l.b16 %v6197
    %v6237 = vunpack.c.l.b16 %v6198
    %v6238 = vunpack.c.l.b16 %v6199
    %v6239 = vpack.c.b16 %v6224, %v6223
    %v6240 = vpack.c.b16 %v6226, %v6225
    %v6241 = vpack.c.b16 %v6228, %v6227
    %v6242 = vpack.c.b16 %v6230, %v6229
    %v6243 = vpack.c.b16 %v6232, %v6231
    %v6244 = vpack.c.b16 %v6234, %v6233
    %v6245 = vpack.c.b16 %v6236, %v6235
    %v6246 = vpack.c.b16 %v6238, %v6237
    %6255 = vmatprep.subr.bf16.mxu0 0
    %6256 = vmatpush1.bf16.msra.mxu0 %v6239
    %6257 = vmatprep.subr.bf16.mxu0 0
    %6258 = vmatpush1.bf16.msra.mxu0 %v6240
    %6259 = vmatprep.subr.bf16.mxu0 0
    %6260 = vmatpush1.bf16.msra.mxu0 %v6241
    %6261 = vmatprep.subr.bf16.mxu0 0
    %6262 = vmatpush1.bf16.msra.mxu0 %v6242
    %6263 = vmatprep.subr.bf16.mxu0 0
    %6264 = vmatpush1.bf16.msra.mxu0 %v6243
    %6265 = vmatprep.subr.bf16.mxu0 0
    %6266 = vmatpush1.bf16.msra.mxu0 %v6244
    %6267 = vmatprep.subr.bf16.mxu0 0
    %6268 = vmatpush1.bf16.msra.mxu0 %v6245
    %6269 = vmatprep.subr.bf16.mxu0 0
    %6270 = vmatpush1.bf16.msra.mxu0 %v6246
    %6271 = vmatprep.subr.bf16.mxu0 0
    %6272 = vmatpush1.bf16.msra.mxu0 0
    %6273 = vmatprep.subr.bf16.mxu0 0
    %6274 = vmatpush1.bf16.msra.mxu0 0
    %6275 = vmatprep.subr.bf16.mxu0 0
    %6276 = vmatpush1.bf16.msra.mxu0 0
    %6277 = vmatprep.subr.bf16.mxu0 0
    %6278 = vmatpush1.bf16.msra.mxu0 0
    %6279 = vmatprep.subr.bf16.mxu0 0
    %6280 = vmatpush1.bf16.msra.mxu0 0
    %6281 = vmatprep.subr.bf16.mxu0 0
    %6282 = vmatpush1.bf16.msra.mxu0 0
    %6283 = vmatprep.subr.bf16.mxu0 0
    %6284 = vmatpush1.bf16.msra.mxu0 0
    %6285 = vmatprep.subr.bf16.mxu0 0
    %6286 = vmatpush1.bf16.msra.mxu0 0
    %6287 = vmatprep.mubr.bf16.mxu0 0
    %6288 = vmatmul.mubr.bf16.gmra.mrb[0].mxu0 %v6183
    %v6289 = vpop.f32.mrb[0].mxu0
    %v6290 = vadd.f32 %v6205, %v6289
    %v6291 = vpop.f32.mrb[0].mxu0
    %v6292 = vpop.f32.mrb[0].mxu0
    %v6293 = vpop.f32.mrb[0].mxu0
    %6294 = vdwg.mxu0
    %6295 = vst [vmem:[%s8] sm:$0xff] %v6290
    // Predicated region
    $region42: #{bayesian_lstm_forward.3} parent=1 // pred_check
      _
    $region43: #{bayesian_lstm_forward.3} parent=1 // pred_check_branch
      %6297 = sbr.rel (0) target = $region45
    $region44: #{bayesian_lstm_forward.3} parent=1 // pred_region
      _
    $region45: #{bayesian_lstm_forward.3} parent=1 // pred_fallthru
      _
    // Predicated region
    $region46: #{bayesian_lstm_forward.3} parent=1 // pred_check
      _
    $region47: #{bayesian_lstm_forward.3} parent=1 // pred_check_branch
      %6299 = sbr.rel (0) target = $region49
    $region48: #{bayesian_lstm_forward.3} parent=1 // pred_region
      _
    $region49: #{bayesian_lstm_forward.3} parent=1 // pred_fallthru
      _
    %6300 = vsyncpa [#allocation5], 1
    %6301 = vsyncpa [#allocation7], 1

</llo_original>
